<compile_context>
chip_gen: v6e
topology: v6e:2x2x1
jax: 0.10.0
libtpu: 0.0.40
codegen_flags: <defaults>
</compile_context>

<pallas_src>
import functools
import math

import jax
import jax.numpy as jnp
from jax.experimental import pallas as pl
from jax.experimental.pallas import tpu as pltpu


def _round_up(x, m):
    return ((x + m - 1) // m) * m


def _vmem_capacity_bytes(default=64 << 20):
    """Per-core VMEM capacity; conservative (v7x-sized) default if unknown."""
    cap = None
    try:
        info = pltpu.get_tpu_info()
        cap = getattr(info, "vmem_capacity_bytes", None)
    except Exception:
        cap = None
    if not cap:
        cap = default
    return int(min(max(int(cap), 32 << 20), 128 << 20))


def _choose_block_n(N, D, x_itemsize, vmem_cap):
    """Rows per grid step, sized from padded VMEM footprints and HBM per step."""
    lanes = _round_up(max(D, 1), 128)
    stream_row_hbm = 2 * D * x_itemsize        # logical HBM bytes / row (x + x_feas)
    stream_row_vmem = 2 * lanes * x_itemsize   # lane-padded VMEM bytes / row / buffer
    aux_row_vmem = 5 * 4                       # v0, v1, L, g0, g1 dense f32 / row / buffer

    # Enough HBM traffic per step to amortize the ~0.35us per-step overhead.
    target_hbm = 6 << 20
    bn = target_hbm // max(stream_row_hbm, 1)

    # Double-buffered padded working set must fit a generation-aware budget:
    # <= ~40 MiB on v7x (64 MiB VMEM/core), <= ~56 MiB on v5e/v6e (128 MiB VMEM).
    budget = min(vmem_cap * 5 // 8, 56 << 20)
    bn = min(bn, budget // (2 * (stream_row_vmem + aux_row_vmem)))

    # Keep >= 2 grid steps when N allows (v7x megacore balance).
    bn = min(bn, max(1024, _round_up((N + 1) // 2, 1024)))
    return int(max(1024, (bn // 1024) * 1024))


def _optlik_kernel(v0_ref, v1_ref, x_ref, xf_ref, L_ref, g0_ref, g1_ref, *,
                   sigma, log_sigma_term):
    # Streamed feature tiles; upcast to f32 right after load (bf16 math unsafe on v5e).
    x = x_ref[...].astype(jnp.float32)                 # (bn, D)
    xf = xf_ref[...].astype(jnp.float32)               # (bn, D)
    diff = x - xf
    bn = diff.shape[0]

    # Row squared-norms: split the row axis (free, layout-preserving) and lane-reduce
    # so the bn per-row scalars land as a dense rows-over-lanes (bn//128, 128) tile.
    # This is the single sublane->lane relayout paid per step; everything downstream
    # (EUP/VALU chain, output stores) stays lane-dense.
    d2 = (diff * diff).reshape(bn // 128, 128, x.shape[1])
    csq = jnp.sum(d2, axis=-1)                          # (bn//128, 128)
    c = jnp.sqrt(csq)

    v0 = v0_ref[...]                                    # (bn//128, 128), lane-dense
    v1 = v1_ref[...]                                    # (bn//128, 128), lane-dense

    # NOTE: as in the PyTorch reference, d = v1 + sigma <= 0 yields inf/nan.
    d = v1 + sigma
    r = c - v0
    inv_d = 1.0 / d                  # one exact reciprocal reused everywhere
    inv_d2 = inv_d * inv_d
    r2 = r * r

    # Full unmasked dense-tile stores (lane-dense outputs).
    L_ref[...] = jnp.log(d) + 0.5 * r2 * inv_d2 + log_sigma_term
    g0_ref[...] = -r * inv_d2
    g1_ref[...] = inv_d - r2 * inv_d2 * inv_d


def optimistic_likelihood_forward(v, x, x_feas, *, x_dim, sigma, block_n=None):
    """Returns (L, v_grad) matching OptimisticLikelihood.forward."""
    N, D = x.shape
    assert v.shape == (N, 2) and x_feas.shape == (N, D)
    assert x_feas.dtype == x.dtype

    itemsize = jnp.dtype(x.dtype).itemsize
    vmem_cap = _vmem_capacity_bytes()
    if block_n is None:
        block_n = _choose_block_n(N, D, itemsize, vmem_cap)
    assert block_n % 1024 == 0

    N_pad = _round_up(N, block_n)
    pad = N_pad - N

    # Split v into two lane-dense planes (cheap XLA ops on 8*N bytes); padded rows
    # stay finite: c = 0 and d = sigma > 0.
    v_f32 = v.astype(jnp.float32)
    v0_col = v_f32[:, 0]
    v1_col = v_f32[:, 1]
    if pad:
        v0_col = jnp.pad(v0_col, (0, pad))
        v1_col = jnp.pad(v1_col, (0, pad))
        x = jnp.pad(x, ((0, pad), (0, 0)))
        x_feas = jnp.pad(x_feas, ((0, pad), (0, 0)))

    rows = N_pad // 128
    r_blk = block_n // 128
    v0_pl = v0_col.reshape(rows, 128)        # free row-major reshapes: rows-over-lanes
    v1_pl = v1_col.reshape(rows, 128)

    grid = N_pad // block_n
    sigma = float(sigma)
    p = float(x_dim)
    kernel = functools.partial(
        _optlik_kernel, sigma=sigma, log_sigma_term=(p - 1.0) * math.log(sigma))

    # Padded VMEM accounting: lane dim of x/x_feas rounded up to 128; all blocks
    # double-buffered (default Buffered(2); Buffered(3) on x/x_feas is a possible
    # further tweak on v7x but is not required).
    lanes = _round_up(D, 128)
    work = 2 * (2 * block_n * lanes * itemsize) + 2 * (5 * block_n * 4)
    vmem_limit = int(min(vmem_cap, max(32 << 20, work + (8 << 20))))

    row_plane = pl.BlockSpec((r_blk, 128), lambda i: (i, 0))
    feat_tile = pl.BlockSpec((block_n, D), lambda i: (i, 0))

    L_pl, g0_pl, g1_pl = pl.pallas_call(
        kernel,
        out_shape=(
            jax.ShapeDtypeStruct((rows, 128), jnp.float32),   # L plane
            jax.ShapeDtypeStruct((rows, 128), jnp.float32),   # g0 plane
            jax.ShapeDtypeStruct((rows, 128), jnp.float32),   # g1 plane
        ),
        grid=(grid,),
        in_specs=[row_plane, row_plane, feat_tile, feat_tile],
        out_specs=(row_plane, row_plane, row_plane),
        compiler_params=pltpu.CompilerParams(
            dimension_semantics=("parallel",),
            vmem_limit_bytes=vmem_limit,
        ),
        cost_estimate=pl.CostEstimate(
            flops=int(N_pad) * (3 * D + 20),
            transcendentals=3 * int(N_pad),
            bytes_accessed=2 * int(N_pad) * D * itemsize + int(N_pad) * 5 * 4,
        ),
    )(v0_pl, v1_pl, x, x_feas)

    L = L_pl.reshape(N_pad)[:N]
    v_grad = jnp.stack([g0_pl.reshape(N_pad), g1_pl.reshape(N_pad)], axis=-1)[:N]
    return L, v_grad


def _reference_forward(v, x, x_feas, *, x_dim, sigma):
    x = x.astype(jnp.float32)
    x_feas = x_feas.astype(jnp.float32)
    v = v.astype(jnp.float32)
    c = jnp.linalg.norm(x - x_feas, axis=-1)
    d = v[..., 1] + sigma
    r = c - v[..., 0]
    L = jnp.log(d) + r ** 2 / (2.0 * d ** 2) + (x_dim - 1.0) * jnp.log(sigma)
    g0 = -r / d ** 2
    g1 = 1.0 / d - r ** 2 / d ** 3
    return L, jnp.stack([g0, g1], axis=-1)


if __name__ == "__main__":
    SIGMA = 0.5  # sigma > 0 (scalar module parameter); epsilon_op only used in optimize()

    key = jax.random.PRNGKey(0)
    key_a, key_b = jax.random.split(key)

    # --- small f32 case (module-consistent shapes) ---
    N, D = 16, 32
    X_DIM = float(D)
    kv, kx, kf = jax.random.split(key_a, 3)
    v = jax.random.uniform(kv, (N, 2), dtype=jnp.float32, minval=0.0, maxval=0.3)
    x = jax.random.normal(kx, (N, D), dtype=jnp.float32)
    x_feas = jax.random.normal(kf, (N, D), dtype=jnp.float32)

    L, v_grad = optimistic_likelihood_forward(v, x, x_feas, x_dim=X_DIM, sigma=SIGMA)
    L, v_grad = jax.block_until_ready((L, v_grad))
    L_ref, g_ref = _reference_forward(v, x, x_feas, x_dim=X_DIM, sigma=SIGMA)
    assert jnp.allclose(L, L_ref, atol=1e-5, rtol=1e-5), "L mismatch (f32)"
    assert jnp.allclose(v_grad, g_ref, atol=1e-5, rtol=1e-5), "v_grad mismatch (f32)"

    # --- non-multiple-of-block N (exercises internal padding) with bf16 inputs ---
    N2 = 100
    kv2, kx2, kf2 = jax.random.split(key_b, 3)
    v2 = jax.random.uniform(kv2, (N2, 2), dtype=jnp.float32, minval=0.0, maxval=0.3)
    x2 = jax.random.normal(kx2, (N2, D), dtype=jnp.float32).astype(jnp.bfloat16)
    xf2 = jax.random.normal(kf2, (N2, D), dtype=jnp.float32).astype(jnp.bfloat16)

    L2, g2 = optimistic_likelihood_forward(v2, x2, xf2, x_dim=X_DIM, sigma=SIGMA)
    L2, g2 = jax.block_until_ready((L2, g2))
    L2_ref, g2_ref = _reference_forward(v2, x2, xf2, x_dim=X_DIM, sigma=SIGMA)
    assert jnp.allclose(L2, L2_ref, atol=1e-4, rtol=1e-4), "L mismatch (bf16 inputs)"
    assert jnp.allclose(g2, g2_ref, atol=1e-4, rtol=1e-4), "v_grad mismatch (bf16 inputs)"

    print("KERNEL_OK")
</pallas_src>

<mosaic_0001>
module attributes {stable_mosaic.version = 11 : i64} {
  func.func @_optlik_kernel(%arg0: i32, %arg1: memref<8x128xf32, #tpu.memory_space<vmem>>, %arg2: memref<8x128xf32, #tpu.memory_space<vmem>>, %arg3: memref<1024x32xf32, #tpu.memory_space<vmem>>, %arg4: memref<1024x32xf32, #tpu.memory_space<vmem>>, %arg5: memref<8x128xf32, #tpu.memory_space<vmem>>, %arg6: memref<8x128xf32, #tpu.memory_space<vmem>>, %arg7: memref<8x128xf32, #tpu.memory_space<vmem>>) attributes {dimension_semantics = [#tpu.dimension_semantics<parallel>], iteration_bounds = array<i64: 1>, scalar_prefetch = 0 : i64, scratch_operands = 0 : i64, tpu.core_type = #tpu.core_type<tc>, window_params = [{transform_indices = @transform_0, window_bounds = array<i64: 8, 128>}, {transform_indices = @transform_1, window_bounds = array<i64: 8, 128>}, {transform_indices = @transform_2, window_bounds = array<i64: 1024, 32>}, {transform_indices = @transform_3, window_bounds = array<i64: 1024, 32>}, {transform_indices = @transform_4, window_bounds = array<i64: 8, 128>}, {transform_indices = @transform_5, window_bounds = array<i64: 8, 128>}, {transform_indices = @transform_6, window_bounds = array<i64: 8, 128>}]} {
    %c0 = arith.constant 0 : index
    %c0_0 = arith.constant 0 : index
    %0 = vector.load %arg3[%c0, %c0_0] : memref<1024x32xf32, #tpu.memory_space<vmem>>, vector<1024x32xf32>
    %c0_1 = arith.constant 0 : index
    %c0_2 = arith.constant 0 : index
    %1 = vector.load %arg4[%c0_1, %c0_2] : memref<1024x32xf32, #tpu.memory_space<vmem>>, vector<1024x32xf32>
    %2 = arith.subf %0, %1 : vector<1024x32xf32>
    %3 = arith.mulf %2, %2 : vector<1024x32xf32>
    %4 = vector.shape_cast %3 : vector<1024x32xf32> to vector<8x128x32xf32>
    %cst = arith.constant dense<0.000000e+00> : vector<8x128xf32>
    %5 = vector.multi_reduction <add>, %4, %cst [2] : vector<8x128x32xf32> to vector<8x128xf32>
    %6 = math.sqrt %5 : vector<8x128xf32>
    %c0_3 = arith.constant 0 : index
    %c0_4 = arith.constant 0 : index
    %7 = vector.load %arg1[%c0_3, %c0_4] : memref<8x128xf32, #tpu.memory_space<vmem>>, vector<8x128xf32>
    %c0_5 = arith.constant 0 : index
    %c0_6 = arith.constant 0 : index
    %8 = vector.load %arg2[%c0_5, %c0_6] : memref<8x128xf32, #tpu.memory_space<vmem>>, vector<8x128xf32>
    %cst_7 = arith.constant 5.000000e-01 : f32
    %9 = vector.broadcast %cst_7 : f32 to vector<8x128xf32>
    %10 = arith.addf %8, %9 : vector<8x128xf32>
    %11 = arith.subf %6, %7 : vector<8x128xf32>
    %cst_8 = arith.constant 1.000000e+00 : f32
    %12 = vector.broadcast %cst_8 : f32 to vector<8x128xf32>
    %13 = arith.divf %12, %10 : vector<8x128xf32>
    %14 = arith.mulf %13, %13 : vector<8x128xf32>
    %15 = arith.mulf %11, %11 : vector<8x128xf32>
    %16 = math.log %10 : vector<8x128xf32>
    %cst_9 = arith.constant 5.000000e-01 : f32
    %17 = vector.broadcast %cst_9 : f32 to vector<8x128xf32>
    %18 = arith.mulf %17, %15 : vector<8x128xf32>
    %19 = arith.mulf %18, %14 : vector<8x128xf32>
    %20 = arith.addf %16, %19 : vector<8x128xf32>
    %cst_10 = arith.constant -21.4875622 : f32
    %21 = vector.broadcast %cst_10 : f32 to vector<8x128xf32>
    %22 = arith.addf %20, %21 : vector<8x128xf32>
    %c0_11 = arith.constant 0 : index
    %c0_12 = arith.constant 0 : index
    %23 = vector.load %arg5[%c0_11, %c0_12] : memref<8x128xf32, #tpu.memory_space<vmem>>, vector<8x128xf32>
    tpu.vector_store %arg5[%c0_11, %c0_12], %22 {strides = array<i32>} : memref<8x128xf32, #tpu.memory_space<vmem>>, vector<8x128xf32>,
    %cst_13 = arith.constant 0.000000e+00 : f32
    %24 = vector.broadcast %cst_13 : f32 to vector<8x128xf32>
    %25 = arith.subf %24, %11 : vector<8x128xf32>
    %26 = arith.mulf %25, %14 : vector<8x128xf32>
    %c0_14 = arith.constant 0 : index
    %c0_15 = arith.constant 0 : index
    %27 = vector.load %arg6[%c0_14, %c0_15] : memref<8x128xf32, #tpu.memory_space<vmem>>, vector<8x128xf32>
    tpu.vector_store %arg6[%c0_14, %c0_15], %26 {strides = array<i32>} : memref<8x128xf32, #tpu.memory_space<vmem>>, vector<8x128xf32>,
    %28 = arith.mulf %15, %14 : vector<8x128xf32>
    %29 = arith.mulf %28, %13 : vector<8x128xf32>
    %30 = arith.subf %13, %29 : vector<8x128xf32>
    %c0_16 = arith.constant 0 : index
    %c0_17 = arith.constant 0 : index
    %31 = vector.load %arg7[%c0_16, %c0_17] : memref<8x128xf32, #tpu.memory_space<vmem>>, vector<8x128xf32>
    tpu.vector_store %arg7[%c0_16, %c0_17], %30 {strides = array<i32>} : memref<8x128xf32, #tpu.memory_space<vmem>>, vector<8x128xf32>,
    return
  }
  func.func @transform_0(%arg0: i32) -> (i32, i32) {
    %c0_i32 = arith.constant 0 : i32
    %c0_i32_0 = arith.constant 0 : i32
    return %arg0, %c0_i32 : i32, i32
  }
  func.func @transform_1(%arg0: i32) -> (i32, i32) {
    %c0_i32 = arith.constant 0 : i32
    %c0_i32_0 = arith.constant 0 : i32
    return %arg0, %c0_i32 : i32, i32
  }
  func.func @transform_2(%arg0: i32) -> (i32, i32) {
    %c0_i32 = arith.constant 0 : i32
    %c0_i32_0 = arith.constant 0 : i32
    return %arg0, %c0_i32 : i32, i32
  }
  func.func @transform_3(%arg0: i32) -> (i32, i32) {
    %c0_i32 = arith.constant 0 : i32
    %c0_i32_0 = arith.constant 0 : i32
    return %arg0, %c0_i32 : i32, i32
  }
  func.func @transform_4(%arg0: i32) -> (i32, i32) {
    %c0_i32 = arith.constant 0 : i32
    %c0_i32_0 = arith.constant 0 : i32
    return %arg0, %c0_i32 : i32, i32
  }
  func.func @transform_5(%arg0: i32) -> (i32, i32) {
    %c0_i32 = arith.constant 0 : i32
    %c0_i32_0 = arith.constant 0 : i32
    return %arg0, %c0_i32 : i32, i32
  }
  func.func @transform_6(%arg0: i32) -> (i32, i32) {
    %c0_i32 = arith.constant 0 : i32
    %c0_i32_0 = arith.constant 0 : i32
    return %arg0, %c0_i32 : i32, i32
  }
}

</mosaic_0001>

<llo_original>
// kernel: tpu_custom_call.1
$region0: #{tpu_custom_call.1}
  #allocation0 [shape = 'u32[]', space=smem, size = 0x4, offset = 0x4, fixed_abs, tag = 'smem constant byte address 0x4 - core index']
  #allocation1 [shape = 'u32[144,128]{1,0:T(1,128)}', space=vmem, size = 0x12000, scoped, tag = 'internal scratch']
  %s0 = inlined_call_operand.vmem [shape: f32[8,128], index: 0, kind: input, shape index: {}]
  %s1 = inlined_call_operand.vmem [shape: f32[8,128], index: 1, kind: input, shape index: {}]
  %s2 = inlined_call_operand.vmem [shape: f32[1024,32], index: 2, kind: input, shape index: {}]
  %s3 = inlined_call_operand.vmem [shape: f32[1024,32], index: 3, kind: input, shape index: {}]
  %s4 = inlined_call_operand.hbm [shape: f32[8,128], index: 4, kind: output, shape index: {0}]
  %s5 = inlined_call_operand.hbm [shape: f32[8,128], index: 5, kind: output, shape index: {1}]
  %s6 = inlined_call_operand.hbm [shape: f32[8,128], index: 6, kind: output, shape index: {2}]
  %7 = xla_tuple %s4, %s5, %s6
  %s8 = sld [smem:[#allocation0]]
  $region42: #{tpu_custom_call.1} parent=0
    _
  %s10 = ssub.s32 1, %s8
  %s11 = scalar_select 0, %s10, %s8
  $region1: #{tpu_custom_call.1} parent=0
    #allocation2 [shape = 'u8[4096]{0}', space=vmem, size = 0x1000, scoped, tag = 'output window, operand 0, single buffered']
    #allocation3 [shape = 's32[1]{0}', space=sflag, size = 0x4, scoped, tag = 'scoped memory for tpu_custom_call.1']
    #allocation4 [shape = 'u8[4096]{0}', space=vmem, size = 0x1000, scoped, tag = 'output window, operand 1, single buffered']
    #allocation5 [shape = 's32[1]{0}', space=sflag, size = 0x4, scoped, tag = 'scoped memory for tpu_custom_call.1']
    #allocation6 [shape = 'u8[4096]{0}', space=vmem, size = 0x1000, scoped, tag = 'output window, operand 2, single buffered']
    %12 = vsyncpa [#allocation3], 0
    %13 = vsyncpa [#allocation5], 0
    // Predicated region
    $region2: #{tpu_custom_call.1} parent=1 // pred_check
      _
    $region3: #{tpu_custom_call.1} parent=1 // pred_check_branch
      %15 = sbr.rel (0) target = $region5
    $region4: #{tpu_custom_call.1} parent=1 // pred_region
      _
    $region5: #{tpu_custom_call.1} parent=1 // pred_fallthru
      _
    // Predicated region
    $region6: #{tpu_custom_call.1} parent=1 // pred_check
      _
    $region7: #{tpu_custom_call.1} parent=1 // pred_check_branch
      %17 = sbr.rel (0) target = $region9
    $region8: #{tpu_custom_call.1} parent=1 // pred_region
      _
    $region9: #{tpu_custom_call.1} parent=1 // pred_fallthru
      _
    // Predicated region
    $region10: #{tpu_custom_call.1} parent=1 // pred_check
      _
    $region11: #{tpu_custom_call.1} parent=1 // pred_check_branch
      %19 = sbr.rel (0) target = $region13
    $region12: #{tpu_custom_call.1} parent=1 // pred_region
      _
    $region13: #{tpu_custom_call.1} parent=1 // pred_fallthru
      _
    // Predicated region
    $region14: #{tpu_custom_call.1} parent=1 // pred_check
      _
    $region15: #{tpu_custom_call.1} parent=1 // pred_check_branch
      %21 = sbr.rel (0) target = $region17
    $region16: #{tpu_custom_call.1} parent=1 // pred_region
      _
    $region17: #{tpu_custom_call.1} parent=1 // pred_fallthru
      _
    %v22 = vld [vmem:[%s2] sm:$0xff]
    %v23 = vld [vmem:[%s2 + $0x8] sm:$0xff]
    %v24 = vld [vmem:[%s2 + $0x10] sm:$0xff]
    %v25 = vld [vmem:[%s2 + $0x18] sm:$0xff]
    %v26 = vld [vmem:[%s2 + $0x20] sm:$0xff]
    %v27 = vld [vmem:[%s2 + $0x28] sm:$0xff]
    %v28 = vld [vmem:[%s2 + $0x30] sm:$0xff]
    %v29 = vld [vmem:[%s2 + $0x38] sm:$0xff]
    %v30 = vld [vmem:[%s2 + $0x40] sm:$0xff]
    %v31 = vld [vmem:[%s2 + $0x48] sm:$0xff]
    %v32 = vld [vmem:[%s2 + $0x50] sm:$0xff]
    %v33 = vld [vmem:[%s2 + $0x58] sm:$0xff]
    %v34 = vld [vmem:[%s2 + $0x60] sm:$0xff]
    %v35 = vld [vmem:[%s2 + $0x68] sm:$0xff]
    %v36 = vld [vmem:[%s2 + $0x70] sm:$0xff]
    %v37 = vld [vmem:[%s2 + $0x78] sm:$0xff]
    %v38 = vld [vmem:[%s2 + $0x80] sm:$0xff]
    %v39 = vld [vmem:[%s2 + $0x88] sm:$0xff]
    %v40 = vld [vmem:[%s2 + $0x90] sm:$0xff]
    %v41 = vld [vmem:[%s2 + $0x98] sm:$0xff]
    %v42 = vld [vmem:[%s2 + $0xa0] sm:$0xff]
    %v43 = vld [vmem:[%s2 + $0xa8] sm:$0xff]
    %v44 = vld [vmem:[%s2 + $0xb0] sm:$0xff]
    %v45 = vld [vmem:[%s2 + $0xb8] sm:$0xff]
    %v46 = vld [vmem:[%s2 + $0xc0] sm:$0xff]
    %v47 = vld [vmem:[%s2 + $0xc8] sm:$0xff]
    %v48 = vld [vmem:[%s2 + $0xd0] sm:$0xff]
    %v49 = vld [vmem:[%s2 + $0xd8] sm:$0xff]
    %v50 = vld [vmem:[%s2 + $0xe0] sm:$0xff]
    %v51 = vld [vmem:[%s2 + $0xe8] sm:$0xff]
    %v52 = vld [vmem:[%s2 + $0xf0] sm:$0xff]
    %v53 = vld [vmem:[%s2 + $0xf8] sm:$0xff]
    %v54 = vld [vmem:[%s2 + $0x100] sm:$0xff]
    %v55 = vld [vmem:[%s2 + $0x108] sm:$0xff]
    %v56 = vld [vmem:[%s2 + $0x110] sm:$0xff]
    %v57 = vld [vmem:[%s2 + $0x118] sm:$0xff]
    %v58 = vld [vmem:[%s2 + $0x120] sm:$0xff]
    %v59 = vld [vmem:[%s2 + $0x128] sm:$0xff]
    %v60 = vld [vmem:[%s2 + $0x130] sm:$0xff]
    %v61 = vld [vmem:[%s2 + $0x138] sm:$0xff]
    %v62 = vld [vmem:[%s2 + $0x140] sm:$0xff]
    %v63 = vld [vmem:[%s2 + $0x148] sm:$0xff]
    %v64 = vld [vmem:[%s2 + $0x150] sm:$0xff]
    %v65 = vld [vmem:[%s2 + $0x158] sm:$0xff]
    %v66 = vld [vmem:[%s2 + $0x160] sm:$0xff]
    %v67 = vld [vmem:[%s2 + $0x168] sm:$0xff]
    %v68 = vld [vmem:[%s2 + $0x170] sm:$0xff]
    %v69 = vld [vmem:[%s2 + $0x178] sm:$0xff]
    %v70 = vld [vmem:[%s2 + $0x180] sm:$0xff]
    %v71 = vld [vmem:[%s2 + $0x188] sm:$0xff]
    %v72 = vld [vmem:[%s2 + $0x190] sm:$0xff]
    %v73 = vld [vmem:[%s2 + $0x198] sm:$0xff]
    %v74 = vld [vmem:[%s2 + $0x1a0] sm:$0xff]
    %v75 = vld [vmem:[%s2 + $0x1a8] sm:$0xff]
    %v76 = vld [vmem:[%s2 + $0x1b0] sm:$0xff]
    %v77 = vld [vmem:[%s2 + $0x1b8] sm:$0xff]
    %v78 = vld [vmem:[%s2 + $0x1c0] sm:$0xff]
    %v79 = vld [vmem:[%s2 + $0x1c8] sm:$0xff]
    %v80 = vld [vmem:[%s2 + $0x1d0] sm:$0xff]
    %v81 = vld [vmem:[%s2 + $0x1d8] sm:$0xff]
    %v82 = vld [vmem:[%s2 + $0x1e0] sm:$0xff]
    %v83 = vld [vmem:[%s2 + $0x1e8] sm:$0xff]
    %v84 = vld [vmem:[%s2 + $0x1f0] sm:$0xff]
    %v85 = vld [vmem:[%s2 + $0x1f8] sm:$0xff]
    %v86 = vld [vmem:[%s2 + $0x200] sm:$0xff]
    %v87 = vld [vmem:[%s2 + $0x208] sm:$0xff]
    %v88 = vld [vmem:[%s2 + $0x210] sm:$0xff]
    %v89 = vld [vmem:[%s2 + $0x218] sm:$0xff]
    %v90 = vld [vmem:[%s2 + $0x220] sm:$0xff]
    %v91 = vld [vmem:[%s2 + $0x228] sm:$0xff]
    %v92 = vld [vmem:[%s2 + $0x230] sm:$0xff]
    %v93 = vld [vmem:[%s2 + $0x238] sm:$0xff]
    %v94 = vld [vmem:[%s2 + $0x240] sm:$0xff]
    %v95 = vld [vmem:[%s2 + $0x248] sm:$0xff]
    %v96 = vld [vmem:[%s2 + $0x250] sm:$0xff]
    %v97 = vld [vmem:[%s2 + $0x258] sm:$0xff]
    %v98 = vld [vmem:[%s2 + $0x260] sm:$0xff]
    %v99 = vld [vmem:[%s2 + $0x268] sm:$0xff]
    %v100 = vld [vmem:[%s2 + $0x270] sm:$0xff]
    %v101 = vld [vmem:[%s2 + $0x278] sm:$0xff]
    %v102 = vld [vmem:[%s2 + $0x280] sm:$0xff]
    %v103 = vld [vmem:[%s2 + $0x288] sm:$0xff]
    %v104 = vld [vmem:[%s2 + $0x290] sm:$0xff]
    %v105 = vld [vmem:[%s2 + $0x298] sm:$0xff]
    %v106 = vld [vmem:[%s2 + $0x2a0] sm:$0xff]
    %v107 = vld [vmem:[%s2 + $0x2a8] sm:$0xff]
    %v108 = vld [vmem:[%s2 + $0x2b0] sm:$0xff]
    %v109 = vld [vmem:[%s2 + $0x2b8] sm:$0xff]
    %v110 = vld [vmem:[%s2 + $0x2c0] sm:$0xff]
    %v111 = vld [vmem:[%s2 + $0x2c8] sm:$0xff]
    %v112 = vld [vmem:[%s2 + $0x2d0] sm:$0xff]
    %v113 = vld [vmem:[%s2 + $0x2d8] sm:$0xff]
    %v114 = vld [vmem:[%s2 + $0x2e0] sm:$0xff]
    %v115 = vld [vmem:[%s2 + $0x2e8] sm:$0xff]
    %v116 = vld [vmem:[%s2 + $0x2f0] sm:$0xff]
    %v117 = vld [vmem:[%s2 + $0x2f8] sm:$0xff]
    %v118 = vld [vmem:[%s2 + $0x300] sm:$0xff]
    %v119 = vld [vmem:[%s2 + $0x308] sm:$0xff]
    %v120 = vld [vmem:[%s2 + $0x310] sm:$0xff]
    %v121 = vld [vmem:[%s2 + $0x318] sm:$0xff]
    %v122 = vld [vmem:[%s2 + $0x320] sm:$0xff]
    %v123 = vld [vmem:[%s2 + $0x328] sm:$0xff]
    %v124 = vld [vmem:[%s2 + $0x330] sm:$0xff]
    %v125 = vld [vmem:[%s2 + $0x338] sm:$0xff]
    %v126 = vld [vmem:[%s2 + $0x340] sm:$0xff]
    %v127 = vld [vmem:[%s2 + $0x348] sm:$0xff]
    %v128 = vld [vmem:[%s2 + $0x350] sm:$0xff]
    %v129 = vld [vmem:[%s2 + $0x358] sm:$0xff]
    %v130 = vld [vmem:[%s2 + $0x360] sm:$0xff]
    %v131 = vld [vmem:[%s2 + $0x368] sm:$0xff]
    %v132 = vld [vmem:[%s2 + $0x370] sm:$0xff]
    %v133 = vld [vmem:[%s2 + $0x378] sm:$0xff]
    %v134 = vld [vmem:[%s2 + $0x380] sm:$0xff]
    %v135 = vld [vmem:[%s2 + $0x388] sm:$0xff]
    %v136 = vld [vmem:[%s2 + $0x390] sm:$0xff]
    %v137 = vld [vmem:[%s2 + $0x398] sm:$0xff]
    %v138 = vld [vmem:[%s2 + $0x3a0] sm:$0xff]
    %v139 = vld [vmem:[%s2 + $0x3a8] sm:$0xff]
    %v140 = vld [vmem:[%s2 + $0x3b0] sm:$0xff]
    %v141 = vld [vmem:[%s2 + $0x3b8] sm:$0xff]
    %v142 = vld [vmem:[%s2 + $0x3c0] sm:$0xff]
    %v143 = vld [vmem:[%s2 + $0x3c8] sm:$0xff]
    %v144 = vld [vmem:[%s2 + $0x3d0] sm:$0xff]
    %v145 = vld [vmem:[%s2 + $0x3d8] sm:$0xff]
    %v146 = vld [vmem:[%s2 + $0x3e0] sm:$0xff]
    %v147 = vld [vmem:[%s2 + $0x3e8] sm:$0xff]
    %v148 = vld [vmem:[%s2 + $0x3f0] sm:$0xff]
    %v149 = vld [vmem:[%s2 + $0x3f8] sm:$0xff]
    %v150 = vld [vmem:[%s3] sm:$0xff]
    %v151 = vld [vmem:[%s3 + $0x8] sm:$0xff]
    %v152 = vld [vmem:[%s3 + $0x10] sm:$0xff]
    %v153 = vld [vmem:[%s3 + $0x18] sm:$0xff]
    %v154 = vld [vmem:[%s3 + $0x20] sm:$0xff]
    %v155 = vld [vmem:[%s3 + $0x28] sm:$0xff]
    %v156 = vld [vmem:[%s3 + $0x30] sm:$0xff]
    %v157 = vld [vmem:[%s3 + $0x38] sm:$0xff]
    %v158 = vld [vmem:[%s3 + $0x40] sm:$0xff]
    %v159 = vld [vmem:[%s3 + $0x48] sm:$0xff]
    %v160 = vld [vmem:[%s3 + $0x50] sm:$0xff]
    %v161 = vld [vmem:[%s3 + $0x58] sm:$0xff]
    %v162 = vld [vmem:[%s3 + $0x60] sm:$0xff]
    %v163 = vld [vmem:[%s3 + $0x68] sm:$0xff]
    %v164 = vld [vmem:[%s3 + $0x70] sm:$0xff]
    %v165 = vld [vmem:[%s3 + $0x78] sm:$0xff]
    %v166 = vld [vmem:[%s3 + $0x80] sm:$0xff]
    %v167 = vld [vmem:[%s3 + $0x88] sm:$0xff]
    %v168 = vld [vmem:[%s3 + $0x90] sm:$0xff]
    %v169 = vld [vmem:[%s3 + $0x98] sm:$0xff]
    %v170 = vld [vmem:[%s3 + $0xa0] sm:$0xff]
    %v171 = vld [vmem:[%s3 + $0xa8] sm:$0xff]
    %v172 = vld [vmem:[%s3 + $0xb0] sm:$0xff]
    %v173 = vld [vmem:[%s3 + $0xb8] sm:$0xff]
    %v174 = vld [vmem:[%s3 + $0xc0] sm:$0xff]
    %v175 = vld [vmem:[%s3 + $0xc8] sm:$0xff]
    %v176 = vld [vmem:[%s3 + $0xd0] sm:$0xff]
    %v177 = vld [vmem:[%s3 + $0xd8] sm:$0xff]
    %v178 = vld [vmem:[%s3 + $0xe0] sm:$0xff]
    %v179 = vld [vmem:[%s3 + $0xe8] sm:$0xff]
    %v180 = vld [vmem:[%s3 + $0xf0] sm:$0xff]
    %v181 = vld [vmem:[%s3 + $0xf8] sm:$0xff]
    %v182 = vld [vmem:[%s3 + $0x100] sm:$0xff]
    %v183 = vld [vmem:[%s3 + $0x108] sm:$0xff]
    %v184 = vld [vmem:[%s3 + $0x110] sm:$0xff]
    %v185 = vld [vmem:[%s3 + $0x118] sm:$0xff]
    %v186 = vld [vmem:[%s3 + $0x120] sm:$0xff]
    %v187 = vld [vmem:[%s3 + $0x128] sm:$0xff]
    %v188 = vld [vmem:[%s3 + $0x130] sm:$0xff]
    %v189 = vld [vmem:[%s3 + $0x138] sm:$0xff]
    %v190 = vld [vmem:[%s3 + $0x140] sm:$0xff]
    %v191 = vld [vmem:[%s3 + $0x148] sm:$0xff]
    %v192 = vld [vmem:[%s3 + $0x150] sm:$0xff]
    %v193 = vld [vmem:[%s3 + $0x158] sm:$0xff]
    %v194 = vld [vmem:[%s3 + $0x160] sm:$0xff]
    %v195 = vld [vmem:[%s3 + $0x168] sm:$0xff]
    %v196 = vld [vmem:[%s3 + $0x170] sm:$0xff]
    %v197 = vld [vmem:[%s3 + $0x178] sm:$0xff]
    %v198 = vld [vmem:[%s3 + $0x180] sm:$0xff]
    %v199 = vld [vmem:[%s3 + $0x188] sm:$0xff]
    %v200 = vld [vmem:[%s3 + $0x190] sm:$0xff]
    %v201 = vld [vmem:[%s3 + $0x198] sm:$0xff]
    %v202 = vld [vmem:[%s3 + $0x1a0] sm:$0xff]
    %v203 = vld [vmem:[%s3 + $0x1a8] sm:$0xff]
    %v204 = vld [vmem:[%s3 + $0x1b0] sm:$0xff]
    %v205 = vld [vmem:[%s3 + $0x1b8] sm:$0xff]
    %v206 = vld [vmem:[%s3 + $0x1c0] sm:$0xff]
    %v207 = vld [vmem:[%s3 + $0x1c8] sm:$0xff]
    %v208 = vld [vmem:[%s3 + $0x1d0] sm:$0xff]
    %v209 = vld [vmem:[%s3 + $0x1d8] sm:$0xff]
    %v210 = vld [vmem:[%s3 + $0x1e0] sm:$0xff]
    %v211 = vld [vmem:[%s3 + $0x1e8] sm:$0xff]
    %v212 = vld [vmem:[%s3 + $0x1f0] sm:$0xff]
    %v213 = vld [vmem:[%s3 + $0x1f8] sm:$0xff]
    %v214 = vld [vmem:[%s3 + $0x200] sm:$0xff]
    %v215 = vld [vmem:[%s3 + $0x208] sm:$0xff]
    %v216 = vld [vmem:[%s3 + $0x210] sm:$0xff]
    %v217 = vld [vmem:[%s3 + $0x218] sm:$0xff]
    %v218 = vld [vmem:[%s3 + $0x220] sm:$0xff]
    %v219 = vld [vmem:[%s3 + $0x228] sm:$0xff]
    %v220 = vld [vmem:[%s3 + $0x230] sm:$0xff]
    %v221 = vld [vmem:[%s3 + $0x238] sm:$0xff]
    %v222 = vld [vmem:[%s3 + $0x240] sm:$0xff]
    %v223 = vld [vmem:[%s3 + $0x248] sm:$0xff]
    %v224 = vld [vmem:[%s3 + $0x250] sm:$0xff]
    %v225 = vld [vmem:[%s3 + $0x258] sm:$0xff]
    %v226 = vld [vmem:[%s3 + $0x260] sm:$0xff]
    %v227 = vld [vmem:[%s3 + $0x268] sm:$0xff]
    %v228 = vld [vmem:[%s3 + $0x270] sm:$0xff]
    %v229 = vld [vmem:[%s3 + $0x278] sm:$0xff]
    %v230 = vld [vmem:[%s3 + $0x280] sm:$0xff]
    %v231 = vld [vmem:[%s3 + $0x288] sm:$0xff]
    %v232 = vld [vmem:[%s3 + $0x290] sm:$0xff]
    %v233 = vld [vmem:[%s3 + $0x298] sm:$0xff]
    %v234 = vld [vmem:[%s3 + $0x2a0] sm:$0xff]
    %v235 = vld [vmem:[%s3 + $0x2a8] sm:$0xff]
    %v236 = vld [vmem:[%s3 + $0x2b0] sm:$0xff]
    %v237 = vld [vmem:[%s3 + $0x2b8] sm:$0xff]
    %v238 = vld [vmem:[%s3 + $0x2c0] sm:$0xff]
    %v239 = vld [vmem:[%s3 + $0x2c8] sm:$0xff]
    %v240 = vld [vmem:[%s3 + $0x2d0] sm:$0xff]
    %v241 = vld [vmem:[%s3 + $0x2d8] sm:$0xff]
    %v242 = vld [vmem:[%s3 + $0x2e0] sm:$0xff]
    %v243 = vld [vmem:[%s3 + $0x2e8] sm:$0xff]
    %v244 = vld [vmem:[%s3 + $0x2f0] sm:$0xff]
    %v245 = vld [vmem:[%s3 + $0x2f8] sm:$0xff]
    %v246 = vld [vmem:[%s3 + $0x300] sm:$0xff]
    %v247 = vld [vmem:[%s3 + $0x308] sm:$0xff]
    %v248 = vld [vmem:[%s3 + $0x310] sm:$0xff]
    %v249 = vld [vmem:[%s3 + $0x318] sm:$0xff]
    %v250 = vld [vmem:[%s3 + $0x320] sm:$0xff]
    %v251 = vld [vmem:[%s3 + $0x328] sm:$0xff]
    %v252 = vld [vmem:[%s3 + $0x330] sm:$0xff]
    %v253 = vld [vmem:[%s3 + $0x338] sm:$0xff]
    %v254 = vld [vmem:[%s3 + $0x340] sm:$0xff]
    %v255 = vld [vmem:[%s3 + $0x348] sm:$0xff]
    %v256 = vld [vmem:[%s3 + $0x350] sm:$0xff]
    %v257 = vld [vmem:[%s3 + $0x358] sm:$0xff]
    %v258 = vld [vmem:[%s3 + $0x360] sm:$0xff]
    %v259 = vld [vmem:[%s3 + $0x368] sm:$0xff]
    %v260 = vld [vmem:[%s3 + $0x370] sm:$0xff]
    %v261 = vld [vmem:[%s3 + $0x378] sm:$0xff]
    %v262 = vld [vmem:[%s3 + $0x380] sm:$0xff]
    %v263 = vld [vmem:[%s3 + $0x388] sm:$0xff]
    %v264 = vld [vmem:[%s3 + $0x390] sm:$0xff]
    %v265 = vld [vmem:[%s3 + $0x398] sm:$0xff]
    %v266 = vld [vmem:[%s3 + $0x3a0] sm:$0xff]
    %v267 = vld [vmem:[%s3 + $0x3a8] sm:$0xff]
    %v268 = vld [vmem:[%s3 + $0x3b0] sm:$0xff]
    %v269 = vld [vmem:[%s3 + $0x3b8] sm:$0xff]
    %v270 = vld [vmem:[%s3 + $0x3c0] sm:$0xff]
    %v271 = vld [vmem:[%s3 + $0x3c8] sm:$0xff]
    %v272 = vld [vmem:[%s3 + $0x3d0] sm:$0xff]
    %v273 = vld [vmem:[%s3 + $0x3d8] sm:$0xff]
    %v274 = vld [vmem:[%s3 + $0x3e0] sm:$0xff]
    %v275 = vld [vmem:[%s3 + $0x3e8] sm:$0xff]
    %v276 = vld [vmem:[%s3 + $0x3f0] sm:$0xff]
    %v277 = vld [vmem:[%s3 + $0x3f8] sm:$0xff]
    %v278 = vsub.f32 %v22, %v150
    %v279 = vsub.f32 %v23, %v151
    %v280 = vsub.f32 %v24, %v152
    %v281 = vsub.f32 %v25, %v153
    %v282 = vsub.f32 %v26, %v154
    %v283 = vsub.f32 %v27, %v155
    %v284 = vsub.f32 %v28, %v156
    %v285 = vsub.f32 %v29, %v157
    %v286 = vsub.f32 %v30, %v158
    %v287 = vsub.f32 %v31, %v159
    %v288 = vsub.f32 %v32, %v160
    %v289 = vsub.f32 %v33, %v161
    %v290 = vsub.f32 %v34, %v162
    %v291 = vsub.f32 %v35, %v163
    %v292 = vsub.f32 %v36, %v164
    %v293 = vsub.f32 %v37, %v165
    %v294 = vsub.f32 %v38, %v166
    %v295 = vsub.f32 %v39, %v167
    %v296 = vsub.f32 %v40, %v168
    %v297 = vsub.f32 %v41, %v169
    %v298 = vsub.f32 %v42, %v170
    %v299 = vsub.f32 %v43, %v171
    %v300 = vsub.f32 %v44, %v172
    %v301 = vsub.f32 %v45, %v173
    %v302 = vsub.f32 %v46, %v174
    %v303 = vsub.f32 %v47, %v175
    %v304 = vsub.f32 %v48, %v176
    %v305 = vsub.f32 %v49, %v177
    %v306 = vsub.f32 %v50, %v178
    %v307 = vsub.f32 %v51, %v179
    %v308 = vsub.f32 %v52, %v180
    %v309 = vsub.f32 %v53, %v181
    %v310 = vsub.f32 %v54, %v182
    %v311 = vsub.f32 %v55, %v183
    %v312 = vsub.f32 %v56, %v184
    %v313 = vsub.f32 %v57, %v185
    %v314 = vsub.f32 %v58, %v186
    %v315 = vsub.f32 %v59, %v187
    %v316 = vsub.f32 %v60, %v188
    %v317 = vsub.f32 %v61, %v189
    %v318 = vsub.f32 %v62, %v190
    %v319 = vsub.f32 %v63, %v191
    %v320 = vsub.f32 %v64, %v192
    %v321 = vsub.f32 %v65, %v193
    %v322 = vsub.f32 %v66, %v194
    %v323 = vsub.f32 %v67, %v195
    %v324 = vsub.f32 %v68, %v196
    %v325 = vsub.f32 %v69, %v197
    %v326 = vsub.f32 %v70, %v198
    %v327 = vsub.f32 %v71, %v199
    %v328 = vsub.f32 %v72, %v200
    %v329 = vsub.f32 %v73, %v201
    %v330 = vsub.f32 %v74, %v202
    %v331 = vsub.f32 %v75, %v203
    %v332 = vsub.f32 %v76, %v204
    %v333 = vsub.f32 %v77, %v205
    %v334 = vsub.f32 %v78, %v206
    %v335 = vsub.f32 %v79, %v207
    %v336 = vsub.f32 %v80, %v208
    %v337 = vsub.f32 %v81, %v209
    %v338 = vsub.f32 %v82, %v210
    %v339 = vsub.f32 %v83, %v211
    %v340 = vsub.f32 %v84, %v212
    %v341 = vsub.f32 %v85, %v213
    %v342 = vsub.f32 %v86, %v214
    %v343 = vsub.f32 %v87, %v215
    %v344 = vsub.f32 %v88, %v216
    %v345 = vsub.f32 %v89, %v217
    %v346 = vsub.f32 %v90, %v218
    %v347 = vsub.f32 %v91, %v219
    %v348 = vsub.f32 %v92, %v220
    %v349 = vsub.f32 %v93, %v221
    %v350 = vsub.f32 %v94, %v222
    %v351 = vsub.f32 %v95, %v223
    %v352 = vsub.f32 %v96, %v224
    %v353 = vsub.f32 %v97, %v225
    %v354 = vsub.f32 %v98, %v226
    %v355 = vsub.f32 %v99, %v227
    %v356 = vsub.f32 %v100, %v228
    %v357 = vsub.f32 %v101, %v229
    %v358 = vsub.f32 %v102, %v230
    %v359 = vsub.f32 %v103, %v231
    %v360 = vsub.f32 %v104, %v232
    %v361 = vsub.f32 %v105, %v233
    %v362 = vsub.f32 %v106, %v234
    %v363 = vsub.f32 %v107, %v235
    %v364 = vsub.f32 %v108, %v236
    %v365 = vsub.f32 %v109, %v237
    %v366 = vsub.f32 %v110, %v238
    %v367 = vsub.f32 %v111, %v239
    %v368 = vsub.f32 %v112, %v240
    %v369 = vsub.f32 %v113, %v241
    %v370 = vsub.f32 %v114, %v242
    %v371 = vsub.f32 %v115, %v243
    %v372 = vsub.f32 %v116, %v244
    %v373 = vsub.f32 %v117, %v245
    %v374 = vsub.f32 %v118, %v246
    %v375 = vsub.f32 %v119, %v247
    %v376 = vsub.f32 %v120, %v248
    %v377 = vsub.f32 %v121, %v249
    %v378 = vsub.f32 %v122, %v250
    %v379 = vsub.f32 %v123, %v251
    %v380 = vsub.f32 %v124, %v252
    %v381 = vsub.f32 %v125, %v253
    %v382 = vsub.f32 %v126, %v254
    %v383 = vsub.f32 %v127, %v255
    %v384 = vsub.f32 %v128, %v256
    %v385 = vsub.f32 %v129, %v257
    %v386 = vsub.f32 %v130, %v258
    %v387 = vsub.f32 %v131, %v259
    %v388 = vsub.f32 %v132, %v260
    %v389 = vsub.f32 %v133, %v261
    %v390 = vsub.f32 %v134, %v262
    %v391 = vsub.f32 %v135, %v263
    %v392 = vsub.f32 %v136, %v264
    %v393 = vsub.f32 %v137, %v265
    %v394 = vsub.f32 %v138, %v266
    %v395 = vsub.f32 %v139, %v267
    %v396 = vsub.f32 %v140, %v268
    %v397 = vsub.f32 %v141, %v269
    %v398 = vsub.f32 %v142, %v270
    %v399 = vsub.f32 %v143, %v271
    %v400 = vsub.f32 %v144, %v272
    %v401 = vsub.f32 %v145, %v273
    %v402 = vsub.f32 %v146, %v274
    %v403 = vsub.f32 %v147, %v275
    %v404 = vsub.f32 %v148, %v276
    %v405 = vsub.f32 %v149, %v277
    %v406 = vmul.f32 %v278, %v278
    %v407 = vmul.f32 %v279, %v279
    %v408 = vmul.f32 %v280, %v280
    %v409 = vmul.f32 %v281, %v281
    %v410 = vmul.f32 %v282, %v282
    %v411 = vmul.f32 %v283, %v283
    %v412 = vmul.f32 %v284, %v284
    %v413 = vmul.f32 %v285, %v285
    %v414 = vmul.f32 %v286, %v286
    %v415 = vmul.f32 %v287, %v287
    %v416 = vmul.f32 %v288, %v288
    %v417 = vmul.f32 %v289, %v289
    %v418 = vmul.f32 %v290, %v290
    %v419 = vmul.f32 %v291, %v291
    %v420 = vmul.f32 %v292, %v292
    %v421 = vmul.f32 %v293, %v293
    %v422 = vmul.f32 %v294, %v294
    %v423 = vmul.f32 %v295, %v295
    %v424 = vmul.f32 %v296, %v296
    %v425 = vmul.f32 %v297, %v297
    %v426 = vmul.f32 %v298, %v298
    %v427 = vmul.f32 %v299, %v299
    %v428 = vmul.f32 %v300, %v300
    %v429 = vmul.f32 %v301, %v301
    %v430 = vmul.f32 %v302, %v302
    %v431 = vmul.f32 %v303, %v303
    %v432 = vmul.f32 %v304, %v304
    %v433 = vmul.f32 %v305, %v305
    %v434 = vmul.f32 %v306, %v306
    %v435 = vmul.f32 %v307, %v307
    %v436 = vmul.f32 %v308, %v308
    %v437 = vmul.f32 %v309, %v309
    %v438 = vmul.f32 %v310, %v310
    %v439 = vmul.f32 %v311, %v311
    %v440 = vmul.f32 %v312, %v312
    %v441 = vmul.f32 %v313, %v313
    %v442 = vmul.f32 %v314, %v314
    %v443 = vmul.f32 %v315, %v315
    %v444 = vmul.f32 %v316, %v316
    %v445 = vmul.f32 %v317, %v317
    %v446 = vmul.f32 %v318, %v318
    %v447 = vmul.f32 %v319, %v319
    %v448 = vmul.f32 %v320, %v320
    %v449 = vmul.f32 %v321, %v321
    %v450 = vmul.f32 %v322, %v322
    %v451 = vmul.f32 %v323, %v323
    %v452 = vmul.f32 %v324, %v324
    %v453 = vmul.f32 %v325, %v325
    %v454 = vmul.f32 %v326, %v326
    %v455 = vmul.f32 %v327, %v327
    %v456 = vmul.f32 %v328, %v328
    %v457 = vmul.f32 %v329, %v329
    %v458 = vmul.f32 %v330, %v330
    %v459 = vmul.f32 %v331, %v331
    %v460 = vmul.f32 %v332, %v332
    %v461 = vmul.f32 %v333, %v333
    %v462 = vmul.f32 %v334, %v334
    %v463 = vmul.f32 %v335, %v335
    %v464 = vmul.f32 %v336, %v336
    %v465 = vmul.f32 %v337, %v337
    %v466 = vmul.f32 %v338, %v338
    %v467 = vmul.f32 %v339, %v339
    %v468 = vmul.f32 %v340, %v340
    %v469 = vmul.f32 %v341, %v341
    %v470 = vmul.f32 %v342, %v342
    %v471 = vmul.f32 %v343, %v343
    %v472 = vmul.f32 %v344, %v344
    %v473 = vmul.f32 %v345, %v345
    %v474 = vmul.f32 %v346, %v346
    %v475 = vmul.f32 %v347, %v347
    %v476 = vmul.f32 %v348, %v348
    %v477 = vmul.f32 %v349, %v349
    %v478 = vmul.f32 %v350, %v350
    %v479 = vmul.f32 %v351, %v351
    %v480 = vmul.f32 %v352, %v352
    %v481 = vmul.f32 %v353, %v353
    %v482 = vmul.f32 %v354, %v354
    %v483 = vmul.f32 %v355, %v355
    %v484 = vmul.f32 %v356, %v356
    %v485 = vmul.f32 %v357, %v357
    %v486 = vmul.f32 %v358, %v358
    %v487 = vmul.f32 %v359, %v359
    %v488 = vmul.f32 %v360, %v360
    %v489 = vmul.f32 %v361, %v361
    %v490 = vmul.f32 %v362, %v362
    %v491 = vmul.f32 %v363, %v363
    %v492 = vmul.f32 %v364, %v364
    %v493 = vmul.f32 %v365, %v365
    %v494 = vmul.f32 %v366, %v366
    %v495 = vmul.f32 %v367, %v367
    %v496 = vmul.f32 %v368, %v368
    %v497 = vmul.f32 %v369, %v369
    %v498 = vmul.f32 %v370, %v370
    %v499 = vmul.f32 %v371, %v371
    %v500 = vmul.f32 %v372, %v372
    %v501 = vmul.f32 %v373, %v373
    %v502 = vmul.f32 %v374, %v374
    %v503 = vmul.f32 %v375, %v375
    %v504 = vmul.f32 %v376, %v376
    %v505 = vmul.f32 %v377, %v377
    %v506 = vmul.f32 %v378, %v378
    %v507 = vmul.f32 %v379, %v379
    %v508 = vmul.f32 %v380, %v380
    %v509 = vmul.f32 %v381, %v381
    %v510 = vmul.f32 %v382, %v382
    %v511 = vmul.f32 %v383, %v383
    %v512 = vmul.f32 %v384, %v384
    %v513 = vmul.f32 %v385, %v385
    %v514 = vmul.f32 %v386, %v386
    %v515 = vmul.f32 %v387, %v387
    %v516 = vmul.f32 %v388, %v388
    %v517 = vmul.f32 %v389, %v389
    %v518 = vmul.f32 %v390, %v390
    %v519 = vmul.f32 %v391, %v391
    %v520 = vmul.f32 %v392, %v392
    %v521 = vmul.f32 %v393, %v393
    %v522 = vmul.f32 %v394, %v394
    %v523 = vmul.f32 %v395, %v395
    %v524 = vmul.f32 %v396, %v396
    %v525 = vmul.f32 %v397, %v397
    %v526 = vmul.f32 %v398, %v398
    %v527 = vmul.f32 %v399, %v399
    %v528 = vmul.f32 %v400, %v400
    %v529 = vmul.f32 %v401, %v401
    %v530 = vmul.f32 %v402, %v402
    %v531 = vmul.f32 %v403, %v403
    %v532 = vmul.f32 %v404, %v404
    %v533 = vmul.f32 %v405, %v405
    %vm534 = vcmask 261120
    %v535 = vsel %vm534, %v406, 0.0
    %536 = vadd.xlane.f32.xlu0 %v535
    %v537 = vpop.xlane.xlu0 %536
    %v538 = vsel %vm534, %v407, 0.0
    %539 = vadd.xlane.f32.xlu0 %v538
    %v540 = vpop.xlane.xlu0 %539
    %v541 = vsel %vm534, %v408, 0.0
    %542 = vadd.xlane.f32.xlu0 %v541
    %v543 = vpop.xlane.xlu0 %542
    %v544 = vsel %vm534, %v409, 0.0
    %545 = vadd.xlane.f32.xlu0 %v544
    %v546 = vpop.xlane.xlu0 %545
    %v547 = vsel %vm534, %v410, 0.0
    %548 = vadd.xlane.f32.xlu0 %v547
    %v549 = vpop.xlane.xlu0 %548
    %v550 = vsel %vm534, %v411, 0.0
    %551 = vadd.xlane.f32.xlu0 %v550
    %v552 = vpop.xlane.xlu0 %551
    %v553 = vsel %vm534, %v412, 0.0
    %554 = vadd.xlane.f32.xlu0 %v553
    %v555 = vpop.xlane.xlu0 %554
    %v556 = vsel %vm534, %v413, 0.0
    %557 = vadd.xlane.f32.xlu0 %v556
    %v558 = vpop.xlane.xlu0 %557
    %v559 = vsel %vm534, %v414, 0.0
    %560 = vadd.xlane.f32.xlu0 %v559
    %v561 = vpop.xlane.xlu0 %560
    %v562 = vsel %vm534, %v415, 0.0
    %563 = vadd.xlane.f32.xlu0 %v562
    %v564 = vpop.xlane.xlu0 %563
    %v565 = vsel %vm534, %v416, 0.0
    %566 = vadd.xlane.f32.xlu0 %v565
    %v567 = vpop.xlane.xlu0 %566
    %v568 = vsel %vm534, %v417, 0.0
    %569 = vadd.xlane.f32.xlu0 %v568
    %v570 = vpop.xlane.xlu0 %569
    %v571 = vsel %vm534, %v418, 0.0
    %572 = vadd.xlane.f32.xlu0 %v571
    %v573 = vpop.xlane.xlu0 %572
    %v574 = vsel %vm534, %v419, 0.0
    %575 = vadd.xlane.f32.xlu0 %v574
    %v576 = vpop.xlane.xlu0 %575
    %v577 = vsel %vm534, %v420, 0.0
    %578 = vadd.xlane.f32.xlu0 %v577
    %v579 = vpop.xlane.xlu0 %578
    %v580 = vsel %vm534, %v421, 0.0
    %581 = vadd.xlane.f32.xlu0 %v580
    %v582 = vpop.xlane.xlu0 %581
    %v583 = vsel %vm534, %v422, 0.0
    %584 = vadd.xlane.f32.xlu0 %v583
    %v585 = vpop.xlane.xlu0 %584
    %v586 = vsel %vm534, %v423, 0.0
    %587 = vadd.xlane.f32.xlu0 %v586
    %v588 = vpop.xlane.xlu0 %587
    %v589 = vsel %vm534, %v424, 0.0
    %590 = vadd.xlane.f32.xlu0 %v589
    %v591 = vpop.xlane.xlu0 %590
    %v592 = vsel %vm534, %v425, 0.0
    %593 = vadd.xlane.f32.xlu0 %v592
    %v594 = vpop.xlane.xlu0 %593
    %v595 = vsel %vm534, %v426, 0.0
    %596 = vadd.xlane.f32.xlu0 %v595
    %v597 = vpop.xlane.xlu0 %596
    %v598 = vsel %vm534, %v427, 0.0
    %599 = vadd.xlane.f32.xlu0 %v598
    %v600 = vpop.xlane.xlu0 %599
    %v601 = vsel %vm534, %v428, 0.0
    %602 = vadd.xlane.f32.xlu0 %v601
    %v603 = vpop.xlane.xlu0 %602
    %v604 = vsel %vm534, %v429, 0.0
    %605 = vadd.xlane.f32.xlu0 %v604
    %v606 = vpop.xlane.xlu0 %605
    %v607 = vsel %vm534, %v430, 0.0
    %608 = vadd.xlane.f32.xlu0 %v607
    %v609 = vpop.xlane.xlu0 %608
    %v610 = vsel %vm534, %v431, 0.0
    %611 = vadd.xlane.f32.xlu0 %v610
    %v612 = vpop.xlane.xlu0 %611
    %v613 = vsel %vm534, %v432, 0.0
    %614 = vadd.xlane.f32.xlu0 %v613
    %v615 = vpop.xlane.xlu0 %614
    %v616 = vsel %vm534, %v433, 0.0
    %617 = vadd.xlane.f32.xlu0 %v616
    %v618 = vpop.xlane.xlu0 %617
    %v619 = vsel %vm534, %v434, 0.0
    %620 = vadd.xlane.f32.xlu0 %v619
    %v621 = vpop.xlane.xlu0 %620
    %v622 = vsel %vm534, %v435, 0.0
    %623 = vadd.xlane.f32.xlu0 %v622
    %v624 = vpop.xlane.xlu0 %623
    %v625 = vsel %vm534, %v436, 0.0
    %626 = vadd.xlane.f32.xlu0 %v625
    %v627 = vpop.xlane.xlu0 %626
    %v628 = vsel %vm534, %v437, 0.0
    %629 = vadd.xlane.f32.xlu0 %v628
    %v630 = vpop.xlane.xlu0 %629
    %v631 = vsel %vm534, %v438, 0.0
    %632 = vadd.xlane.f32.xlu0 %v631
    %v633 = vpop.xlane.xlu0 %632
    %v634 = vsel %vm534, %v439, 0.0
    %635 = vadd.xlane.f32.xlu0 %v634
    %v636 = vpop.xlane.xlu0 %635
    %v637 = vsel %vm534, %v440, 0.0
    %638 = vadd.xlane.f32.xlu0 %v637
    %v639 = vpop.xlane.xlu0 %638
    %v640 = vsel %vm534, %v441, 0.0
    %641 = vadd.xlane.f32.xlu0 %v640
    %v642 = vpop.xlane.xlu0 %641
    %v643 = vsel %vm534, %v442, 0.0
    %644 = vadd.xlane.f32.xlu0 %v643
    %v645 = vpop.xlane.xlu0 %644
    %v646 = vsel %vm534, %v443, 0.0
    %647 = vadd.xlane.f32.xlu0 %v646
    %v648 = vpop.xlane.xlu0 %647
    %v649 = vsel %vm534, %v444, 0.0
    %650 = vadd.xlane.f32.xlu0 %v649
    %v651 = vpop.xlane.xlu0 %650
    %v652 = vsel %vm534, %v445, 0.0
    %653 = vadd.xlane.f32.xlu0 %v652
    %v654 = vpop.xlane.xlu0 %653
    %v655 = vsel %vm534, %v446, 0.0
    %656 = vadd.xlane.f32.xlu0 %v655
    %v657 = vpop.xlane.xlu0 %656
    %v658 = vsel %vm534, %v447, 0.0
    %659 = vadd.xlane.f32.xlu0 %v658
    %v660 = vpop.xlane.xlu0 %659
    %v661 = vsel %vm534, %v448, 0.0
    %662 = vadd.xlane.f32.xlu0 %v661
    %v663 = vpop.xlane.xlu0 %662
    %v664 = vsel %vm534, %v449, 0.0
    %665 = vadd.xlane.f32.xlu0 %v664
    %v666 = vpop.xlane.xlu0 %665
    %v667 = vsel %vm534, %v450, 0.0
    %668 = vadd.xlane.f32.xlu0 %v667
    %v669 = vpop.xlane.xlu0 %668
    %v670 = vsel %vm534, %v451, 0.0
    %671 = vadd.xlane.f32.xlu0 %v670
    %v672 = vpop.xlane.xlu0 %671
    %v673 = vsel %vm534, %v452, 0.0
    %674 = vadd.xlane.f32.xlu0 %v673
    %v675 = vpop.xlane.xlu0 %674
    %v676 = vsel %vm534, %v453, 0.0
    %677 = vadd.xlane.f32.xlu0 %v676
    %v678 = vpop.xlane.xlu0 %677
    %v679 = vsel %vm534, %v454, 0.0
    %680 = vadd.xlane.f32.xlu0 %v679
    %v681 = vpop.xlane.xlu0 %680
    %v682 = vsel %vm534, %v455, 0.0
    %683 = vadd.xlane.f32.xlu0 %v682
    %v684 = vpop.xlane.xlu0 %683
    %v685 = vsel %vm534, %v456, 0.0
    %686 = vadd.xlane.f32.xlu0 %v685
    %v687 = vpop.xlane.xlu0 %686
    %v688 = vsel %vm534, %v457, 0.0
    %689 = vadd.xlane.f32.xlu0 %v688
    %v690 = vpop.xlane.xlu0 %689
    %v691 = vsel %vm534, %v458, 0.0
    %692 = vadd.xlane.f32.xlu0 %v691
    %v693 = vpop.xlane.xlu0 %692
    %v694 = vsel %vm534, %v459, 0.0
    %695 = vadd.xlane.f32.xlu0 %v694
    %v696 = vpop.xlane.xlu0 %695
    %v697 = vsel %vm534, %v460, 0.0
    %698 = vadd.xlane.f32.xlu0 %v697
    %v699 = vpop.xlane.xlu0 %698
    %v700 = vsel %vm534, %v461, 0.0
    %701 = vadd.xlane.f32.xlu0 %v700
    %v702 = vpop.xlane.xlu0 %701
    %v703 = vsel %vm534, %v462, 0.0
    %704 = vadd.xlane.f32.xlu0 %v703
    %v705 = vpop.xlane.xlu0 %704
    %v706 = vsel %vm534, %v463, 0.0
    %707 = vadd.xlane.f32.xlu0 %v706
    %v708 = vpop.xlane.xlu0 %707
    %v709 = vsel %vm534, %v464, 0.0
    %710 = vadd.xlane.f32.xlu0 %v709
    %v711 = vpop.xlane.xlu0 %710
    %v712 = vsel %vm534, %v465, 0.0
    %713 = vadd.xlane.f32.xlu0 %v712
    %v714 = vpop.xlane.xlu0 %713
    %v715 = vsel %vm534, %v466, 0.0
    %716 = vadd.xlane.f32.xlu0 %v715
    %v717 = vpop.xlane.xlu0 %716
    %v718 = vsel %vm534, %v467, 0.0
    %719 = vadd.xlane.f32.xlu0 %v718
    %v720 = vpop.xlane.xlu0 %719
    %v721 = vsel %vm534, %v468, 0.0
    %722 = vadd.xlane.f32.xlu0 %v721
    %v723 = vpop.xlane.xlu0 %722
    %v724 = vsel %vm534, %v469, 0.0
    %725 = vadd.xlane.f32.xlu0 %v724
    %v726 = vpop.xlane.xlu0 %725
    %v727 = vsel %vm534, %v470, 0.0
    %728 = vadd.xlane.f32.xlu0 %v727
    %v729 = vpop.xlane.xlu0 %728
    %v730 = vsel %vm534, %v471, 0.0
    %731 = vadd.xlane.f32.xlu0 %v730
    %v732 = vpop.xlane.xlu0 %731
    %v733 = vsel %vm534, %v472, 0.0
    %734 = vadd.xlane.f32.xlu0 %v733
    %v735 = vpop.xlane.xlu0 %734
    %v736 = vsel %vm534, %v473, 0.0
    %737 = vadd.xlane.f32.xlu0 %v736
    %v738 = vpop.xlane.xlu0 %737
    %v739 = vsel %vm534, %v474, 0.0
    %740 = vadd.xlane.f32.xlu0 %v739
    %v741 = vpop.xlane.xlu0 %740
    %v742 = vsel %vm534, %v475, 0.0
    %743 = vadd.xlane.f32.xlu0 %v742
    %v744 = vpop.xlane.xlu0 %743
    %v745 = vsel %vm534, %v476, 0.0
    %746 = vadd.xlane.f32.xlu0 %v745
    %v747 = vpop.xlane.xlu0 %746
    %v748 = vsel %vm534, %v477, 0.0
    %749 = vadd.xlane.f32.xlu0 %v748
    %v750 = vpop.xlane.xlu0 %749
    %v751 = vsel %vm534, %v478, 0.0
    %752 = vadd.xlane.f32.xlu0 %v751
    %v753 = vpop.xlane.xlu0 %752
    %v754 = vsel %vm534, %v479, 0.0
    %755 = vadd.xlane.f32.xlu0 %v754
    %v756 = vpop.xlane.xlu0 %755
    %v757 = vsel %vm534, %v480, 0.0
    %758 = vadd.xlane.f32.xlu0 %v757
    %v759 = vpop.xlane.xlu0 %758
    %v760 = vsel %vm534, %v481, 0.0
    %761 = vadd.xlane.f32.xlu0 %v760
    %v762 = vpop.xlane.xlu0 %761
    %v763 = vsel %vm534, %v482, 0.0
    %764 = vadd.xlane.f32.xlu0 %v763
    %v765 = vpop.xlane.xlu0 %764
    %v766 = vsel %vm534, %v483, 0.0
    %767 = vadd.xlane.f32.xlu0 %v766
    %v768 = vpop.xlane.xlu0 %767
    %v769 = vsel %vm534, %v484, 0.0
    %770 = vadd.xlane.f32.xlu0 %v769
    %v771 = vpop.xlane.xlu0 %770
    %v772 = vsel %vm534, %v485, 0.0
    %773 = vadd.xlane.f32.xlu0 %v772
    %v774 = vpop.xlane.xlu0 %773
    %v775 = vsel %vm534, %v486, 0.0
    %776 = vadd.xlane.f32.xlu0 %v775
    %v777 = vpop.xlane.xlu0 %776
    %v778 = vsel %vm534, %v487, 0.0
    %779 = vadd.xlane.f32.xlu0 %v778
    %v780 = vpop.xlane.xlu0 %779
    %v781 = vsel %vm534, %v488, 0.0
    %782 = vadd.xlane.f32.xlu0 %v781
    %v783 = vpop.xlane.xlu0 %782
    %v784 = vsel %vm534, %v489, 0.0
    %785 = vadd.xlane.f32.xlu0 %v784
    %v786 = vpop.xlane.xlu0 %785
    %v787 = vsel %vm534, %v490, 0.0
    %788 = vadd.xlane.f32.xlu0 %v787
    %v789 = vpop.xlane.xlu0 %788
    %v790 = vsel %vm534, %v491, 0.0
    %791 = vadd.xlane.f32.xlu0 %v790
    %v792 = vpop.xlane.xlu0 %791
    %v793 = vsel %vm534, %v492, 0.0
    %794 = vadd.xlane.f32.xlu0 %v793
    %v795 = vpop.xlane.xlu0 %794
    %v796 = vsel %vm534, %v493, 0.0
    %797 = vadd.xlane.f32.xlu0 %v796
    %v798 = vpop.xlane.xlu0 %797
    %v799 = vsel %vm534, %v494, 0.0
    %800 = vadd.xlane.f32.xlu0 %v799
    %v801 = vpop.xlane.xlu0 %800
    %v802 = vsel %vm534, %v495, 0.0
    %803 = vadd.xlane.f32.xlu0 %v802
    %v804 = vpop.xlane.xlu0 %803
    %v805 = vsel %vm534, %v496, 0.0
    %806 = vadd.xlane.f32.xlu0 %v805
    %v807 = vpop.xlane.xlu0 %806
    %v808 = vsel %vm534, %v497, 0.0
    %809 = vadd.xlane.f32.xlu0 %v808
    %v810 = vpop.xlane.xlu0 %809
    %v811 = vsel %vm534, %v498, 0.0
    %812 = vadd.xlane.f32.xlu0 %v811
    %v813 = vpop.xlane.xlu0 %812
    %v814 = vsel %vm534, %v499, 0.0
    %815 = vadd.xlane.f32.xlu0 %v814
    %v816 = vpop.xlane.xlu0 %815
    %v817 = vsel %vm534, %v500, 0.0
    %818 = vadd.xlane.f32.xlu0 %v817
    %v819 = vpop.xlane.xlu0 %818
    %v820 = vsel %vm534, %v501, 0.0
    %821 = vadd.xlane.f32.xlu0 %v820
    %v822 = vpop.xlane.xlu0 %821
    %v823 = vsel %vm534, %v502, 0.0
    %824 = vadd.xlane.f32.xlu0 %v823
    %v825 = vpop.xlane.xlu0 %824
    %v826 = vsel %vm534, %v503, 0.0
    %827 = vadd.xlane.f32.xlu0 %v826
    %v828 = vpop.xlane.xlu0 %827
    %v829 = vsel %vm534, %v504, 0.0
    %830 = vadd.xlane.f32.xlu0 %v829
    %v831 = vpop.xlane.xlu0 %830
    %v832 = vsel %vm534, %v505, 0.0
    %833 = vadd.xlane.f32.xlu0 %v832
    %v834 = vpop.xlane.xlu0 %833
    %v835 = vsel %vm534, %v506, 0.0
    %836 = vadd.xlane.f32.xlu0 %v835
    %v837 = vpop.xlane.xlu0 %836
    %v838 = vsel %vm534, %v507, 0.0
    %839 = vadd.xlane.f32.xlu0 %v838
    %v840 = vpop.xlane.xlu0 %839
    %v841 = vsel %vm534, %v508, 0.0
    %842 = vadd.xlane.f32.xlu0 %v841
    %v843 = vpop.xlane.xlu0 %842
    %v844 = vsel %vm534, %v509, 0.0
    %845 = vadd.xlane.f32.xlu0 %v844
    %v846 = vpop.xlane.xlu0 %845
    %v847 = vsel %vm534, %v510, 0.0
    %848 = vadd.xlane.f32.xlu0 %v847
    %v849 = vpop.xlane.xlu0 %848
    %v850 = vsel %vm534, %v511, 0.0
    %851 = vadd.xlane.f32.xlu0 %v850
    %v852 = vpop.xlane.xlu0 %851
    %v853 = vsel %vm534, %v512, 0.0
    %854 = vadd.xlane.f32.xlu0 %v853
    %v855 = vpop.xlane.xlu0 %854
    %v856 = vsel %vm534, %v513, 0.0
    %857 = vadd.xlane.f32.xlu0 %v856
    %v858 = vpop.xlane.xlu0 %857
    %v859 = vsel %vm534, %v514, 0.0
    %860 = vadd.xlane.f32.xlu0 %v859
    %v861 = vpop.xlane.xlu0 %860
    %v862 = vsel %vm534, %v515, 0.0
    %863 = vadd.xlane.f32.xlu0 %v862
    %v864 = vpop.xlane.xlu0 %863
    %v865 = vsel %vm534, %v516, 0.0
    %866 = vadd.xlane.f32.xlu0 %v865
    %v867 = vpop.xlane.xlu0 %866
    %v868 = vsel %vm534, %v517, 0.0
    %869 = vadd.xlane.f32.xlu0 %v868
    %v870 = vpop.xlane.xlu0 %869
    %v871 = vsel %vm534, %v518, 0.0
    %872 = vadd.xlane.f32.xlu0 %v871
    %v873 = vpop.xlane.xlu0 %872
    %v874 = vsel %vm534, %v519, 0.0
    %875 = vadd.xlane.f32.xlu0 %v874
    %v876 = vpop.xlane.xlu0 %875
    %v877 = vsel %vm534, %v520, 0.0
    %878 = vadd.xlane.f32.xlu0 %v877
    %v879 = vpop.xlane.xlu0 %878
    %v880 = vsel %vm534, %v521, 0.0
    %881 = vadd.xlane.f32.xlu0 %v880
    %v882 = vpop.xlane.xlu0 %881
    %v883 = vsel %vm534, %v522, 0.0
    %884 = vadd.xlane.f32.xlu0 %v883
    %v885 = vpop.xlane.xlu0 %884
    %v886 = vsel %vm534, %v523, 0.0
    %887 = vadd.xlane.f32.xlu0 %v886
    %v888 = vpop.xlane.xlu0 %887
    %v889 = vsel %vm534, %v524, 0.0
    %890 = vadd.xlane.f32.xlu0 %v889
    %v891 = vpop.xlane.xlu0 %890
    %v892 = vsel %vm534, %v525, 0.0
    %893 = vadd.xlane.f32.xlu0 %v892
    %v894 = vpop.xlane.xlu0 %893
    %v895 = vsel %vm534, %v526, 0.0
    %896 = vadd.xlane.f32.xlu0 %v895
    %v897 = vpop.xlane.xlu0 %896
    %v898 = vsel %vm534, %v527, 0.0
    %899 = vadd.xlane.f32.xlu0 %v898
    %v900 = vpop.xlane.xlu0 %899
    %v901 = vsel %vm534, %v528, 0.0
    %902 = vadd.xlane.f32.xlu0 %v901
    %v903 = vpop.xlane.xlu0 %902
    %v904 = vsel %vm534, %v529, 0.0
    %905 = vadd.xlane.f32.xlu0 %v904
    %v906 = vpop.xlane.xlu0 %905
    %v907 = vsel %vm534, %v530, 0.0
    %908 = vadd.xlane.f32.xlu0 %v907
    %v909 = vpop.xlane.xlu0 %908
    %v910 = vsel %vm534, %v531, 0.0
    %911 = vadd.xlane.f32.xlu0 %v910
    %v912 = vpop.xlane.xlu0 %911
    %v913 = vsel %vm534, %v532, 0.0
    %914 = vadd.xlane.f32.xlu0 %v913
    %v915 = vpop.xlane.xlu0 %914
    %v916 = vsel %vm534, %v533, 0.0
    %917 = vadd.xlane.f32.xlu0 %v916
    %v918 = vpop.xlane.xlu0 %917
    %v919 = vrsqrt.pop %v537
    %v920 = vmul.f32 %v537, %v919
    %vm921 = vcmp.eq.f32.partialorder %v537, inf
    %v922 = vsel %vm921, %v537, %v920
    %vm923 = vcmp.eq.f32.partialorder %v537, 0.0
    %v924 = vand.u32 %v537, 2147483648
    %v925 = vsel %vm923, %v924, %v922
    %v926 = vrsqrt.pop %v540
    %v927 = vmul.f32 %v540, %v926
    %vm928 = vcmp.eq.f32.partialorder %v540, inf
    %v929 = vsel %vm928, %v540, %v927
    %vm930 = vcmp.eq.f32.partialorder %v540, 0.0
    %v931 = vand.u32 %v540, 2147483648
    %v932 = vsel %vm930, %v931, %v929
    %v933 = vrsqrt.pop %v543
    %v934 = vmul.f32 %v543, %v933
    %vm935 = vcmp.eq.f32.partialorder %v543, inf
    %v936 = vsel %vm935, %v543, %v934
    %vm937 = vcmp.eq.f32.partialorder %v543, 0.0
    %v938 = vand.u32 %v543, 2147483648
    %v939 = vsel %vm937, %v938, %v936
    %v940 = vrsqrt.pop %v546
    %v941 = vmul.f32 %v546, %v940
    %vm942 = vcmp.eq.f32.partialorder %v546, inf
    %v943 = vsel %vm942, %v546, %v941
    %vm944 = vcmp.eq.f32.partialorder %v546, 0.0
    %v945 = vand.u32 %v546, 2147483648
    %v946 = vsel %vm944, %v945, %v943
    %v947 = vrsqrt.pop %v549
    %v948 = vmul.f32 %v549, %v947
    %vm949 = vcmp.eq.f32.partialorder %v549, inf
    %v950 = vsel %vm949, %v549, %v948
    %vm951 = vcmp.eq.f32.partialorder %v549, 0.0
    %v952 = vand.u32 %v549, 2147483648
    %v953 = vsel %vm951, %v952, %v950
    %v954 = vrsqrt.pop %v552
    %v955 = vmul.f32 %v552, %v954
    %vm956 = vcmp.eq.f32.partialorder %v552, inf
    %v957 = vsel %vm956, %v552, %v955
    %vm958 = vcmp.eq.f32.partialorder %v552, 0.0
    %v959 = vand.u32 %v552, 2147483648
    %v960 = vsel %vm958, %v959, %v957
    %v961 = vrsqrt.pop %v555
    %v962 = vmul.f32 %v555, %v961
    %vm963 = vcmp.eq.f32.partialorder %v555, inf
    %v964 = vsel %vm963, %v555, %v962
    %vm965 = vcmp.eq.f32.partialorder %v555, 0.0
    %v966 = vand.u32 %v555, 2147483648
    %v967 = vsel %vm965, %v966, %v964
    %v968 = vrsqrt.pop %v558
    %v969 = vmul.f32 %v558, %v968
    %vm970 = vcmp.eq.f32.partialorder %v558, inf
    %v971 = vsel %vm970, %v558, %v969
    %vm972 = vcmp.eq.f32.partialorder %v558, 0.0
    %v973 = vand.u32 %v558, 2147483648
    %v974 = vsel %vm972, %v973, %v971
    %v975 = vrsqrt.pop %v561
    %v976 = vmul.f32 %v561, %v975
    %vm977 = vcmp.eq.f32.partialorder %v561, inf
    %v978 = vsel %vm977, %v561, %v976
    %vm979 = vcmp.eq.f32.partialorder %v561, 0.0
    %v980 = vand.u32 %v561, 2147483648
    %v981 = vsel %vm979, %v980, %v978
    %v982 = vrsqrt.pop %v564
    %v983 = vmul.f32 %v564, %v982
    %vm984 = vcmp.eq.f32.partialorder %v564, inf
    %v985 = vsel %vm984, %v564, %v983
    %vm986 = vcmp.eq.f32.partialorder %v564, 0.0
    %v987 = vand.u32 %v564, 2147483648
    %v988 = vsel %vm986, %v987, %v985
    %v989 = vrsqrt.pop %v567
    %v990 = vmul.f32 %v567, %v989
    %vm991 = vcmp.eq.f32.partialorder %v567, inf
    %v992 = vsel %vm991, %v567, %v990
    %vm993 = vcmp.eq.f32.partialorder %v567, 0.0
    %v994 = vand.u32 %v567, 2147483648
    %v995 = vsel %vm993, %v994, %v992
    %v996 = vrsqrt.pop %v570
    %v997 = vmul.f32 %v570, %v996
    %vm998 = vcmp.eq.f32.partialorder %v570, inf
    %v999 = vsel %vm998, %v570, %v997
    %vm1000 = vcmp.eq.f32.partialorder %v570, 0.0
    %v1001 = vand.u32 %v570, 2147483648
    %v1002 = vsel %vm1000, %v1001, %v999
    %v1003 = vrsqrt.pop %v573
    %v1004 = vmul.f32 %v573, %v1003
    %vm1005 = vcmp.eq.f32.partialorder %v573, inf
    %v1006 = vsel %vm1005, %v573, %v1004
    %vm1007 = vcmp.eq.f32.partialorder %v573, 0.0
    %v1008 = vand.u32 %v573, 2147483648
    %v1009 = vsel %vm1007, %v1008, %v1006
    %v1010 = vrsqrt.pop %v576
    %v1011 = vmul.f32 %v576, %v1010
    %vm1012 = vcmp.eq.f32.partialorder %v576, inf
    %v1013 = vsel %vm1012, %v576, %v1011
    %vm1014 = vcmp.eq.f32.partialorder %v576, 0.0
    %v1015 = vand.u32 %v576, 2147483648
    %v1016 = vsel %vm1014, %v1015, %v1013
    %v1017 = vrsqrt.pop %v579
    %v1018 = vmul.f32 %v579, %v1017
    %vm1019 = vcmp.eq.f32.partialorder %v579, inf
    %v1020 = vsel %vm1019, %v579, %v1018
    %vm1021 = vcmp.eq.f32.partialorder %v579, 0.0
    %v1022 = vand.u32 %v579, 2147483648
    %v1023 = vsel %vm1021, %v1022, %v1020
    %v1024 = vrsqrt.pop %v582
    %v1025 = vmul.f32 %v582, %v1024
    %vm1026 = vcmp.eq.f32.partialorder %v582, inf
    %v1027 = vsel %vm1026, %v582, %v1025
    %vm1028 = vcmp.eq.f32.partialorder %v582, 0.0
    %v1029 = vand.u32 %v582, 2147483648
    %v1030 = vsel %vm1028, %v1029, %v1027
    %v1031 = vrsqrt.pop %v585
    %v1032 = vmul.f32 %v585, %v1031
    %vm1033 = vcmp.eq.f32.partialorder %v585, inf
    %v1034 = vsel %vm1033, %v585, %v1032
    %vm1035 = vcmp.eq.f32.partialorder %v585, 0.0
    %v1036 = vand.u32 %v585, 2147483648
    %v1037 = vsel %vm1035, %v1036, %v1034
    %v1038 = vrsqrt.pop %v588
    %v1039 = vmul.f32 %v588, %v1038
    %vm1040 = vcmp.eq.f32.partialorder %v588, inf
    %v1041 = vsel %vm1040, %v588, %v1039
    %vm1042 = vcmp.eq.f32.partialorder %v588, 0.0
    %v1043 = vand.u32 %v588, 2147483648
    %v1044 = vsel %vm1042, %v1043, %v1041
    %v1045 = vrsqrt.pop %v591
    %v1046 = vmul.f32 %v591, %v1045
    %vm1047 = vcmp.eq.f32.partialorder %v591, inf
    %v1048 = vsel %vm1047, %v591, %v1046
    %vm1049 = vcmp.eq.f32.partialorder %v591, 0.0
    %v1050 = vand.u32 %v591, 2147483648
    %v1051 = vsel %vm1049, %v1050, %v1048
    %v1052 = vrsqrt.pop %v594
    %v1053 = vmul.f32 %v594, %v1052
    %vm1054 = vcmp.eq.f32.partialorder %v594, inf
    %v1055 = vsel %vm1054, %v594, %v1053
    %vm1056 = vcmp.eq.f32.partialorder %v594, 0.0
    %v1057 = vand.u32 %v594, 2147483648
    %v1058 = vsel %vm1056, %v1057, %v1055
    %v1059 = vrsqrt.pop %v597
    %v1060 = vmul.f32 %v597, %v1059
    %vm1061 = vcmp.eq.f32.partialorder %v597, inf
    %v1062 = vsel %vm1061, %v597, %v1060
    %vm1063 = vcmp.eq.f32.partialorder %v597, 0.0
    %v1064 = vand.u32 %v597, 2147483648
    %v1065 = vsel %vm1063, %v1064, %v1062
    %v1066 = vrsqrt.pop %v600
    %v1067 = vmul.f32 %v600, %v1066
    %vm1068 = vcmp.eq.f32.partialorder %v600, inf
    %v1069 = vsel %vm1068, %v600, %v1067
    %vm1070 = vcmp.eq.f32.partialorder %v600, 0.0
    %v1071 = vand.u32 %v600, 2147483648
    %v1072 = vsel %vm1070, %v1071, %v1069
    %v1073 = vrsqrt.pop %v603
    %v1074 = vmul.f32 %v603, %v1073
    %vm1075 = vcmp.eq.f32.partialorder %v603, inf
    %v1076 = vsel %vm1075, %v603, %v1074
    %vm1077 = vcmp.eq.f32.partialorder %v603, 0.0
    %v1078 = vand.u32 %v603, 2147483648
    %v1079 = vsel %vm1077, %v1078, %v1076
    %v1080 = vrsqrt.pop %v606
    %v1081 = vmul.f32 %v606, %v1080
    %vm1082 = vcmp.eq.f32.partialorder %v606, inf
    %v1083 = vsel %vm1082, %v606, %v1081
    %vm1084 = vcmp.eq.f32.partialorder %v606, 0.0
    %v1085 = vand.u32 %v606, 2147483648
    %v1086 = vsel %vm1084, %v1085, %v1083
    %v1087 = vrsqrt.pop %v609
    %v1088 = vmul.f32 %v609, %v1087
    %vm1089 = vcmp.eq.f32.partialorder %v609, inf
    %v1090 = vsel %vm1089, %v609, %v1088
    %vm1091 = vcmp.eq.f32.partialorder %v609, 0.0
    %v1092 = vand.u32 %v609, 2147483648
    %v1093 = vsel %vm1091, %v1092, %v1090
    %v1094 = vrsqrt.pop %v612
    %v1095 = vmul.f32 %v612, %v1094
    %vm1096 = vcmp.eq.f32.partialorder %v612, inf
    %v1097 = vsel %vm1096, %v612, %v1095
    %vm1098 = vcmp.eq.f32.partialorder %v612, 0.0
    %v1099 = vand.u32 %v612, 2147483648
    %v1100 = vsel %vm1098, %v1099, %v1097
    %v1101 = vrsqrt.pop %v615
    %v1102 = vmul.f32 %v615, %v1101
    %vm1103 = vcmp.eq.f32.partialorder %v615, inf
    %v1104 = vsel %vm1103, %v615, %v1102
    %vm1105 = vcmp.eq.f32.partialorder %v615, 0.0
    %v1106 = vand.u32 %v615, 2147483648
    %v1107 = vsel %vm1105, %v1106, %v1104
    %v1108 = vrsqrt.pop %v618
    %v1109 = vmul.f32 %v618, %v1108
    %vm1110 = vcmp.eq.f32.partialorder %v618, inf
    %v1111 = vsel %vm1110, %v618, %v1109
    %vm1112 = vcmp.eq.f32.partialorder %v618, 0.0
    %v1113 = vand.u32 %v618, 2147483648
    %v1114 = vsel %vm1112, %v1113, %v1111
    %v1115 = vrsqrt.pop %v621
    %v1116 = vmul.f32 %v621, %v1115
    %vm1117 = vcmp.eq.f32.partialorder %v621, inf
    %v1118 = vsel %vm1117, %v621, %v1116
    %vm1119 = vcmp.eq.f32.partialorder %v621, 0.0
    %v1120 = vand.u32 %v621, 2147483648
    %v1121 = vsel %vm1119, %v1120, %v1118
    %v1122 = vrsqrt.pop %v624
    %v1123 = vmul.f32 %v624, %v1122
    %vm1124 = vcmp.eq.f32.partialorder %v624, inf
    %v1125 = vsel %vm1124, %v624, %v1123
    %vm1126 = vcmp.eq.f32.partialorder %v624, 0.0
    %v1127 = vand.u32 %v624, 2147483648
    %v1128 = vsel %vm1126, %v1127, %v1125
    %v1129 = vrsqrt.pop %v627
    %v1130 = vmul.f32 %v627, %v1129
    %vm1131 = vcmp.eq.f32.partialorder %v627, inf
    %v1132 = vsel %vm1131, %v627, %v1130
    %vm1133 = vcmp.eq.f32.partialorder %v627, 0.0
    %v1134 = vand.u32 %v627, 2147483648
    %v1135 = vsel %vm1133, %v1134, %v1132
    %v1136 = vrsqrt.pop %v630
    %v1137 = vmul.f32 %v630, %v1136
    %vm1138 = vcmp.eq.f32.partialorder %v630, inf
    %v1139 = vsel %vm1138, %v630, %v1137
    %vm1140 = vcmp.eq.f32.partialorder %v630, 0.0
    %v1141 = vand.u32 %v630, 2147483648
    %v1142 = vsel %vm1140, %v1141, %v1139
    %v1143 = vrsqrt.pop %v633
    %v1144 = vmul.f32 %v633, %v1143
    %vm1145 = vcmp.eq.f32.partialorder %v633, inf
    %v1146 = vsel %vm1145, %v633, %v1144
    %vm1147 = vcmp.eq.f32.partialorder %v633, 0.0
    %v1148 = vand.u32 %v633, 2147483648
    %v1149 = vsel %vm1147, %v1148, %v1146
    %v1150 = vrsqrt.pop %v636
    %v1151 = vmul.f32 %v636, %v1150
    %vm1152 = vcmp.eq.f32.partialorder %v636, inf
    %v1153 = vsel %vm1152, %v636, %v1151
    %vm1154 = vcmp.eq.f32.partialorder %v636, 0.0
    %v1155 = vand.u32 %v636, 2147483648
    %v1156 = vsel %vm1154, %v1155, %v1153
    %v1157 = vrsqrt.pop %v639
    %v1158 = vmul.f32 %v639, %v1157
    %vm1159 = vcmp.eq.f32.partialorder %v639, inf
    %v1160 = vsel %vm1159, %v639, %v1158
    %vm1161 = vcmp.eq.f32.partialorder %v639, 0.0
    %v1162 = vand.u32 %v639, 2147483648
    %v1163 = vsel %vm1161, %v1162, %v1160
    %v1164 = vrsqrt.pop %v642
    %v1165 = vmul.f32 %v642, %v1164
    %vm1166 = vcmp.eq.f32.partialorder %v642, inf
    %v1167 = vsel %vm1166, %v642, %v1165
    %vm1168 = vcmp.eq.f32.partialorder %v642, 0.0
    %v1169 = vand.u32 %v642, 2147483648
    %v1170 = vsel %vm1168, %v1169, %v1167
    %v1171 = vrsqrt.pop %v645
    %v1172 = vmul.f32 %v645, %v1171
    %vm1173 = vcmp.eq.f32.partialorder %v645, inf
    %v1174 = vsel %vm1173, %v645, %v1172
    %vm1175 = vcmp.eq.f32.partialorder %v645, 0.0
    %v1176 = vand.u32 %v645, 2147483648
    %v1177 = vsel %vm1175, %v1176, %v1174
    %v1178 = vrsqrt.pop %v648
    %v1179 = vmul.f32 %v648, %v1178
    %vm1180 = vcmp.eq.f32.partialorder %v648, inf
    %v1181 = vsel %vm1180, %v648, %v1179
    %vm1182 = vcmp.eq.f32.partialorder %v648, 0.0
    %v1183 = vand.u32 %v648, 2147483648
    %v1184 = vsel %vm1182, %v1183, %v1181
    %v1185 = vrsqrt.pop %v651
    %v1186 = vmul.f32 %v651, %v1185
    %vm1187 = vcmp.eq.f32.partialorder %v651, inf
    %v1188 = vsel %vm1187, %v651, %v1186
    %vm1189 = vcmp.eq.f32.partialorder %v651, 0.0
    %v1190 = vand.u32 %v651, 2147483648
    %v1191 = vsel %vm1189, %v1190, %v1188
    %v1192 = vrsqrt.pop %v654
    %v1193 = vmul.f32 %v654, %v1192
    %vm1194 = vcmp.eq.f32.partialorder %v654, inf
    %v1195 = vsel %vm1194, %v654, %v1193
    %vm1196 = vcmp.eq.f32.partialorder %v654, 0.0
    %v1197 = vand.u32 %v654, 2147483648
    %v1198 = vsel %vm1196, %v1197, %v1195
    %v1199 = vrsqrt.pop %v657
    %v1200 = vmul.f32 %v657, %v1199
    %vm1201 = vcmp.eq.f32.partialorder %v657, inf
    %v1202 = vsel %vm1201, %v657, %v1200
    %vm1203 = vcmp.eq.f32.partialorder %v657, 0.0
    %v1204 = vand.u32 %v657, 2147483648
    %v1205 = vsel %vm1203, %v1204, %v1202
    %v1206 = vrsqrt.pop %v660
    %v1207 = vmul.f32 %v660, %v1206
    %vm1208 = vcmp.eq.f32.partialorder %v660, inf
    %v1209 = vsel %vm1208, %v660, %v1207
    %vm1210 = vcmp.eq.f32.partialorder %v660, 0.0
    %v1211 = vand.u32 %v660, 2147483648
    %v1212 = vsel %vm1210, %v1211, %v1209
    %v1213 = vrsqrt.pop %v663
    %v1214 = vmul.f32 %v663, %v1213
    %vm1215 = vcmp.eq.f32.partialorder %v663, inf
    %v1216 = vsel %vm1215, %v663, %v1214
    %vm1217 = vcmp.eq.f32.partialorder %v663, 0.0
    %v1218 = vand.u32 %v663, 2147483648
    %v1219 = vsel %vm1217, %v1218, %v1216
    %v1220 = vrsqrt.pop %v666
    %v1221 = vmul.f32 %v666, %v1220
    %vm1222 = vcmp.eq.f32.partialorder %v666, inf
    %v1223 = vsel %vm1222, %v666, %v1221
    %vm1224 = vcmp.eq.f32.partialorder %v666, 0.0
    %v1225 = vand.u32 %v666, 2147483648
    %v1226 = vsel %vm1224, %v1225, %v1223
    %v1227 = vrsqrt.pop %v669
    %v1228 = vmul.f32 %v669, %v1227
    %vm1229 = vcmp.eq.f32.partialorder %v669, inf
    %v1230 = vsel %vm1229, %v669, %v1228
    %vm1231 = vcmp.eq.f32.partialorder %v669, 0.0
    %v1232 = vand.u32 %v669, 2147483648
    %v1233 = vsel %vm1231, %v1232, %v1230
    %v1234 = vrsqrt.pop %v672
    %v1235 = vmul.f32 %v672, %v1234
    %vm1236 = vcmp.eq.f32.partialorder %v672, inf
    %v1237 = vsel %vm1236, %v672, %v1235
    %vm1238 = vcmp.eq.f32.partialorder %v672, 0.0
    %v1239 = vand.u32 %v672, 2147483648
    %v1240 = vsel %vm1238, %v1239, %v1237
    %v1241 = vrsqrt.pop %v675
    %v1242 = vmul.f32 %v675, %v1241
    %vm1243 = vcmp.eq.f32.partialorder %v675, inf
    %v1244 = vsel %vm1243, %v675, %v1242
    %vm1245 = vcmp.eq.f32.partialorder %v675, 0.0
    %v1246 = vand.u32 %v675, 2147483648
    %v1247 = vsel %vm1245, %v1246, %v1244
    %v1248 = vrsqrt.pop %v678
    %v1249 = vmul.f32 %v678, %v1248
    %vm1250 = vcmp.eq.f32.partialorder %v678, inf
    %v1251 = vsel %vm1250, %v678, %v1249
    %vm1252 = vcmp.eq.f32.partialorder %v678, 0.0
    %v1253 = vand.u32 %v678, 2147483648
    %v1254 = vsel %vm1252, %v1253, %v1251
    %v1255 = vrsqrt.pop %v681
    %v1256 = vmul.f32 %v681, %v1255
    %vm1257 = vcmp.eq.f32.partialorder %v681, inf
    %v1258 = vsel %vm1257, %v681, %v1256
    %vm1259 = vcmp.eq.f32.partialorder %v681, 0.0
    %v1260 = vand.u32 %v681, 2147483648
    %v1261 = vsel %vm1259, %v1260, %v1258
    %v1262 = vrsqrt.pop %v684
    %v1263 = vmul.f32 %v684, %v1262
    %vm1264 = vcmp.eq.f32.partialorder %v684, inf
    %v1265 = vsel %vm1264, %v684, %v1263
    %vm1266 = vcmp.eq.f32.partialorder %v684, 0.0
    %v1267 = vand.u32 %v684, 2147483648
    %v1268 = vsel %vm1266, %v1267, %v1265
    %v1269 = vrsqrt.pop %v687
    %v1270 = vmul.f32 %v687, %v1269
    %vm1271 = vcmp.eq.f32.partialorder %v687, inf
    %v1272 = vsel %vm1271, %v687, %v1270
    %vm1273 = vcmp.eq.f32.partialorder %v687, 0.0
    %v1274 = vand.u32 %v687, 2147483648
    %v1275 = vsel %vm1273, %v1274, %v1272
    %v1276 = vrsqrt.pop %v690
    %v1277 = vmul.f32 %v690, %v1276
    %vm1278 = vcmp.eq.f32.partialorder %v690, inf
    %v1279 = vsel %vm1278, %v690, %v1277
    %vm1280 = vcmp.eq.f32.partialorder %v690, 0.0
    %v1281 = vand.u32 %v690, 2147483648
    %v1282 = vsel %vm1280, %v1281, %v1279
    %v1283 = vrsqrt.pop %v693
    %v1284 = vmul.f32 %v693, %v1283
    %vm1285 = vcmp.eq.f32.partialorder %v693, inf
    %v1286 = vsel %vm1285, %v693, %v1284
    %vm1287 = vcmp.eq.f32.partialorder %v693, 0.0
    %v1288 = vand.u32 %v693, 2147483648
    %v1289 = vsel %vm1287, %v1288, %v1286
    %v1290 = vrsqrt.pop %v696
    %v1291 = vmul.f32 %v696, %v1290
    %vm1292 = vcmp.eq.f32.partialorder %v696, inf
    %v1293 = vsel %vm1292, %v696, %v1291
    %vm1294 = vcmp.eq.f32.partialorder %v696, 0.0
    %v1295 = vand.u32 %v696, 2147483648
    %v1296 = vsel %vm1294, %v1295, %v1293
    %v1297 = vrsqrt.pop %v699
    %v1298 = vmul.f32 %v699, %v1297
    %vm1299 = vcmp.eq.f32.partialorder %v699, inf
    %v1300 = vsel %vm1299, %v699, %v1298
    %vm1301 = vcmp.eq.f32.partialorder %v699, 0.0
    %v1302 = vand.u32 %v699, 2147483648
    %v1303 = vsel %vm1301, %v1302, %v1300
    %v1304 = vrsqrt.pop %v702
    %v1305 = vmul.f32 %v702, %v1304
    %vm1306 = vcmp.eq.f32.partialorder %v702, inf
    %v1307 = vsel %vm1306, %v702, %v1305
    %vm1308 = vcmp.eq.f32.partialorder %v702, 0.0
    %v1309 = vand.u32 %v702, 2147483648
    %v1310 = vsel %vm1308, %v1309, %v1307
    %v1311 = vrsqrt.pop %v705
    %v1312 = vmul.f32 %v705, %v1311
    %vm1313 = vcmp.eq.f32.partialorder %v705, inf
    %v1314 = vsel %vm1313, %v705, %v1312
    %vm1315 = vcmp.eq.f32.partialorder %v705, 0.0
    %v1316 = vand.u32 %v705, 2147483648
    %v1317 = vsel %vm1315, %v1316, %v1314
    %v1318 = vrsqrt.pop %v708
    %v1319 = vmul.f32 %v708, %v1318
    %vm1320 = vcmp.eq.f32.partialorder %v708, inf
    %v1321 = vsel %vm1320, %v708, %v1319
    %vm1322 = vcmp.eq.f32.partialorder %v708, 0.0
    %v1323 = vand.u32 %v708, 2147483648
    %v1324 = vsel %vm1322, %v1323, %v1321
    %v1325 = vrsqrt.pop %v711
    %v1326 = vmul.f32 %v711, %v1325
    %vm1327 = vcmp.eq.f32.partialorder %v711, inf
    %v1328 = vsel %vm1327, %v711, %v1326
    %vm1329 = vcmp.eq.f32.partialorder %v711, 0.0
    %v1330 = vand.u32 %v711, 2147483648
    %v1331 = vsel %vm1329, %v1330, %v1328
    %v1332 = vrsqrt.pop %v714
    %v1333 = vmul.f32 %v714, %v1332
    %vm1334 = vcmp.eq.f32.partialorder %v714, inf
    %v1335 = vsel %vm1334, %v714, %v1333
    %vm1336 = vcmp.eq.f32.partialorder %v714, 0.0
    %v1337 = vand.u32 %v714, 2147483648
    %v1338 = vsel %vm1336, %v1337, %v1335
    %v1339 = vrsqrt.pop %v717
    %v1340 = vmul.f32 %v717, %v1339
    %vm1341 = vcmp.eq.f32.partialorder %v717, inf
    %v1342 = vsel %vm1341, %v717, %v1340
    %vm1343 = vcmp.eq.f32.partialorder %v717, 0.0
    %v1344 = vand.u32 %v717, 2147483648
    %v1345 = vsel %vm1343, %v1344, %v1342
    %v1346 = vrsqrt.pop %v720
    %v1347 = vmul.f32 %v720, %v1346
    %vm1348 = vcmp.eq.f32.partialorder %v720, inf
    %v1349 = vsel %vm1348, %v720, %v1347
    %vm1350 = vcmp.eq.f32.partialorder %v720, 0.0
    %v1351 = vand.u32 %v720, 2147483648
    %v1352 = vsel %vm1350, %v1351, %v1349
    %v1353 = vrsqrt.pop %v723
    %v1354 = vmul.f32 %v723, %v1353
    %vm1355 = vcmp.eq.f32.partialorder %v723, inf
    %v1356 = vsel %vm1355, %v723, %v1354
    %vm1357 = vcmp.eq.f32.partialorder %v723, 0.0
    %v1358 = vand.u32 %v723, 2147483648
    %v1359 = vsel %vm1357, %v1358, %v1356
    %v1360 = vrsqrt.pop %v726
    %v1361 = vmul.f32 %v726, %v1360
    %vm1362 = vcmp.eq.f32.partialorder %v726, inf
    %v1363 = vsel %vm1362, %v726, %v1361
    %vm1364 = vcmp.eq.f32.partialorder %v726, 0.0
    %v1365 = vand.u32 %v726, 2147483648
    %v1366 = vsel %vm1364, %v1365, %v1363
    %v1367 = vrsqrt.pop %v729
    %v1368 = vmul.f32 %v729, %v1367
    %vm1369 = vcmp.eq.f32.partialorder %v729, inf
    %v1370 = vsel %vm1369, %v729, %v1368
    %vm1371 = vcmp.eq.f32.partialorder %v729, 0.0
    %v1372 = vand.u32 %v729, 2147483648
    %v1373 = vsel %vm1371, %v1372, %v1370
    %v1374 = vrsqrt.pop %v732
    %v1375 = vmul.f32 %v732, %v1374
    %vm1376 = vcmp.eq.f32.partialorder %v732, inf
    %v1377 = vsel %vm1376, %v732, %v1375
    %vm1378 = vcmp.eq.f32.partialorder %v732, 0.0
    %v1379 = vand.u32 %v732, 2147483648
    %v1380 = vsel %vm1378, %v1379, %v1377
    %v1381 = vrsqrt.pop %v735
    %v1382 = vmul.f32 %v735, %v1381
    %vm1383 = vcmp.eq.f32.partialorder %v735, inf
    %v1384 = vsel %vm1383, %v735, %v1382
    %vm1385 = vcmp.eq.f32.partialorder %v735, 0.0
    %v1386 = vand.u32 %v735, 2147483648
    %v1387 = vsel %vm1385, %v1386, %v1384
    %v1388 = vrsqrt.pop %v738
    %v1389 = vmul.f32 %v738, %v1388
    %vm1390 = vcmp.eq.f32.partialorder %v738, inf
    %v1391 = vsel %vm1390, %v738, %v1389
    %vm1392 = vcmp.eq.f32.partialorder %v738, 0.0
    %v1393 = vand.u32 %v738, 2147483648
    %v1394 = vsel %vm1392, %v1393, %v1391
    %v1395 = vrsqrt.pop %v741
    %v1396 = vmul.f32 %v741, %v1395
    %vm1397 = vcmp.eq.f32.partialorder %v741, inf
    %v1398 = vsel %vm1397, %v741, %v1396
    %vm1399 = vcmp.eq.f32.partialorder %v741, 0.0
    %v1400 = vand.u32 %v741, 2147483648
    %v1401 = vsel %vm1399, %v1400, %v1398
    %v1402 = vrsqrt.pop %v744
    %v1403 = vmul.f32 %v744, %v1402
    %vm1404 = vcmp.eq.f32.partialorder %v744, inf
    %v1405 = vsel %vm1404, %v744, %v1403
    %vm1406 = vcmp.eq.f32.partialorder %v744, 0.0
    %v1407 = vand.u32 %v744, 2147483648
    %v1408 = vsel %vm1406, %v1407, %v1405
    %v1409 = vrsqrt.pop %v747
    %v1410 = vmul.f32 %v747, %v1409
    %vm1411 = vcmp.eq.f32.partialorder %v747, inf
    %v1412 = vsel %vm1411, %v747, %v1410
    %vm1413 = vcmp.eq.f32.partialorder %v747, 0.0
    %v1414 = vand.u32 %v747, 2147483648
    %v1415 = vsel %vm1413, %v1414, %v1412
    %v1416 = vrsqrt.pop %v750
    %v1417 = vmul.f32 %v750, %v1416
    %vm1418 = vcmp.eq.f32.partialorder %v750, inf
    %v1419 = vsel %vm1418, %v750, %v1417
    %vm1420 = vcmp.eq.f32.partialorder %v750, 0.0
    %v1421 = vand.u32 %v750, 2147483648
    %v1422 = vsel %vm1420, %v1421, %v1419
    %v1423 = vrsqrt.pop %v753
    %v1424 = vmul.f32 %v753, %v1423
    %vm1425 = vcmp.eq.f32.partialorder %v753, inf
    %v1426 = vsel %vm1425, %v753, %v1424
    %vm1427 = vcmp.eq.f32.partialorder %v753, 0.0
    %v1428 = vand.u32 %v753, 2147483648
    %v1429 = vsel %vm1427, %v1428, %v1426
    %v1430 = vrsqrt.pop %v756
    %v1431 = vmul.f32 %v756, %v1430
    %vm1432 = vcmp.eq.f32.partialorder %v756, inf
    %v1433 = vsel %vm1432, %v756, %v1431
    %vm1434 = vcmp.eq.f32.partialorder %v756, 0.0
    %v1435 = vand.u32 %v756, 2147483648
    %v1436 = vsel %vm1434, %v1435, %v1433
    %v1437 = vrsqrt.pop %v759
    %v1438 = vmul.f32 %v759, %v1437
    %vm1439 = vcmp.eq.f32.partialorder %v759, inf
    %v1440 = vsel %vm1439, %v759, %v1438
    %vm1441 = vcmp.eq.f32.partialorder %v759, 0.0
    %v1442 = vand.u32 %v759, 2147483648
    %v1443 = vsel %vm1441, %v1442, %v1440
    %v1444 = vrsqrt.pop %v762
    %v1445 = vmul.f32 %v762, %v1444
    %vm1446 = vcmp.eq.f32.partialorder %v762, inf
    %v1447 = vsel %vm1446, %v762, %v1445
    %vm1448 = vcmp.eq.f32.partialorder %v762, 0.0
    %v1449 = vand.u32 %v762, 2147483648
    %v1450 = vsel %vm1448, %v1449, %v1447
    %v1451 = vrsqrt.pop %v765
    %v1452 = vmul.f32 %v765, %v1451
    %vm1453 = vcmp.eq.f32.partialorder %v765, inf
    %v1454 = vsel %vm1453, %v765, %v1452
    %vm1455 = vcmp.eq.f32.partialorder %v765, 0.0
    %v1456 = vand.u32 %v765, 2147483648
    %v1457 = vsel %vm1455, %v1456, %v1454
    %v1458 = vrsqrt.pop %v768
    %v1459 = vmul.f32 %v768, %v1458
    %vm1460 = vcmp.eq.f32.partialorder %v768, inf
    %v1461 = vsel %vm1460, %v768, %v1459
    %vm1462 = vcmp.eq.f32.partialorder %v768, 0.0
    %v1463 = vand.u32 %v768, 2147483648
    %v1464 = vsel %vm1462, %v1463, %v1461
    %v1465 = vrsqrt.pop %v771
    %v1466 = vmul.f32 %v771, %v1465
    %vm1467 = vcmp.eq.f32.partialorder %v771, inf
    %v1468 = vsel %vm1467, %v771, %v1466
    %vm1469 = vcmp.eq.f32.partialorder %v771, 0.0
    %v1470 = vand.u32 %v771, 2147483648
    %v1471 = vsel %vm1469, %v1470, %v1468
    %v1472 = vrsqrt.pop %v774
    %v1473 = vmul.f32 %v774, %v1472
    %vm1474 = vcmp.eq.f32.partialorder %v774, inf
    %v1475 = vsel %vm1474, %v774, %v1473
    %vm1476 = vcmp.eq.f32.partialorder %v774, 0.0
    %v1477 = vand.u32 %v774, 2147483648
    %v1478 = vsel %vm1476, %v1477, %v1475
    %v1479 = vrsqrt.pop %v777
    %v1480 = vmul.f32 %v777, %v1479
    %vm1481 = vcmp.eq.f32.partialorder %v777, inf
    %v1482 = vsel %vm1481, %v777, %v1480
    %vm1483 = vcmp.eq.f32.partialorder %v777, 0.0
    %v1484 = vand.u32 %v777, 2147483648
    %v1485 = vsel %vm1483, %v1484, %v1482
    %v1486 = vrsqrt.pop %v780
    %v1487 = vmul.f32 %v780, %v1486
    %vm1488 = vcmp.eq.f32.partialorder %v780, inf
    %v1489 = vsel %vm1488, %v780, %v1487
    %vm1490 = vcmp.eq.f32.partialorder %v780, 0.0
    %v1491 = vand.u32 %v780, 2147483648
    %v1492 = vsel %vm1490, %v1491, %v1489
    %v1493 = vrsqrt.pop %v783
    %v1494 = vmul.f32 %v783, %v1493
    %vm1495 = vcmp.eq.f32.partialorder %v783, inf
    %v1496 = vsel %vm1495, %v783, %v1494
    %vm1497 = vcmp.eq.f32.partialorder %v783, 0.0
    %v1498 = vand.u32 %v783, 2147483648
    %v1499 = vsel %vm1497, %v1498, %v1496
    %v1500 = vrsqrt.pop %v786
    %v1501 = vmul.f32 %v786, %v1500
    %vm1502 = vcmp.eq.f32.partialorder %v786, inf
    %v1503 = vsel %vm1502, %v786, %v1501
    %vm1504 = vcmp.eq.f32.partialorder %v786, 0.0
    %v1505 = vand.u32 %v786, 2147483648
    %v1506 = vsel %vm1504, %v1505, %v1503
    %v1507 = vrsqrt.pop %v789
    %v1508 = vmul.f32 %v789, %v1507
    %vm1509 = vcmp.eq.f32.partialorder %v789, inf
    %v1510 = vsel %vm1509, %v789, %v1508
    %vm1511 = vcmp.eq.f32.partialorder %v789, 0.0
    %v1512 = vand.u32 %v789, 2147483648
    %v1513 = vsel %vm1511, %v1512, %v1510
    %v1514 = vrsqrt.pop %v792
    %v1515 = vmul.f32 %v792, %v1514
    %vm1516 = vcmp.eq.f32.partialorder %v792, inf
    %v1517 = vsel %vm1516, %v792, %v1515
    %vm1518 = vcmp.eq.f32.partialorder %v792, 0.0
    %v1519 = vand.u32 %v792, 2147483648
    %v1520 = vsel %vm1518, %v1519, %v1517
    %v1521 = vrsqrt.pop %v795
    %v1522 = vmul.f32 %v795, %v1521
    %vm1523 = vcmp.eq.f32.partialorder %v795, inf
    %v1524 = vsel %vm1523, %v795, %v1522
    %vm1525 = vcmp.eq.f32.partialorder %v795, 0.0
    %v1526 = vand.u32 %v795, 2147483648
    %v1527 = vsel %vm1525, %v1526, %v1524
    %v1528 = vrsqrt.pop %v798
    %v1529 = vmul.f32 %v798, %v1528
    %vm1530 = vcmp.eq.f32.partialorder %v798, inf
    %v1531 = vsel %vm1530, %v798, %v1529
    %vm1532 = vcmp.eq.f32.partialorder %v798, 0.0
    %v1533 = vand.u32 %v798, 2147483648
    %v1534 = vsel %vm1532, %v1533, %v1531
    %v1535 = vrsqrt.pop %v801
    %v1536 = vmul.f32 %v801, %v1535
    %vm1537 = vcmp.eq.f32.partialorder %v801, inf
    %v1538 = vsel %vm1537, %v801, %v1536
    %vm1539 = vcmp.eq.f32.partialorder %v801, 0.0
    %v1540 = vand.u32 %v801, 2147483648
    %v1541 = vsel %vm1539, %v1540, %v1538
    %v1542 = vrsqrt.pop %v804
    %v1543 = vmul.f32 %v804, %v1542
    %vm1544 = vcmp.eq.f32.partialorder %v804, inf
    %v1545 = vsel %vm1544, %v804, %v1543
    %vm1546 = vcmp.eq.f32.partialorder %v804, 0.0
    %v1547 = vand.u32 %v804, 2147483648
    %v1548 = vsel %vm1546, %v1547, %v1545
    %v1549 = vrsqrt.pop %v807
    %v1550 = vmul.f32 %v807, %v1549
    %vm1551 = vcmp.eq.f32.partialorder %v807, inf
    %v1552 = vsel %vm1551, %v807, %v1550
    %vm1553 = vcmp.eq.f32.partialorder %v807, 0.0
    %v1554 = vand.u32 %v807, 2147483648
    %v1555 = vsel %vm1553, %v1554, %v1552
    %v1556 = vrsqrt.pop %v810
    %v1557 = vmul.f32 %v810, %v1556
    %vm1558 = vcmp.eq.f32.partialorder %v810, inf
    %v1559 = vsel %vm1558, %v810, %v1557
    %vm1560 = vcmp.eq.f32.partialorder %v810, 0.0
    %v1561 = vand.u32 %v810, 2147483648
    %v1562 = vsel %vm1560, %v1561, %v1559
    %v1563 = vrsqrt.pop %v813
    %v1564 = vmul.f32 %v813, %v1563
    %vm1565 = vcmp.eq.f32.partialorder %v813, inf
    %v1566 = vsel %vm1565, %v813, %v1564
    %vm1567 = vcmp.eq.f32.partialorder %v813, 0.0
    %v1568 = vand.u32 %v813, 2147483648
    %v1569 = vsel %vm1567, %v1568, %v1566
    %v1570 = vrsqrt.pop %v816
    %v1571 = vmul.f32 %v816, %v1570
    %vm1572 = vcmp.eq.f32.partialorder %v816, inf
    %v1573 = vsel %vm1572, %v816, %v1571
    %vm1574 = vcmp.eq.f32.partialorder %v816, 0.0
    %v1575 = vand.u32 %v816, 2147483648
    %v1576 = vsel %vm1574, %v1575, %v1573
    %v1577 = vrsqrt.pop %v819
    %v1578 = vmul.f32 %v819, %v1577
    %vm1579 = vcmp.eq.f32.partialorder %v819, inf
    %v1580 = vsel %vm1579, %v819, %v1578
    %vm1581 = vcmp.eq.f32.partialorder %v819, 0.0
    %v1582 = vand.u32 %v819, 2147483648
    %v1583 = vsel %vm1581, %v1582, %v1580
    %v1584 = vrsqrt.pop %v822
    %v1585 = vmul.f32 %v822, %v1584
    %vm1586 = vcmp.eq.f32.partialorder %v822, inf
    %v1587 = vsel %vm1586, %v822, %v1585
    %vm1588 = vcmp.eq.f32.partialorder %v822, 0.0
    %v1589 = vand.u32 %v822, 2147483648
    %v1590 = vsel %vm1588, %v1589, %v1587
    %v1591 = vrsqrt.pop %v825
    %v1592 = vmul.f32 %v825, %v1591
    %vm1593 = vcmp.eq.f32.partialorder %v825, inf
    %v1594 = vsel %vm1593, %v825, %v1592
    %vm1595 = vcmp.eq.f32.partialorder %v825, 0.0
    %v1596 = vand.u32 %v825, 2147483648
    %v1597 = vsel %vm1595, %v1596, %v1594
    %v1598 = vrsqrt.pop %v828
    %v1599 = vmul.f32 %v828, %v1598
    %vm1600 = vcmp.eq.f32.partialorder %v828, inf
    %v1601 = vsel %vm1600, %v828, %v1599
    %vm1602 = vcmp.eq.f32.partialorder %v828, 0.0
    %v1603 = vand.u32 %v828, 2147483648
    %v1604 = vsel %vm1602, %v1603, %v1601
    %v1605 = vrsqrt.pop %v831
    %v1606 = vmul.f32 %v831, %v1605
    %vm1607 = vcmp.eq.f32.partialorder %v831, inf
    %v1608 = vsel %vm1607, %v831, %v1606
    %vm1609 = vcmp.eq.f32.partialorder %v831, 0.0
    %v1610 = vand.u32 %v831, 2147483648
    %v1611 = vsel %vm1609, %v1610, %v1608
    %v1612 = vrsqrt.pop %v834
    %v1613 = vmul.f32 %v834, %v1612
    %vm1614 = vcmp.eq.f32.partialorder %v834, inf
    %v1615 = vsel %vm1614, %v834, %v1613
    %vm1616 = vcmp.eq.f32.partialorder %v834, 0.0
    %v1617 = vand.u32 %v834, 2147483648
    %v1618 = vsel %vm1616, %v1617, %v1615
    %v1619 = vrsqrt.pop %v837
    %v1620 = vmul.f32 %v837, %v1619
    %vm1621 = vcmp.eq.f32.partialorder %v837, inf
    %v1622 = vsel %vm1621, %v837, %v1620
    %vm1623 = vcmp.eq.f32.partialorder %v837, 0.0
    %v1624 = vand.u32 %v837, 2147483648
    %v1625 = vsel %vm1623, %v1624, %v1622
    %v1626 = vrsqrt.pop %v840
    %v1627 = vmul.f32 %v840, %v1626
    %vm1628 = vcmp.eq.f32.partialorder %v840, inf
    %v1629 = vsel %vm1628, %v840, %v1627
    %vm1630 = vcmp.eq.f32.partialorder %v840, 0.0
    %v1631 = vand.u32 %v840, 2147483648
    %v1632 = vsel %vm1630, %v1631, %v1629
    %v1633 = vrsqrt.pop %v843
    %v1634 = vmul.f32 %v843, %v1633
    %vm1635 = vcmp.eq.f32.partialorder %v843, inf
    %v1636 = vsel %vm1635, %v843, %v1634
    %vm1637 = vcmp.eq.f32.partialorder %v843, 0.0
    %v1638 = vand.u32 %v843, 2147483648
    %v1639 = vsel %vm1637, %v1638, %v1636
    %v1640 = vrsqrt.pop %v846
    %v1641 = vmul.f32 %v846, %v1640
    %vm1642 = vcmp.eq.f32.partialorder %v846, inf
    %v1643 = vsel %vm1642, %v846, %v1641
    %vm1644 = vcmp.eq.f32.partialorder %v846, 0.0
    %v1645 = vand.u32 %v846, 2147483648
    %v1646 = vsel %vm1644, %v1645, %v1643
    %v1647 = vrsqrt.pop %v849
    %v1648 = vmul.f32 %v849, %v1647
    %vm1649 = vcmp.eq.f32.partialorder %v849, inf
    %v1650 = vsel %vm1649, %v849, %v1648
    %vm1651 = vcmp.eq.f32.partialorder %v849, 0.0
    %v1652 = vand.u32 %v849, 2147483648
    %v1653 = vsel %vm1651, %v1652, %v1650
    %v1654 = vrsqrt.pop %v852
    %v1655 = vmul.f32 %v852, %v1654
    %vm1656 = vcmp.eq.f32.partialorder %v852, inf
    %v1657 = vsel %vm1656, %v852, %v1655
    %vm1658 = vcmp.eq.f32.partialorder %v852, 0.0
    %v1659 = vand.u32 %v852, 2147483648
    %v1660 = vsel %vm1658, %v1659, %v1657
    %v1661 = vrsqrt.pop %v855
    %v1662 = vmul.f32 %v855, %v1661
    %vm1663 = vcmp.eq.f32.partialorder %v855, inf
    %v1664 = vsel %vm1663, %v855, %v1662
    %vm1665 = vcmp.eq.f32.partialorder %v855, 0.0
    %v1666 = vand.u32 %v855, 2147483648
    %v1667 = vsel %vm1665, %v1666, %v1664
    %v1668 = vrsqrt.pop %v858
    %v1669 = vmul.f32 %v858, %v1668
    %vm1670 = vcmp.eq.f32.partialorder %v858, inf
    %v1671 = vsel %vm1670, %v858, %v1669
    %vm1672 = vcmp.eq.f32.partialorder %v858, 0.0
    %v1673 = vand.u32 %v858, 2147483648
    %v1674 = vsel %vm1672, %v1673, %v1671
    %v1675 = vrsqrt.pop %v861
    %v1676 = vmul.f32 %v861, %v1675
    %vm1677 = vcmp.eq.f32.partialorder %v861, inf
    %v1678 = vsel %vm1677, %v861, %v1676
    %vm1679 = vcmp.eq.f32.partialorder %v861, 0.0
    %v1680 = vand.u32 %v861, 2147483648
    %v1681 = vsel %vm1679, %v1680, %v1678
    %v1682 = vrsqrt.pop %v864
    %v1683 = vmul.f32 %v864, %v1682
    %vm1684 = vcmp.eq.f32.partialorder %v864, inf
    %v1685 = vsel %vm1684, %v864, %v1683
    %vm1686 = vcmp.eq.f32.partialorder %v864, 0.0
    %v1687 = vand.u32 %v864, 2147483648
    %v1688 = vsel %vm1686, %v1687, %v1685
    %v1689 = vrsqrt.pop %v867
    %v1690 = vmul.f32 %v867, %v1689
    %vm1691 = vcmp.eq.f32.partialorder %v867, inf
    %v1692 = vsel %vm1691, %v867, %v1690
    %vm1693 = vcmp.eq.f32.partialorder %v867, 0.0
    %v1694 = vand.u32 %v867, 2147483648
    %v1695 = vsel %vm1693, %v1694, %v1692
    %v1696 = vrsqrt.pop %v870
    %v1697 = vmul.f32 %v870, %v1696
    %vm1698 = vcmp.eq.f32.partialorder %v870, inf
    %v1699 = vsel %vm1698, %v870, %v1697
    %vm1700 = vcmp.eq.f32.partialorder %v870, 0.0
    %v1701 = vand.u32 %v870, 2147483648
    %v1702 = vsel %vm1700, %v1701, %v1699
    %v1703 = vrsqrt.pop %v873
    %v1704 = vmul.f32 %v873, %v1703
    %vm1705 = vcmp.eq.f32.partialorder %v873, inf
    %v1706 = vsel %vm1705, %v873, %v1704
    %vm1707 = vcmp.eq.f32.partialorder %v873, 0.0
    %v1708 = vand.u32 %v873, 2147483648
    %v1709 = vsel %vm1707, %v1708, %v1706
    %v1710 = vrsqrt.pop %v876
    %v1711 = vmul.f32 %v876, %v1710
    %vm1712 = vcmp.eq.f32.partialorder %v876, inf
    %v1713 = vsel %vm1712, %v876, %v1711
    %vm1714 = vcmp.eq.f32.partialorder %v876, 0.0
    %v1715 = vand.u32 %v876, 2147483648
    %v1716 = vsel %vm1714, %v1715, %v1713
    %v1717 = vrsqrt.pop %v879
    %v1718 = vmul.f32 %v879, %v1717
    %vm1719 = vcmp.eq.f32.partialorder %v879, inf
    %v1720 = vsel %vm1719, %v879, %v1718
    %vm1721 = vcmp.eq.f32.partialorder %v879, 0.0
    %v1722 = vand.u32 %v879, 2147483648
    %v1723 = vsel %vm1721, %v1722, %v1720
    %v1724 = vrsqrt.pop %v882
    %v1725 = vmul.f32 %v882, %v1724
    %vm1726 = vcmp.eq.f32.partialorder %v882, inf
    %v1727 = vsel %vm1726, %v882, %v1725
    %vm1728 = vcmp.eq.f32.partialorder %v882, 0.0
    %v1729 = vand.u32 %v882, 2147483648
    %v1730 = vsel %vm1728, %v1729, %v1727
    %v1731 = vrsqrt.pop %v885
    %v1732 = vmul.f32 %v885, %v1731
    %vm1733 = vcmp.eq.f32.partialorder %v885, inf
    %v1734 = vsel %vm1733, %v885, %v1732
    %vm1735 = vcmp.eq.f32.partialorder %v885, 0.0
    %v1736 = vand.u32 %v885, 2147483648
    %v1737 = vsel %vm1735, %v1736, %v1734
    %v1738 = vrsqrt.pop %v888
    %v1739 = vmul.f32 %v888, %v1738
    %vm1740 = vcmp.eq.f32.partialorder %v888, inf
    %v1741 = vsel %vm1740, %v888, %v1739
    %vm1742 = vcmp.eq.f32.partialorder %v888, 0.0
    %v1743 = vand.u32 %v888, 2147483648
    %v1744 = vsel %vm1742, %v1743, %v1741
    %v1745 = vrsqrt.pop %v891
    %v1746 = vmul.f32 %v891, %v1745
    %vm1747 = vcmp.eq.f32.partialorder %v891, inf
    %v1748 = vsel %vm1747, %v891, %v1746
    %vm1749 = vcmp.eq.f32.partialorder %v891, 0.0
    %v1750 = vand.u32 %v891, 2147483648
    %v1751 = vsel %vm1749, %v1750, %v1748
    %v1752 = vrsqrt.pop %v894
    %v1753 = vmul.f32 %v894, %v1752
    %vm1754 = vcmp.eq.f32.partialorder %v894, inf
    %v1755 = vsel %vm1754, %v894, %v1753
    %vm1756 = vcmp.eq.f32.partialorder %v894, 0.0
    %v1757 = vand.u32 %v894, 2147483648
    %v1758 = vsel %vm1756, %v1757, %v1755
    %v1759 = vrsqrt.pop %v897
    %v1760 = vmul.f32 %v897, %v1759
    %vm1761 = vcmp.eq.f32.partialorder %v897, inf
    %v1762 = vsel %vm1761, %v897, %v1760
    %vm1763 = vcmp.eq.f32.partialorder %v897, 0.0
    %v1764 = vand.u32 %v897, 2147483648
    %v1765 = vsel %vm1763, %v1764, %v1762
    %v1766 = vrsqrt.pop %v900
    %v1767 = vmul.f32 %v900, %v1766
    %vm1768 = vcmp.eq.f32.partialorder %v900, inf
    %v1769 = vsel %vm1768, %v900, %v1767
    %vm1770 = vcmp.eq.f32.partialorder %v900, 0.0
    %v1771 = vand.u32 %v900, 2147483648
    %v1772 = vsel %vm1770, %v1771, %v1769
    %v1773 = vrsqrt.pop %v903
    %v1774 = vmul.f32 %v903, %v1773
    %vm1775 = vcmp.eq.f32.partialorder %v903, inf
    %v1776 = vsel %vm1775, %v903, %v1774
    %vm1777 = vcmp.eq.f32.partialorder %v903, 0.0
    %v1778 = vand.u32 %v903, 2147483648
    %v1779 = vsel %vm1777, %v1778, %v1776
    %v1780 = vrsqrt.pop %v906
    %v1781 = vmul.f32 %v906, %v1780
    %vm1782 = vcmp.eq.f32.partialorder %v906, inf
    %v1783 = vsel %vm1782, %v906, %v1781
    %vm1784 = vcmp.eq.f32.partialorder %v906, 0.0
    %v1785 = vand.u32 %v906, 2147483648
    %v1786 = vsel %vm1784, %v1785, %v1783
    %v1787 = vrsqrt.pop %v909
    %v1788 = vmul.f32 %v909, %v1787
    %vm1789 = vcmp.eq.f32.partialorder %v909, inf
    %v1790 = vsel %vm1789, %v909, %v1788
    %vm1791 = vcmp.eq.f32.partialorder %v909, 0.0
    %v1792 = vand.u32 %v909, 2147483648
    %v1793 = vsel %vm1791, %v1792, %v1790
    %v1794 = vrsqrt.pop %v912
    %v1795 = vmul.f32 %v912, %v1794
    %vm1796 = vcmp.eq.f32.partialorder %v912, inf
    %v1797 = vsel %vm1796, %v912, %v1795
    %vm1798 = vcmp.eq.f32.partialorder %v912, 0.0
    %v1799 = vand.u32 %v912, 2147483648
    %v1800 = vsel %vm1798, %v1799, %v1797
    %v1801 = vrsqrt.pop %v915
    %v1802 = vmul.f32 %v915, %v1801
    %vm1803 = vcmp.eq.f32.partialorder %v915, inf
    %v1804 = vsel %vm1803, %v915, %v1802
    %vm1805 = vcmp.eq.f32.partialorder %v915, 0.0
    %v1806 = vand.u32 %v915, 2147483648
    %v1807 = vsel %vm1805, %v1806, %v1804
    %v1808 = vrsqrt.pop %v918
    %v1809 = vmul.f32 %v918, %v1808
    %vm1810 = vcmp.eq.f32.partialorder %v918, inf
    %v1811 = vsel %vm1810, %v918, %v1809
    %vm1812 = vcmp.eq.f32.partialorder %v918, 0.0
    %v1813 = vand.u32 %v918, 2147483648
    %v1814 = vsel %vm1812, %v1813, %v1811
    %v1815 = vld [vmem:[%s0] sm:$0xff]
    %v1816 = vld [vmem:[%s1] sm:$0xff]
    %v1817 = vadd.f32 %v1816, 0.5
    %v1819 = vlaneseq
    %v1820 = vshrl.u32 %v1819, 7
    %v1821 = vsub.s32 0, %v1820
    %v1822 = vrot.slane %v1815, %v1821
    %1824 = vbcast.lane.b32.xlu0 %v1822, 256
    %v1825 = vpop.permute.xlu0 %1824
    %s1827 = sor.u32 256, 8
    %1828 = vbcast.lane.b32.xlu0 %v1822, %s1827
    %v1829 = vpop.permute.xlu0 %1828
    %s1831 = sor.u32 256, 16
    %1832 = vbcast.lane.b32.xlu0 %v1822, %s1831
    %v1833 = vpop.permute.xlu0 %1832
    %s1835 = sor.u32 256, 24
    %1836 = vbcast.lane.b32.xlu0 %v1822, %s1835
    %v1837 = vpop.permute.xlu0 %1836
    %s1839 = sor.u32 256, 32
    %1840 = vbcast.lane.b32.xlu0 %v1822, %s1839
    %v1841 = vpop.permute.xlu0 %1840
    %s1843 = sor.u32 256, 40
    %1844 = vbcast.lane.b32.xlu0 %v1822, %s1843
    %v1845 = vpop.permute.xlu0 %1844
    %s1847 = sor.u32 256, 48
    %1848 = vbcast.lane.b32.xlu0 %v1822, %s1847
    %v1849 = vpop.permute.xlu0 %1848
    %s1851 = sor.u32 256, 56
    %1852 = vbcast.lane.b32.xlu0 %v1822, %s1851
    %v1853 = vpop.permute.xlu0 %1852
    %s1855 = sor.u32 256, 64
    %1856 = vbcast.lane.b32.xlu0 %v1822, %s1855
    %v1857 = vpop.permute.xlu0 %1856
    %s1859 = sor.u32 256, 72
    %1860 = vbcast.lane.b32.xlu0 %v1822, %s1859
    %v1861 = vpop.permute.xlu0 %1860
    %s1863 = sor.u32 256, 80
    %1864 = vbcast.lane.b32.xlu0 %v1822, %s1863
    %v1865 = vpop.permute.xlu0 %1864
    %s1867 = sor.u32 256, 88
    %1868 = vbcast.lane.b32.xlu0 %v1822, %s1867
    %v1869 = vpop.permute.xlu0 %1868
    %s1871 = sor.u32 256, 96
    %1872 = vbcast.lane.b32.xlu0 %v1822, %s1871
    %v1873 = vpop.permute.xlu0 %1872
    %s1875 = sor.u32 256, 104
    %1876 = vbcast.lane.b32.xlu0 %v1822, %s1875
    %v1877 = vpop.permute.xlu0 %1876
    %s1879 = sor.u32 256, 112
    %1880 = vbcast.lane.b32.xlu0 %v1822, %s1879
    %v1881 = vpop.permute.xlu0 %1880
    %s1883 = sor.u32 256, 120
    %1884 = vbcast.lane.b32.xlu0 %v1822, %s1883
    %v1885 = vpop.permute.xlu0 %1884
    %v1886 = vlaneseq
    %v1887 = vshrl.u32 %v1886, 7
    %v1888 = vsub.s32 1, %v1887
    %v1889 = vrot.slane %v1815, %v1888
    %1891 = vbcast.lane.b32.xlu0 %v1889, 256
    %v1892 = vpop.permute.xlu0 %1891
    %s1894 = sor.u32 256, 8
    %1895 = vbcast.lane.b32.xlu0 %v1889, %s1894
    %v1896 = vpop.permute.xlu0 %1895
    %s1898 = sor.u32 256, 16
    %1899 = vbcast.lane.b32.xlu0 %v1889, %s1898
    %v1900 = vpop.permute.xlu0 %1899
    %s1902 = sor.u32 256, 24
    %1903 = vbcast.lane.b32.xlu0 %v1889, %s1902
    %v1904 = vpop.permute.xlu0 %1903
    %s1906 = sor.u32 256, 32
    %1907 = vbcast.lane.b32.xlu0 %v1889, %s1906
    %v1908 = vpop.permute.xlu0 %1907
    %s1910 = sor.u32 256, 40
    %1911 = vbcast.lane.b32.xlu0 %v1889, %s1910
    %v1912 = vpop.permute.xlu0 %1911
    %s1914 = sor.u32 256, 48
    %1915 = vbcast.lane.b32.xlu0 %v1889, %s1914
    %v1916 = vpop.permute.xlu0 %1915
    %s1918 = sor.u32 256, 56
    %1919 = vbcast.lane.b32.xlu0 %v1889, %s1918
    %v1920 = vpop.permute.xlu0 %1919
    %s1922 = sor.u32 256, 64
    %1923 = vbcast.lane.b32.xlu0 %v1889, %s1922
    %v1924 = vpop.permute.xlu0 %1923
    %s1926 = sor.u32 256, 72
    %1927 = vbcast.lane.b32.xlu0 %v1889, %s1926
    %v1928 = vpop.permute.xlu0 %1927
    %s1930 = sor.u32 256, 80
    %1931 = vbcast.lane.b32.xlu0 %v1889, %s1930
    %v1932 = vpop.permute.xlu0 %1931
    %s1934 = sor.u32 256, 88
    %1935 = vbcast.lane.b32.xlu0 %v1889, %s1934
    %v1936 = vpop.permute.xlu0 %1935
    %s1938 = sor.u32 256, 96
    %1939 = vbcast.lane.b32.xlu0 %v1889, %s1938
    %v1940 = vpop.permute.xlu0 %1939
    %s1942 = sor.u32 256, 104
    %1943 = vbcast.lane.b32.xlu0 %v1889, %s1942
    %v1944 = vpop.permute.xlu0 %1943
    %s1946 = sor.u32 256, 112
    %1947 = vbcast.lane.b32.xlu0 %v1889, %s1946
    %v1948 = vpop.permute.xlu0 %1947
    %s1950 = sor.u32 256, 120
    %1951 = vbcast.lane.b32.xlu0 %v1889, %s1950
    %v1952 = vpop.permute.xlu0 %1951
    %v1953 = vlaneseq
    %v1954 = vshrl.u32 %v1953, 7
    %v1955 = vsub.s32 2, %v1954
    %v1956 = vrot.slane %v1815, %v1955
    %1958 = vbcast.lane.b32.xlu0 %v1956, 256
    %v1959 = vpop.permute.xlu0 %1958
    %s1961 = sor.u32 256, 8
    %1962 = vbcast.lane.b32.xlu0 %v1956, %s1961
    %v1963 = vpop.permute.xlu0 %1962
    %s1965 = sor.u32 256, 16
    %1966 = vbcast.lane.b32.xlu0 %v1956, %s1965
    %v1967 = vpop.permute.xlu0 %1966
    %s1969 = sor.u32 256, 24
    %1970 = vbcast.lane.b32.xlu0 %v1956, %s1969
    %v1971 = vpop.permute.xlu0 %1970
    %s1973 = sor.u32 256, 32
    %1974 = vbcast.lane.b32.xlu0 %v1956, %s1973
    %v1975 = vpop.permute.xlu0 %1974
    %s1977 = sor.u32 256, 40
    %1978 = vbcast.lane.b32.xlu0 %v1956, %s1977
    %v1979 = vpop.permute.xlu0 %1978
    %s1981 = sor.u32 256, 48
    %1982 = vbcast.lane.b32.xlu0 %v1956, %s1981
    %v1983 = vpop.permute.xlu0 %1982
    %s1985 = sor.u32 256, 56
    %1986 = vbcast.lane.b32.xlu0 %v1956, %s1985
    %v1987 = vpop.permute.xlu0 %1986
    %s1989 = sor.u32 256, 64
    %1990 = vbcast.lane.b32.xlu0 %v1956, %s1989
    %v1991 = vpop.permute.xlu0 %1990
    %s1993 = sor.u32 256, 72
    %1994 = vbcast.lane.b32.xlu0 %v1956, %s1993
    %v1995 = vpop.permute.xlu0 %1994
    %s1997 = sor.u32 256, 80
    %1998 = vbcast.lane.b32.xlu0 %v1956, %s1997
    %v1999 = vpop.permute.xlu0 %1998
    %s2001 = sor.u32 256, 88
    %2002 = vbcast.lane.b32.xlu0 %v1956, %s2001
    %v2003 = vpop.permute.xlu0 %2002
    %s2005 = sor.u32 256, 96
    %2006 = vbcast.lane.b32.xlu0 %v1956, %s2005
    %v2007 = vpop.permute.xlu0 %2006
    %s2009 = sor.u32 256, 104
    %2010 = vbcast.lane.b32.xlu0 %v1956, %s2009
    %v2011 = vpop.permute.xlu0 %2010
    %s2013 = sor.u32 256, 112
    %2014 = vbcast.lane.b32.xlu0 %v1956, %s2013
    %v2015 = vpop.permute.xlu0 %2014
    %s2017 = sor.u32 256, 120
    %2018 = vbcast.lane.b32.xlu0 %v1956, %s2017
    %v2019 = vpop.permute.xlu0 %2018
    %v2020 = vlaneseq
    %v2021 = vshrl.u32 %v2020, 7
    %v2022 = vsub.s32 3, %v2021
    %v2023 = vrot.slane %v1815, %v2022
    %2025 = vbcast.lane.b32.xlu0 %v2023, 256
    %v2026 = vpop.permute.xlu0 %2025
    %s2028 = sor.u32 256, 8
    %2029 = vbcast.lane.b32.xlu0 %v2023, %s2028
    %v2030 = vpop.permute.xlu0 %2029
    %s2032 = sor.u32 256, 16
    %2033 = vbcast.lane.b32.xlu0 %v2023, %s2032
    %v2034 = vpop.permute.xlu0 %2033
    %s2036 = sor.u32 256, 24
    %2037 = vbcast.lane.b32.xlu0 %v2023, %s2036
    %v2038 = vpop.permute.xlu0 %2037
    %s2040 = sor.u32 256, 32
    %2041 = vbcast.lane.b32.xlu0 %v2023, %s2040
    %v2042 = vpop.permute.xlu0 %2041
    %s2044 = sor.u32 256, 40
    %2045 = vbcast.lane.b32.xlu0 %v2023, %s2044
    %v2046 = vpop.permute.xlu0 %2045
    %s2048 = sor.u32 256, 48
    %2049 = vbcast.lane.b32.xlu0 %v2023, %s2048
    %v2050 = vpop.permute.xlu0 %2049
    %s2052 = sor.u32 256, 56
    %2053 = vbcast.lane.b32.xlu0 %v2023, %s2052
    %v2054 = vpop.permute.xlu0 %2053
    %s2056 = sor.u32 256, 64
    %2057 = vbcast.lane.b32.xlu0 %v2023, %s2056
    %v2058 = vpop.permute.xlu0 %2057
    %s2060 = sor.u32 256, 72
    %2061 = vbcast.lane.b32.xlu0 %v2023, %s2060
    %v2062 = vpop.permute.xlu0 %2061
    %s2064 = sor.u32 256, 80
    %2065 = vbcast.lane.b32.xlu0 %v2023, %s2064
    %v2066 = vpop.permute.xlu0 %2065
    %s2068 = sor.u32 256, 88
    %2069 = vbcast.lane.b32.xlu0 %v2023, %s2068
    %v2070 = vpop.permute.xlu0 %2069
    %s2072 = sor.u32 256, 96
    %2073 = vbcast.lane.b32.xlu0 %v2023, %s2072
    %v2074 = vpop.permute.xlu0 %2073
    %s2076 = sor.u32 256, 104
    %2077 = vbcast.lane.b32.xlu0 %v2023, %s2076
    %v2078 = vpop.permute.xlu0 %2077
    %s2080 = sor.u32 256, 112
    %2081 = vbcast.lane.b32.xlu0 %v2023, %s2080
    %v2082 = vpop.permute.xlu0 %2081
    %s2084 = sor.u32 256, 120
    %2085 = vbcast.lane.b32.xlu0 %v2023, %s2084
    %v2086 = vpop.permute.xlu0 %2085
    %v2087 = vlaneseq
    %v2088 = vshrl.u32 %v2087, 7
    %v2089 = vsub.s32 4, %v2088
    %v2090 = vrot.slane %v1815, %v2089
    %2092 = vbcast.lane.b32.xlu0 %v2090, 256
    %v2093 = vpop.permute.xlu0 %2092
    %s2095 = sor.u32 256, 8
    %2096 = vbcast.lane.b32.xlu0 %v2090, %s2095
    %v2097 = vpop.permute.xlu0 %2096
    %s2099 = sor.u32 256, 16
    %2100 = vbcast.lane.b32.xlu0 %v2090, %s2099
    %v2101 = vpop.permute.xlu0 %2100
    %s2103 = sor.u32 256, 24
    %2104 = vbcast.lane.b32.xlu0 %v2090, %s2103
    %v2105 = vpop.permute.xlu0 %2104
    %s2107 = sor.u32 256, 32
    %2108 = vbcast.lane.b32.xlu0 %v2090, %s2107
    %v2109 = vpop.permute.xlu0 %2108
    %s2111 = sor.u32 256, 40
    %2112 = vbcast.lane.b32.xlu0 %v2090, %s2111
    %v2113 = vpop.permute.xlu0 %2112
    %s2115 = sor.u32 256, 48
    %2116 = vbcast.lane.b32.xlu0 %v2090, %s2115
    %v2117 = vpop.permute.xlu0 %2116
    %s2119 = sor.u32 256, 56
    %2120 = vbcast.lane.b32.xlu0 %v2090, %s2119
    %v2121 = vpop.permute.xlu0 %2120
    %s2123 = sor.u32 256, 64
    %2124 = vbcast.lane.b32.xlu0 %v2090, %s2123
    %v2125 = vpop.permute.xlu0 %2124
    %s2127 = sor.u32 256, 72
    %2128 = vbcast.lane.b32.xlu0 %v2090, %s2127
    %v2129 = vpop.permute.xlu0 %2128
    %s2131 = sor.u32 256, 80
    %2132 = vbcast.lane.b32.xlu0 %v2090, %s2131
    %v2133 = vpop.permute.xlu0 %2132
    %s2135 = sor.u32 256, 88
    %2136 = vbcast.lane.b32.xlu0 %v2090, %s2135
    %v2137 = vpop.permute.xlu0 %2136
    %s2139 = sor.u32 256, 96
    %2140 = vbcast.lane.b32.xlu0 %v2090, %s2139
    %v2141 = vpop.permute.xlu0 %2140
    %s2143 = sor.u32 256, 104
    %2144 = vbcast.lane.b32.xlu0 %v2090, %s2143
    %v2145 = vpop.permute.xlu0 %2144
    %s2147 = sor.u32 256, 112
    %2148 = vbcast.lane.b32.xlu0 %v2090, %s2147
    %v2149 = vpop.permute.xlu0 %2148
    %s2151 = sor.u32 256, 120
    %2152 = vbcast.lane.b32.xlu0 %v2090, %s2151
    %v2153 = vpop.permute.xlu0 %2152
    %v2154 = vlaneseq
    %v2155 = vshrl.u32 %v2154, 7
    %v2156 = vsub.s32 5, %v2155
    %v2157 = vrot.slane %v1815, %v2156
    %2159 = vbcast.lane.b32.xlu0 %v2157, 256
    %v2160 = vpop.permute.xlu0 %2159
    %s2162 = sor.u32 256, 8
    %2163 = vbcast.lane.b32.xlu0 %v2157, %s2162
    %v2164 = vpop.permute.xlu0 %2163
    %s2166 = sor.u32 256, 16
    %2167 = vbcast.lane.b32.xlu0 %v2157, %s2166
    %v2168 = vpop.permute.xlu0 %2167
    %s2170 = sor.u32 256, 24
    %2171 = vbcast.lane.b32.xlu0 %v2157, %s2170
    %v2172 = vpop.permute.xlu0 %2171
    %s2174 = sor.u32 256, 32
    %2175 = vbcast.lane.b32.xlu0 %v2157, %s2174
    %v2176 = vpop.permute.xlu0 %2175
    %s2178 = sor.u32 256, 40
    %2179 = vbcast.lane.b32.xlu0 %v2157, %s2178
    %v2180 = vpop.permute.xlu0 %2179
    %s2182 = sor.u32 256, 48
    %2183 = vbcast.lane.b32.xlu0 %v2157, %s2182
    %v2184 = vpop.permute.xlu0 %2183
    %s2186 = sor.u32 256, 56
    %2187 = vbcast.lane.b32.xlu0 %v2157, %s2186
    %v2188 = vpop.permute.xlu0 %2187
    %s2190 = sor.u32 256, 64
    %2191 = vbcast.lane.b32.xlu0 %v2157, %s2190
    %v2192 = vpop.permute.xlu0 %2191
    %s2194 = sor.u32 256, 72
    %2195 = vbcast.lane.b32.xlu0 %v2157, %s2194
    %v2196 = vpop.permute.xlu0 %2195
    %s2198 = sor.u32 256, 80
    %2199 = vbcast.lane.b32.xlu0 %v2157, %s2198
    %v2200 = vpop.permute.xlu0 %2199
    %s2202 = sor.u32 256, 88
    %2203 = vbcast.lane.b32.xlu0 %v2157, %s2202
    %v2204 = vpop.permute.xlu0 %2203
    %s2206 = sor.u32 256, 96
    %2207 = vbcast.lane.b32.xlu0 %v2157, %s2206
    %v2208 = vpop.permute.xlu0 %2207
    %s2210 = sor.u32 256, 104
    %2211 = vbcast.lane.b32.xlu0 %v2157, %s2210
    %v2212 = vpop.permute.xlu0 %2211
    %s2214 = sor.u32 256, 112
    %2215 = vbcast.lane.b32.xlu0 %v2157, %s2214
    %v2216 = vpop.permute.xlu0 %2215
    %s2218 = sor.u32 256, 120
    %2219 = vbcast.lane.b32.xlu0 %v2157, %s2218
    %v2220 = vpop.permute.xlu0 %2219
    %v2221 = vlaneseq
    %v2222 = vshrl.u32 %v2221, 7
    %v2223 = vsub.s32 6, %v2222
    %v2224 = vrot.slane %v1815, %v2223
    %2226 = vbcast.lane.b32.xlu0 %v2224, 256
    %v2227 = vpop.permute.xlu0 %2226
    %s2229 = sor.u32 256, 8
    %2230 = vbcast.lane.b32.xlu0 %v2224, %s2229
    %v2231 = vpop.permute.xlu0 %2230
    %s2233 = sor.u32 256, 16
    %2234 = vbcast.lane.b32.xlu0 %v2224, %s2233
    %v2235 = vpop.permute.xlu0 %2234
    %s2237 = sor.u32 256, 24
    %2238 = vbcast.lane.b32.xlu0 %v2224, %s2237
    %v2239 = vpop.permute.xlu0 %2238
    %s2241 = sor.u32 256, 32
    %2242 = vbcast.lane.b32.xlu0 %v2224, %s2241
    %v2243 = vpop.permute.xlu0 %2242
    %s2245 = sor.u32 256, 40
    %2246 = vbcast.lane.b32.xlu0 %v2224, %s2245
    %v2247 = vpop.permute.xlu0 %2246
    %s2249 = sor.u32 256, 48
    %2250 = vbcast.lane.b32.xlu0 %v2224, %s2249
    %v2251 = vpop.permute.xlu0 %2250
    %s2253 = sor.u32 256, 56
    %2254 = vbcast.lane.b32.xlu0 %v2224, %s2253
    %v2255 = vpop.permute.xlu0 %2254
    %s2257 = sor.u32 256, 64
    %2258 = vbcast.lane.b32.xlu0 %v2224, %s2257
    %v2259 = vpop.permute.xlu0 %2258
    %s2261 = sor.u32 256, 72
    %2262 = vbcast.lane.b32.xlu0 %v2224, %s2261
    %v2263 = vpop.permute.xlu0 %2262
    %s2265 = sor.u32 256, 80
    %2266 = vbcast.lane.b32.xlu0 %v2224, %s2265
    %v2267 = vpop.permute.xlu0 %2266
    %s2269 = sor.u32 256, 88
    %2270 = vbcast.lane.b32.xlu0 %v2224, %s2269
    %v2271 = vpop.permute.xlu0 %2270
    %s2273 = sor.u32 256, 96
    %2274 = vbcast.lane.b32.xlu0 %v2224, %s2273
    %v2275 = vpop.permute.xlu0 %2274
    %s2277 = sor.u32 256, 104
    %2278 = vbcast.lane.b32.xlu0 %v2224, %s2277
    %v2279 = vpop.permute.xlu0 %2278
    %s2281 = sor.u32 256, 112
    %2282 = vbcast.lane.b32.xlu0 %v2224, %s2281
    %v2283 = vpop.permute.xlu0 %2282
    %s2285 = sor.u32 256, 120
    %2286 = vbcast.lane.b32.xlu0 %v2224, %s2285
    %v2287 = vpop.permute.xlu0 %2286
    %v2288 = vlaneseq
    %v2289 = vshrl.u32 %v2288, 7
    %v2290 = vsub.s32 7, %v2289
    %v2291 = vrot.slane %v1815, %v2290
    %2293 = vbcast.lane.b32.xlu0 %v2291, 256
    %v2294 = vpop.permute.xlu0 %2293
    %s2296 = sor.u32 256, 8
    %2297 = vbcast.lane.b32.xlu0 %v2291, %s2296
    %v2298 = vpop.permute.xlu0 %2297
    %s2300 = sor.u32 256, 16
    %2301 = vbcast.lane.b32.xlu0 %v2291, %s2300
    %v2302 = vpop.permute.xlu0 %2301
    %s2304 = sor.u32 256, 24
    %2305 = vbcast.lane.b32.xlu0 %v2291, %s2304
    %v2306 = vpop.permute.xlu0 %2305
    %s2308 = sor.u32 256, 32
    %2309 = vbcast.lane.b32.xlu0 %v2291, %s2308
    %v2310 = vpop.permute.xlu0 %2309
    %s2312 = sor.u32 256, 40
    %2313 = vbcast.lane.b32.xlu0 %v2291, %s2312
    %v2314 = vpop.permute.xlu0 %2313
    %s2316 = sor.u32 256, 48
    %2317 = vbcast.lane.b32.xlu0 %v2291, %s2316
    %v2318 = vpop.permute.xlu0 %2317
    %s2320 = sor.u32 256, 56
    %2321 = vbcast.lane.b32.xlu0 %v2291, %s2320
    %v2322 = vpop.permute.xlu0 %2321
    %s2324 = sor.u32 256, 64
    %2325 = vbcast.lane.b32.xlu0 %v2291, %s2324
    %v2326 = vpop.permute.xlu0 %2325
    %s2328 = sor.u32 256, 72
    %2329 = vbcast.lane.b32.xlu0 %v2291, %s2328
    %v2330 = vpop.permute.xlu0 %2329
    %s2332 = sor.u32 256, 80
    %2333 = vbcast.lane.b32.xlu0 %v2291, %s2332
    %v2334 = vpop.permute.xlu0 %2333
    %s2336 = sor.u32 256, 88
    %2337 = vbcast.lane.b32.xlu0 %v2291, %s2336
    %v2338 = vpop.permute.xlu0 %2337
    %s2340 = sor.u32 256, 96
    %2341 = vbcast.lane.b32.xlu0 %v2291, %s2340
    %v2342 = vpop.permute.xlu0 %2341
    %s2344 = sor.u32 256, 104
    %2345 = vbcast.lane.b32.xlu0 %v2291, %s2344
    %v2346 = vpop.permute.xlu0 %2345
    %s2348 = sor.u32 256, 112
    %2349 = vbcast.lane.b32.xlu0 %v2291, %s2348
    %v2350 = vpop.permute.xlu0 %2349
    %s2352 = sor.u32 256, 120
    %2353 = vbcast.lane.b32.xlu0 %v2291, %s2352
    %v2354 = vpop.permute.xlu0 %2353
    %v2483 = vsub.f32 %v925, %v1825
    %v2484 = vsub.f32 %v932, %v1829
    %v2485 = vsub.f32 %v939, %v1833
    %v2486 = vsub.f32 %v946, %v1837
    %v2487 = vsub.f32 %v953, %v1841
    %v2488 = vsub.f32 %v960, %v1845
    %v2489 = vsub.f32 %v967, %v1849
    %v2490 = vsub.f32 %v974, %v1853
    %v2491 = vsub.f32 %v981, %v1857
    %v2492 = vsub.f32 %v988, %v1861
    %v2493 = vsub.f32 %v995, %v1865
    %v2494 = vsub.f32 %v1002, %v1869
    %v2495 = vsub.f32 %v1009, %v1873
    %v2496 = vsub.f32 %v1016, %v1877
    %v2497 = vsub.f32 %v1023, %v1881
    %v2498 = vsub.f32 %v1030, %v1885
    %v2499 = vsub.f32 %v1037, %v1892
    %v2500 = vsub.f32 %v1044, %v1896
    %v2501 = vsub.f32 %v1051, %v1900
    %v2502 = vsub.f32 %v1058, %v1904
    %v2503 = vsub.f32 %v1065, %v1908
    %v2504 = vsub.f32 %v1072, %v1912
    %v2505 = vsub.f32 %v1079, %v1916
    %v2506 = vsub.f32 %v1086, %v1920
    %v2507 = vsub.f32 %v1093, %v1924
    %v2508 = vsub.f32 %v1100, %v1928
    %v2509 = vsub.f32 %v1107, %v1932
    %v2510 = vsub.f32 %v1114, %v1936
    %v2511 = vsub.f32 %v1121, %v1940
    %v2512 = vsub.f32 %v1128, %v1944
    %v2513 = vsub.f32 %v1135, %v1948
    %v2514 = vsub.f32 %v1142, %v1952
    %v2515 = vsub.f32 %v1149, %v1959
    %v2516 = vsub.f32 %v1156, %v1963
    %v2517 = vsub.f32 %v1163, %v1967
    %v2518 = vsub.f32 %v1170, %v1971
    %v2519 = vsub.f32 %v1177, %v1975
    %v2520 = vsub.f32 %v1184, %v1979
    %v2521 = vsub.f32 %v1191, %v1983
    %v2522 = vsub.f32 %v1198, %v1987
    %v2523 = vsub.f32 %v1205, %v1991
    %v2524 = vsub.f32 %v1212, %v1995
    %v2525 = vsub.f32 %v1219, %v1999
    %v2526 = vsub.f32 %v1226, %v2003
    %v2527 = vsub.f32 %v1233, %v2007
    %v2528 = vsub.f32 %v1240, %v2011
    %v2529 = vsub.f32 %v1247, %v2015
    %v2530 = vsub.f32 %v1254, %v2019
    %v2531 = vsub.f32 %v1261, %v2026
    %v2532 = vsub.f32 %v1268, %v2030
    %v2533 = vsub.f32 %v1275, %v2034
    %v2534 = vsub.f32 %v1282, %v2038
    %v2535 = vsub.f32 %v1289, %v2042
    %v2536 = vsub.f32 %v1296, %v2046
    %v2537 = vsub.f32 %v1303, %v2050
    %v2538 = vsub.f32 %v1310, %v2054
    %v2539 = vsub.f32 %v1317, %v2058
    %v2540 = vsub.f32 %v1324, %v2062
    %v2541 = vsub.f32 %v1331, %v2066
    %v2542 = vsub.f32 %v1338, %v2070
    %v2543 = vsub.f32 %v1345, %v2074
    %v2544 = vsub.f32 %v1352, %v2078
    %v2545 = vsub.f32 %v1359, %v2082
    %v2546 = vsub.f32 %v1366, %v2086
    %v2547 = vsub.f32 %v1373, %v2093
    %v2548 = vsub.f32 %v1380, %v2097
    %v2549 = vsub.f32 %v1387, %v2101
    %v2550 = vsub.f32 %v1394, %v2105
    %v2551 = vsub.f32 %v1401, %v2109
    %v2552 = vsub.f32 %v1408, %v2113
    %v2553 = vsub.f32 %v1415, %v2117
    %v2554 = vsub.f32 %v1422, %v2121
    %v2555 = vsub.f32 %v1429, %v2125
    %v2556 = vsub.f32 %v1436, %v2129
    %v2557 = vsub.f32 %v1443, %v2133
    %v2558 = vsub.f32 %v1450, %v2137
    %v2559 = vsub.f32 %v1457, %v2141
    %v2560 = vsub.f32 %v1464, %v2145
    %v2561 = vsub.f32 %v1471, %v2149
    %v2562 = vsub.f32 %v1478, %v2153
    %v2563 = vsub.f32 %v1485, %v2160
    %v2564 = vsub.f32 %v1492, %v2164
    %v2565 = vsub.f32 %v1499, %v2168
    %v2566 = vsub.f32 %v1506, %v2172
    %v2567 = vsub.f32 %v1513, %v2176
    %v2568 = vsub.f32 %v1520, %v2180
    %v2569 = vsub.f32 %v1527, %v2184
    %v2570 = vsub.f32 %v1534, %v2188
    %v2571 = vsub.f32 %v1541, %v2192
    %v2572 = vsub.f32 %v1548, %v2196
    %v2573 = vsub.f32 %v1555, %v2200
    %v2574 = vsub.f32 %v1562, %v2204
    %v2575 = vsub.f32 %v1569, %v2208
    %v2576 = vsub.f32 %v1576, %v2212
    %v2577 = vsub.f32 %v1583, %v2216
    %v2578 = vsub.f32 %v1590, %v2220
    %v2579 = vsub.f32 %v1597, %v2227
    %v2580 = vsub.f32 %v1604, %v2231
    %v2581 = vsub.f32 %v1611, %v2235
    %v2582 = vsub.f32 %v1618, %v2239
    %v2583 = vsub.f32 %v1625, %v2243
    %v2584 = vsub.f32 %v1632, %v2247
    %v2585 = vsub.f32 %v1639, %v2251
    %v2586 = vsub.f32 %v1646, %v2255
    %v2587 = vsub.f32 %v1653, %v2259
    %v2588 = vsub.f32 %v1660, %v2263
    %v2589 = vsub.f32 %v1667, %v2267
    %v2590 = vsub.f32 %v1674, %v2271
    %v2591 = vsub.f32 %v1681, %v2275
    %v2592 = vsub.f32 %v1688, %v2279
    %v2593 = vsub.f32 %v1695, %v2283
    %v2594 = vsub.f32 %v1702, %v2287
    %v2595 = vsub.f32 %v1709, %v2294
    %v2596 = vsub.f32 %v1716, %v2298
    %v2597 = vsub.f32 %v1723, %v2302
    %v2598 = vsub.f32 %v1730, %v2306
    %v2599 = vsub.f32 %v1737, %v2310
    %v2600 = vsub.f32 %v1744, %v2314
    %v2601 = vsub.f32 %v1751, %v2318
    %v2602 = vsub.f32 %v1758, %v2322
    %v2603 = vsub.f32 %v1765, %v2326
    %v2604 = vsub.f32 %v1772, %v2330
    %v2605 = vsub.f32 %v1779, %v2334
    %v2606 = vsub.f32 %v1786, %v2338
    %v2607 = vsub.f32 %v1793, %v2342
    %v2608 = vsub.f32 %v1800, %v2346
    %v2609 = vsub.f32 %v1807, %v2350
    %v2610 = vsub.f32 %v1814, %v2354
    %v2611 = vrcp.pop %v1817
    %v2612 = vmul.f32 1.0, %v2611
    %v2613 = vmul.f32 %v2612, %v2612
    %v2614 = vmul.f32 %v2483, %v2483
    %v2615 = vmul.f32 %v2484, %v2484
    %v2616 = vmul.f32 %v2485, %v2485
    %v2617 = vmul.f32 %v2486, %v2486
    %v2618 = vmul.f32 %v2487, %v2487
    %v2619 = vmul.f32 %v2488, %v2488
    %v2620 = vmul.f32 %v2489, %v2489
    %v2621 = vmul.f32 %v2490, %v2490
    %v2622 = vmul.f32 %v2491, %v2491
    %v2623 = vmul.f32 %v2492, %v2492
    %v2624 = vmul.f32 %v2493, %v2493
    %v2625 = vmul.f32 %v2494, %v2494
    %v2626 = vmul.f32 %v2495, %v2495
    %v2627 = vmul.f32 %v2496, %v2496
    %v2628 = vmul.f32 %v2497, %v2497
    %v2629 = vmul.f32 %v2498, %v2498
    %v2630 = vmul.f32 %v2499, %v2499
    %v2631 = vmul.f32 %v2500, %v2500
    %v2632 = vmul.f32 %v2501, %v2501
    %v2633 = vmul.f32 %v2502, %v2502
    %v2634 = vmul.f32 %v2503, %v2503
    %v2635 = vmul.f32 %v2504, %v2504
    %v2636 = vmul.f32 %v2505, %v2505
    %v2637 = vmul.f32 %v2506, %v2506
    %v2638 = vmul.f32 %v2507, %v2507
    %v2639 = vmul.f32 %v2508, %v2508
    %v2640 = vmul.f32 %v2509, %v2509
    %v2641 = vmul.f32 %v2510, %v2510
    %v2642 = vmul.f32 %v2511, %v2511
    %v2643 = vmul.f32 %v2512, %v2512
    %v2644 = vmul.f32 %v2513, %v2513
    %v2645 = vmul.f32 %v2514, %v2514
    %v2646 = vmul.f32 %v2515, %v2515
    %v2647 = vmul.f32 %v2516, %v2516
    %v2648 = vmul.f32 %v2517, %v2517
    %v2649 = vmul.f32 %v2518, %v2518
    %v2650 = vmul.f32 %v2519, %v2519
    %v2651 = vmul.f32 %v2520, %v2520
    %v2652 = vmul.f32 %v2521, %v2521
    %v2653 = vmul.f32 %v2522, %v2522
    %v2654 = vmul.f32 %v2523, %v2523
    %v2655 = vmul.f32 %v2524, %v2524
    %v2656 = vmul.f32 %v2525, %v2525
    %v2657 = vmul.f32 %v2526, %v2526
    %v2658 = vmul.f32 %v2527, %v2527
    %v2659 = vmul.f32 %v2528, %v2528
    %v2660 = vmul.f32 %v2529, %v2529
    %v2661 = vmul.f32 %v2530, %v2530
    %v2662 = vmul.f32 %v2531, %v2531
    %v2663 = vmul.f32 %v2532, %v2532
    %v2664 = vmul.f32 %v2533, %v2533
    %v2665 = vmul.f32 %v2534, %v2534
    %v2666 = vmul.f32 %v2535, %v2535
    %v2667 = vmul.f32 %v2536, %v2536
    %v2668 = vmul.f32 %v2537, %v2537
    %v2669 = vmul.f32 %v2538, %v2538
    %v2670 = vmul.f32 %v2539, %v2539
    %v2671 = vmul.f32 %v2540, %v2540
    %v2672 = vmul.f32 %v2541, %v2541
    %v2673 = vmul.f32 %v2542, %v2542
    %v2674 = vmul.f32 %v2543, %v2543
    %v2675 = vmul.f32 %v2544, %v2544
    %v2676 = vmul.f32 %v2545, %v2545
    %v2677 = vmul.f32 %v2546, %v2546
    %v2678 = vmul.f32 %v2547, %v2547
    %v2679 = vmul.f32 %v2548, %v2548
    %v2680 = vmul.f32 %v2549, %v2549
    %v2681 = vmul.f32 %v2550, %v2550
    %v2682 = vmul.f32 %v2551, %v2551
    %v2683 = vmul.f32 %v2552, %v2552
    %v2684 = vmul.f32 %v2553, %v2553
    %v2685 = vmul.f32 %v2554, %v2554
    %v2686 = vmul.f32 %v2555, %v2555
    %v2687 = vmul.f32 %v2556, %v2556
    %v2688 = vmul.f32 %v2557, %v2557
    %v2689 = vmul.f32 %v2558, %v2558
    %v2690 = vmul.f32 %v2559, %v2559
    %v2691 = vmul.f32 %v2560, %v2560
    %v2692 = vmul.f32 %v2561, %v2561
    %v2693 = vmul.f32 %v2562, %v2562
    %v2694 = vmul.f32 %v2563, %v2563
    %v2695 = vmul.f32 %v2564, %v2564
    %v2696 = vmul.f32 %v2565, %v2565
    %v2697 = vmul.f32 %v2566, %v2566
    %v2698 = vmul.f32 %v2567, %v2567
    %v2699 = vmul.f32 %v2568, %v2568
    %v2700 = vmul.f32 %v2569, %v2569
    %v2701 = vmul.f32 %v2570, %v2570
    %v2702 = vmul.f32 %v2571, %v2571
    %v2703 = vmul.f32 %v2572, %v2572
    %v2704 = vmul.f32 %v2573, %v2573
    %v2705 = vmul.f32 %v2574, %v2574
    %v2706 = vmul.f32 %v2575, %v2575
    %v2707 = vmul.f32 %v2576, %v2576
    %v2708 = vmul.f32 %v2577, %v2577
    %v2709 = vmul.f32 %v2578, %v2578
    %v2710 = vmul.f32 %v2579, %v2579
    %v2711 = vmul.f32 %v2580, %v2580
    %v2712 = vmul.f32 %v2581, %v2581
    %v2713 = vmul.f32 %v2582, %v2582
    %v2714 = vmul.f32 %v2583, %v2583
    %v2715 = vmul.f32 %v2584, %v2584
    %v2716 = vmul.f32 %v2585, %v2585
    %v2717 = vmul.f32 %v2586, %v2586
    %v2718 = vmul.f32 %v2587, %v2587
    %v2719 = vmul.f32 %v2588, %v2588
    %v2720 = vmul.f32 %v2589, %v2589
    %v2721 = vmul.f32 %v2590, %v2590
    %v2722 = vmul.f32 %v2591, %v2591
    %v2723 = vmul.f32 %v2592, %v2592
    %v2724 = vmul.f32 %v2593, %v2593
    %v2725 = vmul.f32 %v2594, %v2594
    %v2726 = vmul.f32 %v2595, %v2595
    %v2727 = vmul.f32 %v2596, %v2596
    %v2728 = vmul.f32 %v2597, %v2597
    %v2729 = vmul.f32 %v2598, %v2598
    %v2730 = vmul.f32 %v2599, %v2599
    %v2731 = vmul.f32 %v2600, %v2600
    %v2732 = vmul.f32 %v2601, %v2601
    %v2733 = vmul.f32 %v2602, %v2602
    %v2734 = vmul.f32 %v2603, %v2603
    %v2735 = vmul.f32 %v2604, %v2604
    %v2736 = vmul.f32 %v2605, %v2605
    %v2737 = vmul.f32 %v2606, %v2606
    %v2738 = vmul.f32 %v2607, %v2607
    %v2739 = vmul.f32 %v2608, %v2608
    %v2740 = vmul.f32 %v2609, %v2609
    %v2741 = vmul.f32 %v2610, %v2610
    %v2742 = vlog2.pop %v1817
    %v2743 = vmul.f32 %v2742, 0.6931472
    %v2744 = vmul.f32 %v2614, 0.5
    %v2745 = vmul.f32 %v2615, 0.5
    %v2746 = vmul.f32 %v2616, 0.5
    %v2747 = vmul.f32 %v2617, 0.5
    %v2748 = vmul.f32 %v2618, 0.5
    %v2749 = vmul.f32 %v2619, 0.5
    %v2750 = vmul.f32 %v2620, 0.5
    %v2751 = vmul.f32 %v2621, 0.5
    %v2752 = vmul.f32 %v2622, 0.5
    %v2753 = vmul.f32 %v2623, 0.5
    %v2754 = vmul.f32 %v2624, 0.5
    %v2755 = vmul.f32 %v2625, 0.5
    %v2756 = vmul.f32 %v2626, 0.5
    %v2757 = vmul.f32 %v2627, 0.5
    %v2758 = vmul.f32 %v2628, 0.5
    %v2759 = vmul.f32 %v2629, 0.5
    %v2760 = vmul.f32 %v2630, 0.5
    %v2761 = vmul.f32 %v2631, 0.5
    %v2762 = vmul.f32 %v2632, 0.5
    %v2763 = vmul.f32 %v2633, 0.5
    %v2764 = vmul.f32 %v2634, 0.5
    %v2765 = vmul.f32 %v2635, 0.5
    %v2766 = vmul.f32 %v2636, 0.5
    %v2767 = vmul.f32 %v2637, 0.5
    %v2768 = vmul.f32 %v2638, 0.5
    %v2769 = vmul.f32 %v2639, 0.5
    %v2770 = vmul.f32 %v2640, 0.5
    %v2771 = vmul.f32 %v2641, 0.5
    %v2772 = vmul.f32 %v2642, 0.5
    %v2773 = vmul.f32 %v2643, 0.5
    %v2774 = vmul.f32 %v2644, 0.5
    %v2775 = vmul.f32 %v2645, 0.5
    %v2776 = vmul.f32 %v2646, 0.5
    %v2777 = vmul.f32 %v2647, 0.5
    %v2778 = vmul.f32 %v2648, 0.5
    %v2779 = vmul.f32 %v2649, 0.5
    %v2780 = vmul.f32 %v2650, 0.5
    %v2781 = vmul.f32 %v2651, 0.5
    %v2782 = vmul.f32 %v2652, 0.5
    %v2783 = vmul.f32 %v2653, 0.5
    %v2784 = vmul.f32 %v2654, 0.5
    %v2785 = vmul.f32 %v2655, 0.5
    %v2786 = vmul.f32 %v2656, 0.5
    %v2787 = vmul.f32 %v2657, 0.5
    %v2788 = vmul.f32 %v2658, 0.5
    %v2789 = vmul.f32 %v2659, 0.5
    %v2790 = vmul.f32 %v2660, 0.5
    %v2791 = vmul.f32 %v2661, 0.5
    %v2792 = vmul.f32 %v2662, 0.5
    %v2793 = vmul.f32 %v2663, 0.5
    %v2794 = vmul.f32 %v2664, 0.5
    %v2795 = vmul.f32 %v2665, 0.5
    %v2796 = vmul.f32 %v2666, 0.5
    %v2797 = vmul.f32 %v2667, 0.5
    %v2798 = vmul.f32 %v2668, 0.5
    %v2799 = vmul.f32 %v2669, 0.5
    %v2800 = vmul.f32 %v2670, 0.5
    %v2801 = vmul.f32 %v2671, 0.5
    %v2802 = vmul.f32 %v2672, 0.5
    %v2803 = vmul.f32 %v2673, 0.5
    %v2804 = vmul.f32 %v2674, 0.5
    %v2805 = vmul.f32 %v2675, 0.5
    %v2806 = vmul.f32 %v2676, 0.5
    %v2807 = vmul.f32 %v2677, 0.5
    %v2808 = vmul.f32 %v2678, 0.5
    %v2809 = vmul.f32 %v2679, 0.5
    %v2810 = vmul.f32 %v2680, 0.5
    %v2811 = vmul.f32 %v2681, 0.5
    %v2812 = vmul.f32 %v2682, 0.5
    %v2813 = vmul.f32 %v2683, 0.5
    %v2814 = vmul.f32 %v2684, 0.5
    %v2815 = vmul.f32 %v2685, 0.5
    %v2816 = vmul.f32 %v2686, 0.5
    %v2817 = vmul.f32 %v2687, 0.5
    %v2818 = vmul.f32 %v2688, 0.5
    %v2819 = vmul.f32 %v2689, 0.5
    %v2820 = vmul.f32 %v2690, 0.5
    %v2821 = vmul.f32 %v2691, 0.5
    %v2822 = vmul.f32 %v2692, 0.5
    %v2823 = vmul.f32 %v2693, 0.5
    %v2824 = vmul.f32 %v2694, 0.5
    %v2825 = vmul.f32 %v2695, 0.5
    %v2826 = vmul.f32 %v2696, 0.5
    %v2827 = vmul.f32 %v2697, 0.5
    %v2828 = vmul.f32 %v2698, 0.5
    %v2829 = vmul.f32 %v2699, 0.5
    %v2830 = vmul.f32 %v2700, 0.5
    %v2831 = vmul.f32 %v2701, 0.5
    %v2832 = vmul.f32 %v2702, 0.5
    %v2833 = vmul.f32 %v2703, 0.5
    %v2834 = vmul.f32 %v2704, 0.5
    %v2835 = vmul.f32 %v2705, 0.5
    %v2836 = vmul.f32 %v2706, 0.5
    %v2837 = vmul.f32 %v2707, 0.5
    %v2838 = vmul.f32 %v2708, 0.5
    %v2839 = vmul.f32 %v2709, 0.5
    %v2840 = vmul.f32 %v2710, 0.5
    %v2841 = vmul.f32 %v2711, 0.5
    %v2842 = vmul.f32 %v2712, 0.5
    %v2843 = vmul.f32 %v2713, 0.5
    %v2844 = vmul.f32 %v2714, 0.5
    %v2845 = vmul.f32 %v2715, 0.5
    %v2846 = vmul.f32 %v2716, 0.5
    %v2847 = vmul.f32 %v2717, 0.5
    %v2848 = vmul.f32 %v2718, 0.5
    %v2849 = vmul.f32 %v2719, 0.5
    %v2850 = vmul.f32 %v2720, 0.5
    %v2851 = vmul.f32 %v2721, 0.5
    %v2852 = vmul.f32 %v2722, 0.5
    %v2853 = vmul.f32 %v2723, 0.5
    %v2854 = vmul.f32 %v2724, 0.5
    %v2855 = vmul.f32 %v2725, 0.5
    %v2856 = vmul.f32 %v2726, 0.5
    %v2857 = vmul.f32 %v2727, 0.5
    %v2858 = vmul.f32 %v2728, 0.5
    %v2859 = vmul.f32 %v2729, 0.5
    %v2860 = vmul.f32 %v2730, 0.5
    %v2861 = vmul.f32 %v2731, 0.5
    %v2862 = vmul.f32 %v2732, 0.5
    %v2863 = vmul.f32 %v2733, 0.5
    %v2864 = vmul.f32 %v2734, 0.5
    %v2865 = vmul.f32 %v2735, 0.5
    %v2866 = vmul.f32 %v2736, 0.5
    %v2867 = vmul.f32 %v2737, 0.5
    %v2868 = vmul.f32 %v2738, 0.5
    %v2869 = vmul.f32 %v2739, 0.5
    %v2870 = vmul.f32 %v2740, 0.5
    %v2871 = vmul.f32 %v2741, 0.5
    %v2873 = vlaneseq
    %v2874 = vshrl.u32 %v2873, 7
    %v2875 = vsub.s32 0, %v2874
    %v2876 = vrot.slane %v2613, %v2875
    %2878 = vbcast.lane.b32.xlu0 %v2876, 256
    %v2879 = vpop.permute.xlu0 %2878
    %s2881 = sor.u32 256, 8
    %2882 = vbcast.lane.b32.xlu0 %v2876, %s2881
    %v2883 = vpop.permute.xlu0 %2882
    %s2885 = sor.u32 256, 16
    %2886 = vbcast.lane.b32.xlu0 %v2876, %s2885
    %v2887 = vpop.permute.xlu0 %2886
    %s2889 = sor.u32 256, 24
    %2890 = vbcast.lane.b32.xlu0 %v2876, %s2889
    %v2891 = vpop.permute.xlu0 %2890
    %s2893 = sor.u32 256, 32
    %2894 = vbcast.lane.b32.xlu0 %v2876, %s2893
    %v2895 = vpop.permute.xlu0 %2894
    %s2897 = sor.u32 256, 40
    %2898 = vbcast.lane.b32.xlu0 %v2876, %s2897
    %v2899 = vpop.permute.xlu0 %2898
    %s2901 = sor.u32 256, 48
    %2902 = vbcast.lane.b32.xlu0 %v2876, %s2901
    %v2903 = vpop.permute.xlu0 %2902
    %s2905 = sor.u32 256, 56
    %2906 = vbcast.lane.b32.xlu0 %v2876, %s2905
    %v2907 = vpop.permute.xlu0 %2906
    %s2909 = sor.u32 256, 64
    %2910 = vbcast.lane.b32.xlu0 %v2876, %s2909
    %v2911 = vpop.permute.xlu0 %2910
    %s2913 = sor.u32 256, 72
    %2914 = vbcast.lane.b32.xlu0 %v2876, %s2913
    %v2915 = vpop.permute.xlu0 %2914
    %s2917 = sor.u32 256, 80
    %2918 = vbcast.lane.b32.xlu0 %v2876, %s2917
    %v2919 = vpop.permute.xlu0 %2918
    %s2921 = sor.u32 256, 88
    %2922 = vbcast.lane.b32.xlu0 %v2876, %s2921
    %v2923 = vpop.permute.xlu0 %2922
    %s2925 = sor.u32 256, 96
    %2926 = vbcast.lane.b32.xlu0 %v2876, %s2925
    %v2927 = vpop.permute.xlu0 %2926
    %s2929 = sor.u32 256, 104
    %2930 = vbcast.lane.b32.xlu0 %v2876, %s2929
    %v2931 = vpop.permute.xlu0 %2930
    %s2933 = sor.u32 256, 112
    %2934 = vbcast.lane.b32.xlu0 %v2876, %s2933
    %v2935 = vpop.permute.xlu0 %2934
    %s2937 = sor.u32 256, 120
    %2938 = vbcast.lane.b32.xlu0 %v2876, %s2937
    %v2939 = vpop.permute.xlu0 %2938
    %v2940 = vlaneseq
    %v2941 = vshrl.u32 %v2940, 7
    %v2942 = vsub.s32 1, %v2941
    %v2943 = vrot.slane %v2613, %v2942
    %2945 = vbcast.lane.b32.xlu0 %v2943, 256
    %v2946 = vpop.permute.xlu0 %2945
    %s2948 = sor.u32 256, 8
    %2949 = vbcast.lane.b32.xlu0 %v2943, %s2948
    %v2950 = vpop.permute.xlu0 %2949
    %s2952 = sor.u32 256, 16
    %2953 = vbcast.lane.b32.xlu0 %v2943, %s2952
    %v2954 = vpop.permute.xlu0 %2953
    %s2956 = sor.u32 256, 24
    %2957 = vbcast.lane.b32.xlu0 %v2943, %s2956
    %v2958 = vpop.permute.xlu0 %2957
    %s2960 = sor.u32 256, 32
    %2961 = vbcast.lane.b32.xlu0 %v2943, %s2960
    %v2962 = vpop.permute.xlu0 %2961
    %s2964 = sor.u32 256, 40
    %2965 = vbcast.lane.b32.xlu0 %v2943, %s2964
    %v2966 = vpop.permute.xlu0 %2965
    %s2968 = sor.u32 256, 48
    %2969 = vbcast.lane.b32.xlu0 %v2943, %s2968
    %v2970 = vpop.permute.xlu0 %2969
    %s2972 = sor.u32 256, 56
    %2973 = vbcast.lane.b32.xlu0 %v2943, %s2972
    %v2974 = vpop.permute.xlu0 %2973
    %s2976 = sor.u32 256, 64
    %2977 = vbcast.lane.b32.xlu0 %v2943, %s2976
    %v2978 = vpop.permute.xlu0 %2977
    %s2980 = sor.u32 256, 72
    %2981 = vbcast.lane.b32.xlu0 %v2943, %s2980
    %v2982 = vpop.permute.xlu0 %2981
    %s2984 = sor.u32 256, 80
    %2985 = vbcast.lane.b32.xlu0 %v2943, %s2984
    %v2986 = vpop.permute.xlu0 %2985
    %s2988 = sor.u32 256, 88
    %2989 = vbcast.lane.b32.xlu0 %v2943, %s2988
    %v2990 = vpop.permute.xlu0 %2989
    %s2992 = sor.u32 256, 96
    %2993 = vbcast.lane.b32.xlu0 %v2943, %s2992
    %v2994 = vpop.permute.xlu0 %2993
    %s2996 = sor.u32 256, 104
    %2997 = vbcast.lane.b32.xlu0 %v2943, %s2996
    %v2998 = vpop.permute.xlu0 %2997
    %s3000 = sor.u32 256, 112
    %3001 = vbcast.lane.b32.xlu0 %v2943, %s3000
    %v3002 = vpop.permute.xlu0 %3001
    %s3004 = sor.u32 256, 120
    %3005 = vbcast.lane.b32.xlu0 %v2943, %s3004
    %v3006 = vpop.permute.xlu0 %3005
    %v3007 = vlaneseq
    %v3008 = vshrl.u32 %v3007, 7
    %v3009 = vsub.s32 2, %v3008
    %v3010 = vrot.slane %v2613, %v3009
    %3012 = vbcast.lane.b32.xlu0 %v3010, 256
    %v3013 = vpop.permute.xlu0 %3012
    %s3015 = sor.u32 256, 8
    %3016 = vbcast.lane.b32.xlu0 %v3010, %s3015
    %v3017 = vpop.permute.xlu0 %3016
    %s3019 = sor.u32 256, 16
    %3020 = vbcast.lane.b32.xlu0 %v3010, %s3019
    %v3021 = vpop.permute.xlu0 %3020
    %s3023 = sor.u32 256, 24
    %3024 = vbcast.lane.b32.xlu0 %v3010, %s3023
    %v3025 = vpop.permute.xlu0 %3024
    %s3027 = sor.u32 256, 32
    %3028 = vbcast.lane.b32.xlu0 %v3010, %s3027
    %v3029 = vpop.permute.xlu0 %3028
    %s3031 = sor.u32 256, 40
    %3032 = vbcast.lane.b32.xlu0 %v3010, %s3031
    %v3033 = vpop.permute.xlu0 %3032
    %s3035 = sor.u32 256, 48
    %3036 = vbcast.lane.b32.xlu0 %v3010, %s3035
    %v3037 = vpop.permute.xlu0 %3036
    %s3039 = sor.u32 256, 56
    %3040 = vbcast.lane.b32.xlu0 %v3010, %s3039
    %v3041 = vpop.permute.xlu0 %3040
    %s3043 = sor.u32 256, 64
    %3044 = vbcast.lane.b32.xlu0 %v3010, %s3043
    %v3045 = vpop.permute.xlu0 %3044
    %s3047 = sor.u32 256, 72
    %3048 = vbcast.lane.b32.xlu0 %v3010, %s3047
    %v3049 = vpop.permute.xlu0 %3048
    %s3051 = sor.u32 256, 80
    %3052 = vbcast.lane.b32.xlu0 %v3010, %s3051
    %v3053 = vpop.permute.xlu0 %3052
    %s3055 = sor.u32 256, 88
    %3056 = vbcast.lane.b32.xlu0 %v3010, %s3055
    %v3057 = vpop.permute.xlu0 %3056
    %s3059 = sor.u32 256, 96
    %3060 = vbcast.lane.b32.xlu0 %v3010, %s3059
    %v3061 = vpop.permute.xlu0 %3060
    %s3063 = sor.u32 256, 104
    %3064 = vbcast.lane.b32.xlu0 %v3010, %s3063
    %v3065 = vpop.permute.xlu0 %3064
    %s3067 = sor.u32 256, 112
    %3068 = vbcast.lane.b32.xlu0 %v3010, %s3067
    %v3069 = vpop.permute.xlu0 %3068
    %s3071 = sor.u32 256, 120
    %3072 = vbcast.lane.b32.xlu0 %v3010, %s3071
    %v3073 = vpop.permute.xlu0 %3072
    %v3074 = vlaneseq
    %v3075 = vshrl.u32 %v3074, 7
    %v3076 = vsub.s32 3, %v3075
    %v3077 = vrot.slane %v2613, %v3076
    %3079 = vbcast.lane.b32.xlu0 %v3077, 256
    %v3080 = vpop.permute.xlu0 %3079
    %s3082 = sor.u32 256, 8
    %3083 = vbcast.lane.b32.xlu0 %v3077, %s3082
    %v3084 = vpop.permute.xlu0 %3083
    %s3086 = sor.u32 256, 16
    %3087 = vbcast.lane.b32.xlu0 %v3077, %s3086
    %v3088 = vpop.permute.xlu0 %3087
    %s3090 = sor.u32 256, 24
    %3091 = vbcast.lane.b32.xlu0 %v3077, %s3090
    %v3092 = vpop.permute.xlu0 %3091
    %s3094 = sor.u32 256, 32
    %3095 = vbcast.lane.b32.xlu0 %v3077, %s3094
    %v3096 = vpop.permute.xlu0 %3095
    %s3098 = sor.u32 256, 40
    %3099 = vbcast.lane.b32.xlu0 %v3077, %s3098
    %v3100 = vpop.permute.xlu0 %3099
    %s3102 = sor.u32 256, 48
    %3103 = vbcast.lane.b32.xlu0 %v3077, %s3102
    %v3104 = vpop.permute.xlu0 %3103
    %s3106 = sor.u32 256, 56
    %3107 = vbcast.lane.b32.xlu0 %v3077, %s3106
    %v3108 = vpop.permute.xlu0 %3107
    %s3110 = sor.u32 256, 64
    %3111 = vbcast.lane.b32.xlu0 %v3077, %s3110
    %v3112 = vpop.permute.xlu0 %3111
    %s3114 = sor.u32 256, 72
    %3115 = vbcast.lane.b32.xlu0 %v3077, %s3114
    %v3116 = vpop.permute.xlu0 %3115
    %s3118 = sor.u32 256, 80
    %3119 = vbcast.lane.b32.xlu0 %v3077, %s3118
    %v3120 = vpop.permute.xlu0 %3119
    %s3122 = sor.u32 256, 88
    %3123 = vbcast.lane.b32.xlu0 %v3077, %s3122
    %v3124 = vpop.permute.xlu0 %3123
    %s3126 = sor.u32 256, 96
    %3127 = vbcast.lane.b32.xlu0 %v3077, %s3126
    %v3128 = vpop.permute.xlu0 %3127
    %s3130 = sor.u32 256, 104
    %3131 = vbcast.lane.b32.xlu0 %v3077, %s3130
    %v3132 = vpop.permute.xlu0 %3131
    %s3134 = sor.u32 256, 112
    %3135 = vbcast.lane.b32.xlu0 %v3077, %s3134
    %v3136 = vpop.permute.xlu0 %3135
    %s3138 = sor.u32 256, 120
    %3139 = vbcast.lane.b32.xlu0 %v3077, %s3138
    %v3140 = vpop.permute.xlu0 %3139
    %v3141 = vlaneseq
    %v3142 = vshrl.u32 %v3141, 7
    %v3143 = vsub.s32 4, %v3142
    %v3144 = vrot.slane %v2613, %v3143
    %3146 = vbcast.lane.b32.xlu0 %v3144, 256
    %v3147 = vpop.permute.xlu0 %3146
    %s3149 = sor.u32 256, 8
    %3150 = vbcast.lane.b32.xlu0 %v3144, %s3149
    %v3151 = vpop.permute.xlu0 %3150
    %s3153 = sor.u32 256, 16
    %3154 = vbcast.lane.b32.xlu0 %v3144, %s3153
    %v3155 = vpop.permute.xlu0 %3154
    %s3157 = sor.u32 256, 24
    %3158 = vbcast.lane.b32.xlu0 %v3144, %s3157
    %v3159 = vpop.permute.xlu0 %3158
    %s3161 = sor.u32 256, 32
    %3162 = vbcast.lane.b32.xlu0 %v3144, %s3161
    %v3163 = vpop.permute.xlu0 %3162
    %s3165 = sor.u32 256, 40
    %3166 = vbcast.lane.b32.xlu0 %v3144, %s3165
    %v3167 = vpop.permute.xlu0 %3166
    %s3169 = sor.u32 256, 48
    %3170 = vbcast.lane.b32.xlu0 %v3144, %s3169
    %v3171 = vpop.permute.xlu0 %3170
    %s3173 = sor.u32 256, 56
    %3174 = vbcast.lane.b32.xlu0 %v3144, %s3173
    %v3175 = vpop.permute.xlu0 %3174
    %s3177 = sor.u32 256, 64
    %3178 = vbcast.lane.b32.xlu0 %v3144, %s3177
    %v3179 = vpop.permute.xlu0 %3178
    %s3181 = sor.u32 256, 72
    %3182 = vbcast.lane.b32.xlu0 %v3144, %s3181
    %v3183 = vpop.permute.xlu0 %3182
    %s3185 = sor.u32 256, 80
    %3186 = vbcast.lane.b32.xlu0 %v3144, %s3185
    %v3187 = vpop.permute.xlu0 %3186
    %s3189 = sor.u32 256, 88
    %3190 = vbcast.lane.b32.xlu0 %v3144, %s3189
    %v3191 = vpop.permute.xlu0 %3190
    %s3193 = sor.u32 256, 96
    %3194 = vbcast.lane.b32.xlu0 %v3144, %s3193
    %v3195 = vpop.permute.xlu0 %3194
    %s3197 = sor.u32 256, 104
    %3198 = vbcast.lane.b32.xlu0 %v3144, %s3197
    %v3199 = vpop.permute.xlu0 %3198
    %s3201 = sor.u32 256, 112
    %3202 = vbcast.lane.b32.xlu0 %v3144, %s3201
    %v3203 = vpop.permute.xlu0 %3202
    %s3205 = sor.u32 256, 120
    %3206 = vbcast.lane.b32.xlu0 %v3144, %s3205
    %v3207 = vpop.permute.xlu0 %3206
    %v3208 = vlaneseq
    %v3209 = vshrl.u32 %v3208, 7
    %v3210 = vsub.s32 5, %v3209
    %v3211 = vrot.slane %v2613, %v3210
    %3213 = vbcast.lane.b32.xlu0 %v3211, 256
    %v3214 = vpop.permute.xlu0 %3213
    %s3216 = sor.u32 256, 8
    %3217 = vbcast.lane.b32.xlu0 %v3211, %s3216
    %v3218 = vpop.permute.xlu0 %3217
    %s3220 = sor.u32 256, 16
    %3221 = vbcast.lane.b32.xlu0 %v3211, %s3220
    %v3222 = vpop.permute.xlu0 %3221
    %s3224 = sor.u32 256, 24
    %3225 = vbcast.lane.b32.xlu0 %v3211, %s3224
    %v3226 = vpop.permute.xlu0 %3225
    %s3228 = sor.u32 256, 32
    %3229 = vbcast.lane.b32.xlu0 %v3211, %s3228
    %v3230 = vpop.permute.xlu0 %3229
    %s3232 = sor.u32 256, 40
    %3233 = vbcast.lane.b32.xlu0 %v3211, %s3232
    %v3234 = vpop.permute.xlu0 %3233
    %s3236 = sor.u32 256, 48
    %3237 = vbcast.lane.b32.xlu0 %v3211, %s3236
    %v3238 = vpop.permute.xlu0 %3237
    %s3240 = sor.u32 256, 56
    %3241 = vbcast.lane.b32.xlu0 %v3211, %s3240
    %v3242 = vpop.permute.xlu0 %3241
    %s3244 = sor.u32 256, 64
    %3245 = vbcast.lane.b32.xlu0 %v3211, %s3244
    %v3246 = vpop.permute.xlu0 %3245
    %s3248 = sor.u32 256, 72
    %3249 = vbcast.lane.b32.xlu0 %v3211, %s3248
    %v3250 = vpop.permute.xlu0 %3249
    %s3252 = sor.u32 256, 80
    %3253 = vbcast.lane.b32.xlu0 %v3211, %s3252
    %v3254 = vpop.permute.xlu0 %3253
    %s3256 = sor.u32 256, 88
    %3257 = vbcast.lane.b32.xlu0 %v3211, %s3256
    %v3258 = vpop.permute.xlu0 %3257
    %s3260 = sor.u32 256, 96
    %3261 = vbcast.lane.b32.xlu0 %v3211, %s3260
    %v3262 = vpop.permute.xlu0 %3261
    %s3264 = sor.u32 256, 104
    %3265 = vbcast.lane.b32.xlu0 %v3211, %s3264
    %v3266 = vpop.permute.xlu0 %3265
    %s3268 = sor.u32 256, 112
    %3269 = vbcast.lane.b32.xlu0 %v3211, %s3268
    %v3270 = vpop.permute.xlu0 %3269
    %s3272 = sor.u32 256, 120
    %3273 = vbcast.lane.b32.xlu0 %v3211, %s3272
    %v3274 = vpop.permute.xlu0 %3273
    %v3275 = vlaneseq
    %v3276 = vshrl.u32 %v3275, 7
    %v3277 = vsub.s32 6, %v3276
    %v3278 = vrot.slane %v2613, %v3277
    %3280 = vbcast.lane.b32.xlu0 %v3278, 256
    %v3281 = vpop.permute.xlu0 %3280
    %s3283 = sor.u32 256, 8
    %3284 = vbcast.lane.b32.xlu0 %v3278, %s3283
    %v3285 = vpop.permute.xlu0 %3284
    %s3287 = sor.u32 256, 16
    %3288 = vbcast.lane.b32.xlu0 %v3278, %s3287
    %v3289 = vpop.permute.xlu0 %3288
    %s3291 = sor.u32 256, 24
    %3292 = vbcast.lane.b32.xlu0 %v3278, %s3291
    %v3293 = vpop.permute.xlu0 %3292
    %s3295 = sor.u32 256, 32
    %3296 = vbcast.lane.b32.xlu0 %v3278, %s3295
    %v3297 = vpop.permute.xlu0 %3296
    %s3299 = sor.u32 256, 40
    %3300 = vbcast.lane.b32.xlu0 %v3278, %s3299
    %v3301 = vpop.permute.xlu0 %3300
    %s3303 = sor.u32 256, 48
    %3304 = vbcast.lane.b32.xlu0 %v3278, %s3303
    %v3305 = vpop.permute.xlu0 %3304
    %s3307 = sor.u32 256, 56
    %3308 = vbcast.lane.b32.xlu0 %v3278, %s3307
    %v3309 = vpop.permute.xlu0 %3308
    %s3311 = sor.u32 256, 64
    %3312 = vbcast.lane.b32.xlu0 %v3278, %s3311
    %v3313 = vpop.permute.xlu0 %3312
    %s3315 = sor.u32 256, 72
    %3316 = vbcast.lane.b32.xlu0 %v3278, %s3315
    %v3317 = vpop.permute.xlu0 %3316
    %s3319 = sor.u32 256, 80
    %3320 = vbcast.lane.b32.xlu0 %v3278, %s3319
    %v3321 = vpop.permute.xlu0 %3320
    %s3323 = sor.u32 256, 88
    %3324 = vbcast.lane.b32.xlu0 %v3278, %s3323
    %v3325 = vpop.permute.xlu0 %3324
    %s3327 = sor.u32 256, 96
    %3328 = vbcast.lane.b32.xlu0 %v3278, %s3327
    %v3329 = vpop.permute.xlu0 %3328
    %s3331 = sor.u32 256, 104
    %3332 = vbcast.lane.b32.xlu0 %v3278, %s3331
    %v3333 = vpop.permute.xlu0 %3332
    %s3335 = sor.u32 256, 112
    %3336 = vbcast.lane.b32.xlu0 %v3278, %s3335
    %v3337 = vpop.permute.xlu0 %3336
    %s3339 = sor.u32 256, 120
    %3340 = vbcast.lane.b32.xlu0 %v3278, %s3339
    %v3341 = vpop.permute.xlu0 %3340
    %v3342 = vlaneseq
    %v3343 = vshrl.u32 %v3342, 7
    %v3344 = vsub.s32 7, %v3343
    %v3345 = vrot.slane %v2613, %v3344
    %3347 = vbcast.lane.b32.xlu0 %v3345, 256
    %v3348 = vpop.permute.xlu0 %3347
    %s3350 = sor.u32 256, 8
    %3351 = vbcast.lane.b32.xlu0 %v3345, %s3350
    %v3352 = vpop.permute.xlu0 %3351
    %s3354 = sor.u32 256, 16
    %3355 = vbcast.lane.b32.xlu0 %v3345, %s3354
    %v3356 = vpop.permute.xlu0 %3355
    %s3358 = sor.u32 256, 24
    %3359 = vbcast.lane.b32.xlu0 %v3345, %s3358
    %v3360 = vpop.permute.xlu0 %3359
    %s3362 = sor.u32 256, 32
    %3363 = vbcast.lane.b32.xlu0 %v3345, %s3362
    %v3364 = vpop.permute.xlu0 %3363
    %s3366 = sor.u32 256, 40
    %3367 = vbcast.lane.b32.xlu0 %v3345, %s3366
    %v3368 = vpop.permute.xlu0 %3367
    %s3370 = sor.u32 256, 48
    %3371 = vbcast.lane.b32.xlu0 %v3345, %s3370
    %v3372 = vpop.permute.xlu0 %3371
    %s3374 = sor.u32 256, 56
    %3375 = vbcast.lane.b32.xlu0 %v3345, %s3374
    %v3376 = vpop.permute.xlu0 %3375
    %s3378 = sor.u32 256, 64
    %3379 = vbcast.lane.b32.xlu0 %v3345, %s3378
    %v3380 = vpop.permute.xlu0 %3379
    %s3382 = sor.u32 256, 72
    %3383 = vbcast.lane.b32.xlu0 %v3345, %s3382
    %v3384 = vpop.permute.xlu0 %3383
    %s3386 = sor.u32 256, 80
    %3387 = vbcast.lane.b32.xlu0 %v3345, %s3386
    %v3388 = vpop.permute.xlu0 %3387
    %s3390 = sor.u32 256, 88
    %3391 = vbcast.lane.b32.xlu0 %v3345, %s3390
    %v3392 = vpop.permute.xlu0 %3391
    %s3394 = sor.u32 256, 96
    %3395 = vbcast.lane.b32.xlu0 %v3345, %s3394
    %v3396 = vpop.permute.xlu0 %3395
    %s3398 = sor.u32 256, 104
    %3399 = vbcast.lane.b32.xlu0 %v3345, %s3398
    %v3400 = vpop.permute.xlu0 %3399
    %s3402 = sor.u32 256, 112
    %3403 = vbcast.lane.b32.xlu0 %v3345, %s3402
    %v3404 = vpop.permute.xlu0 %3403
    %s3406 = sor.u32 256, 120
    %3407 = vbcast.lane.b32.xlu0 %v3345, %s3406
    %v3408 = vpop.permute.xlu0 %3407
    %v3537 = vmul.f32 %v2744, %v2879
    %v3538 = vmul.f32 %v2745, %v2883
    %v3539 = vmul.f32 %v2746, %v2887
    %v3540 = vmul.f32 %v2747, %v2891
    %v3541 = vmul.f32 %v2748, %v2895
    %v3542 = vmul.f32 %v2749, %v2899
    %v3543 = vmul.f32 %v2750, %v2903
    %v3544 = vmul.f32 %v2751, %v2907
    %v3545 = vmul.f32 %v2752, %v2911
    %v3546 = vmul.f32 %v2753, %v2915
    %v3547 = vmul.f32 %v2754, %v2919
    %v3548 = vmul.f32 %v2755, %v2923
    %v3549 = vmul.f32 %v2756, %v2927
    %v3550 = vmul.f32 %v2757, %v2931
    %v3551 = vmul.f32 %v2758, %v2935
    %v3552 = vmul.f32 %v2759, %v2939
    %v3553 = vmul.f32 %v2760, %v2946
    %v3554 = vmul.f32 %v2761, %v2950
    %v3555 = vmul.f32 %v2762, %v2954
    %v3556 = vmul.f32 %v2763, %v2958
    %v3557 = vmul.f32 %v2764, %v2962
    %v3558 = vmul.f32 %v2765, %v2966
    %v3559 = vmul.f32 %v2766, %v2970
    %v3560 = vmul.f32 %v2767, %v2974
    %v3561 = vmul.f32 %v2768, %v2978
    %v3562 = vmul.f32 %v2769, %v2982
    %v3563 = vmul.f32 %v2770, %v2986
    %v3564 = vmul.f32 %v2771, %v2990
    %v3565 = vmul.f32 %v2772, %v2994
    %v3566 = vmul.f32 %v2773, %v2998
    %v3567 = vmul.f32 %v2774, %v3002
    %v3568 = vmul.f32 %v2775, %v3006
    %v3569 = vmul.f32 %v2776, %v3013
    %v3570 = vmul.f32 %v2777, %v3017
    %v3571 = vmul.f32 %v2778, %v3021
    %v3572 = vmul.f32 %v2779, %v3025
    %v3573 = vmul.f32 %v2780, %v3029
    %v3574 = vmul.f32 %v2781, %v3033
    %v3575 = vmul.f32 %v2782, %v3037
    %v3576 = vmul.f32 %v2783, %v3041
    %v3577 = vmul.f32 %v2784, %v3045
    %v3578 = vmul.f32 %v2785, %v3049
    %v3579 = vmul.f32 %v2786, %v3053
    %v3580 = vmul.f32 %v2787, %v3057
    %v3581 = vmul.f32 %v2788, %v3061
    %v3582 = vmul.f32 %v2789, %v3065
    %v3583 = vmul.f32 %v2790, %v3069
    %v3584 = vmul.f32 %v2791, %v3073
    %v3585 = vmul.f32 %v2792, %v3080
    %v3586 = vmul.f32 %v2793, %v3084
    %v3587 = vmul.f32 %v2794, %v3088
    %v3588 = vmul.f32 %v2795, %v3092
    %v3589 = vmul.f32 %v2796, %v3096
    %v3590 = vmul.f32 %v2797, %v3100
    %v3591 = vmul.f32 %v2798, %v3104
    %v3592 = vmul.f32 %v2799, %v3108
    %v3593 = vmul.f32 %v2800, %v3112
    %v3594 = vmul.f32 %v2801, %v3116
    %v3595 = vmul.f32 %v2802, %v3120
    %v3596 = vmul.f32 %v2803, %v3124
    %v3597 = vmul.f32 %v2804, %v3128
    %v3598 = vmul.f32 %v2805, %v3132
    %v3599 = vmul.f32 %v2806, %v3136
    %v3600 = vmul.f32 %v2807, %v3140
    %v3601 = vmul.f32 %v2808, %v3147
    %v3602 = vmul.f32 %v2809, %v3151
    %v3603 = vmul.f32 %v2810, %v3155
    %v3604 = vmul.f32 %v2811, %v3159
    %v3605 = vmul.f32 %v2812, %v3163
    %v3606 = vmul.f32 %v2813, %v3167
    %v3607 = vmul.f32 %v2814, %v3171
    %v3608 = vmul.f32 %v2815, %v3175
    %v3609 = vmul.f32 %v2816, %v3179
    %v3610 = vmul.f32 %v2817, %v3183
    %v3611 = vmul.f32 %v2818, %v3187
    %v3612 = vmul.f32 %v2819, %v3191
    %v3613 = vmul.f32 %v2820, %v3195
    %v3614 = vmul.f32 %v2821, %v3199
    %v3615 = vmul.f32 %v2822, %v3203
    %v3616 = vmul.f32 %v2823, %v3207
    %v3617 = vmul.f32 %v2824, %v3214
    %v3618 = vmul.f32 %v2825, %v3218
    %v3619 = vmul.f32 %v2826, %v3222
    %v3620 = vmul.f32 %v2827, %v3226
    %v3621 = vmul.f32 %v2828, %v3230
    %v3622 = vmul.f32 %v2829, %v3234
    %v3623 = vmul.f32 %v2830, %v3238
    %v3624 = vmul.f32 %v2831, %v3242
    %v3625 = vmul.f32 %v2832, %v3246
    %v3626 = vmul.f32 %v2833, %v3250
    %v3627 = vmul.f32 %v2834, %v3254
    %v3628 = vmul.f32 %v2835, %v3258
    %v3629 = vmul.f32 %v2836, %v3262
    %v3630 = vmul.f32 %v2837, %v3266
    %v3631 = vmul.f32 %v2838, %v3270
    %v3632 = vmul.f32 %v2839, %v3274
    %v3633 = vmul.f32 %v2840, %v3281
    %v3634 = vmul.f32 %v2841, %v3285
    %v3635 = vmul.f32 %v2842, %v3289
    %v3636 = vmul.f32 %v2843, %v3293
    %v3637 = vmul.f32 %v2844, %v3297
    %v3638 = vmul.f32 %v2845, %v3301
    %v3639 = vmul.f32 %v2846, %v3305
    %v3640 = vmul.f32 %v2847, %v3309
    %v3641 = vmul.f32 %v2848, %v3313
    %v3642 = vmul.f32 %v2849, %v3317
    %v3643 = vmul.f32 %v2850, %v3321
    %v3644 = vmul.f32 %v2851, %v3325
    %v3645 = vmul.f32 %v2852, %v3329
    %v3646 = vmul.f32 %v2853, %v3333
    %v3647 = vmul.f32 %v2854, %v3337
    %v3648 = vmul.f32 %v2855, %v3341
    %v3649 = vmul.f32 %v2856, %v3348
    %v3650 = vmul.f32 %v2857, %v3352
    %v3651 = vmul.f32 %v2858, %v3356
    %v3652 = vmul.f32 %v2859, %v3360
    %v3653 = vmul.f32 %v2860, %v3364
    %v3654 = vmul.f32 %v2861, %v3368
    %v3655 = vmul.f32 %v2862, %v3372
    %v3656 = vmul.f32 %v2863, %v3376
    %v3657 = vmul.f32 %v2864, %v3380
    %v3658 = vmul.f32 %v2865, %v3384
    %v3659 = vmul.f32 %v2866, %v3388
    %v3660 = vmul.f32 %v2867, %v3392
    %v3661 = vmul.f32 %v2868, %v3396
    %v3662 = vmul.f32 %v2869, %v3400
    %v3663 = vmul.f32 %v2870, %v3404
    %v3664 = vmul.f32 %v2871, %v3408
    %3793 = vset.pattern.permute.xlu0 0
    %3794 = vperm.xlu0 %3793, %v3537
    %v3795 = vpop.permute.xlu0 %3794
    %3796 = vset.pattern.permute.xlu0 0
    %3797 = vperm.xlu0 %3796, %v3538
    %v3798 = vpop.permute.xlu0 %3797
    %3799 = vset.pattern.permute.xlu0 0
    %3800 = vperm.xlu0 %3799, %v3539
    %v3801 = vpop.permute.xlu0 %3800
    %3802 = vset.pattern.permute.xlu0 0
    %3803 = vperm.xlu0 %3802, %v3540
    %v3804 = vpop.permute.xlu0 %3803
    %3805 = vset.pattern.permute.xlu0 0
    %3806 = vperm.xlu0 %3805, %v3541
    %v3807 = vpop.permute.xlu0 %3806
    %3808 = vset.pattern.permute.xlu0 0
    %3809 = vperm.xlu0 %3808, %v3542
    %v3810 = vpop.permute.xlu0 %3809
    %3811 = vset.pattern.permute.xlu0 0
    %3812 = vperm.xlu0 %3811, %v3543
    %v3813 = vpop.permute.xlu0 %3812
    %3814 = vset.pattern.permute.xlu0 0
    %3815 = vperm.xlu0 %3814, %v3544
    %v3816 = vpop.permute.xlu0 %3815
    %3817 = vset.pattern.permute.xlu0 0
    %3818 = vperm.xlu0 %3817, %v3545
    %v3819 = vpop.permute.xlu0 %3818
    %3820 = vset.pattern.permute.xlu0 0
    %3821 = vperm.xlu0 %3820, %v3546
    %v3822 = vpop.permute.xlu0 %3821
    %3823 = vset.pattern.permute.xlu0 0
    %3824 = vperm.xlu0 %3823, %v3547
    %v3825 = vpop.permute.xlu0 %3824
    %3826 = vset.pattern.permute.xlu0 0
    %3827 = vperm.xlu0 %3826, %v3548
    %v3828 = vpop.permute.xlu0 %3827
    %3829 = vset.pattern.permute.xlu0 0
    %3830 = vperm.xlu0 %3829, %v3549
    %v3831 = vpop.permute.xlu0 %3830
    %3832 = vset.pattern.permute.xlu0 0
    %3833 = vperm.xlu0 %3832, %v3550
    %v3834 = vpop.permute.xlu0 %3833
    %3835 = vset.pattern.permute.xlu0 0
    %3836 = vperm.xlu0 %3835, %v3551
    %v3837 = vpop.permute.xlu0 %3836
    %3838 = vset.pattern.permute.xlu0 0
    %3839 = vperm.xlu0 %3838, %v3552
    %v3840 = vpop.permute.xlu0 %3839
    %3841 = vset.pattern.permute.xlu0 0
    %3842 = vperm.xlu0 %3841, %v3553
    %v3843 = vpop.permute.xlu0 %3842
    %3844 = vset.pattern.permute.xlu0 0
    %3845 = vperm.xlu0 %3844, %v3554
    %v3846 = vpop.permute.xlu0 %3845
    %3847 = vset.pattern.permute.xlu0 0
    %3848 = vperm.xlu0 %3847, %v3555
    %v3849 = vpop.permute.xlu0 %3848
    %3850 = vset.pattern.permute.xlu0 0
    %3851 = vperm.xlu0 %3850, %v3556
    %v3852 = vpop.permute.xlu0 %3851
    %3853 = vset.pattern.permute.xlu0 0
    %3854 = vperm.xlu0 %3853, %v3557
    %v3855 = vpop.permute.xlu0 %3854
    %3856 = vset.pattern.permute.xlu0 0
    %3857 = vperm.xlu0 %3856, %v3558
    %v3858 = vpop.permute.xlu0 %3857
    %3859 = vset.pattern.permute.xlu0 0
    %3860 = vperm.xlu0 %3859, %v3559
    %v3861 = vpop.permute.xlu0 %3860
    %3862 = vset.pattern.permute.xlu0 0
    %3863 = vperm.xlu0 %3862, %v3560
    %v3864 = vpop.permute.xlu0 %3863
    %3865 = vset.pattern.permute.xlu0 0
    %3866 = vperm.xlu0 %3865, %v3561
    %v3867 = vpop.permute.xlu0 %3866
    %3868 = vset.pattern.permute.xlu0 0
    %3869 = vperm.xlu0 %3868, %v3562
    %v3870 = vpop.permute.xlu0 %3869
    %3871 = vset.pattern.permute.xlu0 0
    %3872 = vperm.xlu0 %3871, %v3563
    %v3873 = vpop.permute.xlu0 %3872
    %3874 = vset.pattern.permute.xlu0 0
    %3875 = vperm.xlu0 %3874, %v3564
    %v3876 = vpop.permute.xlu0 %3875
    %3877 = vset.pattern.permute.xlu0 0
    %3878 = vperm.xlu0 %3877, %v3565
    %v3879 = vpop.permute.xlu0 %3878
    %3880 = vset.pattern.permute.xlu0 0
    %3881 = vperm.xlu0 %3880, %v3566
    %v3882 = vpop.permute.xlu0 %3881
    %3883 = vset.pattern.permute.xlu0 0
    %3884 = vperm.xlu0 %3883, %v3567
    %v3885 = vpop.permute.xlu0 %3884
    %3886 = vset.pattern.permute.xlu0 0
    %3887 = vperm.xlu0 %3886, %v3568
    %v3888 = vpop.permute.xlu0 %3887
    %3889 = vset.pattern.permute.xlu0 0
    %3890 = vperm.xlu0 %3889, %v3569
    %v3891 = vpop.permute.xlu0 %3890
    %3892 = vset.pattern.permute.xlu0 0
    %3893 = vperm.xlu0 %3892, %v3570
    %v3894 = vpop.permute.xlu0 %3893
    %3895 = vset.pattern.permute.xlu0 0
    %3896 = vperm.xlu0 %3895, %v3571
    %v3897 = vpop.permute.xlu0 %3896
    %3898 = vset.pattern.permute.xlu0 0
    %3899 = vperm.xlu0 %3898, %v3572
    %v3900 = vpop.permute.xlu0 %3899
    %3901 = vset.pattern.permute.xlu0 0
    %3902 = vperm.xlu0 %3901, %v3573
    %v3903 = vpop.permute.xlu0 %3902
    %3904 = vset.pattern.permute.xlu0 0
    %3905 = vperm.xlu0 %3904, %v3574
    %v3906 = vpop.permute.xlu0 %3905
    %3907 = vset.pattern.permute.xlu0 0
    %3908 = vperm.xlu0 %3907, %v3575
    %v3909 = vpop.permute.xlu0 %3908
    %3910 = vset.pattern.permute.xlu0 0
    %3911 = vperm.xlu0 %3910, %v3576
    %v3912 = vpop.permute.xlu0 %3911
    %3913 = vset.pattern.permute.xlu0 0
    %3914 = vperm.xlu0 %3913, %v3577
    %v3915 = vpop.permute.xlu0 %3914
    %3916 = vset.pattern.permute.xlu0 0
    %3917 = vperm.xlu0 %3916, %v3578
    %v3918 = vpop.permute.xlu0 %3917
    %3919 = vset.pattern.permute.xlu0 0
    %3920 = vperm.xlu0 %3919, %v3579
    %v3921 = vpop.permute.xlu0 %3920
    %3922 = vset.pattern.permute.xlu0 0
    %3923 = vperm.xlu0 %3922, %v3580
    %v3924 = vpop.permute.xlu0 %3923
    %3925 = vset.pattern.permute.xlu0 0
    %3926 = vperm.xlu0 %3925, %v3581
    %v3927 = vpop.permute.xlu0 %3926
    %3928 = vset.pattern.permute.xlu0 0
    %3929 = vperm.xlu0 %3928, %v3582
    %v3930 = vpop.permute.xlu0 %3929
    %3931 = vset.pattern.permute.xlu0 0
    %3932 = vperm.xlu0 %3931, %v3583
    %v3933 = vpop.permute.xlu0 %3932
    %3934 = vset.pattern.permute.xlu0 0
    %3935 = vperm.xlu0 %3934, %v3584
    %v3936 = vpop.permute.xlu0 %3935
    %3937 = vset.pattern.permute.xlu0 0
    %3938 = vperm.xlu0 %3937, %v3585
    %v3939 = vpop.permute.xlu0 %3938
    %3940 = vset.pattern.permute.xlu0 0
    %3941 = vperm.xlu0 %3940, %v3586
    %v3942 = vpop.permute.xlu0 %3941
    %3943 = vset.pattern.permute.xlu0 0
    %3944 = vperm.xlu0 %3943, %v3587
    %v3945 = vpop.permute.xlu0 %3944
    %3946 = vset.pattern.permute.xlu0 0
    %3947 = vperm.xlu0 %3946, %v3588
    %v3948 = vpop.permute.xlu0 %3947
    %3949 = vset.pattern.permute.xlu0 0
    %3950 = vperm.xlu0 %3949, %v3589
    %v3951 = vpop.permute.xlu0 %3950
    %3952 = vset.pattern.permute.xlu0 0
    %3953 = vperm.xlu0 %3952, %v3590
    %v3954 = vpop.permute.xlu0 %3953
    %3955 = vset.pattern.permute.xlu0 0
    %3956 = vperm.xlu0 %3955, %v3591
    %v3957 = vpop.permute.xlu0 %3956
    %3958 = vset.pattern.permute.xlu0 0
    %3959 = vperm.xlu0 %3958, %v3592
    %v3960 = vpop.permute.xlu0 %3959
    %3961 = vset.pattern.permute.xlu0 0
    %3962 = vperm.xlu0 %3961, %v3593
    %v3963 = vpop.permute.xlu0 %3962
    %3964 = vset.pattern.permute.xlu0 0
    %3965 = vperm.xlu0 %3964, %v3594
    %v3966 = vpop.permute.xlu0 %3965
    %3967 = vset.pattern.permute.xlu0 0
    %3968 = vperm.xlu0 %3967, %v3595
    %v3969 = vpop.permute.xlu0 %3968
    %3970 = vset.pattern.permute.xlu0 0
    %3971 = vperm.xlu0 %3970, %v3596
    %v3972 = vpop.permute.xlu0 %3971
    %3973 = vset.pattern.permute.xlu0 0
    %3974 = vperm.xlu0 %3973, %v3597
    %v3975 = vpop.permute.xlu0 %3974
    %3976 = vset.pattern.permute.xlu0 0
    %3977 = vperm.xlu0 %3976, %v3598
    %v3978 = vpop.permute.xlu0 %3977
    %3979 = vset.pattern.permute.xlu0 0
    %3980 = vperm.xlu0 %3979, %v3599
    %v3981 = vpop.permute.xlu0 %3980
    %3982 = vset.pattern.permute.xlu0 0
    %3983 = vperm.xlu0 %3982, %v3600
    %v3984 = vpop.permute.xlu0 %3983
    %3985 = vset.pattern.permute.xlu0 0
    %3986 = vperm.xlu0 %3985, %v3601
    %v3987 = vpop.permute.xlu0 %3986
    %3988 = vset.pattern.permute.xlu0 0
    %3989 = vperm.xlu0 %3988, %v3602
    %v3990 = vpop.permute.xlu0 %3989
    %3991 = vset.pattern.permute.xlu0 0
    %3992 = vperm.xlu0 %3991, %v3603
    %v3993 = vpop.permute.xlu0 %3992
    %3994 = vset.pattern.permute.xlu0 0
    %3995 = vperm.xlu0 %3994, %v3604
    %v3996 = vpop.permute.xlu0 %3995
    %3997 = vset.pattern.permute.xlu0 0
    %3998 = vperm.xlu0 %3997, %v3605
    %v3999 = vpop.permute.xlu0 %3998
    %4000 = vset.pattern.permute.xlu0 0
    %4001 = vperm.xlu0 %4000, %v3606
    %v4002 = vpop.permute.xlu0 %4001
    %4003 = vset.pattern.permute.xlu0 0
    %4004 = vperm.xlu0 %4003, %v3607
    %v4005 = vpop.permute.xlu0 %4004
    %4006 = vset.pattern.permute.xlu0 0
    %4007 = vperm.xlu0 %4006, %v3608
    %v4008 = vpop.permute.xlu0 %4007
    %4009 = vset.pattern.permute.xlu0 0
    %4010 = vperm.xlu0 %4009, %v3609
    %v4011 = vpop.permute.xlu0 %4010
    %4012 = vset.pattern.permute.xlu0 0
    %4013 = vperm.xlu0 %4012, %v3610
    %v4014 = vpop.permute.xlu0 %4013
    %4015 = vset.pattern.permute.xlu0 0
    %4016 = vperm.xlu0 %4015, %v3611
    %v4017 = vpop.permute.xlu0 %4016
    %4018 = vset.pattern.permute.xlu0 0
    %4019 = vperm.xlu0 %4018, %v3612
    %v4020 = vpop.permute.xlu0 %4019
    %4021 = vset.pattern.permute.xlu0 0
    %4022 = vperm.xlu0 %4021, %v3613
    %v4023 = vpop.permute.xlu0 %4022
    %4024 = vset.pattern.permute.xlu0 0
    %4025 = vperm.xlu0 %4024, %v3614
    %v4026 = vpop.permute.xlu0 %4025
    %4027 = vset.pattern.permute.xlu0 0
    %4028 = vperm.xlu0 %4027, %v3615
    %v4029 = vpop.permute.xlu0 %4028
    %4030 = vset.pattern.permute.xlu0 0
    %4031 = vperm.xlu0 %4030, %v3616
    %v4032 = vpop.permute.xlu0 %4031
    %4033 = vset.pattern.permute.xlu0 0
    %4034 = vperm.xlu0 %4033, %v3617
    %v4035 = vpop.permute.xlu0 %4034
    %4036 = vset.pattern.permute.xlu0 0
    %4037 = vperm.xlu0 %4036, %v3618
    %v4038 = vpop.permute.xlu0 %4037
    %4039 = vset.pattern.permute.xlu0 0
    %4040 = vperm.xlu0 %4039, %v3619
    %v4041 = vpop.permute.xlu0 %4040
    %4042 = vset.pattern.permute.xlu0 0
    %4043 = vperm.xlu0 %4042, %v3620
    %v4044 = vpop.permute.xlu0 %4043
    %4045 = vset.pattern.permute.xlu0 0
    %4046 = vperm.xlu0 %4045, %v3621
    %v4047 = vpop.permute.xlu0 %4046
    %4048 = vset.pattern.permute.xlu0 0
    %4049 = vperm.xlu0 %4048, %v3622
    %v4050 = vpop.permute.xlu0 %4049
    %4051 = vset.pattern.permute.xlu0 0
    %4052 = vperm.xlu0 %4051, %v3623
    %v4053 = vpop.permute.xlu0 %4052
    %4054 = vset.pattern.permute.xlu0 0
    %4055 = vperm.xlu0 %4054, %v3624
    %v4056 = vpop.permute.xlu0 %4055
    %4057 = vset.pattern.permute.xlu0 0
    %4058 = vperm.xlu0 %4057, %v3625
    %v4059 = vpop.permute.xlu0 %4058
    %4060 = vset.pattern.permute.xlu0 0
    %4061 = vperm.xlu0 %4060, %v3626
    %v4062 = vpop.permute.xlu0 %4061
    %4063 = vset.pattern.permute.xlu0 0
    %4064 = vperm.xlu0 %4063, %v3627
    %v4065 = vpop.permute.xlu0 %4064
    %4066 = vset.pattern.permute.xlu0 0
    %4067 = vperm.xlu0 %4066, %v3628
    %v4068 = vpop.permute.xlu0 %4067
    %4069 = vset.pattern.permute.xlu0 0
    %4070 = vperm.xlu0 %4069, %v3629
    %v4071 = vpop.permute.xlu0 %4070
    %4072 = vset.pattern.permute.xlu0 0
    %4073 = vperm.xlu0 %4072, %v3630
    %v4074 = vpop.permute.xlu0 %4073
    %4075 = vset.pattern.permute.xlu0 0
    %4076 = vperm.xlu0 %4075, %v3631
    %v4077 = vpop.permute.xlu0 %4076
    %4078 = vset.pattern.permute.xlu0 0
    %4079 = vperm.xlu0 %4078, %v3632
    %v4080 = vpop.permute.xlu0 %4079
    %4081 = vset.pattern.permute.xlu0 0
    %4082 = vperm.xlu0 %4081, %v3633
    %v4083 = vpop.permute.xlu0 %4082
    %4084 = vset.pattern.permute.xlu0 0
    %4085 = vperm.xlu0 %4084, %v3634
    %v4086 = vpop.permute.xlu0 %4085
    %4087 = vset.pattern.permute.xlu0 0
    %4088 = vperm.xlu0 %4087, %v3635
    %v4089 = vpop.permute.xlu0 %4088
    %4090 = vset.pattern.permute.xlu0 0
    %4091 = vperm.xlu0 %4090, %v3636
    %v4092 = vpop.permute.xlu0 %4091
    %4093 = vset.pattern.permute.xlu0 0
    %4094 = vperm.xlu0 %4093, %v3637
    %v4095 = vpop.permute.xlu0 %4094
    %4096 = vset.pattern.permute.xlu0 0
    %4097 = vperm.xlu0 %4096, %v3638
    %v4098 = vpop.permute.xlu0 %4097
    %4099 = vset.pattern.permute.xlu0 0
    %4100 = vperm.xlu0 %4099, %v3639
    %v4101 = vpop.permute.xlu0 %4100
    %4102 = vset.pattern.permute.xlu0 0
    %4103 = vperm.xlu0 %4102, %v3640
    %v4104 = vpop.permute.xlu0 %4103
    %4105 = vset.pattern.permute.xlu0 0
    %4106 = vperm.xlu0 %4105, %v3641
    %v4107 = vpop.permute.xlu0 %4106
    %4108 = vset.pattern.permute.xlu0 0
    %4109 = vperm.xlu0 %4108, %v3642
    %v4110 = vpop.permute.xlu0 %4109
    %4111 = vset.pattern.permute.xlu0 0
    %4112 = vperm.xlu0 %4111, %v3643
    %v4113 = vpop.permute.xlu0 %4112
    %4114 = vset.pattern.permute.xlu0 0
    %4115 = vperm.xlu0 %4114, %v3644
    %v4116 = vpop.permute.xlu0 %4115
    %4117 = vset.pattern.permute.xlu0 0
    %4118 = vperm.xlu0 %4117, %v3645
    %v4119 = vpop.permute.xlu0 %4118
    %4120 = vset.pattern.permute.xlu0 0
    %4121 = vperm.xlu0 %4120, %v3646
    %v4122 = vpop.permute.xlu0 %4121
    %4123 = vset.pattern.permute.xlu0 0
    %4124 = vperm.xlu0 %4123, %v3647
    %v4125 = vpop.permute.xlu0 %4124
    %4126 = vset.pattern.permute.xlu0 0
    %4127 = vperm.xlu0 %4126, %v3648
    %v4128 = vpop.permute.xlu0 %4127
    %4129 = vset.pattern.permute.xlu0 0
    %4130 = vperm.xlu0 %4129, %v3649
    %v4131 = vpop.permute.xlu0 %4130
    %4132 = vset.pattern.permute.xlu0 0
    %4133 = vperm.xlu0 %4132, %v3650
    %v4134 = vpop.permute.xlu0 %4133
    %4135 = vset.pattern.permute.xlu0 0
    %4136 = vperm.xlu0 %4135, %v3651
    %v4137 = vpop.permute.xlu0 %4136
    %4138 = vset.pattern.permute.xlu0 0
    %4139 = vperm.xlu0 %4138, %v3652
    %v4140 = vpop.permute.xlu0 %4139
    %4141 = vset.pattern.permute.xlu0 0
    %4142 = vperm.xlu0 %4141, %v3653
    %v4143 = vpop.permute.xlu0 %4142
    %4144 = vset.pattern.permute.xlu0 0
    %4145 = vperm.xlu0 %4144, %v3654
    %v4146 = vpop.permute.xlu0 %4145
    %4147 = vset.pattern.permute.xlu0 0
    %4148 = vperm.xlu0 %4147, %v3655
    %v4149 = vpop.permute.xlu0 %4148
    %4150 = vset.pattern.permute.xlu0 0
    %4151 = vperm.xlu0 %4150, %v3656
    %v4152 = vpop.permute.xlu0 %4151
    %4153 = vset.pattern.permute.xlu0 0
    %4154 = vperm.xlu0 %4153, %v3657
    %v4155 = vpop.permute.xlu0 %4154
    %4156 = vset.pattern.permute.xlu0 0
    %4157 = vperm.xlu0 %4156, %v3658
    %v4158 = vpop.permute.xlu0 %4157
    %4159 = vset.pattern.permute.xlu0 0
    %4160 = vperm.xlu0 %4159, %v3659
    %v4161 = vpop.permute.xlu0 %4160
    %4162 = vset.pattern.permute.xlu0 0
    %4163 = vperm.xlu0 %4162, %v3660
    %v4164 = vpop.permute.xlu0 %4163
    %4165 = vset.pattern.permute.xlu0 0
    %4166 = vperm.xlu0 %4165, %v3661
    %v4167 = vpop.permute.xlu0 %4166
    %4168 = vset.pattern.permute.xlu0 0
    %4169 = vperm.xlu0 %4168, %v3662
    %v4170 = vpop.permute.xlu0 %4169
    %4171 = vset.pattern.permute.xlu0 0
    %4172 = vperm.xlu0 %4171, %v3663
    %v4173 = vpop.permute.xlu0 %4172
    %4174 = vset.pattern.permute.xlu0 0
    %4175 = vperm.xlu0 %4174, %v3664
    %v4176 = vpop.permute.xlu0 %4175
    %v4177 = vlaneseq
    %v4178 = vand.u32 %v4177, 127
    %v4179 = vlaneseq
    %v4180 = vshrl.u32 %v4179, 7
    %v4181 = vsub.s32 %v4178, %v4180
    %v4182 = vrot.slane %v3795, %v4181
    %v4183 = vadd.s32 %v4178, 4294967288
    %v4184 = vlaneseq
    %v4185 = vshrl.u32 %v4184, 7
    %v4186 = vsub.s32 %v4183, %v4185
    %v4187 = vrot.slane %v3798, %v4186
    %vm4188 = vcmask 130112
    %v4189 = vsel %vm4188, %v4187, %v4182
    %v4190 = vadd.s32 %v4178, 4294967280
    %v4191 = vlaneseq
    %v4192 = vshrl.u32 %v4191, 7
    %v4193 = vsub.s32 %v4190, %v4192
    %v4194 = vrot.slane %v3801, %v4193
    %vm4195 = vcmask 195712
    %v4196 = vsel %vm4195, %v4194, %v4189
    %v4197 = vadd.s32 %v4178, 4294967272
    %v4198 = vlaneseq
    %v4199 = vshrl.u32 %v4198, 7
    %v4200 = vsub.s32 %v4197, %v4199
    %v4201 = vrot.slane %v3804, %v4200
    %vm4202 = vcmask 261312
    %v4203 = vsel %vm4202, %v4201, %v4196
    %v4204 = vadd.s32 %v4178, 4294967264
    %v4205 = vlaneseq
    %v4206 = vshrl.u32 %v4205, 7
    %v4207 = vsub.s32 %v4204, %v4206
    %v4208 = vrot.slane %v3807, %v4207
    %vm4209 = vcmask 326912
    %v4210 = vsel %vm4209, %v4208, %v4203
    %v4211 = vadd.s32 %v4178, 4294967256
    %v4212 = vlaneseq
    %v4213 = vshrl.u32 %v4212, 7
    %v4214 = vsub.s32 %v4211, %v4213
    %v4215 = vrot.slane %v3810, %v4214
    %vm4216 = vcmask 392512
    %v4217 = vsel %vm4216, %v4215, %v4210
    %v4218 = vadd.s32 %v4178, 4294967248
    %v4219 = vlaneseq
    %v4220 = vshrl.u32 %v4219, 7
    %v4221 = vsub.s32 %v4218, %v4220
    %v4222 = vrot.slane %v3813, %v4221
    %vm4223 = vcmask 458112
    %v4224 = vsel %vm4223, %v4222, %v4217
    %v4225 = vadd.s32 %v4178, 4294967240
    %v4226 = vlaneseq
    %v4227 = vshrl.u32 %v4226, 7
    %v4228 = vsub.s32 %v4225, %v4227
    %v4229 = vrot.slane %v3816, %v4228
    %vm4230 = vcmask 523712
    %v4231 = vsel %vm4230, %v4229, %v4224
    %v4232 = vadd.s32 %v4178, 4294967232
    %v4233 = vlaneseq
    %v4234 = vshrl.u32 %v4233, 7
    %v4235 = vsub.s32 %v4232, %v4234
    %v4236 = vrot.slane %v3819, %v4235
    %vm4237 = vcmask 589312
    %v4238 = vsel %vm4237, %v4236, %v4231
    %v4239 = vadd.s32 %v4178, 4294967224
    %v4240 = vlaneseq
    %v4241 = vshrl.u32 %v4240, 7
    %v4242 = vsub.s32 %v4239, %v4241
    %v4243 = vrot.slane %v3822, %v4242
    %vm4244 = vcmask 654912
    %v4245 = vsel %vm4244, %v4243, %v4238
    %v4246 = vadd.s32 %v4178, 4294967216
    %v4247 = vlaneseq
    %v4248 = vshrl.u32 %v4247, 7
    %v4249 = vsub.s32 %v4246, %v4248
    %v4250 = vrot.slane %v3825, %v4249
    %vm4251 = vcmask 720512
    %v4252 = vsel %vm4251, %v4250, %v4245
    %v4253 = vadd.s32 %v4178, 4294967208
    %v4254 = vlaneseq
    %v4255 = vshrl.u32 %v4254, 7
    %v4256 = vsub.s32 %v4253, %v4255
    %v4257 = vrot.slane %v3828, %v4256
    %vm4258 = vcmask 786112
    %v4259 = vsel %vm4258, %v4257, %v4252
    %v4260 = vadd.s32 %v4178, 4294967200
    %v4261 = vlaneseq
    %v4262 = vshrl.u32 %v4261, 7
    %v4263 = vsub.s32 %v4260, %v4262
    %v4264 = vrot.slane %v3831, %v4263
    %vm4265 = vcmask 851712
    %v4266 = vsel %vm4265, %v4264, %v4259
    %v4267 = vadd.s32 %v4178, 4294967192
    %v4268 = vlaneseq
    %v4269 = vshrl.u32 %v4268, 7
    %v4270 = vsub.s32 %v4267, %v4269
    %v4271 = vrot.slane %v3834, %v4270
    %vm4272 = vcmask 917312
    %v4273 = vsel %vm4272, %v4271, %v4266
    %v4274 = vadd.s32 %v4178, 4294967184
    %v4275 = vlaneseq
    %v4276 = vshrl.u32 %v4275, 7
    %v4277 = vsub.s32 %v4274, %v4276
    %v4278 = vrot.slane %v3837, %v4277
    %vm4279 = vcmask 982912
    %v4280 = vsel %vm4279, %v4278, %v4273
    %v4281 = vadd.s32 %v4178, 4294967176
    %v4282 = vlaneseq
    %v4283 = vshrl.u32 %v4282, 7
    %v4284 = vsub.s32 %v4281, %v4283
    %v4285 = vrot.slane %v3840, %v4284
    %vm4286 = vcmask 1048512
    %v4287 = vsel %vm4286, %v4285, %v4280
    %v4288 = vlaneseq
    %v4289 = vshrl.u32 %v4288, 7
    %v4290 = vsub.s32 %v4178, %v4289
    %v4291 = vrot.slane %v3843, %v4290
    %v4292 = vlaneseq
    %v4293 = vshrl.u32 %v4292, 7
    %v4294 = vsub.s32 %v4183, %v4293
    %v4295 = vrot.slane %v3846, %v4294
    %v4296 = vsel %vm4188, %v4295, %v4291
    %v4297 = vlaneseq
    %v4298 = vshrl.u32 %v4297, 7
    %v4299 = vsub.s32 %v4190, %v4298
    %v4300 = vrot.slane %v3849, %v4299
    %v4301 = vsel %vm4195, %v4300, %v4296
    %v4302 = vlaneseq
    %v4303 = vshrl.u32 %v4302, 7
    %v4304 = vsub.s32 %v4197, %v4303
    %v4305 = vrot.slane %v3852, %v4304
    %v4306 = vsel %vm4202, %v4305, %v4301
    %v4307 = vlaneseq
    %v4308 = vshrl.u32 %v4307, 7
    %v4309 = vsub.s32 %v4204, %v4308
    %v4310 = vrot.slane %v3855, %v4309
    %v4311 = vsel %vm4209, %v4310, %v4306
    %v4312 = vlaneseq
    %v4313 = vshrl.u32 %v4312, 7
    %v4314 = vsub.s32 %v4211, %v4313
    %v4315 = vrot.slane %v3858, %v4314
    %v4316 = vsel %vm4216, %v4315, %v4311
    %v4317 = vlaneseq
    %v4318 = vshrl.u32 %v4317, 7
    %v4319 = vsub.s32 %v4218, %v4318
    %v4320 = vrot.slane %v3861, %v4319
    %v4321 = vsel %vm4223, %v4320, %v4316
    %v4322 = vlaneseq
    %v4323 = vshrl.u32 %v4322, 7
    %v4324 = vsub.s32 %v4225, %v4323
    %v4325 = vrot.slane %v3864, %v4324
    %v4326 = vsel %vm4230, %v4325, %v4321
    %v4327 = vlaneseq
    %v4328 = vshrl.u32 %v4327, 7
    %v4329 = vsub.s32 %v4232, %v4328
    %v4330 = vrot.slane %v3867, %v4329
    %v4331 = vsel %vm4237, %v4330, %v4326
    %v4332 = vlaneseq
    %v4333 = vshrl.u32 %v4332, 7
    %v4334 = vsub.s32 %v4239, %v4333
    %v4335 = vrot.slane %v3870, %v4334
    %v4336 = vsel %vm4244, %v4335, %v4331
    %v4337 = vlaneseq
    %v4338 = vshrl.u32 %v4337, 7
    %v4339 = vsub.s32 %v4246, %v4338
    %v4340 = vrot.slane %v3873, %v4339
    %v4341 = vsel %vm4251, %v4340, %v4336
    %v4342 = vlaneseq
    %v4343 = vshrl.u32 %v4342, 7
    %v4344 = vsub.s32 %v4253, %v4343
    %v4345 = vrot.slane %v3876, %v4344
    %v4346 = vsel %vm4258, %v4345, %v4341
    %v4347 = vlaneseq
    %v4348 = vshrl.u32 %v4347, 7
    %v4349 = vsub.s32 %v4260, %v4348
    %v4350 = vrot.slane %v3879, %v4349
    %v4351 = vsel %vm4265, %v4350, %v4346
    %v4352 = vlaneseq
    %v4353 = vshrl.u32 %v4352, 7
    %v4354 = vsub.s32 %v4267, %v4353
    %v4355 = vrot.slane %v3882, %v4354
    %v4356 = vsel %vm4272, %v4355, %v4351
    %v4357 = vlaneseq
    %v4358 = vshrl.u32 %v4357, 7
    %v4359 = vsub.s32 %v4274, %v4358
    %v4360 = vrot.slane %v3885, %v4359
    %v4361 = vsel %vm4279, %v4360, %v4356
    %v4362 = vlaneseq
    %v4363 = vshrl.u32 %v4362, 7
    %v4364 = vsub.s32 %v4281, %v4363
    %v4365 = vrot.slane %v3888, %v4364
    %v4366 = vsel %vm4286, %v4365, %v4361
    %v4367 = vlaneseq
    %v4368 = vshrl.u32 %v4367, 7
    %v4369 = vsub.s32 %v4178, %v4368
    %v4370 = vrot.slane %v3891, %v4369
    %v4371 = vlaneseq
    %v4372 = vshrl.u32 %v4371, 7
    %v4373 = vsub.s32 %v4183, %v4372
    %v4374 = vrot.slane %v3894, %v4373
    %v4375 = vsel %vm4188, %v4374, %v4370
    %v4376 = vlaneseq
    %v4377 = vshrl.u32 %v4376, 7
    %v4378 = vsub.s32 %v4190, %v4377
    %v4379 = vrot.slane %v3897, %v4378
    %v4380 = vsel %vm4195, %v4379, %v4375
    %v4381 = vlaneseq
    %v4382 = vshrl.u32 %v4381, 7
    %v4383 = vsub.s32 %v4197, %v4382
    %v4384 = vrot.slane %v3900, %v4383
    %v4385 = vsel %vm4202, %v4384, %v4380
    %v4386 = vlaneseq
    %v4387 = vshrl.u32 %v4386, 7
    %v4388 = vsub.s32 %v4204, %v4387
    %v4389 = vrot.slane %v3903, %v4388
    %v4390 = vsel %vm4209, %v4389, %v4385
    %v4391 = vlaneseq
    %v4392 = vshrl.u32 %v4391, 7
    %v4393 = vsub.s32 %v4211, %v4392
    %v4394 = vrot.slane %v3906, %v4393
    %v4395 = vsel %vm4216, %v4394, %v4390
    %v4396 = vlaneseq
    %v4397 = vshrl.u32 %v4396, 7
    %v4398 = vsub.s32 %v4218, %v4397
    %v4399 = vrot.slane %v3909, %v4398
    %v4400 = vsel %vm4223, %v4399, %v4395
    %v4401 = vlaneseq
    %v4402 = vshrl.u32 %v4401, 7
    %v4403 = vsub.s32 %v4225, %v4402
    %v4404 = vrot.slane %v3912, %v4403
    %v4405 = vsel %vm4230, %v4404, %v4400
    %v4406 = vlaneseq
    %v4407 = vshrl.u32 %v4406, 7
    %v4408 = vsub.s32 %v4232, %v4407
    %v4409 = vrot.slane %v3915, %v4408
    %v4410 = vsel %vm4237, %v4409, %v4405
    %v4411 = vlaneseq
    %v4412 = vshrl.u32 %v4411, 7
    %v4413 = vsub.s32 %v4239, %v4412
    %v4414 = vrot.slane %v3918, %v4413
    %v4415 = vsel %vm4244, %v4414, %v4410
    %v4416 = vlaneseq
    %v4417 = vshrl.u32 %v4416, 7
    %v4418 = vsub.s32 %v4246, %v4417
    %v4419 = vrot.slane %v3921, %v4418
    %v4420 = vsel %vm4251, %v4419, %v4415
    %v4421 = vlaneseq
    %v4422 = vshrl.u32 %v4421, 7
    %v4423 = vsub.s32 %v4253, %v4422
    %v4424 = vrot.slane %v3924, %v4423
    %v4425 = vsel %vm4258, %v4424, %v4420
    %v4426 = vlaneseq
    %v4427 = vshrl.u32 %v4426, 7
    %v4428 = vsub.s32 %v4260, %v4427
    %v4429 = vrot.slane %v3927, %v4428
    %v4430 = vsel %vm4265, %v4429, %v4425
    %v4431 = vlaneseq
    %v4432 = vshrl.u32 %v4431, 7
    %v4433 = vsub.s32 %v4267, %v4432
    %v4434 = vrot.slane %v3930, %v4433
    %v4435 = vsel %vm4272, %v4434, %v4430
    %v4436 = vlaneseq
    %v4437 = vshrl.u32 %v4436, 7
    %v4438 = vsub.s32 %v4274, %v4437
    %v4439 = vrot.slane %v3933, %v4438
    %v4440 = vsel %vm4279, %v4439, %v4435
    %v4441 = vlaneseq
    %v4442 = vshrl.u32 %v4441, 7
    %v4443 = vsub.s32 %v4281, %v4442
    %v4444 = vrot.slane %v3936, %v4443
    %v4445 = vsel %vm4286, %v4444, %v4440
    %v4446 = vlaneseq
    %v4447 = vshrl.u32 %v4446, 7
    %v4448 = vsub.s32 %v4178, %v4447
    %v4449 = vrot.slane %v3939, %v4448
    %v4450 = vlaneseq
    %v4451 = vshrl.u32 %v4450, 7
    %v4452 = vsub.s32 %v4183, %v4451
    %v4453 = vrot.slane %v3942, %v4452
    %v4454 = vsel %vm4188, %v4453, %v4449
    %v4455 = vlaneseq
    %v4456 = vshrl.u32 %v4455, 7
    %v4457 = vsub.s32 %v4190, %v4456
    %v4458 = vrot.slane %v3945, %v4457
    %v4459 = vsel %vm4195, %v4458, %v4454
    %v4460 = vlaneseq
    %v4461 = vshrl.u32 %v4460, 7
    %v4462 = vsub.s32 %v4197, %v4461
    %v4463 = vrot.slane %v3948, %v4462
    %v4464 = vsel %vm4202, %v4463, %v4459
    %v4465 = vlaneseq
    %v4466 = vshrl.u32 %v4465, 7
    %v4467 = vsub.s32 %v4204, %v4466
    %v4468 = vrot.slane %v3951, %v4467
    %v4469 = vsel %vm4209, %v4468, %v4464
    %v4470 = vlaneseq
    %v4471 = vshrl.u32 %v4470, 7
    %v4472 = vsub.s32 %v4211, %v4471
    %v4473 = vrot.slane %v3954, %v4472
    %v4474 = vsel %vm4216, %v4473, %v4469
    %v4475 = vlaneseq
    %v4476 = vshrl.u32 %v4475, 7
    %v4477 = vsub.s32 %v4218, %v4476
    %v4478 = vrot.slane %v3957, %v4477
    %v4479 = vsel %vm4223, %v4478, %v4474
    %v4480 = vlaneseq
    %v4481 = vshrl.u32 %v4480, 7
    %v4482 = vsub.s32 %v4225, %v4481
    %v4483 = vrot.slane %v3960, %v4482
    %v4484 = vsel %vm4230, %v4483, %v4479
    %v4485 = vlaneseq
    %v4486 = vshrl.u32 %v4485, 7
    %v4487 = vsub.s32 %v4232, %v4486
    %v4488 = vrot.slane %v3963, %v4487
    %v4489 = vsel %vm4237, %v4488, %v4484
    %v4490 = vlaneseq
    %v4491 = vshrl.u32 %v4490, 7
    %v4492 = vsub.s32 %v4239, %v4491
    %v4493 = vrot.slane %v3966, %v4492
    %v4494 = vsel %vm4244, %v4493, %v4489
    %v4495 = vlaneseq
    %v4496 = vshrl.u32 %v4495, 7
    %v4497 = vsub.s32 %v4246, %v4496
    %v4498 = vrot.slane %v3969, %v4497
    %v4499 = vsel %vm4251, %v4498, %v4494
    %v4500 = vlaneseq
    %v4501 = vshrl.u32 %v4500, 7
    %v4502 = vsub.s32 %v4253, %v4501
    %v4503 = vrot.slane %v3972, %v4502
    %v4504 = vsel %vm4258, %v4503, %v4499
    %v4505 = vlaneseq
    %v4506 = vshrl.u32 %v4505, 7
    %v4507 = vsub.s32 %v4260, %v4506
    %v4508 = vrot.slane %v3975, %v4507
    %v4509 = vsel %vm4265, %v4508, %v4504
    %v4510 = vlaneseq
    %v4511 = vshrl.u32 %v4510, 7
    %v4512 = vsub.s32 %v4267, %v4511
    %v4513 = vrot.slane %v3978, %v4512
    %v4514 = vsel %vm4272, %v4513, %v4509
    %v4515 = vlaneseq
    %v4516 = vshrl.u32 %v4515, 7
    %v4517 = vsub.s32 %v4274, %v4516
    %v4518 = vrot.slane %v3981, %v4517
    %v4519 = vsel %vm4279, %v4518, %v4514
    %v4520 = vlaneseq
    %v4521 = vshrl.u32 %v4520, 7
    %v4522 = vsub.s32 %v4281, %v4521
    %v4523 = vrot.slane %v3984, %v4522
    %v4524 = vsel %vm4286, %v4523, %v4519
    %v4525 = vlaneseq
    %v4526 = vshrl.u32 %v4525, 7
    %v4527 = vsub.s32 %v4178, %v4526
    %v4528 = vrot.slane %v3987, %v4527
    %v4529 = vlaneseq
    %v4530 = vshrl.u32 %v4529, 7
    %v4531 = vsub.s32 %v4183, %v4530
    %v4532 = vrot.slane %v3990, %v4531
    %v4533 = vsel %vm4188, %v4532, %v4528
    %v4534 = vlaneseq
    %v4535 = vshrl.u32 %v4534, 7
    %v4536 = vsub.s32 %v4190, %v4535
    %v4537 = vrot.slane %v3993, %v4536
    %v4538 = vsel %vm4195, %v4537, %v4533
    %v4539 = vlaneseq
    %v4540 = vshrl.u32 %v4539, 7
    %v4541 = vsub.s32 %v4197, %v4540
    %v4542 = vrot.slane %v3996, %v4541
    %v4543 = vsel %vm4202, %v4542, %v4538
    %v4544 = vlaneseq
    %v4545 = vshrl.u32 %v4544, 7
    %v4546 = vsub.s32 %v4204, %v4545
    %v4547 = vrot.slane %v3999, %v4546
    %v4548 = vsel %vm4209, %v4547, %v4543
    %v4549 = vlaneseq
    %v4550 = vshrl.u32 %v4549, 7
    %v4551 = vsub.s32 %v4211, %v4550
    %v4552 = vrot.slane %v4002, %v4551
    %v4553 = vsel %vm4216, %v4552, %v4548
    %v4554 = vlaneseq
    %v4555 = vshrl.u32 %v4554, 7
    %v4556 = vsub.s32 %v4218, %v4555
    %v4557 = vrot.slane %v4005, %v4556
    %v4558 = vsel %vm4223, %v4557, %v4553
    %v4559 = vlaneseq
    %v4560 = vshrl.u32 %v4559, 7
    %v4561 = vsub.s32 %v4225, %v4560
    %v4562 = vrot.slane %v4008, %v4561
    %v4563 = vsel %vm4230, %v4562, %v4558
    %v4564 = vlaneseq
    %v4565 = vshrl.u32 %v4564, 7
    %v4566 = vsub.s32 %v4232, %v4565
    %v4567 = vrot.slane %v4011, %v4566
    %v4568 = vsel %vm4237, %v4567, %v4563
    %v4569 = vlaneseq
    %v4570 = vshrl.u32 %v4569, 7
    %v4571 = vsub.s32 %v4239, %v4570
    %v4572 = vrot.slane %v4014, %v4571
    %v4573 = vsel %vm4244, %v4572, %v4568
    %v4574 = vlaneseq
    %v4575 = vshrl.u32 %v4574, 7
    %v4576 = vsub.s32 %v4246, %v4575
    %v4577 = vrot.slane %v4017, %v4576
    %v4578 = vsel %vm4251, %v4577, %v4573
    %v4579 = vlaneseq
    %v4580 = vshrl.u32 %v4579, 7
    %v4581 = vsub.s32 %v4253, %v4580
    %v4582 = vrot.slane %v4020, %v4581
    %v4583 = vsel %vm4258, %v4582, %v4578
    %v4584 = vlaneseq
    %v4585 = vshrl.u32 %v4584, 7
    %v4586 = vsub.s32 %v4260, %v4585
    %v4587 = vrot.slane %v4023, %v4586
    %v4588 = vsel %vm4265, %v4587, %v4583
    %v4589 = vlaneseq
    %v4590 = vshrl.u32 %v4589, 7
    %v4591 = vsub.s32 %v4267, %v4590
    %v4592 = vrot.slane %v4026, %v4591
    %v4593 = vsel %vm4272, %v4592, %v4588
    %v4594 = vlaneseq
    %v4595 = vshrl.u32 %v4594, 7
    %v4596 = vsub.s32 %v4274, %v4595
    %v4597 = vrot.slane %v4029, %v4596
    %v4598 = vsel %vm4279, %v4597, %v4593
    %v4599 = vlaneseq
    %v4600 = vshrl.u32 %v4599, 7
    %v4601 = vsub.s32 %v4281, %v4600
    %v4602 = vrot.slane %v4032, %v4601
    %v4603 = vsel %vm4286, %v4602, %v4598
    %v4604 = vlaneseq
    %v4605 = vshrl.u32 %v4604, 7
    %v4606 = vsub.s32 %v4178, %v4605
    %v4607 = vrot.slane %v4035, %v4606
    %v4608 = vlaneseq
    %v4609 = vshrl.u32 %v4608, 7
    %v4610 = vsub.s32 %v4183, %v4609
    %v4611 = vrot.slane %v4038, %v4610
    %v4612 = vsel %vm4188, %v4611, %v4607
    %v4613 = vlaneseq
    %v4614 = vshrl.u32 %v4613, 7
    %v4615 = vsub.s32 %v4190, %v4614
    %v4616 = vrot.slane %v4041, %v4615
    %v4617 = vsel %vm4195, %v4616, %v4612
    %v4618 = vlaneseq
    %v4619 = vshrl.u32 %v4618, 7
    %v4620 = vsub.s32 %v4197, %v4619
    %v4621 = vrot.slane %v4044, %v4620
    %v4622 = vsel %vm4202, %v4621, %v4617
    %v4623 = vlaneseq
    %v4624 = vshrl.u32 %v4623, 7
    %v4625 = vsub.s32 %v4204, %v4624
    %v4626 = vrot.slane %v4047, %v4625
    %v4627 = vsel %vm4209, %v4626, %v4622
    %v4628 = vlaneseq
    %v4629 = vshrl.u32 %v4628, 7
    %v4630 = vsub.s32 %v4211, %v4629
    %v4631 = vrot.slane %v4050, %v4630
    %v4632 = vsel %vm4216, %v4631, %v4627
    %v4633 = vlaneseq
    %v4634 = vshrl.u32 %v4633, 7
    %v4635 = vsub.s32 %v4218, %v4634
    %v4636 = vrot.slane %v4053, %v4635
    %v4637 = vsel %vm4223, %v4636, %v4632
    %v4638 = vlaneseq
    %v4639 = vshrl.u32 %v4638, 7
    %v4640 = vsub.s32 %v4225, %v4639
    %v4641 = vrot.slane %v4056, %v4640
    %v4642 = vsel %vm4230, %v4641, %v4637
    %v4643 = vlaneseq
    %v4644 = vshrl.u32 %v4643, 7
    %v4645 = vsub.s32 %v4232, %v4644
    %v4646 = vrot.slane %v4059, %v4645
    %v4647 = vsel %vm4237, %v4646, %v4642
    %v4648 = vlaneseq
    %v4649 = vshrl.u32 %v4648, 7
    %v4650 = vsub.s32 %v4239, %v4649
    %v4651 = vrot.slane %v4062, %v4650
    %v4652 = vsel %vm4244, %v4651, %v4647
    %v4653 = vlaneseq
    %v4654 = vshrl.u32 %v4653, 7
    %v4655 = vsub.s32 %v4246, %v4654
    %v4656 = vrot.slane %v4065, %v4655
    %v4657 = vsel %vm4251, %v4656, %v4652
    %v4658 = vlaneseq
    %v4659 = vshrl.u32 %v4658, 7
    %v4660 = vsub.s32 %v4253, %v4659
    %v4661 = vrot.slane %v4068, %v4660
    %v4662 = vsel %vm4258, %v4661, %v4657
    %v4663 = vlaneseq
    %v4664 = vshrl.u32 %v4663, 7
    %v4665 = vsub.s32 %v4260, %v4664
    %v4666 = vrot.slane %v4071, %v4665
    %v4667 = vsel %vm4265, %v4666, %v4662
    %v4668 = vlaneseq
    %v4669 = vshrl.u32 %v4668, 7
    %v4670 = vsub.s32 %v4267, %v4669
    %v4671 = vrot.slane %v4074, %v4670
    %v4672 = vsel %vm4272, %v4671, %v4667
    %v4673 = vlaneseq
    %v4674 = vshrl.u32 %v4673, 7
    %v4675 = vsub.s32 %v4274, %v4674
    %v4676 = vrot.slane %v4077, %v4675
    %v4677 = vsel %vm4279, %v4676, %v4672
    %v4678 = vlaneseq
    %v4679 = vshrl.u32 %v4678, 7
    %v4680 = vsub.s32 %v4281, %v4679
    %v4681 = vrot.slane %v4080, %v4680
    %v4682 = vsel %vm4286, %v4681, %v4677
    %v4683 = vlaneseq
    %v4684 = vshrl.u32 %v4683, 7
    %v4685 = vsub.s32 %v4178, %v4684
    %v4686 = vrot.slane %v4083, %v4685
    %v4687 = vlaneseq
    %v4688 = vshrl.u32 %v4687, 7
    %v4689 = vsub.s32 %v4183, %v4688
    %v4690 = vrot.slane %v4086, %v4689
    %v4691 = vsel %vm4188, %v4690, %v4686
    %v4692 = vlaneseq
    %v4693 = vshrl.u32 %v4692, 7
    %v4694 = vsub.s32 %v4190, %v4693
    %v4695 = vrot.slane %v4089, %v4694
    %v4696 = vsel %vm4195, %v4695, %v4691
    %v4697 = vlaneseq
    %v4698 = vshrl.u32 %v4697, 7
    %v4699 = vsub.s32 %v4197, %v4698
    %v4700 = vrot.slane %v4092, %v4699
    %v4701 = vsel %vm4202, %v4700, %v4696
    %v4702 = vlaneseq
    %v4703 = vshrl.u32 %v4702, 7
    %v4704 = vsub.s32 %v4204, %v4703
    %v4705 = vrot.slane %v4095, %v4704
    %v4706 = vsel %vm4209, %v4705, %v4701
    %v4707 = vlaneseq
    %v4708 = vshrl.u32 %v4707, 7
    %v4709 = vsub.s32 %v4211, %v4708
    %v4710 = vrot.slane %v4098, %v4709
    %v4711 = vsel %vm4216, %v4710, %v4706
    %v4712 = vlaneseq
    %v4713 = vshrl.u32 %v4712, 7
    %v4714 = vsub.s32 %v4218, %v4713
    %v4715 = vrot.slane %v4101, %v4714
    %v4716 = vsel %vm4223, %v4715, %v4711
    %v4717 = vlaneseq
    %v4718 = vshrl.u32 %v4717, 7
    %v4719 = vsub.s32 %v4225, %v4718
    %v4720 = vrot.slane %v4104, %v4719
    %v4721 = vsel %vm4230, %v4720, %v4716
    %v4722 = vlaneseq
    %v4723 = vshrl.u32 %v4722, 7
    %v4724 = vsub.s32 %v4232, %v4723
    %v4725 = vrot.slane %v4107, %v4724
    %v4726 = vsel %vm4237, %v4725, %v4721
    %v4727 = vlaneseq
    %v4728 = vshrl.u32 %v4727, 7
    %v4729 = vsub.s32 %v4239, %v4728
    %v4730 = vrot.slane %v4110, %v4729
    %v4731 = vsel %vm4244, %v4730, %v4726
    %v4732 = vlaneseq
    %v4733 = vshrl.u32 %v4732, 7
    %v4734 = vsub.s32 %v4246, %v4733
    %v4735 = vrot.slane %v4113, %v4734
    %v4736 = vsel %vm4251, %v4735, %v4731
    %v4737 = vlaneseq
    %v4738 = vshrl.u32 %v4737, 7
    %v4739 = vsub.s32 %v4253, %v4738
    %v4740 = vrot.slane %v4116, %v4739
    %v4741 = vsel %vm4258, %v4740, %v4736
    %v4742 = vlaneseq
    %v4743 = vshrl.u32 %v4742, 7
    %v4744 = vsub.s32 %v4260, %v4743
    %v4745 = vrot.slane %v4119, %v4744
    %v4746 = vsel %vm4265, %v4745, %v4741
    %v4747 = vlaneseq
    %v4748 = vshrl.u32 %v4747, 7
    %v4749 = vsub.s32 %v4267, %v4748
    %v4750 = vrot.slane %v4122, %v4749
    %v4751 = vsel %vm4272, %v4750, %v4746
    %v4752 = vlaneseq
    %v4753 = vshrl.u32 %v4752, 7
    %v4754 = vsub.s32 %v4274, %v4753
    %v4755 = vrot.slane %v4125, %v4754
    %v4756 = vsel %vm4279, %v4755, %v4751
    %v4757 = vlaneseq
    %v4758 = vshrl.u32 %v4757, 7
    %v4759 = vsub.s32 %v4281, %v4758
    %v4760 = vrot.slane %v4128, %v4759
    %v4761 = vsel %vm4286, %v4760, %v4756
    %v4762 = vlaneseq
    %v4763 = vshrl.u32 %v4762, 7
    %v4764 = vsub.s32 %v4178, %v4763
    %v4765 = vrot.slane %v4131, %v4764
    %v4766 = vlaneseq
    %v4767 = vshrl.u32 %v4766, 7
    %v4768 = vsub.s32 %v4183, %v4767
    %v4769 = vrot.slane %v4134, %v4768
    %v4770 = vsel %vm4188, %v4769, %v4765
    %v4771 = vlaneseq
    %v4772 = vshrl.u32 %v4771, 7
    %v4773 = vsub.s32 %v4190, %v4772
    %v4774 = vrot.slane %v4137, %v4773
    %v4775 = vsel %vm4195, %v4774, %v4770
    %v4776 = vlaneseq
    %v4777 = vshrl.u32 %v4776, 7
    %v4778 = vsub.s32 %v4197, %v4777
    %v4779 = vrot.slane %v4140, %v4778
    %v4780 = vsel %vm4202, %v4779, %v4775
    %v4781 = vlaneseq
    %v4782 = vshrl.u32 %v4781, 7
    %v4783 = vsub.s32 %v4204, %v4782
    %v4784 = vrot.slane %v4143, %v4783
    %v4785 = vsel %vm4209, %v4784, %v4780
    %v4786 = vlaneseq
    %v4787 = vshrl.u32 %v4786, 7
    %v4788 = vsub.s32 %v4211, %v4787
    %v4789 = vrot.slane %v4146, %v4788
    %v4790 = vsel %vm4216, %v4789, %v4785
    %v4791 = vlaneseq
    %v4792 = vshrl.u32 %v4791, 7
    %v4793 = vsub.s32 %v4218, %v4792
    %v4794 = vrot.slane %v4149, %v4793
    %v4795 = vsel %vm4223, %v4794, %v4790
    %v4796 = vlaneseq
    %v4797 = vshrl.u32 %v4796, 7
    %v4798 = vsub.s32 %v4225, %v4797
    %v4799 = vrot.slane %v4152, %v4798
    %v4800 = vsel %vm4230, %v4799, %v4795
    %v4801 = vlaneseq
    %v4802 = vshrl.u32 %v4801, 7
    %v4803 = vsub.s32 %v4232, %v4802
    %v4804 = vrot.slane %v4155, %v4803
    %v4805 = vsel %vm4237, %v4804, %v4800
    %v4806 = vlaneseq
    %v4807 = vshrl.u32 %v4806, 7
    %v4808 = vsub.s32 %v4239, %v4807
    %v4809 = vrot.slane %v4158, %v4808
    %v4810 = vsel %vm4244, %v4809, %v4805
    %v4811 = vlaneseq
    %v4812 = vshrl.u32 %v4811, 7
    %v4813 = vsub.s32 %v4246, %v4812
    %v4814 = vrot.slane %v4161, %v4813
    %v4815 = vsel %vm4251, %v4814, %v4810
    %v4816 = vlaneseq
    %v4817 = vshrl.u32 %v4816, 7
    %v4818 = vsub.s32 %v4253, %v4817
    %v4819 = vrot.slane %v4164, %v4818
    %v4820 = vsel %vm4258, %v4819, %v4815
    %v4821 = vlaneseq
    %v4822 = vshrl.u32 %v4821, 7
    %v4823 = vsub.s32 %v4260, %v4822
    %v4824 = vrot.slane %v4167, %v4823
    %v4825 = vsel %vm4265, %v4824, %v4820
    %v4826 = vlaneseq
    %v4827 = vshrl.u32 %v4826, 7
    %v4828 = vsub.s32 %v4267, %v4827
    %v4829 = vrot.slane %v4170, %v4828
    %v4830 = vsel %vm4272, %v4829, %v4825
    %v4831 = vlaneseq
    %v4832 = vshrl.u32 %v4831, 7
    %v4833 = vsub.s32 %v4274, %v4832
    %v4834 = vrot.slane %v4173, %v4833
    %v4835 = vsel %vm4279, %v4834, %v4830
    %v4836 = vlaneseq
    %v4837 = vshrl.u32 %v4836, 7
    %v4838 = vsub.s32 %v4281, %v4837
    %v4839 = vrot.slane %v4176, %v4838
    %v4840 = vsel %vm4286, %v4839, %v4835
    %vm4841 = vcmask 1041409
    %v4842 = vsel %vm4841, %v4366, %v4287
    %vm4843 = vcmask 1042434
    %v4844 = vsel %vm4843, %v4445, %v4842
    %vm4845 = vcmask 1043459
    %v4846 = vsel %vm4845, %v4524, %v4844
    %vm4847 = vcmask 1044484
    %v4848 = vsel %vm4847, %v4603, %v4846
    %vm4849 = vcmask 1045509
    %v4850 = vsel %vm4849, %v4682, %v4848
    %vm4851 = vcmask 1046534
    %v4852 = vsel %vm4851, %v4761, %v4850
    %vm4853 = vcmask 1047559
    %v4854 = vsel %vm4853, %v4840, %v4852
    %v4856 = vadd.f32 %v2743, %v4854
    %v4857 = vadd.f32 %v4856, -21.487562
    %4858 = vst [vmem:[#allocation2] sm:$0xff] %v4857
    %v4859 = vsub.f32 0.0, %v2483
    %v4860 = vsub.f32 0.0, %v2484
    %v4861 = vsub.f32 0.0, %v2485
    %v4862 = vsub.f32 0.0, %v2486
    %v4863 = vsub.f32 0.0, %v2487
    %v4864 = vsub.f32 0.0, %v2488
    %v4865 = vsub.f32 0.0, %v2489
    %v4866 = vsub.f32 0.0, %v2490
    %v4867 = vsub.f32 0.0, %v2491
    %v4868 = vsub.f32 0.0, %v2492
    %v4869 = vsub.f32 0.0, %v2493
    %v4870 = vsub.f32 0.0, %v2494
    %v4871 = vsub.f32 0.0, %v2495
    %v4872 = vsub.f32 0.0, %v2496
    %v4873 = vsub.f32 0.0, %v2497
    %v4874 = vsub.f32 0.0, %v2498
    %v4875 = vsub.f32 0.0, %v2499
    %v4876 = vsub.f32 0.0, %v2500
    %v4877 = vsub.f32 0.0, %v2501
    %v4878 = vsub.f32 0.0, %v2502
    %v4879 = vsub.f32 0.0, %v2503
    %v4880 = vsub.f32 0.0, %v2504
    %v4881 = vsub.f32 0.0, %v2505
    %v4882 = vsub.f32 0.0, %v2506
    %v4883 = vsub.f32 0.0, %v2507
    %v4884 = vsub.f32 0.0, %v2508
    %v4885 = vsub.f32 0.0, %v2509
    %v4886 = vsub.f32 0.0, %v2510
    %v4887 = vsub.f32 0.0, %v2511
    %v4888 = vsub.f32 0.0, %v2512
    %v4889 = vsub.f32 0.0, %v2513
    %v4890 = vsub.f32 0.0, %v2514
    %v4891 = vsub.f32 0.0, %v2515
    %v4892 = vsub.f32 0.0, %v2516
    %v4893 = vsub.f32 0.0, %v2517
    %v4894 = vsub.f32 0.0, %v2518
    %v4895 = vsub.f32 0.0, %v2519
    %v4896 = vsub.f32 0.0, %v2520
    %v4897 = vsub.f32 0.0, %v2521
    %v4898 = vsub.f32 0.0, %v2522
    %v4899 = vsub.f32 0.0, %v2523
    %v4900 = vsub.f32 0.0, %v2524
    %v4901 = vsub.f32 0.0, %v2525
    %v4902 = vsub.f32 0.0, %v2526
    %v4903 = vsub.f32 0.0, %v2527
    %v4904 = vsub.f32 0.0, %v2528
    %v4905 = vsub.f32 0.0, %v2529
    %v4906 = vsub.f32 0.0, %v2530
    %v4907 = vsub.f32 0.0, %v2531
    %v4908 = vsub.f32 0.0, %v2532
    %v4909 = vsub.f32 0.0, %v2533
    %v4910 = vsub.f32 0.0, %v2534
    %v4911 = vsub.f32 0.0, %v2535
    %v4912 = vsub.f32 0.0, %v2536
    %v4913 = vsub.f32 0.0, %v2537
    %v4914 = vsub.f32 0.0, %v2538
    %v4915 = vsub.f32 0.0, %v2539
    %v4916 = vsub.f32 0.0, %v2540
    %v4917 = vsub.f32 0.0, %v2541
    %v4918 = vsub.f32 0.0, %v2542
    %v4919 = vsub.f32 0.0, %v2543
    %v4920 = vsub.f32 0.0, %v2544
    %v4921 = vsub.f32 0.0, %v2545
    %v4922 = vsub.f32 0.0, %v2546
    %v4923 = vsub.f32 0.0, %v2547
    %v4924 = vsub.f32 0.0, %v2548
    %v4925 = vsub.f32 0.0, %v2549
    %v4926 = vsub.f32 0.0, %v2550
    %v4927 = vsub.f32 0.0, %v2551
    %v4928 = vsub.f32 0.0, %v2552
    %v4929 = vsub.f32 0.0, %v2553
    %v4930 = vsub.f32 0.0, %v2554
    %v4931 = vsub.f32 0.0, %v2555
    %v4932 = vsub.f32 0.0, %v2556
    %v4933 = vsub.f32 0.0, %v2557
    %v4934 = vsub.f32 0.0, %v2558
    %v4935 = vsub.f32 0.0, %v2559
    %v4936 = vsub.f32 0.0, %v2560
    %v4937 = vsub.f32 0.0, %v2561
    %v4938 = vsub.f32 0.0, %v2562
    %v4939 = vsub.f32 0.0, %v2563
    %v4940 = vsub.f32 0.0, %v2564
    %v4941 = vsub.f32 0.0, %v2565
    %v4942 = vsub.f32 0.0, %v2566
    %v4943 = vsub.f32 0.0, %v2567
    %v4944 = vsub.f32 0.0, %v2568
    %v4945 = vsub.f32 0.0, %v2569
    %v4946 = vsub.f32 0.0, %v2570
    %v4947 = vsub.f32 0.0, %v2571
    %v4948 = vsub.f32 0.0, %v2572
    %v4949 = vsub.f32 0.0, %v2573
    %v4950 = vsub.f32 0.0, %v2574
    %v4951 = vsub.f32 0.0, %v2575
    %v4952 = vsub.f32 0.0, %v2576
    %v4953 = vsub.f32 0.0, %v2577
    %v4954 = vsub.f32 0.0, %v2578
    %v4955 = vsub.f32 0.0, %v2579
    %v4956 = vsub.f32 0.0, %v2580
    %v4957 = vsub.f32 0.0, %v2581
    %v4958 = vsub.f32 0.0, %v2582
    %v4959 = vsub.f32 0.0, %v2583
    %v4960 = vsub.f32 0.0, %v2584
    %v4961 = vsub.f32 0.0, %v2585
    %v4962 = vsub.f32 0.0, %v2586
    %v4963 = vsub.f32 0.0, %v2587
    %v4964 = vsub.f32 0.0, %v2588
    %v4965 = vsub.f32 0.0, %v2589
    %v4966 = vsub.f32 0.0, %v2590
    %v4967 = vsub.f32 0.0, %v2591
    %v4968 = vsub.f32 0.0, %v2592
    %v4969 = vsub.f32 0.0, %v2593
    %v4970 = vsub.f32 0.0, %v2594
    %v4971 = vsub.f32 0.0, %v2595
    %v4972 = vsub.f32 0.0, %v2596
    %v4973 = vsub.f32 0.0, %v2597
    %v4974 = vsub.f32 0.0, %v2598
    %v4975 = vsub.f32 0.0, %v2599
    %v4976 = vsub.f32 0.0, %v2600
    %v4977 = vsub.f32 0.0, %v2601
    %v4978 = vsub.f32 0.0, %v2602
    %v4979 = vsub.f32 0.0, %v2603
    %v4980 = vsub.f32 0.0, %v2604
    %v4981 = vsub.f32 0.0, %v2605
    %v4982 = vsub.f32 0.0, %v2606
    %v4983 = vsub.f32 0.0, %v2607
    %v4984 = vsub.f32 0.0, %v2608
    %v4985 = vsub.f32 0.0, %v2609
    %v4986 = vsub.f32 0.0, %v2610
    %v4987 = vmul.f32 %v4859, %v2879
    %v4988 = vmul.f32 %v4860, %v2883
    %v4989 = vmul.f32 %v4861, %v2887
    %v4990 = vmul.f32 %v4862, %v2891
    %v4991 = vmul.f32 %v4863, %v2895
    %v4992 = vmul.f32 %v4864, %v2899
    %v4993 = vmul.f32 %v4865, %v2903
    %v4994 = vmul.f32 %v4866, %v2907
    %v4995 = vmul.f32 %v4867, %v2911
    %v4996 = vmul.f32 %v4868, %v2915
    %v4997 = vmul.f32 %v4869, %v2919
    %v4998 = vmul.f32 %v4870, %v2923
    %v4999 = vmul.f32 %v4871, %v2927
    %v5000 = vmul.f32 %v4872, %v2931
    %v5001 = vmul.f32 %v4873, %v2935
    %v5002 = vmul.f32 %v4874, %v2939
    %v5003 = vmul.f32 %v4875, %v2946
    %v5004 = vmul.f32 %v4876, %v2950
    %v5005 = vmul.f32 %v4877, %v2954
    %v5006 = vmul.f32 %v4878, %v2958
    %v5007 = vmul.f32 %v4879, %v2962
    %v5008 = vmul.f32 %v4880, %v2966
    %v5009 = vmul.f32 %v4881, %v2970
    %v5010 = vmul.f32 %v4882, %v2974
    %v5011 = vmul.f32 %v4883, %v2978
    %v5012 = vmul.f32 %v4884, %v2982
    %v5013 = vmul.f32 %v4885, %v2986
    %v5014 = vmul.f32 %v4886, %v2990
    %v5015 = vmul.f32 %v4887, %v2994
    %v5016 = vmul.f32 %v4888, %v2998
    %v5017 = vmul.f32 %v4889, %v3002
    %v5018 = vmul.f32 %v4890, %v3006
    %v5019 = vmul.f32 %v4891, %v3013
    %v5020 = vmul.f32 %v4892, %v3017
    %v5021 = vmul.f32 %v4893, %v3021
    %v5022 = vmul.f32 %v4894, %v3025
    %v5023 = vmul.f32 %v4895, %v3029
    %v5024 = vmul.f32 %v4896, %v3033
    %v5025 = vmul.f32 %v4897, %v3037
    %v5026 = vmul.f32 %v4898, %v3041
    %v5027 = vmul.f32 %v4899, %v3045
    %v5028 = vmul.f32 %v4900, %v3049
    %v5029 = vmul.f32 %v4901, %v3053
    %v5030 = vmul.f32 %v4902, %v3057
    %v5031 = vmul.f32 %v4903, %v3061
    %v5032 = vmul.f32 %v4904, %v3065
    %v5033 = vmul.f32 %v4905, %v3069
    %v5034 = vmul.f32 %v4906, %v3073
    %v5035 = vmul.f32 %v4907, %v3080
    %v5036 = vmul.f32 %v4908, %v3084
    %v5037 = vmul.f32 %v4909, %v3088
    %v5038 = vmul.f32 %v4910, %v3092
    %v5039 = vmul.f32 %v4911, %v3096
    %v5040 = vmul.f32 %v4912, %v3100
    %v5041 = vmul.f32 %v4913, %v3104
    %v5042 = vmul.f32 %v4914, %v3108
    %v5043 = vmul.f32 %v4915, %v3112
    %v5044 = vmul.f32 %v4916, %v3116
    %v5045 = vmul.f32 %v4917, %v3120
    %v5046 = vmul.f32 %v4918, %v3124
    %v5047 = vmul.f32 %v4919, %v3128
    %v5048 = vmul.f32 %v4920, %v3132
    %v5049 = vmul.f32 %v4921, %v3136
    %v5050 = vmul.f32 %v4922, %v3140
    %v5051 = vmul.f32 %v4923, %v3147
    %v5052 = vmul.f32 %v4924, %v3151
    %v5053 = vmul.f32 %v4925, %v3155
    %v5054 = vmul.f32 %v4926, %v3159
    %v5055 = vmul.f32 %v4927, %v3163
    %v5056 = vmul.f32 %v4928, %v3167
    %v5057 = vmul.f32 %v4929, %v3171
    %v5058 = vmul.f32 %v4930, %v3175
    %v5059 = vmul.f32 %v4931, %v3179
    %v5060 = vmul.f32 %v4932, %v3183
    %v5061 = vmul.f32 %v4933, %v3187
    %v5062 = vmul.f32 %v4934, %v3191
    %v5063 = vmul.f32 %v4935, %v3195
    %v5064 = vmul.f32 %v4936, %v3199
    %v5065 = vmul.f32 %v4937, %v3203
    %v5066 = vmul.f32 %v4938, %v3207
    %v5067 = vmul.f32 %v4939, %v3214
    %v5068 = vmul.f32 %v4940, %v3218
    %v5069 = vmul.f32 %v4941, %v3222
    %v5070 = vmul.f32 %v4942, %v3226
    %v5071 = vmul.f32 %v4943, %v3230
    %v5072 = vmul.f32 %v4944, %v3234
    %v5073 = vmul.f32 %v4945, %v3238
    %v5074 = vmul.f32 %v4946, %v3242
    %v5075 = vmul.f32 %v4947, %v3246
    %v5076 = vmul.f32 %v4948, %v3250
    %v5077 = vmul.f32 %v4949, %v3254
    %v5078 = vmul.f32 %v4950, %v3258
    %v5079 = vmul.f32 %v4951, %v3262
    %v5080 = vmul.f32 %v4952, %v3266
    %v5081 = vmul.f32 %v4953, %v3270
    %v5082 = vmul.f32 %v4954, %v3274
    %v5083 = vmul.f32 %v4955, %v3281
    %v5084 = vmul.f32 %v4956, %v3285
    %v5085 = vmul.f32 %v4957, %v3289
    %v5086 = vmul.f32 %v4958, %v3293
    %v5087 = vmul.f32 %v4959, %v3297
    %v5088 = vmul.f32 %v4960, %v3301
    %v5089 = vmul.f32 %v4961, %v3305
    %v5090 = vmul.f32 %v4962, %v3309
    %v5091 = vmul.f32 %v4963, %v3313
    %v5092 = vmul.f32 %v4964, %v3317
    %v5093 = vmul.f32 %v4965, %v3321
    %v5094 = vmul.f32 %v4966, %v3325
    %v5095 = vmul.f32 %v4967, %v3329
    %v5096 = vmul.f32 %v4968, %v3333
    %v5097 = vmul.f32 %v4969, %v3337
    %v5098 = vmul.f32 %v4970, %v3341
    %v5099 = vmul.f32 %v4971, %v3348
    %v5100 = vmul.f32 %v4972, %v3352
    %v5101 = vmul.f32 %v4973, %v3356
    %v5102 = vmul.f32 %v4974, %v3360
    %v5103 = vmul.f32 %v4975, %v3364
    %v5104 = vmul.f32 %v4976, %v3368
    %v5105 = vmul.f32 %v4977, %v3372
    %v5106 = vmul.f32 %v4978, %v3376
    %v5107 = vmul.f32 %v4979, %v3380
    %v5108 = vmul.f32 %v4980, %v3384
    %v5109 = vmul.f32 %v4981, %v3388
    %v5110 = vmul.f32 %v4982, %v3392
    %v5111 = vmul.f32 %v4983, %v3396
    %v5112 = vmul.f32 %v4984, %v3400
    %v5113 = vmul.f32 %v4985, %v3404
    %v5114 = vmul.f32 %v4986, %v3408
    %5243 = vset.pattern.permute.xlu0 0
    %5244 = vperm.xlu0 %5243, %v4987
    %v5245 = vpop.permute.xlu0 %5244
    %5246 = vset.pattern.permute.xlu0 0
    %5247 = vperm.xlu0 %5246, %v4988
    %v5248 = vpop.permute.xlu0 %5247
    %5249 = vset.pattern.permute.xlu0 0
    %5250 = vperm.xlu0 %5249, %v4989
    %v5251 = vpop.permute.xlu0 %5250
    %5252 = vset.pattern.permute.xlu0 0
    %5253 = vperm.xlu0 %5252, %v4990
    %v5254 = vpop.permute.xlu0 %5253
    %5255 = vset.pattern.permute.xlu0 0
    %5256 = vperm.xlu0 %5255, %v4991
    %v5257 = vpop.permute.xlu0 %5256
    %5258 = vset.pattern.permute.xlu0 0
    %5259 = vperm.xlu0 %5258, %v4992
    %v5260 = vpop.permute.xlu0 %5259
    %5261 = vset.pattern.permute.xlu0 0
    %5262 = vperm.xlu0 %5261, %v4993
    %v5263 = vpop.permute.xlu0 %5262
    %5264 = vset.pattern.permute.xlu0 0
    %5265 = vperm.xlu0 %5264, %v4994
    %v5266 = vpop.permute.xlu0 %5265
    %5267 = vset.pattern.permute.xlu0 0
    %5268 = vperm.xlu0 %5267, %v4995
    %v5269 = vpop.permute.xlu0 %5268
    %5270 = vset.pattern.permute.xlu0 0
    %5271 = vperm.xlu0 %5270, %v4996
    %v5272 = vpop.permute.xlu0 %5271
    %5273 = vset.pattern.permute.xlu0 0
    %5274 = vperm.xlu0 %5273, %v4997
    %v5275 = vpop.permute.xlu0 %5274
    %5276 = vset.pattern.permute.xlu0 0
    %5277 = vperm.xlu0 %5276, %v4998
    %v5278 = vpop.permute.xlu0 %5277
    %5279 = vset.pattern.permute.xlu0 0
    %5280 = vperm.xlu0 %5279, %v4999
    %v5281 = vpop.permute.xlu0 %5280
    %5282 = vset.pattern.permute.xlu0 0
    %5283 = vperm.xlu0 %5282, %v5000
    %v5284 = vpop.permute.xlu0 %5283
    %5285 = vset.pattern.permute.xlu0 0
    %5286 = vperm.xlu0 %5285, %v5001
    %v5287 = vpop.permute.xlu0 %5286
    %5288 = vset.pattern.permute.xlu0 0
    %5289 = vperm.xlu0 %5288, %v5002
    %v5290 = vpop.permute.xlu0 %5289
    %5291 = vset.pattern.permute.xlu0 0
    %5292 = vperm.xlu0 %5291, %v5003
    %v5293 = vpop.permute.xlu0 %5292
    %5294 = vset.pattern.permute.xlu0 0
    %5295 = vperm.xlu0 %5294, %v5004
    %v5296 = vpop.permute.xlu0 %5295
    %5297 = vset.pattern.permute.xlu0 0
    %5298 = vperm.xlu0 %5297, %v5005
    %v5299 = vpop.permute.xlu0 %5298
    %5300 = vset.pattern.permute.xlu0 0
    %5301 = vperm.xlu0 %5300, %v5006
    %v5302 = vpop.permute.xlu0 %5301
    %5303 = vset.pattern.permute.xlu0 0
    %5304 = vperm.xlu0 %5303, %v5007
    %v5305 = vpop.permute.xlu0 %5304
    %5306 = vset.pattern.permute.xlu0 0
    %5307 = vperm.xlu0 %5306, %v5008
    %v5308 = vpop.permute.xlu0 %5307
    %5309 = vset.pattern.permute.xlu0 0
    %5310 = vperm.xlu0 %5309, %v5009
    %v5311 = vpop.permute.xlu0 %5310
    %5312 = vset.pattern.permute.xlu0 0
    %5313 = vperm.xlu0 %5312, %v5010
    %v5314 = vpop.permute.xlu0 %5313
    %5315 = vset.pattern.permute.xlu0 0
    %5316 = vperm.xlu0 %5315, %v5011
    %v5317 = vpop.permute.xlu0 %5316
    %5318 = vset.pattern.permute.xlu0 0
    %5319 = vperm.xlu0 %5318, %v5012
    %v5320 = vpop.permute.xlu0 %5319
    %5321 = vset.pattern.permute.xlu0 0
    %5322 = vperm.xlu0 %5321, %v5013
    %v5323 = vpop.permute.xlu0 %5322
    %5324 = vset.pattern.permute.xlu0 0
    %5325 = vperm.xlu0 %5324, %v5014
    %v5326 = vpop.permute.xlu0 %5325
    %5327 = vset.pattern.permute.xlu0 0
    %5328 = vperm.xlu0 %5327, %v5015
    %v5329 = vpop.permute.xlu0 %5328
    %5330 = vset.pattern.permute.xlu0 0
    %5331 = vperm.xlu0 %5330, %v5016
    %v5332 = vpop.permute.xlu0 %5331
    %5333 = vset.pattern.permute.xlu0 0
    %5334 = vperm.xlu0 %5333, %v5017
    %v5335 = vpop.permute.xlu0 %5334
    %5336 = vset.pattern.permute.xlu0 0
    %5337 = vperm.xlu0 %5336, %v5018
    %v5338 = vpop.permute.xlu0 %5337
    %5339 = vset.pattern.permute.xlu0 0
    %5340 = vperm.xlu0 %5339, %v5019
    %v5341 = vpop.permute.xlu0 %5340
    %5342 = vset.pattern.permute.xlu0 0
    %5343 = vperm.xlu0 %5342, %v5020
    %v5344 = vpop.permute.xlu0 %5343
    %5345 = vset.pattern.permute.xlu0 0
    %5346 = vperm.xlu0 %5345, %v5021
    %v5347 = vpop.permute.xlu0 %5346
    %5348 = vset.pattern.permute.xlu0 0
    %5349 = vperm.xlu0 %5348, %v5022
    %v5350 = vpop.permute.xlu0 %5349
    %5351 = vset.pattern.permute.xlu0 0
    %5352 = vperm.xlu0 %5351, %v5023
    %v5353 = vpop.permute.xlu0 %5352
    %5354 = vset.pattern.permute.xlu0 0
    %5355 = vperm.xlu0 %5354, %v5024
    %v5356 = vpop.permute.xlu0 %5355
    %5357 = vset.pattern.permute.xlu0 0
    %5358 = vperm.xlu0 %5357, %v5025
    %v5359 = vpop.permute.xlu0 %5358
    %5360 = vset.pattern.permute.xlu0 0
    %5361 = vperm.xlu0 %5360, %v5026
    %v5362 = vpop.permute.xlu0 %5361
    %5363 = vset.pattern.permute.xlu0 0
    %5364 = vperm.xlu0 %5363, %v5027
    %v5365 = vpop.permute.xlu0 %5364
    %5366 = vset.pattern.permute.xlu0 0
    %5367 = vperm.xlu0 %5366, %v5028
    %v5368 = vpop.permute.xlu0 %5367
    %5369 = vset.pattern.permute.xlu0 0
    %5370 = vperm.xlu0 %5369, %v5029
    %v5371 = vpop.permute.xlu0 %5370
    %5372 = vset.pattern.permute.xlu0 0
    %5373 = vperm.xlu0 %5372, %v5030
    %v5374 = vpop.permute.xlu0 %5373
    %5375 = vset.pattern.permute.xlu0 0
    %5376 = vperm.xlu0 %5375, %v5031
    %v5377 = vpop.permute.xlu0 %5376
    %5378 = vset.pattern.permute.xlu0 0
    %5379 = vperm.xlu0 %5378, %v5032
    %v5380 = vpop.permute.xlu0 %5379
    %5381 = vset.pattern.permute.xlu0 0
    %5382 = vperm.xlu0 %5381, %v5033
    %v5383 = vpop.permute.xlu0 %5382
    %5384 = vset.pattern.permute.xlu0 0
    %5385 = vperm.xlu0 %5384, %v5034
    %v5386 = vpop.permute.xlu0 %5385
    %5387 = vset.pattern.permute.xlu0 0
    %5388 = vperm.xlu0 %5387, %v5035
    %v5389 = vpop.permute.xlu0 %5388
    %5390 = vset.pattern.permute.xlu0 0
    %5391 = vperm.xlu0 %5390, %v5036
    %v5392 = vpop.permute.xlu0 %5391
    %5393 = vset.pattern.permute.xlu0 0
    %5394 = vperm.xlu0 %5393, %v5037
    %v5395 = vpop.permute.xlu0 %5394
    %5396 = vset.pattern.permute.xlu0 0
    %5397 = vperm.xlu0 %5396, %v5038
    %v5398 = vpop.permute.xlu0 %5397
    %5399 = vset.pattern.permute.xlu0 0
    %5400 = vperm.xlu0 %5399, %v5039
    %v5401 = vpop.permute.xlu0 %5400
    %5402 = vset.pattern.permute.xlu0 0
    %5403 = vperm.xlu0 %5402, %v5040
    %v5404 = vpop.permute.xlu0 %5403
    %5405 = vset.pattern.permute.xlu0 0
    %5406 = vperm.xlu0 %5405, %v5041
    %v5407 = vpop.permute.xlu0 %5406
    %5408 = vset.pattern.permute.xlu0 0
    %5409 = vperm.xlu0 %5408, %v5042
    %v5410 = vpop.permute.xlu0 %5409
    %5411 = vset.pattern.permute.xlu0 0
    %5412 = vperm.xlu0 %5411, %v5043
    %v5413 = vpop.permute.xlu0 %5412
    %5414 = vset.pattern.permute.xlu0 0
    %5415 = vperm.xlu0 %5414, %v5044
    %v5416 = vpop.permute.xlu0 %5415
    %5417 = vset.pattern.permute.xlu0 0
    %5418 = vperm.xlu0 %5417, %v5045
    %v5419 = vpop.permute.xlu0 %5418
    %5420 = vset.pattern.permute.xlu0 0
    %5421 = vperm.xlu0 %5420, %v5046
    %v5422 = vpop.permute.xlu0 %5421
    %5423 = vset.pattern.permute.xlu0 0
    %5424 = vperm.xlu0 %5423, %v5047
    %v5425 = vpop.permute.xlu0 %5424
    %5426 = vset.pattern.permute.xlu0 0
    %5427 = vperm.xlu0 %5426, %v5048
    %v5428 = vpop.permute.xlu0 %5427
    %5429 = vset.pattern.permute.xlu0 0
    %5430 = vperm.xlu0 %5429, %v5049
    %v5431 = vpop.permute.xlu0 %5430
    %5432 = vset.pattern.permute.xlu0 0
    %5433 = vperm.xlu0 %5432, %v5050
    %v5434 = vpop.permute.xlu0 %5433
    %5435 = vset.pattern.permute.xlu0 0
    %5436 = vperm.xlu0 %5435, %v5051
    %v5437 = vpop.permute.xlu0 %5436
    %5438 = vset.pattern.permute.xlu0 0
    %5439 = vperm.xlu0 %5438, %v5052
    %v5440 = vpop.permute.xlu0 %5439
    %5441 = vset.pattern.permute.xlu0 0
    %5442 = vperm.xlu0 %5441, %v5053
    %v5443 = vpop.permute.xlu0 %5442
    %5444 = vset.pattern.permute.xlu0 0
    %5445 = vperm.xlu0 %5444, %v5054
    %v5446 = vpop.permute.xlu0 %5445
    %5447 = vset.pattern.permute.xlu0 0
    %5448 = vperm.xlu0 %5447, %v5055
    %v5449 = vpop.permute.xlu0 %5448
    %5450 = vset.pattern.permute.xlu0 0
    %5451 = vperm.xlu0 %5450, %v5056
    %v5452 = vpop.permute.xlu0 %5451
    %5453 = vset.pattern.permute.xlu0 0
    %5454 = vperm.xlu0 %5453, %v5057
    %v5455 = vpop.permute.xlu0 %5454
    %5456 = vset.pattern.permute.xlu0 0
    %5457 = vperm.xlu0 %5456, %v5058
    %v5458 = vpop.permute.xlu0 %5457
    %5459 = vset.pattern.permute.xlu0 0
    %5460 = vperm.xlu0 %5459, %v5059
    %v5461 = vpop.permute.xlu0 %5460
    %5462 = vset.pattern.permute.xlu0 0
    %5463 = vperm.xlu0 %5462, %v5060
    %v5464 = vpop.permute.xlu0 %5463
    %5465 = vset.pattern.permute.xlu0 0
    %5466 = vperm.xlu0 %5465, %v5061
    %v5467 = vpop.permute.xlu0 %5466
    %5468 = vset.pattern.permute.xlu0 0
    %5469 = vperm.xlu0 %5468, %v5062
    %v5470 = vpop.permute.xlu0 %5469
    %5471 = vset.pattern.permute.xlu0 0
    %5472 = vperm.xlu0 %5471, %v5063
    %v5473 = vpop.permute.xlu0 %5472
    %5474 = vset.pattern.permute.xlu0 0
    %5475 = vperm.xlu0 %5474, %v5064
    %v5476 = vpop.permute.xlu0 %5475
    %5477 = vset.pattern.permute.xlu0 0
    %5478 = vperm.xlu0 %5477, %v5065
    %v5479 = vpop.permute.xlu0 %5478
    %5480 = vset.pattern.permute.xlu0 0
    %5481 = vperm.xlu0 %5480, %v5066
    %v5482 = vpop.permute.xlu0 %5481
    %5483 = vset.pattern.permute.xlu0 0
    %5484 = vperm.xlu0 %5483, %v5067
    %v5485 = vpop.permute.xlu0 %5484
    %5486 = vset.pattern.permute.xlu0 0
    %5487 = vperm.xlu0 %5486, %v5068
    %v5488 = vpop.permute.xlu0 %5487
    %5489 = vset.pattern.permute.xlu0 0
    %5490 = vperm.xlu0 %5489, %v5069
    %v5491 = vpop.permute.xlu0 %5490
    %5492 = vset.pattern.permute.xlu0 0
    %5493 = vperm.xlu0 %5492, %v5070
    %v5494 = vpop.permute.xlu0 %5493
    %5495 = vset.pattern.permute.xlu0 0
    %5496 = vperm.xlu0 %5495, %v5071
    %v5497 = vpop.permute.xlu0 %5496
    %5498 = vset.pattern.permute.xlu0 0
    %5499 = vperm.xlu0 %5498, %v5072
    %v5500 = vpop.permute.xlu0 %5499
    %5501 = vset.pattern.permute.xlu0 0
    %5502 = vperm.xlu0 %5501, %v5073
    %v5503 = vpop.permute.xlu0 %5502
    %5504 = vset.pattern.permute.xlu0 0
    %5505 = vperm.xlu0 %5504, %v5074
    %v5506 = vpop.permute.xlu0 %5505
    %5507 = vset.pattern.permute.xlu0 0
    %5508 = vperm.xlu0 %5507, %v5075
    %v5509 = vpop.permute.xlu0 %5508
    %5510 = vset.pattern.permute.xlu0 0
    %5511 = vperm.xlu0 %5510, %v5076
    %v5512 = vpop.permute.xlu0 %5511
    %5513 = vset.pattern.permute.xlu0 0
    %5514 = vperm.xlu0 %5513, %v5077
    %v5515 = vpop.permute.xlu0 %5514
    %5516 = vset.pattern.permute.xlu0 0
    %5517 = vperm.xlu0 %5516, %v5078
    %v5518 = vpop.permute.xlu0 %5517
    %5519 = vset.pattern.permute.xlu0 0
    %5520 = vperm.xlu0 %5519, %v5079
    %v5521 = vpop.permute.xlu0 %5520
    %5522 = vset.pattern.permute.xlu0 0
    %5523 = vperm.xlu0 %5522, %v5080
    %v5524 = vpop.permute.xlu0 %5523
    %5525 = vset.pattern.permute.xlu0 0
    %5526 = vperm.xlu0 %5525, %v5081
    %v5527 = vpop.permute.xlu0 %5526
    %5528 = vset.pattern.permute.xlu0 0
    %5529 = vperm.xlu0 %5528, %v5082
    %v5530 = vpop.permute.xlu0 %5529
    %5531 = vset.pattern.permute.xlu0 0
    %5532 = vperm.xlu0 %5531, %v5083
    %v5533 = vpop.permute.xlu0 %5532
    %5534 = vset.pattern.permute.xlu0 0
    %5535 = vperm.xlu0 %5534, %v5084
    %v5536 = vpop.permute.xlu0 %5535
    %5537 = vset.pattern.permute.xlu0 0
    %5538 = vperm.xlu0 %5537, %v5085
    %v5539 = vpop.permute.xlu0 %5538
    %5540 = vset.pattern.permute.xlu0 0
    %5541 = vperm.xlu0 %5540, %v5086
    %v5542 = vpop.permute.xlu0 %5541
    %5543 = vset.pattern.permute.xlu0 0
    %5544 = vperm.xlu0 %5543, %v5087
    %v5545 = vpop.permute.xlu0 %5544
    %5546 = vset.pattern.permute.xlu0 0
    %5547 = vperm.xlu0 %5546, %v5088
    %v5548 = vpop.permute.xlu0 %5547
    %5549 = vset.pattern.permute.xlu0 0
    %5550 = vperm.xlu0 %5549, %v5089
    %v5551 = vpop.permute.xlu0 %5550
    %5552 = vset.pattern.permute.xlu0 0
    %5553 = vperm.xlu0 %5552, %v5090
    %v5554 = vpop.permute.xlu0 %5553
    %5555 = vset.pattern.permute.xlu0 0
    %5556 = vperm.xlu0 %5555, %v5091
    %v5557 = vpop.permute.xlu0 %5556
    %5558 = vset.pattern.permute.xlu0 0
    %5559 = vperm.xlu0 %5558, %v5092
    %v5560 = vpop.permute.xlu0 %5559
    %5561 = vset.pattern.permute.xlu0 0
    %5562 = vperm.xlu0 %5561, %v5093
    %v5563 = vpop.permute.xlu0 %5562
    %5564 = vset.pattern.permute.xlu0 0
    %5565 = vperm.xlu0 %5564, %v5094
    %v5566 = vpop.permute.xlu0 %5565
    %5567 = vset.pattern.permute.xlu0 0
    %5568 = vperm.xlu0 %5567, %v5095
    %v5569 = vpop.permute.xlu0 %5568
    %5570 = vset.pattern.permute.xlu0 0
    %5571 = vperm.xlu0 %5570, %v5096
    %v5572 = vpop.permute.xlu0 %5571
    %5573 = vset.pattern.permute.xlu0 0
    %5574 = vperm.xlu0 %5573, %v5097
    %v5575 = vpop.permute.xlu0 %5574
    %5576 = vset.pattern.permute.xlu0 0
    %5577 = vperm.xlu0 %5576, %v5098
    %v5578 = vpop.permute.xlu0 %5577
    %5579 = vset.pattern.permute.xlu0 0
    %5580 = vperm.xlu0 %5579, %v5099
    %v5581 = vpop.permute.xlu0 %5580
    %5582 = vset.pattern.permute.xlu0 0
    %5583 = vperm.xlu0 %5582, %v5100
    %v5584 = vpop.permute.xlu0 %5583
    %5585 = vset.pattern.permute.xlu0 0
    %5586 = vperm.xlu0 %5585, %v5101
    %v5587 = vpop.permute.xlu0 %5586
    %5588 = vset.pattern.permute.xlu0 0
    %5589 = vperm.xlu0 %5588, %v5102
    %v5590 = vpop.permute.xlu0 %5589
    %5591 = vset.pattern.permute.xlu0 0
    %5592 = vperm.xlu0 %5591, %v5103
    %v5593 = vpop.permute.xlu0 %5592
    %5594 = vset.pattern.permute.xlu0 0
    %5595 = vperm.xlu0 %5594, %v5104
    %v5596 = vpop.permute.xlu0 %5595
    %5597 = vset.pattern.permute.xlu0 0
    %5598 = vperm.xlu0 %5597, %v5105
    %v5599 = vpop.permute.xlu0 %5598
    %5600 = vset.pattern.permute.xlu0 0
    %5601 = vperm.xlu0 %5600, %v5106
    %v5602 = vpop.permute.xlu0 %5601
    %5603 = vset.pattern.permute.xlu0 0
    %5604 = vperm.xlu0 %5603, %v5107
    %v5605 = vpop.permute.xlu0 %5604
    %5606 = vset.pattern.permute.xlu0 0
    %5607 = vperm.xlu0 %5606, %v5108
    %v5608 = vpop.permute.xlu0 %5607
    %5609 = vset.pattern.permute.xlu0 0
    %5610 = vperm.xlu0 %5609, %v5109
    %v5611 = vpop.permute.xlu0 %5610
    %5612 = vset.pattern.permute.xlu0 0
    %5613 = vperm.xlu0 %5612, %v5110
    %v5614 = vpop.permute.xlu0 %5613
    %5615 = vset.pattern.permute.xlu0 0
    %5616 = vperm.xlu0 %5615, %v5111
    %v5617 = vpop.permute.xlu0 %5616
    %5618 = vset.pattern.permute.xlu0 0
    %5619 = vperm.xlu0 %5618, %v5112
    %v5620 = vpop.permute.xlu0 %5619
    %5621 = vset.pattern.permute.xlu0 0
    %5622 = vperm.xlu0 %5621, %v5113
    %v5623 = vpop.permute.xlu0 %5622
    %5624 = vset.pattern.permute.xlu0 0
    %5625 = vperm.xlu0 %5624, %v5114
    %v5626 = vpop.permute.xlu0 %5625
    %v5627 = vlaneseq
    %v5628 = vshrl.u32 %v5627, 7
    %v5629 = vsub.s32 %v4178, %v5628
    %v5630 = vrot.slane %v5245, %v5629
    %v5631 = vlaneseq
    %v5632 = vshrl.u32 %v5631, 7
    %v5633 = vsub.s32 %v4183, %v5632
    %v5634 = vrot.slane %v5248, %v5633
    %v5635 = vsel %vm4188, %v5634, %v5630
    %v5636 = vlaneseq
    %v5637 = vshrl.u32 %v5636, 7
    %v5638 = vsub.s32 %v4190, %v5637
    %v5639 = vrot.slane %v5251, %v5638
    %v5640 = vsel %vm4195, %v5639, %v5635
    %v5641 = vlaneseq
    %v5642 = vshrl.u32 %v5641, 7
    %v5643 = vsub.s32 %v4197, %v5642
    %v5644 = vrot.slane %v5254, %v5643
    %v5645 = vsel %vm4202, %v5644, %v5640
    %v5646 = vlaneseq
    %v5647 = vshrl.u32 %v5646, 7
    %v5648 = vsub.s32 %v4204, %v5647
    %v5649 = vrot.slane %v5257, %v5648
    %v5650 = vsel %vm4209, %v5649, %v5645
    %v5651 = vlaneseq
    %v5652 = vshrl.u32 %v5651, 7
    %v5653 = vsub.s32 %v4211, %v5652
    %v5654 = vrot.slane %v5260, %v5653
    %v5655 = vsel %vm4216, %v5654, %v5650
    %v5656 = vlaneseq
    %v5657 = vshrl.u32 %v5656, 7
    %v5658 = vsub.s32 %v4218, %v5657
    %v5659 = vrot.slane %v5263, %v5658
    %v5660 = vsel %vm4223, %v5659, %v5655
    %v5661 = vlaneseq
    %v5662 = vshrl.u32 %v5661, 7
    %v5663 = vsub.s32 %v4225, %v5662
    %v5664 = vrot.slane %v5266, %v5663
    %v5665 = vsel %vm4230, %v5664, %v5660
    %v5666 = vlaneseq
    %v5667 = vshrl.u32 %v5666, 7
    %v5668 = vsub.s32 %v4232, %v5667
    %v5669 = vrot.slane %v5269, %v5668
    %v5670 = vsel %vm4237, %v5669, %v5665
    %v5671 = vlaneseq
    %v5672 = vshrl.u32 %v5671, 7
    %v5673 = vsub.s32 %v4239, %v5672
    %v5674 = vrot.slane %v5272, %v5673
    %v5675 = vsel %vm4244, %v5674, %v5670
    %v5676 = vlaneseq
    %v5677 = vshrl.u32 %v5676, 7
    %v5678 = vsub.s32 %v4246, %v5677
    %v5679 = vrot.slane %v5275, %v5678
    %v5680 = vsel %vm4251, %v5679, %v5675
    %v5681 = vlaneseq
    %v5682 = vshrl.u32 %v5681, 7
    %v5683 = vsub.s32 %v4253, %v5682
    %v5684 = vrot.slane %v5278, %v5683
    %v5685 = vsel %vm4258, %v5684, %v5680
    %v5686 = vlaneseq
    %v5687 = vshrl.u32 %v5686, 7
    %v5688 = vsub.s32 %v4260, %v5687
    %v5689 = vrot.slane %v5281, %v5688
    %v5690 = vsel %vm4265, %v5689, %v5685
    %v5691 = vlaneseq
    %v5692 = vshrl.u32 %v5691, 7
    %v5693 = vsub.s32 %v4267, %v5692
    %v5694 = vrot.slane %v5284, %v5693
    %v5695 = vsel %vm4272, %v5694, %v5690
    %v5696 = vlaneseq
    %v5697 = vshrl.u32 %v5696, 7
    %v5698 = vsub.s32 %v4274, %v5697
    %v5699 = vrot.slane %v5287, %v5698
    %v5700 = vsel %vm4279, %v5699, %v5695
    %v5701 = vlaneseq
    %v5702 = vshrl.u32 %v5701, 7
    %v5703 = vsub.s32 %v4281, %v5702
    %v5704 = vrot.slane %v5290, %v5703
    %v5705 = vsel %vm4286, %v5704, %v5700
    %v5706 = vlaneseq
    %v5707 = vshrl.u32 %v5706, 7
    %v5708 = vsub.s32 %v4178, %v5707
    %v5709 = vrot.slane %v5293, %v5708
    %v5710 = vlaneseq
    %v5711 = vshrl.u32 %v5710, 7
    %v5712 = vsub.s32 %v4183, %v5711
    %v5713 = vrot.slane %v5296, %v5712
    %v5714 = vsel %vm4188, %v5713, %v5709
    %v5715 = vlaneseq
    %v5716 = vshrl.u32 %v5715, 7
    %v5717 = vsub.s32 %v4190, %v5716
    %v5718 = vrot.slane %v5299, %v5717
    %v5719 = vsel %vm4195, %v5718, %v5714
    %v5720 = vlaneseq
    %v5721 = vshrl.u32 %v5720, 7
    %v5722 = vsub.s32 %v4197, %v5721
    %v5723 = vrot.slane %v5302, %v5722
    %v5724 = vsel %vm4202, %v5723, %v5719
    %v5725 = vlaneseq
    %v5726 = vshrl.u32 %v5725, 7
    %v5727 = vsub.s32 %v4204, %v5726
    %v5728 = vrot.slane %v5305, %v5727
    %v5729 = vsel %vm4209, %v5728, %v5724
    %v5730 = vlaneseq
    %v5731 = vshrl.u32 %v5730, 7
    %v5732 = vsub.s32 %v4211, %v5731
    %v5733 = vrot.slane %v5308, %v5732
    %v5734 = vsel %vm4216, %v5733, %v5729
    %v5735 = vlaneseq
    %v5736 = vshrl.u32 %v5735, 7
    %v5737 = vsub.s32 %v4218, %v5736
    %v5738 = vrot.slane %v5311, %v5737
    %v5739 = vsel %vm4223, %v5738, %v5734
    %v5740 = vlaneseq
    %v5741 = vshrl.u32 %v5740, 7
    %v5742 = vsub.s32 %v4225, %v5741
    %v5743 = vrot.slane %v5314, %v5742
    %v5744 = vsel %vm4230, %v5743, %v5739
    %v5745 = vlaneseq
    %v5746 = vshrl.u32 %v5745, 7
    %v5747 = vsub.s32 %v4232, %v5746
    %v5748 = vrot.slane %v5317, %v5747
    %v5749 = vsel %vm4237, %v5748, %v5744
    %v5750 = vlaneseq
    %v5751 = vshrl.u32 %v5750, 7
    %v5752 = vsub.s32 %v4239, %v5751
    %v5753 = vrot.slane %v5320, %v5752
    %v5754 = vsel %vm4244, %v5753, %v5749
    %v5755 = vlaneseq
    %v5756 = vshrl.u32 %v5755, 7
    %v5757 = vsub.s32 %v4246, %v5756
    %v5758 = vrot.slane %v5323, %v5757
    %v5759 = vsel %vm4251, %v5758, %v5754
    %v5760 = vlaneseq
    %v5761 = vshrl.u32 %v5760, 7
    %v5762 = vsub.s32 %v4253, %v5761
    %v5763 = vrot.slane %v5326, %v5762
    %v5764 = vsel %vm4258, %v5763, %v5759
    %v5765 = vlaneseq
    %v5766 = vshrl.u32 %v5765, 7
    %v5767 = vsub.s32 %v4260, %v5766
    %v5768 = vrot.slane %v5329, %v5767
    %v5769 = vsel %vm4265, %v5768, %v5764
    %v5770 = vlaneseq
    %v5771 = vshrl.u32 %v5770, 7
    %v5772 = vsub.s32 %v4267, %v5771
    %v5773 = vrot.slane %v5332, %v5772
    %v5774 = vsel %vm4272, %v5773, %v5769
    %v5775 = vlaneseq
    %v5776 = vshrl.u32 %v5775, 7
    %v5777 = vsub.s32 %v4274, %v5776
    %v5778 = vrot.slane %v5335, %v5777
    %v5779 = vsel %vm4279, %v5778, %v5774
    %v5780 = vlaneseq
    %v5781 = vshrl.u32 %v5780, 7
    %v5782 = vsub.s32 %v4281, %v5781
    %v5783 = vrot.slane %v5338, %v5782
    %v5784 = vsel %vm4286, %v5783, %v5779
    %v5785 = vlaneseq
    %v5786 = vshrl.u32 %v5785, 7
    %v5787 = vsub.s32 %v4178, %v5786
    %v5788 = vrot.slane %v5341, %v5787
    %v5789 = vlaneseq
    %v5790 = vshrl.u32 %v5789, 7
    %v5791 = vsub.s32 %v4183, %v5790
    %v5792 = vrot.slane %v5344, %v5791
    %v5793 = vsel %vm4188, %v5792, %v5788
    %v5794 = vlaneseq
    %v5795 = vshrl.u32 %v5794, 7
    %v5796 = vsub.s32 %v4190, %v5795
    %v5797 = vrot.slane %v5347, %v5796
    %v5798 = vsel %vm4195, %v5797, %v5793
    %v5799 = vlaneseq
    %v5800 = vshrl.u32 %v5799, 7
    %v5801 = vsub.s32 %v4197, %v5800
    %v5802 = vrot.slane %v5350, %v5801
    %v5803 = vsel %vm4202, %v5802, %v5798
    %v5804 = vlaneseq
    %v5805 = vshrl.u32 %v5804, 7
    %v5806 = vsub.s32 %v4204, %v5805
    %v5807 = vrot.slane %v5353, %v5806
    %v5808 = vsel %vm4209, %v5807, %v5803
    %v5809 = vlaneseq
    %v5810 = vshrl.u32 %v5809, 7
    %v5811 = vsub.s32 %v4211, %v5810
    %v5812 = vrot.slane %v5356, %v5811
    %v5813 = vsel %vm4216, %v5812, %v5808
    %v5814 = vlaneseq
    %v5815 = vshrl.u32 %v5814, 7
    %v5816 = vsub.s32 %v4218, %v5815
    %v5817 = vrot.slane %v5359, %v5816
    %v5818 = vsel %vm4223, %v5817, %v5813
    %v5819 = vlaneseq
    %v5820 = vshrl.u32 %v5819, 7
    %v5821 = vsub.s32 %v4225, %v5820
    %v5822 = vrot.slane %v5362, %v5821
    %v5823 = vsel %vm4230, %v5822, %v5818
    %v5824 = vlaneseq
    %v5825 = vshrl.u32 %v5824, 7
    %v5826 = vsub.s32 %v4232, %v5825
    %v5827 = vrot.slane %v5365, %v5826
    %v5828 = vsel %vm4237, %v5827, %v5823
    %v5829 = vlaneseq
    %v5830 = vshrl.u32 %v5829, 7
    %v5831 = vsub.s32 %v4239, %v5830
    %v5832 = vrot.slane %v5368, %v5831
    %v5833 = vsel %vm4244, %v5832, %v5828
    %v5834 = vlaneseq
    %v5835 = vshrl.u32 %v5834, 7
    %v5836 = vsub.s32 %v4246, %v5835
    %v5837 = vrot.slane %v5371, %v5836
    %v5838 = vsel %vm4251, %v5837, %v5833
    %v5839 = vlaneseq
    %v5840 = vshrl.u32 %v5839, 7
    %v5841 = vsub.s32 %v4253, %v5840
    %v5842 = vrot.slane %v5374, %v5841
    %v5843 = vsel %vm4258, %v5842, %v5838
    %v5844 = vlaneseq
    %v5845 = vshrl.u32 %v5844, 7
    %v5846 = vsub.s32 %v4260, %v5845
    %v5847 = vrot.slane %v5377, %v5846
    %v5848 = vsel %vm4265, %v5847, %v5843
    %v5849 = vlaneseq
    %v5850 = vshrl.u32 %v5849, 7
    %v5851 = vsub.s32 %v4267, %v5850
    %v5852 = vrot.slane %v5380, %v5851
    %v5853 = vsel %vm4272, %v5852, %v5848
    %v5854 = vlaneseq
    %v5855 = vshrl.u32 %v5854, 7
    %v5856 = vsub.s32 %v4274, %v5855
    %v5857 = vrot.slane %v5383, %v5856
    %v5858 = vsel %vm4279, %v5857, %v5853
    %v5859 = vlaneseq
    %v5860 = vshrl.u32 %v5859, 7
    %v5861 = vsub.s32 %v4281, %v5860
    %v5862 = vrot.slane %v5386, %v5861
    %v5863 = vsel %vm4286, %v5862, %v5858
    %v5864 = vlaneseq
    %v5865 = vshrl.u32 %v5864, 7
    %v5866 = vsub.s32 %v4178, %v5865
    %v5867 = vrot.slane %v5389, %v5866
    %v5868 = vlaneseq
    %v5869 = vshrl.u32 %v5868, 7
    %v5870 = vsub.s32 %v4183, %v5869
    %v5871 = vrot.slane %v5392, %v5870
    %v5872 = vsel %vm4188, %v5871, %v5867
    %v5873 = vlaneseq
    %v5874 = vshrl.u32 %v5873, 7
    %v5875 = vsub.s32 %v4190, %v5874
    %v5876 = vrot.slane %v5395, %v5875
    %v5877 = vsel %vm4195, %v5876, %v5872
    %v5878 = vlaneseq
    %v5879 = vshrl.u32 %v5878, 7
    %v5880 = vsub.s32 %v4197, %v5879
    %v5881 = vrot.slane %v5398, %v5880
    %v5882 = vsel %vm4202, %v5881, %v5877
    %v5883 = vlaneseq
    %v5884 = vshrl.u32 %v5883, 7
    %v5885 = vsub.s32 %v4204, %v5884
    %v5886 = vrot.slane %v5401, %v5885
    %v5887 = vsel %vm4209, %v5886, %v5882
    %v5888 = vlaneseq
    %v5889 = vshrl.u32 %v5888, 7
    %v5890 = vsub.s32 %v4211, %v5889
    %v5891 = vrot.slane %v5404, %v5890
    %v5892 = vsel %vm4216, %v5891, %v5887
    %v5893 = vlaneseq
    %v5894 = vshrl.u32 %v5893, 7
    %v5895 = vsub.s32 %v4218, %v5894
    %v5896 = vrot.slane %v5407, %v5895
    %v5897 = vsel %vm4223, %v5896, %v5892
    %v5898 = vlaneseq
    %v5899 = vshrl.u32 %v5898, 7
    %v5900 = vsub.s32 %v4225, %v5899
    %v5901 = vrot.slane %v5410, %v5900
    %v5902 = vsel %vm4230, %v5901, %v5897
    %v5903 = vlaneseq
    %v5904 = vshrl.u32 %v5903, 7
    %v5905 = vsub.s32 %v4232, %v5904
    %v5906 = vrot.slane %v5413, %v5905
    %v5907 = vsel %vm4237, %v5906, %v5902
    %v5908 = vlaneseq
    %v5909 = vshrl.u32 %v5908, 7
    %v5910 = vsub.s32 %v4239, %v5909
    %v5911 = vrot.slane %v5416, %v5910
    %v5912 = vsel %vm4244, %v5911, %v5907
    %v5913 = vlaneseq
    %v5914 = vshrl.u32 %v5913, 7
    %v5915 = vsub.s32 %v4246, %v5914
    %v5916 = vrot.slane %v5419, %v5915
    %v5917 = vsel %vm4251, %v5916, %v5912
    %v5918 = vlaneseq
    %v5919 = vshrl.u32 %v5918, 7
    %v5920 = vsub.s32 %v4253, %v5919
    %v5921 = vrot.slane %v5422, %v5920
    %v5922 = vsel %vm4258, %v5921, %v5917
    %v5923 = vlaneseq
    %v5924 = vshrl.u32 %v5923, 7
    %v5925 = vsub.s32 %v4260, %v5924
    %v5926 = vrot.slane %v5425, %v5925
    %v5927 = vsel %vm4265, %v5926, %v5922
    %v5928 = vlaneseq
    %v5929 = vshrl.u32 %v5928, 7
    %v5930 = vsub.s32 %v4267, %v5929
    %v5931 = vrot.slane %v5428, %v5930
    %v5932 = vsel %vm4272, %v5931, %v5927
    %v5933 = vlaneseq
    %v5934 = vshrl.u32 %v5933, 7
    %v5935 = vsub.s32 %v4274, %v5934
    %v5936 = vrot.slane %v5431, %v5935
    %v5937 = vsel %vm4279, %v5936, %v5932
    %v5938 = vlaneseq
    %v5939 = vshrl.u32 %v5938, 7
    %v5940 = vsub.s32 %v4281, %v5939
    %v5941 = vrot.slane %v5434, %v5940
    %v5942 = vsel %vm4286, %v5941, %v5937
    %v5943 = vlaneseq
    %v5944 = vshrl.u32 %v5943, 7
    %v5945 = vsub.s32 %v4178, %v5944
    %v5946 = vrot.slane %v5437, %v5945
    %v5947 = vlaneseq
    %v5948 = vshrl.u32 %v5947, 7
    %v5949 = vsub.s32 %v4183, %v5948
    %v5950 = vrot.slane %v5440, %v5949
    %v5951 = vsel %vm4188, %v5950, %v5946
    %v5952 = vlaneseq
    %v5953 = vshrl.u32 %v5952, 7
    %v5954 = vsub.s32 %v4190, %v5953
    %v5955 = vrot.slane %v5443, %v5954
    %v5956 = vsel %vm4195, %v5955, %v5951
    %v5957 = vlaneseq
    %v5958 = vshrl.u32 %v5957, 7
    %v5959 = vsub.s32 %v4197, %v5958
    %v5960 = vrot.slane %v5446, %v5959
    %v5961 = vsel %vm4202, %v5960, %v5956
    %v5962 = vlaneseq
    %v5963 = vshrl.u32 %v5962, 7
    %v5964 = vsub.s32 %v4204, %v5963
    %v5965 = vrot.slane %v5449, %v5964
    %v5966 = vsel %vm4209, %v5965, %v5961
    %v5967 = vlaneseq
    %v5968 = vshrl.u32 %v5967, 7
    %v5969 = vsub.s32 %v4211, %v5968
    %v5970 = vrot.slane %v5452, %v5969
    %v5971 = vsel %vm4216, %v5970, %v5966
    %v5972 = vlaneseq
    %v5973 = vshrl.u32 %v5972, 7
    %v5974 = vsub.s32 %v4218, %v5973
    %v5975 = vrot.slane %v5455, %v5974
    %v5976 = vsel %vm4223, %v5975, %v5971
    %v5977 = vlaneseq
    %v5978 = vshrl.u32 %v5977, 7
    %v5979 = vsub.s32 %v4225, %v5978
    %v5980 = vrot.slane %v5458, %v5979
    %v5981 = vsel %vm4230, %v5980, %v5976
    %v5982 = vlaneseq
    %v5983 = vshrl.u32 %v5982, 7
    %v5984 = vsub.s32 %v4232, %v5983
    %v5985 = vrot.slane %v5461, %v5984
    %v5986 = vsel %vm4237, %v5985, %v5981
    %v5987 = vlaneseq
    %v5988 = vshrl.u32 %v5987, 7
    %v5989 = vsub.s32 %v4239, %v5988
    %v5990 = vrot.slane %v5464, %v5989
    %v5991 = vsel %vm4244, %v5990, %v5986
    %v5992 = vlaneseq
    %v5993 = vshrl.u32 %v5992, 7
    %v5994 = vsub.s32 %v4246, %v5993
    %v5995 = vrot.slane %v5467, %v5994
    %v5996 = vsel %vm4251, %v5995, %v5991
    %v5997 = vlaneseq
    %v5998 = vshrl.u32 %v5997, 7
    %v5999 = vsub.s32 %v4253, %v5998
    %v6000 = vrot.slane %v5470, %v5999
    %v6001 = vsel %vm4258, %v6000, %v5996
    %v6002 = vlaneseq
    %v6003 = vshrl.u32 %v6002, 7
    %v6004 = vsub.s32 %v4260, %v6003
    %v6005 = vrot.slane %v5473, %v6004
    %v6006 = vsel %vm4265, %v6005, %v6001
    %v6007 = vlaneseq
    %v6008 = vshrl.u32 %v6007, 7
    %v6009 = vsub.s32 %v4267, %v6008
    %v6010 = vrot.slane %v5476, %v6009
    %v6011 = vsel %vm4272, %v6010, %v6006
    %v6012 = vlaneseq
    %v6013 = vshrl.u32 %v6012, 7
    %v6014 = vsub.s32 %v4274, %v6013
    %v6015 = vrot.slane %v5479, %v6014
    %v6016 = vsel %vm4279, %v6015, %v6011
    %v6017 = vlaneseq
    %v6018 = vshrl.u32 %v6017, 7
    %v6019 = vsub.s32 %v4281, %v6018
    %v6020 = vrot.slane %v5482, %v6019
    %v6021 = vsel %vm4286, %v6020, %v6016
    %v6022 = vlaneseq
    %v6023 = vshrl.u32 %v6022, 7
    %v6024 = vsub.s32 %v4178, %v6023
    %v6025 = vrot.slane %v5485, %v6024
    %v6026 = vlaneseq
    %v6027 = vshrl.u32 %v6026, 7
    %v6028 = vsub.s32 %v4183, %v6027
    %v6029 = vrot.slane %v5488, %v6028
    %v6030 = vsel %vm4188, %v6029, %v6025
    %v6031 = vlaneseq
    %v6032 = vshrl.u32 %v6031, 7
    %v6033 = vsub.s32 %v4190, %v6032
    %v6034 = vrot.slane %v5491, %v6033
    %v6035 = vsel %vm4195, %v6034, %v6030
    %v6036 = vlaneseq
    %v6037 = vshrl.u32 %v6036, 7
    %v6038 = vsub.s32 %v4197, %v6037
    %v6039 = vrot.slane %v5494, %v6038
    %v6040 = vsel %vm4202, %v6039, %v6035
    %v6041 = vlaneseq
    %v6042 = vshrl.u32 %v6041, 7
    %v6043 = vsub.s32 %v4204, %v6042
    %v6044 = vrot.slane %v5497, %v6043
    %v6045 = vsel %vm4209, %v6044, %v6040
    %v6046 = vlaneseq
    %v6047 = vshrl.u32 %v6046, 7
    %v6048 = vsub.s32 %v4211, %v6047
    %v6049 = vrot.slane %v5500, %v6048
    %v6050 = vsel %vm4216, %v6049, %v6045
    %v6051 = vlaneseq
    %v6052 = vshrl.u32 %v6051, 7
    %v6053 = vsub.s32 %v4218, %v6052
    %v6054 = vrot.slane %v5503, %v6053
    %v6055 = vsel %vm4223, %v6054, %v6050
    %v6056 = vlaneseq
    %v6057 = vshrl.u32 %v6056, 7
    %v6058 = vsub.s32 %v4225, %v6057
    %v6059 = vrot.slane %v5506, %v6058
    %v6060 = vsel %vm4230, %v6059, %v6055
    %v6061 = vlaneseq
    %v6062 = vshrl.u32 %v6061, 7
    %v6063 = vsub.s32 %v4232, %v6062
    %v6064 = vrot.slane %v5509, %v6063
    %v6065 = vsel %vm4237, %v6064, %v6060
    %v6066 = vlaneseq
    %v6067 = vshrl.u32 %v6066, 7
    %v6068 = vsub.s32 %v4239, %v6067
    %v6069 = vrot.slane %v5512, %v6068
    %v6070 = vsel %vm4244, %v6069, %v6065
    %v6071 = vlaneseq
    %v6072 = vshrl.u32 %v6071, 7
    %v6073 = vsub.s32 %v4246, %v6072
    %v6074 = vrot.slane %v5515, %v6073
    %v6075 = vsel %vm4251, %v6074, %v6070
    %v6076 = vlaneseq
    %v6077 = vshrl.u32 %v6076, 7
    %v6078 = vsub.s32 %v4253, %v6077
    %v6079 = vrot.slane %v5518, %v6078
    %v6080 = vsel %vm4258, %v6079, %v6075
    %v6081 = vlaneseq
    %v6082 = vshrl.u32 %v6081, 7
    %v6083 = vsub.s32 %v4260, %v6082
    %v6084 = vrot.slane %v5521, %v6083
    %v6085 = vsel %vm4265, %v6084, %v6080
    %v6086 = vlaneseq
    %v6087 = vshrl.u32 %v6086, 7
    %v6088 = vsub.s32 %v4267, %v6087
    %v6089 = vrot.slane %v5524, %v6088
    %v6090 = vsel %vm4272, %v6089, %v6085
    %v6091 = vlaneseq
    %v6092 = vshrl.u32 %v6091, 7
    %v6093 = vsub.s32 %v4274, %v6092
    %v6094 = vrot.slane %v5527, %v6093
    %v6095 = vsel %vm4279, %v6094, %v6090
    %v6096 = vlaneseq
    %v6097 = vshrl.u32 %v6096, 7
    %v6098 = vsub.s32 %v4281, %v6097
    %v6099 = vrot.slane %v5530, %v6098
    %v6100 = vsel %vm4286, %v6099, %v6095
    %v6101 = vlaneseq
    %v6102 = vshrl.u32 %v6101, 7
    %v6103 = vsub.s32 %v4178, %v6102
    %v6104 = vrot.slane %v5533, %v6103
    %v6105 = vlaneseq
    %v6106 = vshrl.u32 %v6105, 7
    %v6107 = vsub.s32 %v4183, %v6106
    %v6108 = vrot.slane %v5536, %v6107
    %v6109 = vsel %vm4188, %v6108, %v6104
    %v6110 = vlaneseq
    %v6111 = vshrl.u32 %v6110, 7
    %v6112 = vsub.s32 %v4190, %v6111
    %v6113 = vrot.slane %v5539, %v6112
    %v6114 = vsel %vm4195, %v6113, %v6109
    %v6115 = vlaneseq
    %v6116 = vshrl.u32 %v6115, 7
    %v6117 = vsub.s32 %v4197, %v6116
    %v6118 = vrot.slane %v5542, %v6117
    %v6119 = vsel %vm4202, %v6118, %v6114
    %v6120 = vlaneseq
    %v6121 = vshrl.u32 %v6120, 7
    %v6122 = vsub.s32 %v4204, %v6121
    %v6123 = vrot.slane %v5545, %v6122
    %v6124 = vsel %vm4209, %v6123, %v6119
    %v6125 = vlaneseq
    %v6126 = vshrl.u32 %v6125, 7
    %v6127 = vsub.s32 %v4211, %v6126
    %v6128 = vrot.slane %v5548, %v6127
    %v6129 = vsel %vm4216, %v6128, %v6124
    %v6130 = vlaneseq
    %v6131 = vshrl.u32 %v6130, 7
    %v6132 = vsub.s32 %v4218, %v6131
    %v6133 = vrot.slane %v5551, %v6132
    %v6134 = vsel %vm4223, %v6133, %v6129
    %v6135 = vlaneseq
    %v6136 = vshrl.u32 %v6135, 7
    %v6137 = vsub.s32 %v4225, %v6136
    %v6138 = vrot.slane %v5554, %v6137
    %v6139 = vsel %vm4230, %v6138, %v6134
    %v6140 = vlaneseq
    %v6141 = vshrl.u32 %v6140, 7
    %v6142 = vsub.s32 %v4232, %v6141
    %v6143 = vrot.slane %v5557, %v6142
    %v6144 = vsel %vm4237, %v6143, %v6139
    %v6145 = vlaneseq
    %v6146 = vshrl.u32 %v6145, 7
    %v6147 = vsub.s32 %v4239, %v6146
    %v6148 = vrot.slane %v5560, %v6147
    %v6149 = vsel %vm4244, %v6148, %v6144
    %v6150 = vlaneseq
    %v6151 = vshrl.u32 %v6150, 7
    %v6152 = vsub.s32 %v4246, %v6151
    %v6153 = vrot.slane %v5563, %v6152
    %v6154 = vsel %vm4251, %v6153, %v6149
    %v6155 = vlaneseq
    %v6156 = vshrl.u32 %v6155, 7
    %v6157 = vsub.s32 %v4253, %v6156
    %v6158 = vrot.slane %v5566, %v6157
    %v6159 = vsel %vm4258, %v6158, %v6154
    %v6160 = vlaneseq
    %v6161 = vshrl.u32 %v6160, 7
    %v6162 = vsub.s32 %v4260, %v6161
    %v6163 = vrot.slane %v5569, %v6162
    %v6164 = vsel %vm4265, %v6163, %v6159
    %v6165 = vlaneseq
    %v6166 = vshrl.u32 %v6165, 7
    %v6167 = vsub.s32 %v4267, %v6166
    %v6168 = vrot.slane %v5572, %v6167
    %v6169 = vsel %vm4272, %v6168, %v6164
    %v6170 = vlaneseq
    %v6171 = vshrl.u32 %v6170, 7
    %v6172 = vsub.s32 %v4274, %v6171
    %v6173 = vrot.slane %v5575, %v6172
    %v6174 = vsel %vm4279, %v6173, %v6169
    %v6175 = vlaneseq
    %v6176 = vshrl.u32 %v6175, 7
    %v6177 = vsub.s32 %v4281, %v6176
    %v6178 = vrot.slane %v5578, %v6177
    %v6179 = vsel %vm4286, %v6178, %v6174
    %v6180 = vlaneseq
    %v6181 = vshrl.u32 %v6180, 7
    %v6182 = vsub.s32 %v4178, %v6181
    %v6183 = vrot.slane %v5581, %v6182
    %v6184 = vlaneseq
    %v6185 = vshrl.u32 %v6184, 7
    %v6186 = vsub.s32 %v4183, %v6185
    %v6187 = vrot.slane %v5584, %v6186
    %v6188 = vsel %vm4188, %v6187, %v6183
    %v6189 = vlaneseq
    %v6190 = vshrl.u32 %v6189, 7
    %v6191 = vsub.s32 %v4190, %v6190
    %v6192 = vrot.slane %v5587, %v6191
    %v6193 = vsel %vm4195, %v6192, %v6188
    %v6194 = vlaneseq
    %v6195 = vshrl.u32 %v6194, 7
    %v6196 = vsub.s32 %v4197, %v6195
    %v6197 = vrot.slane %v5590, %v6196
    %v6198 = vsel %vm4202, %v6197, %v6193
    %v6199 = vlaneseq
    %v6200 = vshrl.u32 %v6199, 7
    %v6201 = vsub.s32 %v4204, %v6200
    %v6202 = vrot.slane %v5593, %v6201
    %v6203 = vsel %vm4209, %v6202, %v6198
    %v6204 = vlaneseq
    %v6205 = vshrl.u32 %v6204, 7
    %v6206 = vsub.s32 %v4211, %v6205
    %v6207 = vrot.slane %v5596, %v6206
    %v6208 = vsel %vm4216, %v6207, %v6203
    %v6209 = vlaneseq
    %v6210 = vshrl.u32 %v6209, 7
    %v6211 = vsub.s32 %v4218, %v6210
    %v6212 = vrot.slane %v5599, %v6211
    %v6213 = vsel %vm4223, %v6212, %v6208
    %v6214 = vlaneseq
    %v6215 = vshrl.u32 %v6214, 7
    %v6216 = vsub.s32 %v4225, %v6215
    %v6217 = vrot.slane %v5602, %v6216
    %v6218 = vsel %vm4230, %v6217, %v6213
    %v6219 = vlaneseq
    %v6220 = vshrl.u32 %v6219, 7
    %v6221 = vsub.s32 %v4232, %v6220
    %v6222 = vrot.slane %v5605, %v6221
    %v6223 = vsel %vm4237, %v6222, %v6218
    %v6224 = vlaneseq
    %v6225 = vshrl.u32 %v6224, 7
    %v6226 = vsub.s32 %v4239, %v6225
    %v6227 = vrot.slane %v5608, %v6226
    %v6228 = vsel %vm4244, %v6227, %v6223
    %v6229 = vlaneseq
    %v6230 = vshrl.u32 %v6229, 7
    %v6231 = vsub.s32 %v4246, %v6230
    %v6232 = vrot.slane %v5611, %v6231
    %v6233 = vsel %vm4251, %v6232, %v6228
    %v6234 = vlaneseq
    %v6235 = vshrl.u32 %v6234, 7
    %v6236 = vsub.s32 %v4253, %v6235
    %v6237 = vrot.slane %v5614, %v6236
    %v6238 = vsel %vm4258, %v6237, %v6233
    %v6239 = vlaneseq
    %v6240 = vshrl.u32 %v6239, 7
    %v6241 = vsub.s32 %v4260, %v6240
    %v6242 = vrot.slane %v5617, %v6241
    %v6243 = vsel %vm4265, %v6242, %v6238
    %v6244 = vlaneseq
    %v6245 = vshrl.u32 %v6244, 7
    %v6246 = vsub.s32 %v4267, %v6245
    %v6247 = vrot.slane %v5620, %v6246
    %v6248 = vsel %vm4272, %v6247, %v6243
    %v6249 = vlaneseq
    %v6250 = vshrl.u32 %v6249, 7
    %v6251 = vsub.s32 %v4274, %v6250
    %v6252 = vrot.slane %v5623, %v6251
    %v6253 = vsel %vm4279, %v6252, %v6248
    %v6254 = vlaneseq
    %v6255 = vshrl.u32 %v6254, 7
    %v6256 = vsub.s32 %v4281, %v6255
    %v6257 = vrot.slane %v5626, %v6256
    %v6258 = vsel %vm4286, %v6257, %v6253
    %v6259 = vsel %vm4841, %v5784, %v5705
    %v6260 = vsel %vm4843, %v5863, %v6259
    %v6261 = vsel %vm4845, %v5942, %v6260
    %v6262 = vsel %vm4847, %v6021, %v6261
    %v6263 = vsel %vm4849, %v6100, %v6262
    %v6264 = vsel %vm4851, %v6179, %v6263
    %v6265 = vsel %vm4853, %v6258, %v6264
    %6267 = vst [vmem:[#allocation4] sm:$0xff] %v6265
    %v6268 = vmul.f32 %v2614, %v2879
    %v6269 = vmul.f32 %v2615, %v2883
    %v6270 = vmul.f32 %v2616, %v2887
    %v6271 = vmul.f32 %v2617, %v2891
    %v6272 = vmul.f32 %v2618, %v2895
    %v6273 = vmul.f32 %v2619, %v2899
    %v6274 = vmul.f32 %v2620, %v2903
    %v6275 = vmul.f32 %v2621, %v2907
    %v6276 = vmul.f32 %v2622, %v2911
    %v6277 = vmul.f32 %v2623, %v2915
    %v6278 = vmul.f32 %v2624, %v2919
    %v6279 = vmul.f32 %v2625, %v2923
    %v6280 = vmul.f32 %v2626, %v2927
    %v6281 = vmul.f32 %v2627, %v2931
    %v6282 = vmul.f32 %v2628, %v2935
    %v6283 = vmul.f32 %v2629, %v2939
    %v6284 = vmul.f32 %v2630, %v2946
    %v6285 = vmul.f32 %v2631, %v2950
    %v6286 = vmul.f32 %v2632, %v2954
    %v6287 = vmul.f32 %v2633, %v2958
    %v6288 = vmul.f32 %v2634, %v2962
    %v6289 = vmul.f32 %v2635, %v2966
    %v6290 = vmul.f32 %v2636, %v2970
    %v6291 = vmul.f32 %v2637, %v2974
    %v6292 = vmul.f32 %v2638, %v2978
    %v6293 = vmul.f32 %v2639, %v2982
    %v6294 = vmul.f32 %v2640, %v2986
    %v6295 = vmul.f32 %v2641, %v2990
    %v6296 = vmul.f32 %v2642, %v2994
    %v6297 = vmul.f32 %v2643, %v2998
    %v6298 = vmul.f32 %v2644, %v3002
    %v6299 = vmul.f32 %v2645, %v3006
    %v6300 = vmul.f32 %v2646, %v3013
    %v6301 = vmul.f32 %v2647, %v3017
    %v6302 = vmul.f32 %v2648, %v3021
    %v6303 = vmul.f32 %v2649, %v3025
    %v6304 = vmul.f32 %v2650, %v3029
    %v6305 = vmul.f32 %v2651, %v3033
    %v6306 = vmul.f32 %v2652, %v3037
    %v6307 = vmul.f32 %v2653, %v3041
    %v6308 = vmul.f32 %v2654, %v3045
    %v6309 = vmul.f32 %v2655, %v3049
    %v6310 = vmul.f32 %v2656, %v3053
    %v6311 = vmul.f32 %v2657, %v3057
    %v6312 = vmul.f32 %v2658, %v3061
    %v6313 = vmul.f32 %v2659, %v3065
    %v6314 = vmul.f32 %v2660, %v3069
    %v6315 = vmul.f32 %v2661, %v3073
    %v6316 = vmul.f32 %v2662, %v3080
    %v6317 = vmul.f32 %v2663, %v3084
    %v6318 = vmul.f32 %v2664, %v3088
    %v6319 = vmul.f32 %v2665, %v3092
    %v6320 = vmul.f32 %v2666, %v3096
    %v6321 = vmul.f32 %v2667, %v3100
    %v6322 = vmul.f32 %v2668, %v3104
    %v6323 = vmul.f32 %v2669, %v3108
    %v6324 = vmul.f32 %v2670, %v3112
    %v6325 = vmul.f32 %v2671, %v3116
    %v6326 = vmul.f32 %v2672, %v3120
    %v6327 = vmul.f32 %v2673, %v3124
    %v6328 = vmul.f32 %v2674, %v3128
    %v6329 = vmul.f32 %v2675, %v3132
    %v6330 = vmul.f32 %v2676, %v3136
    %v6331 = vmul.f32 %v2677, %v3140
    %v6332 = vmul.f32 %v2678, %v3147
    %v6333 = vmul.f32 %v2679, %v3151
    %v6334 = vmul.f32 %v2680, %v3155
    %v6335 = vmul.f32 %v2681, %v3159
    %v6336 = vmul.f32 %v2682, %v3163
    %v6337 = vmul.f32 %v2683, %v3167
    %v6338 = vmul.f32 %v2684, %v3171
    %v6339 = vmul.f32 %v2685, %v3175
    %v6340 = vmul.f32 %v2686, %v3179
    %v6341 = vmul.f32 %v2687, %v3183
    %v6342 = vmul.f32 %v2688, %v3187
    %v6343 = vmul.f32 %v2689, %v3191
    %v6344 = vmul.f32 %v2690, %v3195
    %v6345 = vmul.f32 %v2691, %v3199
    %v6346 = vmul.f32 %v2692, %v3203
    %v6347 = vmul.f32 %v2693, %v3207
    %v6348 = vmul.f32 %v2694, %v3214
    %v6349 = vmul.f32 %v2695, %v3218
    %v6350 = vmul.f32 %v2696, %v3222
    %v6351 = vmul.f32 %v2697, %v3226
    %v6352 = vmul.f32 %v2698, %v3230
    %v6353 = vmul.f32 %v2699, %v3234
    %v6354 = vmul.f32 %v2700, %v3238
    %v6355 = vmul.f32 %v2701, %v3242
    %v6356 = vmul.f32 %v2702, %v3246
    %v6357 = vmul.f32 %v2703, %v3250
    %v6358 = vmul.f32 %v2704, %v3254
    %v6359 = vmul.f32 %v2705, %v3258
    %v6360 = vmul.f32 %v2706, %v3262
    %v6361 = vmul.f32 %v2707, %v3266
    %v6362 = vmul.f32 %v2708, %v3270
    %v6363 = vmul.f32 %v2709, %v3274
    %v6364 = vmul.f32 %v2710, %v3281
    %v6365 = vmul.f32 %v2711, %v3285
    %v6366 = vmul.f32 %v2712, %v3289
    %v6367 = vmul.f32 %v2713, %v3293
    %v6368 = vmul.f32 %v2714, %v3297
    %v6369 = vmul.f32 %v2715, %v3301
    %v6370 = vmul.f32 %v2716, %v3305
    %v6371 = vmul.f32 %v2717, %v3309
    %v6372 = vmul.f32 %v2718, %v3313
    %v6373 = vmul.f32 %v2719, %v3317
    %v6374 = vmul.f32 %v2720, %v3321
    %v6375 = vmul.f32 %v2721, %v3325
    %v6376 = vmul.f32 %v2722, %v3329
    %v6377 = vmul.f32 %v2723, %v3333
    %v6378 = vmul.f32 %v2724, %v3337
    %v6379 = vmul.f32 %v2725, %v3341
    %v6380 = vmul.f32 %v2726, %v3348
    %v6381 = vmul.f32 %v2727, %v3352
    %v6382 = vmul.f32 %v2728, %v3356
    %v6383 = vmul.f32 %v2729, %v3360
    %v6384 = vmul.f32 %v2730, %v3364
    %v6385 = vmul.f32 %v2731, %v3368
    %v6386 = vmul.f32 %v2732, %v3372
    %v6387 = vmul.f32 %v2733, %v3376
    %v6388 = vmul.f32 %v2734, %v3380
    %v6389 = vmul.f32 %v2735, %v3384
    %v6390 = vmul.f32 %v2736, %v3388
    %v6391 = vmul.f32 %v2737, %v3392
    %v6392 = vmul.f32 %v2738, %v3396
    %v6393 = vmul.f32 %v2739, %v3400
    %v6394 = vmul.f32 %v2740, %v3404
    %v6395 = vmul.f32 %v2741, %v3408
    %v6397 = vlaneseq
    %v6398 = vshrl.u32 %v6397, 7
    %v6399 = vsub.s32 0, %v6398
    %v6400 = vrot.slane %v2612, %v6399
    %6402 = vbcast.lane.b32.xlu0 %v6400, 256
    %v6403 = vpop.permute.xlu0 %6402
    %s6405 = sor.u32 256, 8
    %6406 = vbcast.lane.b32.xlu0 %v6400, %s6405
    %v6407 = vpop.permute.xlu0 %6406
    %s6409 = sor.u32 256, 16
    %6410 = vbcast.lane.b32.xlu0 %v6400, %s6409
    %v6411 = vpop.permute.xlu0 %6410
    %s6413 = sor.u32 256, 24
    %6414 = vbcast.lane.b32.xlu0 %v6400, %s6413
    %v6415 = vpop.permute.xlu0 %6414
    %s6417 = sor.u32 256, 32
    %6418 = vbcast.lane.b32.xlu0 %v6400, %s6417
    %v6419 = vpop.permute.xlu0 %6418
    %s6421 = sor.u32 256, 40
    %6422 = vbcast.lane.b32.xlu0 %v6400, %s6421
    %v6423 = vpop.permute.xlu0 %6422
    %s6425 = sor.u32 256, 48
    %6426 = vbcast.lane.b32.xlu0 %v6400, %s6425
    %v6427 = vpop.permute.xlu0 %6426
    %s6429 = sor.u32 256, 56
    %6430 = vbcast.lane.b32.xlu0 %v6400, %s6429
    %v6431 = vpop.permute.xlu0 %6430
    %s6433 = sor.u32 256, 64
    %6434 = vbcast.lane.b32.xlu0 %v6400, %s6433
    %v6435 = vpop.permute.xlu0 %6434
    %s6437 = sor.u32 256, 72
    %6438 = vbcast.lane.b32.xlu0 %v6400, %s6437
    %v6439 = vpop.permute.xlu0 %6438
    %s6441 = sor.u32 256, 80
    %6442 = vbcast.lane.b32.xlu0 %v6400, %s6441
    %v6443 = vpop.permute.xlu0 %6442
    %s6445 = sor.u32 256, 88
    %6446 = vbcast.lane.b32.xlu0 %v6400, %s6445
    %v6447 = vpop.permute.xlu0 %6446
    %s6449 = sor.u32 256, 96
    %6450 = vbcast.lane.b32.xlu0 %v6400, %s6449
    %v6451 = vpop.permute.xlu0 %6450
    %s6453 = sor.u32 256, 104
    %6454 = vbcast.lane.b32.xlu0 %v6400, %s6453
    %v6455 = vpop.permute.xlu0 %6454
    %s6457 = sor.u32 256, 112
    %6458 = vbcast.lane.b32.xlu0 %v6400, %s6457
    %v6459 = vpop.permute.xlu0 %6458
    %s6461 = sor.u32 256, 120
    %6462 = vbcast.lane.b32.xlu0 %v6400, %s6461
    %v6463 = vpop.permute.xlu0 %6462
    %v6464 = vlaneseq
    %v6465 = vshrl.u32 %v6464, 7
    %v6466 = vsub.s32 1, %v6465
    %v6467 = vrot.slane %v2612, %v6466
    %6469 = vbcast.lane.b32.xlu0 %v6467, 256
    %v6470 = vpop.permute.xlu0 %6469
    %s6472 = sor.u32 256, 8
    %6473 = vbcast.lane.b32.xlu0 %v6467, %s6472
    %v6474 = vpop.permute.xlu0 %6473
    %s6476 = sor.u32 256, 16
    %6477 = vbcast.lane.b32.xlu0 %v6467, %s6476
    %v6478 = vpop.permute.xlu0 %6477
    %s6480 = sor.u32 256, 24
    %6481 = vbcast.lane.b32.xlu0 %v6467, %s6480
    %v6482 = vpop.permute.xlu0 %6481
    %s6484 = sor.u32 256, 32
    %6485 = vbcast.lane.b32.xlu0 %v6467, %s6484
    %v6486 = vpop.permute.xlu0 %6485
    %s6488 = sor.u32 256, 40
    %6489 = vbcast.lane.b32.xlu0 %v6467, %s6488
    %v6490 = vpop.permute.xlu0 %6489
    %s6492 = sor.u32 256, 48
    %6493 = vbcast.lane.b32.xlu0 %v6467, %s6492
    %v6494 = vpop.permute.xlu0 %6493
    %s6496 = sor.u32 256, 56
    %6497 = vbcast.lane.b32.xlu0 %v6467, %s6496
    %v6498 = vpop.permute.xlu0 %6497
    %s6500 = sor.u32 256, 64
    %6501 = vbcast.lane.b32.xlu0 %v6467, %s6500
    %v6502 = vpop.permute.xlu0 %6501
    %s6504 = sor.u32 256, 72
    %6505 = vbcast.lane.b32.xlu0 %v6467, %s6504
    %v6506 = vpop.permute.xlu0 %6505
    %s6508 = sor.u32 256, 80
    %6509 = vbcast.lane.b32.xlu0 %v6467, %s6508
    %v6510 = vpop.permute.xlu0 %6509
    %s6512 = sor.u32 256, 88
    %6513 = vbcast.lane.b32.xlu0 %v6467, %s6512
    %v6514 = vpop.permute.xlu0 %6513
    %s6516 = sor.u32 256, 96
    %6517 = vbcast.lane.b32.xlu0 %v6467, %s6516
    %v6518 = vpop.permute.xlu0 %6517
    %s6520 = sor.u32 256, 104
    %6521 = vbcast.lane.b32.xlu0 %v6467, %s6520
    %v6522 = vpop.permute.xlu0 %6521
    %s6524 = sor.u32 256, 112
    %6525 = vbcast.lane.b32.xlu0 %v6467, %s6524
    %v6526 = vpop.permute.xlu0 %6525
    %s6528 = sor.u32 256, 120
    %6529 = vbcast.lane.b32.xlu0 %v6467, %s6528
    %v6530 = vpop.permute.xlu0 %6529
    %v6531 = vlaneseq
    %v6532 = vshrl.u32 %v6531, 7
    %v6533 = vsub.s32 2, %v6532
    %v6534 = vrot.slane %v2612, %v6533
    %6536 = vbcast.lane.b32.xlu0 %v6534, 256
    %v6537 = vpop.permute.xlu0 %6536
    %s6539 = sor.u32 256, 8
    %6540 = vbcast.lane.b32.xlu0 %v6534, %s6539
    %v6541 = vpop.permute.xlu0 %6540
    %s6543 = sor.u32 256, 16
    %6544 = vbcast.lane.b32.xlu0 %v6534, %s6543
    %v6545 = vpop.permute.xlu0 %6544
    %s6547 = sor.u32 256, 24
    %6548 = vbcast.lane.b32.xlu0 %v6534, %s6547
    %v6549 = vpop.permute.xlu0 %6548
    %s6551 = sor.u32 256, 32
    %6552 = vbcast.lane.b32.xlu0 %v6534, %s6551
    %v6553 = vpop.permute.xlu0 %6552
    %s6555 = sor.u32 256, 40
    %6556 = vbcast.lane.b32.xlu0 %v6534, %s6555
    %v6557 = vpop.permute.xlu0 %6556
    %s6559 = sor.u32 256, 48
    %6560 = vbcast.lane.b32.xlu0 %v6534, %s6559
    %v6561 = vpop.permute.xlu0 %6560
    %s6563 = sor.u32 256, 56
    %6564 = vbcast.lane.b32.xlu0 %v6534, %s6563
    %v6565 = vpop.permute.xlu0 %6564
    %s6567 = sor.u32 256, 64
    %6568 = vbcast.lane.b32.xlu0 %v6534, %s6567
    %v6569 = vpop.permute.xlu0 %6568
    %s6571 = sor.u32 256, 72
    %6572 = vbcast.lane.b32.xlu0 %v6534, %s6571
    %v6573 = vpop.permute.xlu0 %6572
    %s6575 = sor.u32 256, 80
    %6576 = vbcast.lane.b32.xlu0 %v6534, %s6575
    %v6577 = vpop.permute.xlu0 %6576
    %s6579 = sor.u32 256, 88
    %6580 = vbcast.lane.b32.xlu0 %v6534, %s6579
    %v6581 = vpop.permute.xlu0 %6580
    %s6583 = sor.u32 256, 96
    %6584 = vbcast.lane.b32.xlu0 %v6534, %s6583
    %v6585 = vpop.permute.xlu0 %6584
    %s6587 = sor.u32 256, 104
    %6588 = vbcast.lane.b32.xlu0 %v6534, %s6587
    %v6589 = vpop.permute.xlu0 %6588
    %s6591 = sor.u32 256, 112
    %6592 = vbcast.lane.b32.xlu0 %v6534, %s6591
    %v6593 = vpop.permute.xlu0 %6592
    %s6595 = sor.u32 256, 120
    %6596 = vbcast.lane.b32.xlu0 %v6534, %s6595
    %v6597 = vpop.permute.xlu0 %6596
    %v6598 = vlaneseq
    %v6599 = vshrl.u32 %v6598, 7
    %v6600 = vsub.s32 3, %v6599
    %v6601 = vrot.slane %v2612, %v6600
    %6603 = vbcast.lane.b32.xlu0 %v6601, 256
    %v6604 = vpop.permute.xlu0 %6603
    %s6606 = sor.u32 256, 8
    %6607 = vbcast.lane.b32.xlu0 %v6601, %s6606
    %v6608 = vpop.permute.xlu0 %6607
    %s6610 = sor.u32 256, 16
    %6611 = vbcast.lane.b32.xlu0 %v6601, %s6610
    %v6612 = vpop.permute.xlu0 %6611
    %s6614 = sor.u32 256, 24
    %6615 = vbcast.lane.b32.xlu0 %v6601, %s6614
    %v6616 = vpop.permute.xlu0 %6615
    %s6618 = sor.u32 256, 32
    %6619 = vbcast.lane.b32.xlu0 %v6601, %s6618
    %v6620 = vpop.permute.xlu0 %6619
    %s6622 = sor.u32 256, 40
    %6623 = vbcast.lane.b32.xlu0 %v6601, %s6622
    %v6624 = vpop.permute.xlu0 %6623
    %s6626 = sor.u32 256, 48
    %6627 = vbcast.lane.b32.xlu0 %v6601, %s6626
    %v6628 = vpop.permute.xlu0 %6627
    %s6630 = sor.u32 256, 56
    %6631 = vbcast.lane.b32.xlu0 %v6601, %s6630
    %v6632 = vpop.permute.xlu0 %6631
    %s6634 = sor.u32 256, 64
    %6635 = vbcast.lane.b32.xlu0 %v6601, %s6634
    %v6636 = vpop.permute.xlu0 %6635
    %s6638 = sor.u32 256, 72
    %6639 = vbcast.lane.b32.xlu0 %v6601, %s6638
    %v6640 = vpop.permute.xlu0 %6639
    %s6642 = sor.u32 256, 80
    %6643 = vbcast.lane.b32.xlu0 %v6601, %s6642
    %v6644 = vpop.permute.xlu0 %6643
    %s6646 = sor.u32 256, 88
    %6647 = vbcast.lane.b32.xlu0 %v6601, %s6646
    %v6648 = vpop.permute.xlu0 %6647
    %s6650 = sor.u32 256, 96
    %6651 = vbcast.lane.b32.xlu0 %v6601, %s6650
    %v6652 = vpop.permute.xlu0 %6651
    %s6654 = sor.u32 256, 104
    %6655 = vbcast.lane.b32.xlu0 %v6601, %s6654
    %v6656 = vpop.permute.xlu0 %6655
    %s6658 = sor.u32 256, 112
    %6659 = vbcast.lane.b32.xlu0 %v6601, %s6658
    %v6660 = vpop.permute.xlu0 %6659
    %s6662 = sor.u32 256, 120
    %6663 = vbcast.lane.b32.xlu0 %v6601, %s6662
    %v6664 = vpop.permute.xlu0 %6663
    %v6665 = vlaneseq
    %v6666 = vshrl.u32 %v6665, 7
    %v6667 = vsub.s32 4, %v6666
    %v6668 = vrot.slane %v2612, %v6667
    %6670 = vbcast.lane.b32.xlu0 %v6668, 256
    %v6671 = vpop.permute.xlu0 %6670
    %s6673 = sor.u32 256, 8
    %6674 = vbcast.lane.b32.xlu0 %v6668, %s6673
    %v6675 = vpop.permute.xlu0 %6674
    %s6677 = sor.u32 256, 16
    %6678 = vbcast.lane.b32.xlu0 %v6668, %s6677
    %v6679 = vpop.permute.xlu0 %6678
    %s6681 = sor.u32 256, 24
    %6682 = vbcast.lane.b32.xlu0 %v6668, %s6681
    %v6683 = vpop.permute.xlu0 %6682
    %s6685 = sor.u32 256, 32
    %6686 = vbcast.lane.b32.xlu0 %v6668, %s6685
    %v6687 = vpop.permute.xlu0 %6686
    %s6689 = sor.u32 256, 40
    %6690 = vbcast.lane.b32.xlu0 %v6668, %s6689
    %v6691 = vpop.permute.xlu0 %6690
    %s6693 = sor.u32 256, 48
    %6694 = vbcast.lane.b32.xlu0 %v6668, %s6693
    %v6695 = vpop.permute.xlu0 %6694
    %s6697 = sor.u32 256, 56
    %6698 = vbcast.lane.b32.xlu0 %v6668, %s6697
    %v6699 = vpop.permute.xlu0 %6698
    %s6701 = sor.u32 256, 64
    %6702 = vbcast.lane.b32.xlu0 %v6668, %s6701
    %v6703 = vpop.permute.xlu0 %6702
    %s6705 = sor.u32 256, 72
    %6706 = vbcast.lane.b32.xlu0 %v6668, %s6705
    %v6707 = vpop.permute.xlu0 %6706
    %s6709 = sor.u32 256, 80
    %6710 = vbcast.lane.b32.xlu0 %v6668, %s6709
    %v6711 = vpop.permute.xlu0 %6710
    %s6713 = sor.u32 256, 88
    %6714 = vbcast.lane.b32.xlu0 %v6668, %s6713
    %v6715 = vpop.permute.xlu0 %6714
    %s6717 = sor.u32 256, 96
    %6718 = vbcast.lane.b32.xlu0 %v6668, %s6717
    %v6719 = vpop.permute.xlu0 %6718
    %s6721 = sor.u32 256, 104
    %6722 = vbcast.lane.b32.xlu0 %v6668, %s6721
    %v6723 = vpop.permute.xlu0 %6722
    %s6725 = sor.u32 256, 112
    %6726 = vbcast.lane.b32.xlu0 %v6668, %s6725
    %v6727 = vpop.permute.xlu0 %6726
    %s6729 = sor.u32 256, 120
    %6730 = vbcast.lane.b32.xlu0 %v6668, %s6729
    %v6731 = vpop.permute.xlu0 %6730
    %v6732 = vlaneseq
    %v6733 = vshrl.u32 %v6732, 7
    %v6734 = vsub.s32 5, %v6733
    %v6735 = vrot.slane %v2612, %v6734
    %6737 = vbcast.lane.b32.xlu0 %v6735, 256
    %v6738 = vpop.permute.xlu0 %6737
    %s6740 = sor.u32 256, 8
    %6741 = vbcast.lane.b32.xlu0 %v6735, %s6740
    %v6742 = vpop.permute.xlu0 %6741
    %s6744 = sor.u32 256, 16
    %6745 = vbcast.lane.b32.xlu0 %v6735, %s6744
    %v6746 = vpop.permute.xlu0 %6745
    %s6748 = sor.u32 256, 24
    %6749 = vbcast.lane.b32.xlu0 %v6735, %s6748
    %v6750 = vpop.permute.xlu0 %6749
    %s6752 = sor.u32 256, 32
    %6753 = vbcast.lane.b32.xlu0 %v6735, %s6752
    %v6754 = vpop.permute.xlu0 %6753
    %s6756 = sor.u32 256, 40
    %6757 = vbcast.lane.b32.xlu0 %v6735, %s6756
    %v6758 = vpop.permute.xlu0 %6757
    %s6760 = sor.u32 256, 48
    %6761 = vbcast.lane.b32.xlu0 %v6735, %s6760
    %v6762 = vpop.permute.xlu0 %6761
    %s6764 = sor.u32 256, 56
    %6765 = vbcast.lane.b32.xlu0 %v6735, %s6764
    %v6766 = vpop.permute.xlu0 %6765
    %s6768 = sor.u32 256, 64
    %6769 = vbcast.lane.b32.xlu0 %v6735, %s6768
    %v6770 = vpop.permute.xlu0 %6769
    %s6772 = sor.u32 256, 72
    %6773 = vbcast.lane.b32.xlu0 %v6735, %s6772
    %v6774 = vpop.permute.xlu0 %6773
    %s6776 = sor.u32 256, 80
    %6777 = vbcast.lane.b32.xlu0 %v6735, %s6776
    %v6778 = vpop.permute.xlu0 %6777
    %s6780 = sor.u32 256, 88
    %6781 = vbcast.lane.b32.xlu0 %v6735, %s6780
    %v6782 = vpop.permute.xlu0 %6781
    %s6784 = sor.u32 256, 96
    %6785 = vbcast.lane.b32.xlu0 %v6735, %s6784
    %v6786 = vpop.permute.xlu0 %6785
    %s6788 = sor.u32 256, 104
    %6789 = vbcast.lane.b32.xlu0 %v6735, %s6788
    %v6790 = vpop.permute.xlu0 %6789
    %s6792 = sor.u32 256, 112
    %6793 = vbcast.lane.b32.xlu0 %v6735, %s6792
    %v6794 = vpop.permute.xlu0 %6793
    %s6796 = sor.u32 256, 120
    %6797 = vbcast.lane.b32.xlu0 %v6735, %s6796
    %v6798 = vpop.permute.xlu0 %6797
    %v6799 = vlaneseq
    %v6800 = vshrl.u32 %v6799, 7
    %v6801 = vsub.s32 6, %v6800
    %v6802 = vrot.slane %v2612, %v6801
    %6804 = vbcast.lane.b32.xlu0 %v6802, 256
    %v6805 = vpop.permute.xlu0 %6804
    %s6807 = sor.u32 256, 8
    %6808 = vbcast.lane.b32.xlu0 %v6802, %s6807
    %v6809 = vpop.permute.xlu0 %6808
    %s6811 = sor.u32 256, 16
    %6812 = vbcast.lane.b32.xlu0 %v6802, %s6811
    %v6813 = vpop.permute.xlu0 %6812
    %s6815 = sor.u32 256, 24
    %6816 = vbcast.lane.b32.xlu0 %v6802, %s6815
    %v6817 = vpop.permute.xlu0 %6816
    %s6819 = sor.u32 256, 32
    %6820 = vbcast.lane.b32.xlu0 %v6802, %s6819
    %v6821 = vpop.permute.xlu0 %6820
    %s6823 = sor.u32 256, 40
    %6824 = vbcast.lane.b32.xlu0 %v6802, %s6823
    %v6825 = vpop.permute.xlu0 %6824
    %s6827 = sor.u32 256, 48
    %6828 = vbcast.lane.b32.xlu0 %v6802, %s6827
    %v6829 = vpop.permute.xlu0 %6828
    %s6831 = sor.u32 256, 56
    %6832 = vbcast.lane.b32.xlu0 %v6802, %s6831
    %v6833 = vpop.permute.xlu0 %6832
    %s6835 = sor.u32 256, 64
    %6836 = vbcast.lane.b32.xlu0 %v6802, %s6835
    %v6837 = vpop.permute.xlu0 %6836
    %s6839 = sor.u32 256, 72
    %6840 = vbcast.lane.b32.xlu0 %v6802, %s6839
    %v6841 = vpop.permute.xlu0 %6840
    %s6843 = sor.u32 256, 80
    %6844 = vbcast.lane.b32.xlu0 %v6802, %s6843
    %v6845 = vpop.permute.xlu0 %6844
    %s6847 = sor.u32 256, 88
    %6848 = vbcast.lane.b32.xlu0 %v6802, %s6847
    %v6849 = vpop.permute.xlu0 %6848
    %s6851 = sor.u32 256, 96
    %6852 = vbcast.lane.b32.xlu0 %v6802, %s6851
    %v6853 = vpop.permute.xlu0 %6852
    %s6855 = sor.u32 256, 104
    %6856 = vbcast.lane.b32.xlu0 %v6802, %s6855
    %v6857 = vpop.permute.xlu0 %6856
    %s6859 = sor.u32 256, 112
    %6860 = vbcast.lane.b32.xlu0 %v6802, %s6859
    %v6861 = vpop.permute.xlu0 %6860
    %s6863 = sor.u32 256, 120
    %6864 = vbcast.lane.b32.xlu0 %v6802, %s6863
    %v6865 = vpop.permute.xlu0 %6864
    %v6866 = vlaneseq
    %v6867 = vshrl.u32 %v6866, 7
    %v6868 = vsub.s32 7, %v6867
    %v6869 = vrot.slane %v2612, %v6868
    %6871 = vbcast.lane.b32.xlu0 %v6869, 256
    %v6872 = vpop.permute.xlu0 %6871
    %s6874 = sor.u32 256, 8
    %6875 = vbcast.lane.b32.xlu0 %v6869, %s6874
    %v6876 = vpop.permute.xlu0 %6875
    %s6878 = sor.u32 256, 16
    %6879 = vbcast.lane.b32.xlu0 %v6869, %s6878
    %v6880 = vpop.permute.xlu0 %6879
    %s6882 = sor.u32 256, 24
    %6883 = vbcast.lane.b32.xlu0 %v6869, %s6882
    %v6884 = vpop.permute.xlu0 %6883
    %s6886 = sor.u32 256, 32
    %6887 = vbcast.lane.b32.xlu0 %v6869, %s6886
    %v6888 = vpop.permute.xlu0 %6887
    %s6890 = sor.u32 256, 40
    %6891 = vbcast.lane.b32.xlu0 %v6869, %s6890
    %v6892 = vpop.permute.xlu0 %6891
    %s6894 = sor.u32 256, 48
    %6895 = vbcast.lane.b32.xlu0 %v6869, %s6894
    %v6896 = vpop.permute.xlu0 %6895
    %s6898 = sor.u32 256, 56
    %6899 = vbcast.lane.b32.xlu0 %v6869, %s6898
    %v6900 = vpop.permute.xlu0 %6899
    %s6902 = sor.u32 256, 64
    %6903 = vbcast.lane.b32.xlu0 %v6869, %s6902
    %v6904 = vpop.permute.xlu0 %6903
    %s6906 = sor.u32 256, 72
    %6907 = vbcast.lane.b32.xlu0 %v6869, %s6906
    %v6908 = vpop.permute.xlu0 %6907
    %s6910 = sor.u32 256, 80
    %6911 = vbcast.lane.b32.xlu0 %v6869, %s6910
    %v6912 = vpop.permute.xlu0 %6911
    %s6914 = sor.u32 256, 88
    %6915 = vbcast.lane.b32.xlu0 %v6869, %s6914
    %v6916 = vpop.permute.xlu0 %6915
    %s6918 = sor.u32 256, 96
    %6919 = vbcast.lane.b32.xlu0 %v6869, %s6918
    %v6920 = vpop.permute.xlu0 %6919
    %s6922 = sor.u32 256, 104
    %6923 = vbcast.lane.b32.xlu0 %v6869, %s6922
    %v6924 = vpop.permute.xlu0 %6923
    %s6926 = sor.u32 256, 112
    %6927 = vbcast.lane.b32.xlu0 %v6869, %s6926
    %v6928 = vpop.permute.xlu0 %6927
    %s6930 = sor.u32 256, 120
    %6931 = vbcast.lane.b32.xlu0 %v6869, %s6930
    %v6932 = vpop.permute.xlu0 %6931
    %v7061 = vmul.f32 %v6268, %v6403
    %v7062 = vmul.f32 %v6269, %v6407
    %v7063 = vmul.f32 %v6270, %v6411
    %v7064 = vmul.f32 %v6271, %v6415
    %v7065 = vmul.f32 %v6272, %v6419
    %v7066 = vmul.f32 %v6273, %v6423
    %v7067 = vmul.f32 %v6274, %v6427
    %v7068 = vmul.f32 %v6275, %v6431
    %v7069 = vmul.f32 %v6276, %v6435
    %v7070 = vmul.f32 %v6277, %v6439
    %v7071 = vmul.f32 %v6278, %v6443
    %v7072 = vmul.f32 %v6279, %v6447
    %v7073 = vmul.f32 %v6280, %v6451
    %v7074 = vmul.f32 %v6281, %v6455
    %v7075 = vmul.f32 %v6282, %v6459
    %v7076 = vmul.f32 %v6283, %v6463
    %v7077 = vmul.f32 %v6284, %v6470
    %v7078 = vmul.f32 %v6285, %v6474
    %v7079 = vmul.f32 %v6286, %v6478
    %v7080 = vmul.f32 %v6287, %v6482
    %v7081 = vmul.f32 %v6288, %v6486
    %v7082 = vmul.f32 %v6289, %v6490
    %v7083 = vmul.f32 %v6290, %v6494
    %v7084 = vmul.f32 %v6291, %v6498
    %v7085 = vmul.f32 %v6292, %v6502
    %v7086 = vmul.f32 %v6293, %v6506
    %v7087 = vmul.f32 %v6294, %v6510
    %v7088 = vmul.f32 %v6295, %v6514
    %v7089 = vmul.f32 %v6296, %v6518
    %v7090 = vmul.f32 %v6297, %v6522
    %v7091 = vmul.f32 %v6298, %v6526
    %v7092 = vmul.f32 %v6299, %v6530
    %v7093 = vmul.f32 %v6300, %v6537
    %v7094 = vmul.f32 %v6301, %v6541
    %v7095 = vmul.f32 %v6302, %v6545
    %v7096 = vmul.f32 %v6303, %v6549
    %v7097 = vmul.f32 %v6304, %v6553
    %v7098 = vmul.f32 %v6305, %v6557
    %v7099 = vmul.f32 %v6306, %v6561
    %v7100 = vmul.f32 %v6307, %v6565
    %v7101 = vmul.f32 %v6308, %v6569
    %v7102 = vmul.f32 %v6309, %v6573
    %v7103 = vmul.f32 %v6310, %v6577
    %v7104 = vmul.f32 %v6311, %v6581
    %v7105 = vmul.f32 %v6312, %v6585
    %v7106 = vmul.f32 %v6313, %v6589
    %v7107 = vmul.f32 %v6314, %v6593
    %v7108 = vmul.f32 %v6315, %v6597
    %v7109 = vmul.f32 %v6316, %v6604
    %v7110 = vmul.f32 %v6317, %v6608
    %v7111 = vmul.f32 %v6318, %v6612
    %v7112 = vmul.f32 %v6319, %v6616
    %v7113 = vmul.f32 %v6320, %v6620
    %v7114 = vmul.f32 %v6321, %v6624
    %v7115 = vmul.f32 %v6322, %v6628
    %v7116 = vmul.f32 %v6323, %v6632
    %v7117 = vmul.f32 %v6324, %v6636
    %v7118 = vmul.f32 %v6325, %v6640
    %v7119 = vmul.f32 %v6326, %v6644
    %v7120 = vmul.f32 %v6327, %v6648
    %v7121 = vmul.f32 %v6328, %v6652
    %v7122 = vmul.f32 %v6329, %v6656
    %v7123 = vmul.f32 %v6330, %v6660
    %v7124 = vmul.f32 %v6331, %v6664
    %v7125 = vmul.f32 %v6332, %v6671
    %v7126 = vmul.f32 %v6333, %v6675
    %v7127 = vmul.f32 %v6334, %v6679
    %v7128 = vmul.f32 %v6335, %v6683
    %v7129 = vmul.f32 %v6336, %v6687
    %v7130 = vmul.f32 %v6337, %v6691
    %v7131 = vmul.f32 %v6338, %v6695
    %v7132 = vmul.f32 %v6339, %v6699
    %v7133 = vmul.f32 %v6340, %v6703
    %v7134 = vmul.f32 %v6341, %v6707
    %v7135 = vmul.f32 %v6342, %v6711
    %v7136 = vmul.f32 %v6343, %v6715
    %v7137 = vmul.f32 %v6344, %v6719
    %v7138 = vmul.f32 %v6345, %v6723
    %v7139 = vmul.f32 %v6346, %v6727
    %v7140 = vmul.f32 %v6347, %v6731
    %v7141 = vmul.f32 %v6348, %v6738
    %v7142 = vmul.f32 %v6349, %v6742
    %v7143 = vmul.f32 %v6350, %v6746
    %v7144 = vmul.f32 %v6351, %v6750
    %v7145 = vmul.f32 %v6352, %v6754
    %v7146 = vmul.f32 %v6353, %v6758
    %v7147 = vmul.f32 %v6354, %v6762
    %v7148 = vmul.f32 %v6355, %v6766
    %v7149 = vmul.f32 %v6356, %v6770
    %v7150 = vmul.f32 %v6357, %v6774
    %v7151 = vmul.f32 %v6358, %v6778
    %v7152 = vmul.f32 %v6359, %v6782
    %v7153 = vmul.f32 %v6360, %v6786
    %v7154 = vmul.f32 %v6361, %v6790
    %v7155 = vmul.f32 %v6362, %v6794
    %v7156 = vmul.f32 %v6363, %v6798
    %v7157 = vmul.f32 %v6364, %v6805
    %v7158 = vmul.f32 %v6365, %v6809
    %v7159 = vmul.f32 %v6366, %v6813
    %v7160 = vmul.f32 %v6367, %v6817
    %v7161 = vmul.f32 %v6368, %v6821
    %v7162 = vmul.f32 %v6369, %v6825
    %v7163 = vmul.f32 %v6370, %v6829
    %v7164 = vmul.f32 %v6371, %v6833
    %v7165 = vmul.f32 %v6372, %v6837
    %v7166 = vmul.f32 %v6373, %v6841
    %v7167 = vmul.f32 %v6374, %v6845
    %v7168 = vmul.f32 %v6375, %v6849
    %v7169 = vmul.f32 %v6376, %v6853
    %v7170 = vmul.f32 %v6377, %v6857
    %v7171 = vmul.f32 %v6378, %v6861
    %v7172 = vmul.f32 %v6379, %v6865
    %v7173 = vmul.f32 %v6380, %v6872
    %v7174 = vmul.f32 %v6381, %v6876
    %v7175 = vmul.f32 %v6382, %v6880
    %v7176 = vmul.f32 %v6383, %v6884
    %v7177 = vmul.f32 %v6384, %v6888
    %v7178 = vmul.f32 %v6385, %v6892
    %v7179 = vmul.f32 %v6386, %v6896
    %v7180 = vmul.f32 %v6387, %v6900
    %v7181 = vmul.f32 %v6388, %v6904
    %v7182 = vmul.f32 %v6389, %v6908
    %v7183 = vmul.f32 %v6390, %v6912
    %v7184 = vmul.f32 %v6391, %v6916
    %v7185 = vmul.f32 %v6392, %v6920
    %v7186 = vmul.f32 %v6393, %v6924
    %v7187 = vmul.f32 %v6394, %v6928
    %v7188 = vmul.f32 %v6395, %v6932
    %7317 = vset.pattern.permute.xlu0 0
    %7318 = vperm.xlu0 %7317, %v7061
    %v7319 = vpop.permute.xlu0 %7318
    %7320 = vset.pattern.permute.xlu0 0
    %7321 = vperm.xlu0 %7320, %v7062
    %v7322 = vpop.permute.xlu0 %7321
    %7323 = vset.pattern.permute.xlu0 0
    %7324 = vperm.xlu0 %7323, %v7063
    %v7325 = vpop.permute.xlu0 %7324
    %7326 = vset.pattern.permute.xlu0 0
    %7327 = vperm.xlu0 %7326, %v7064
    %v7328 = vpop.permute.xlu0 %7327
    %7329 = vset.pattern.permute.xlu0 0
    %7330 = vperm.xlu0 %7329, %v7065
    %v7331 = vpop.permute.xlu0 %7330
    %7332 = vset.pattern.permute.xlu0 0
    %7333 = vperm.xlu0 %7332, %v7066
    %v7334 = vpop.permute.xlu0 %7333
    %7335 = vset.pattern.permute.xlu0 0
    %7336 = vperm.xlu0 %7335, %v7067
    %v7337 = vpop.permute.xlu0 %7336
    %7338 = vset.pattern.permute.xlu0 0
    %7339 = vperm.xlu0 %7338, %v7068
    %v7340 = vpop.permute.xlu0 %7339
    %7341 = vset.pattern.permute.xlu0 0
    %7342 = vperm.xlu0 %7341, %v7069
    %v7343 = vpop.permute.xlu0 %7342
    %7344 = vset.pattern.permute.xlu0 0
    %7345 = vperm.xlu0 %7344, %v7070
    %v7346 = vpop.permute.xlu0 %7345
    %7347 = vset.pattern.permute.xlu0 0
    %7348 = vperm.xlu0 %7347, %v7071
    %v7349 = vpop.permute.xlu0 %7348
    %7350 = vset.pattern.permute.xlu0 0
    %7351 = vperm.xlu0 %7350, %v7072
    %v7352 = vpop.permute.xlu0 %7351
    %7353 = vset.pattern.permute.xlu0 0
    %7354 = vperm.xlu0 %7353, %v7073
    %v7355 = vpop.permute.xlu0 %7354
    %7356 = vset.pattern.permute.xlu0 0
    %7357 = vperm.xlu0 %7356, %v7074
    %v7358 = vpop.permute.xlu0 %7357
    %7359 = vset.pattern.permute.xlu0 0
    %7360 = vperm.xlu0 %7359, %v7075
    %v7361 = vpop.permute.xlu0 %7360
    %7362 = vset.pattern.permute.xlu0 0
    %7363 = vperm.xlu0 %7362, %v7076
    %v7364 = vpop.permute.xlu0 %7363
    %7365 = vset.pattern.permute.xlu0 0
    %7366 = vperm.xlu0 %7365, %v7077
    %v7367 = vpop.permute.xlu0 %7366
    %7368 = vset.pattern.permute.xlu0 0
    %7369 = vperm.xlu0 %7368, %v7078
    %v7370 = vpop.permute.xlu0 %7369
    %7371 = vset.pattern.permute.xlu0 0
    %7372 = vperm.xlu0 %7371, %v7079
    %v7373 = vpop.permute.xlu0 %7372
    %7374 = vset.pattern.permute.xlu0 0
    %7375 = vperm.xlu0 %7374, %v7080
    %v7376 = vpop.permute.xlu0 %7375
    %7377 = vset.pattern.permute.xlu0 0
    %7378 = vperm.xlu0 %7377, %v7081
    %v7379 = vpop.permute.xlu0 %7378
    %7380 = vset.pattern.permute.xlu0 0
    %7381 = vperm.xlu0 %7380, %v7082
    %v7382 = vpop.permute.xlu0 %7381
    %7383 = vset.pattern.permute.xlu0 0
    %7384 = vperm.xlu0 %7383, %v7083
    %v7385 = vpop.permute.xlu0 %7384
    %7386 = vset.pattern.permute.xlu0 0
    %7387 = vperm.xlu0 %7386, %v7084
    %v7388 = vpop.permute.xlu0 %7387
    %7389 = vset.pattern.permute.xlu0 0
    %7390 = vperm.xlu0 %7389, %v7085
    %v7391 = vpop.permute.xlu0 %7390
    %7392 = vset.pattern.permute.xlu0 0
    %7393 = vperm.xlu0 %7392, %v7086
    %v7394 = vpop.permute.xlu0 %7393
    %7395 = vset.pattern.permute.xlu0 0
    %7396 = vperm.xlu0 %7395, %v7087
    %v7397 = vpop.permute.xlu0 %7396
    %7398 = vset.pattern.permute.xlu0 0
    %7399 = vperm.xlu0 %7398, %v7088
    %v7400 = vpop.permute.xlu0 %7399
    %7401 = vset.pattern.permute.xlu0 0
    %7402 = vperm.xlu0 %7401, %v7089
    %v7403 = vpop.permute.xlu0 %7402
    %7404 = vset.pattern.permute.xlu0 0
    %7405 = vperm.xlu0 %7404, %v7090
    %v7406 = vpop.permute.xlu0 %7405
    %7407 = vset.pattern.permute.xlu0 0
    %7408 = vperm.xlu0 %7407, %v7091
    %v7409 = vpop.permute.xlu0 %7408
    %7410 = vset.pattern.permute.xlu0 0
    %7411 = vperm.xlu0 %7410, %v7092
    %v7412 = vpop.permute.xlu0 %7411
    %7413 = vset.pattern.permute.xlu0 0
    %7414 = vperm.xlu0 %7413, %v7093
    %v7415 = vpop.permute.xlu0 %7414
    %7416 = vset.pattern.permute.xlu0 0
    %7417 = vperm.xlu0 %7416, %v7094
    %v7418 = vpop.permute.xlu0 %7417
    %7419 = vset.pattern.permute.xlu0 0
    %7420 = vperm.xlu0 %7419, %v7095
    %v7421 = vpop.permute.xlu0 %7420
    %7422 = vset.pattern.permute.xlu0 0
    %7423 = vperm.xlu0 %7422, %v7096
    %v7424 = vpop.permute.xlu0 %7423
    %7425 = vset.pattern.permute.xlu0 0
    %7426 = vperm.xlu0 %7425, %v7097
    %v7427 = vpop.permute.xlu0 %7426
    %7428 = vset.pattern.permute.xlu0 0
    %7429 = vperm.xlu0 %7428, %v7098
    %v7430 = vpop.permute.xlu0 %7429
    %7431 = vset.pattern.permute.xlu0 0
    %7432 = vperm.xlu0 %7431, %v7099
    %v7433 = vpop.permute.xlu0 %7432
    %7434 = vset.pattern.permute.xlu0 0
    %7435 = vperm.xlu0 %7434, %v7100
    %v7436 = vpop.permute.xlu0 %7435
    %7437 = vset.pattern.permute.xlu0 0
    %7438 = vperm.xlu0 %7437, %v7101
    %v7439 = vpop.permute.xlu0 %7438
    %7440 = vset.pattern.permute.xlu0 0
    %7441 = vperm.xlu0 %7440, %v7102
    %v7442 = vpop.permute.xlu0 %7441
    %7443 = vset.pattern.permute.xlu0 0
    %7444 = vperm.xlu0 %7443, %v7103
    %v7445 = vpop.permute.xlu0 %7444
    %7446 = vset.pattern.permute.xlu0 0
    %7447 = vperm.xlu0 %7446, %v7104
    %v7448 = vpop.permute.xlu0 %7447
    %7449 = vset.pattern.permute.xlu0 0
    %7450 = vperm.xlu0 %7449, %v7105
    %v7451 = vpop.permute.xlu0 %7450
    %7452 = vset.pattern.permute.xlu0 0
    %7453 = vperm.xlu0 %7452, %v7106
    %v7454 = vpop.permute.xlu0 %7453
    %7455 = vset.pattern.permute.xlu0 0
    %7456 = vperm.xlu0 %7455, %v7107
    %v7457 = vpop.permute.xlu0 %7456
    %7458 = vset.pattern.permute.xlu0 0
    %7459 = vperm.xlu0 %7458, %v7108
    %v7460 = vpop.permute.xlu0 %7459
    %7461 = vset.pattern.permute.xlu0 0
    %7462 = vperm.xlu0 %7461, %v7109
    %v7463 = vpop.permute.xlu0 %7462
    %7464 = vset.pattern.permute.xlu0 0
    %7465 = vperm.xlu0 %7464, %v7110
    %v7466 = vpop.permute.xlu0 %7465
    %7467 = vset.pattern.permute.xlu0 0
    %7468 = vperm.xlu0 %7467, %v7111
    %v7469 = vpop.permute.xlu0 %7468
    %7470 = vset.pattern.permute.xlu0 0
    %7471 = vperm.xlu0 %7470, %v7112
    %v7472 = vpop.permute.xlu0 %7471
    %7473 = vset.pattern.permute.xlu0 0
    %7474 = vperm.xlu0 %7473, %v7113
    %v7475 = vpop.permute.xlu0 %7474
    %7476 = vset.pattern.permute.xlu0 0
    %7477 = vperm.xlu0 %7476, %v7114
    %v7478 = vpop.permute.xlu0 %7477
    %7479 = vset.pattern.permute.xlu0 0
    %7480 = vperm.xlu0 %7479, %v7115
    %v7481 = vpop.permute.xlu0 %7480
    %7482 = vset.pattern.permute.xlu0 0
    %7483 = vperm.xlu0 %7482, %v7116
    %v7484 = vpop.permute.xlu0 %7483
    %7485 = vset.pattern.permute.xlu0 0
    %7486 = vperm.xlu0 %7485, %v7117
    %v7487 = vpop.permute.xlu0 %7486
    %7488 = vset.pattern.permute.xlu0 0
    %7489 = vperm.xlu0 %7488, %v7118
    %v7490 = vpop.permute.xlu0 %7489
    %7491 = vset.pattern.permute.xlu0 0
    %7492 = vperm.xlu0 %7491, %v7119
    %v7493 = vpop.permute.xlu0 %7492
    %7494 = vset.pattern.permute.xlu0 0
    %7495 = vperm.xlu0 %7494, %v7120
    %v7496 = vpop.permute.xlu0 %7495
    %7497 = vset.pattern.permute.xlu0 0
    %7498 = vperm.xlu0 %7497, %v7121
    %v7499 = vpop.permute.xlu0 %7498
    %7500 = vset.pattern.permute.xlu0 0
    %7501 = vperm.xlu0 %7500, %v7122
    %v7502 = vpop.permute.xlu0 %7501
    %7503 = vset.pattern.permute.xlu0 0
    %7504 = vperm.xlu0 %7503, %v7123
    %v7505 = vpop.permute.xlu0 %7504
    %7506 = vset.pattern.permute.xlu0 0
    %7507 = vperm.xlu0 %7506, %v7124
    %v7508 = vpop.permute.xlu0 %7507
    %7509 = vset.pattern.permute.xlu0 0
    %7510 = vperm.xlu0 %7509, %v7125
    %v7511 = vpop.permute.xlu0 %7510
    %7512 = vset.pattern.permute.xlu0 0
    %7513 = vperm.xlu0 %7512, %v7126
    %v7514 = vpop.permute.xlu0 %7513
    %7515 = vset.pattern.permute.xlu0 0
    %7516 = vperm.xlu0 %7515, %v7127
    %v7517 = vpop.permute.xlu0 %7516
    %7518 = vset.pattern.permute.xlu0 0
    %7519 = vperm.xlu0 %7518, %v7128
    %v7520 = vpop.permute.xlu0 %7519
    %7521 = vset.pattern.permute.xlu0 0
    %7522 = vperm.xlu0 %7521, %v7129
    %v7523 = vpop.permute.xlu0 %7522
    %7524 = vset.pattern.permute.xlu0 0
    %7525 = vperm.xlu0 %7524, %v7130
    %v7526 = vpop.permute.xlu0 %7525
    %7527 = vset.pattern.permute.xlu0 0
    %7528 = vperm.xlu0 %7527, %v7131
    %v7529 = vpop.permute.xlu0 %7528
    %7530 = vset.pattern.permute.xlu0 0
    %7531 = vperm.xlu0 %7530, %v7132
    %v7532 = vpop.permute.xlu0 %7531
    %7533 = vset.pattern.permute.xlu0 0
    %7534 = vperm.xlu0 %7533, %v7133
    %v7535 = vpop.permute.xlu0 %7534
    %7536 = vset.pattern.permute.xlu0 0
    %7537 = vperm.xlu0 %7536, %v7134
    %v7538 = vpop.permute.xlu0 %7537
    %7539 = vset.pattern.permute.xlu0 0
    %7540 = vperm.xlu0 %7539, %v7135
    %v7541 = vpop.permute.xlu0 %7540
    %7542 = vset.pattern.permute.xlu0 0
    %7543 = vperm.xlu0 %7542, %v7136
    %v7544 = vpop.permute.xlu0 %7543
    %7545 = vset.pattern.permute.xlu0 0
    %7546 = vperm.xlu0 %7545, %v7137
    %v7547 = vpop.permute.xlu0 %7546
    %7548 = vset.pattern.permute.xlu0 0
    %7549 = vperm.xlu0 %7548, %v7138
    %v7550 = vpop.permute.xlu0 %7549
    %7551 = vset.pattern.permute.xlu0 0
    %7552 = vperm.xlu0 %7551, %v7139
    %v7553 = vpop.permute.xlu0 %7552
    %7554 = vset.pattern.permute.xlu0 0
    %7555 = vperm.xlu0 %7554, %v7140
    %v7556 = vpop.permute.xlu0 %7555
    %7557 = vset.pattern.permute.xlu0 0
    %7558 = vperm.xlu0 %7557, %v7141
    %v7559 = vpop.permute.xlu0 %7558
    %7560 = vset.pattern.permute.xlu0 0
    %7561 = vperm.xlu0 %7560, %v7142
    %v7562 = vpop.permute.xlu0 %7561
    %7563 = vset.pattern.permute.xlu0 0
    %7564 = vperm.xlu0 %7563, %v7143
    %v7565 = vpop.permute.xlu0 %7564
    %7566 = vset.pattern.permute.xlu0 0
    %7567 = vperm.xlu0 %7566, %v7144
    %v7568 = vpop.permute.xlu0 %7567
    %7569 = vset.pattern.permute.xlu0 0
    %7570 = vperm.xlu0 %7569, %v7145
    %v7571 = vpop.permute.xlu0 %7570
    %7572 = vset.pattern.permute.xlu0 0
    %7573 = vperm.xlu0 %7572, %v7146
    %v7574 = vpop.permute.xlu0 %7573
    %7575 = vset.pattern.permute.xlu0 0
    %7576 = vperm.xlu0 %7575, %v7147
    %v7577 = vpop.permute.xlu0 %7576
    %7578 = vset.pattern.permute.xlu0 0
    %7579 = vperm.xlu0 %7578, %v7148
    %v7580 = vpop.permute.xlu0 %7579
    %7581 = vset.pattern.permute.xlu0 0
    %7582 = vperm.xlu0 %7581, %v7149
    %v7583 = vpop.permute.xlu0 %7582
    %7584 = vset.pattern.permute.xlu0 0
    %7585 = vperm.xlu0 %7584, %v7150
    %v7586 = vpop.permute.xlu0 %7585
    %7587 = vset.pattern.permute.xlu0 0
    %7588 = vperm.xlu0 %7587, %v7151
    %v7589 = vpop.permute.xlu0 %7588
    %7590 = vset.pattern.permute.xlu0 0
    %7591 = vperm.xlu0 %7590, %v7152
    %v7592 = vpop.permute.xlu0 %7591
    %7593 = vset.pattern.permute.xlu0 0
    %7594 = vperm.xlu0 %7593, %v7153
    %v7595 = vpop.permute.xlu0 %7594
    %7596 = vset.pattern.permute.xlu0 0
    %7597 = vperm.xlu0 %7596, %v7154
    %v7598 = vpop.permute.xlu0 %7597
    %7599 = vset.pattern.permute.xlu0 0
    %7600 = vperm.xlu0 %7599, %v7155
    %v7601 = vpop.permute.xlu0 %7600
    %7602 = vset.pattern.permute.xlu0 0
    %7603 = vperm.xlu0 %7602, %v7156
    %v7604 = vpop.permute.xlu0 %7603
    %7605 = vset.pattern.permute.xlu0 0
    %7606 = vperm.xlu0 %7605, %v7157
    %v7607 = vpop.permute.xlu0 %7606
    %7608 = vset.pattern.permute.xlu0 0
    %7609 = vperm.xlu0 %7608, %v7158
    %v7610 = vpop.permute.xlu0 %7609
    %7611 = vset.pattern.permute.xlu0 0
    %7612 = vperm.xlu0 %7611, %v7159
    %v7613 = vpop.permute.xlu0 %7612
    %7614 = vset.pattern.permute.xlu0 0
    %7615 = vperm.xlu0 %7614, %v7160
    %v7616 = vpop.permute.xlu0 %7615
    %7617 = vset.pattern.permute.xlu0 0
    %7618 = vperm.xlu0 %7617, %v7161
    %v7619 = vpop.permute.xlu0 %7618
    %7620 = vset.pattern.permute.xlu0 0
    %7621 = vperm.xlu0 %7620, %v7162
    %v7622 = vpop.permute.xlu0 %7621
    %7623 = vset.pattern.permute.xlu0 0
    %7624 = vperm.xlu0 %7623, %v7163
    %v7625 = vpop.permute.xlu0 %7624
    %7626 = vset.pattern.permute.xlu0 0
    %7627 = vperm.xlu0 %7626, %v7164
    %v7628 = vpop.permute.xlu0 %7627
    %7629 = vset.pattern.permute.xlu0 0
    %7630 = vperm.xlu0 %7629, %v7165
    %v7631 = vpop.permute.xlu0 %7630
    %7632 = vset.pattern.permute.xlu0 0
    %7633 = vperm.xlu0 %7632, %v7166
    %v7634 = vpop.permute.xlu0 %7633
    %7635 = vset.pattern.permute.xlu0 0
    %7636 = vperm.xlu0 %7635, %v7167
    %v7637 = vpop.permute.xlu0 %7636
    %7638 = vset.pattern.permute.xlu0 0
    %7639 = vperm.xlu0 %7638, %v7168
    %v7640 = vpop.permute.xlu0 %7639
    %7641 = vset.pattern.permute.xlu0 0
    %7642 = vperm.xlu0 %7641, %v7169
    %v7643 = vpop.permute.xlu0 %7642
    %7644 = vset.pattern.permute.xlu0 0
    %7645 = vperm.xlu0 %7644, %v7170
    %v7646 = vpop.permute.xlu0 %7645
    %7647 = vset.pattern.permute.xlu0 0
    %7648 = vperm.xlu0 %7647, %v7171
    %v7649 = vpop.permute.xlu0 %7648
    %7650 = vset.pattern.permute.xlu0 0
    %7651 = vperm.xlu0 %7650, %v7172
    %v7652 = vpop.permute.xlu0 %7651
    %7653 = vset.pattern.permute.xlu0 0
    %7654 = vperm.xlu0 %7653, %v7173
    %v7655 = vpop.permute.xlu0 %7654
    %7656 = vset.pattern.permute.xlu0 0
    %7657 = vperm.xlu0 %7656, %v7174
    %v7658 = vpop.permute.xlu0 %7657
    %7659 = vset.pattern.permute.xlu0 0
    %7660 = vperm.xlu0 %7659, %v7175
    %v7661 = vpop.permute.xlu0 %7660
    %7662 = vset.pattern.permute.xlu0 0
    %7663 = vperm.xlu0 %7662, %v7176
    %v7664 = vpop.permute.xlu0 %7663
    %7665 = vset.pattern.permute.xlu0 0
    %7666 = vperm.xlu0 %7665, %v7177
    %v7667 = vpop.permute.xlu0 %7666
    %7668 = vset.pattern.permute.xlu0 0
    %7669 = vperm.xlu0 %7668, %v7178
    %v7670 = vpop.permute.xlu0 %7669
    %7671 = vset.pattern.permute.xlu0 0
    %7672 = vperm.xlu0 %7671, %v7179
    %v7673 = vpop.permute.xlu0 %7672
    %7674 = vset.pattern.permute.xlu0 0
    %7675 = vperm.xlu0 %7674, %v7180
    %v7676 = vpop.permute.xlu0 %7675
    %7677 = vset.pattern.permute.xlu0 0
    %7678 = vperm.xlu0 %7677, %v7181
    %v7679 = vpop.permute.xlu0 %7678
    %7680 = vset.pattern.permute.xlu0 0
    %7681 = vperm.xlu0 %7680, %v7182
    %v7682 = vpop.permute.xlu0 %7681
    %7683 = vset.pattern.permute.xlu0 0
    %7684 = vperm.xlu0 %7683, %v7183
    %v7685 = vpop.permute.xlu0 %7684
    %7686 = vset.pattern.permute.xlu0 0
    %7687 = vperm.xlu0 %7686, %v7184
    %v7688 = vpop.permute.xlu0 %7687
    %7689 = vset.pattern.permute.xlu0 0
    %7690 = vperm.xlu0 %7689, %v7185
    %v7691 = vpop.permute.xlu0 %7690
    %7692 = vset.pattern.permute.xlu0 0
    %7693 = vperm.xlu0 %7692, %v7186
    %v7694 = vpop.permute.xlu0 %7693
    %7695 = vset.pattern.permute.xlu0 0
    %7696 = vperm.xlu0 %7695, %v7187
    %v7697 = vpop.permute.xlu0 %7696
    %7698 = vset.pattern.permute.xlu0 0
    %7699 = vperm.xlu0 %7698, %v7188
    %v7700 = vpop.permute.xlu0 %7699
    %v7701 = vlaneseq
    %v7702 = vshrl.u32 %v7701, 7
    %v7703 = vsub.s32 %v4178, %v7702
    %v7704 = vrot.slane %v7319, %v7703
    %v7705 = vlaneseq
    %v7706 = vshrl.u32 %v7705, 7
    %v7707 = vsub.s32 %v4183, %v7706
    %v7708 = vrot.slane %v7322, %v7707
    %v7709 = vsel %vm4188, %v7708, %v7704
    %v7710 = vlaneseq
    %v7711 = vshrl.u32 %v7710, 7
    %v7712 = vsub.s32 %v4190, %v7711
    %v7713 = vrot.slane %v7325, %v7712
    %v7714 = vsel %vm4195, %v7713, %v7709
    %v7715 = vlaneseq
    %v7716 = vshrl.u32 %v7715, 7
    %v7717 = vsub.s32 %v4197, %v7716
    %v7718 = vrot.slane %v7328, %v7717
    %v7719 = vsel %vm4202, %v7718, %v7714
    %v7720 = vlaneseq
    %v7721 = vshrl.u32 %v7720, 7
    %v7722 = vsub.s32 %v4204, %v7721
    %v7723 = vrot.slane %v7331, %v7722
    %v7724 = vsel %vm4209, %v7723, %v7719
    %v7725 = vlaneseq
    %v7726 = vshrl.u32 %v7725, 7
    %v7727 = vsub.s32 %v4211, %v7726
    %v7728 = vrot.slane %v7334, %v7727
    %v7729 = vsel %vm4216, %v7728, %v7724
    %v7730 = vlaneseq
    %v7731 = vshrl.u32 %v7730, 7
    %v7732 = vsub.s32 %v4218, %v7731
    %v7733 = vrot.slane %v7337, %v7732
    %v7734 = vsel %vm4223, %v7733, %v7729
    %v7735 = vlaneseq
    %v7736 = vshrl.u32 %v7735, 7
    %v7737 = vsub.s32 %v4225, %v7736
    %v7738 = vrot.slane %v7340, %v7737
    %v7739 = vsel %vm4230, %v7738, %v7734
    %v7740 = vlaneseq
    %v7741 = vshrl.u32 %v7740, 7
    %v7742 = vsub.s32 %v4232, %v7741
    %v7743 = vrot.slane %v7343, %v7742
    %v7744 = vsel %vm4237, %v7743, %v7739
    %v7745 = vlaneseq
    %v7746 = vshrl.u32 %v7745, 7
    %v7747 = vsub.s32 %v4239, %v7746
    %v7748 = vrot.slane %v7346, %v7747
    %v7749 = vsel %vm4244, %v7748, %v7744
    %v7750 = vlaneseq
    %v7751 = vshrl.u32 %v7750, 7
    %v7752 = vsub.s32 %v4246, %v7751
    %v7753 = vrot.slane %v7349, %v7752
    %v7754 = vsel %vm4251, %v7753, %v7749
    %v7755 = vlaneseq
    %v7756 = vshrl.u32 %v7755, 7
    %v7757 = vsub.s32 %v4253, %v7756
    %v7758 = vrot.slane %v7352, %v7757
    %v7759 = vsel %vm4258, %v7758, %v7754
    %v7760 = vlaneseq
    %v7761 = vshrl.u32 %v7760, 7
    %v7762 = vsub.s32 %v4260, %v7761
    %v7763 = vrot.slane %v7355, %v7762
    %v7764 = vsel %vm4265, %v7763, %v7759
    %v7765 = vlaneseq
    %v7766 = vshrl.u32 %v7765, 7
    %v7767 = vsub.s32 %v4267, %v7766
    %v7768 = vrot.slane %v7358, %v7767
    %v7769 = vsel %vm4272, %v7768, %v7764
    %v7770 = vlaneseq
    %v7771 = vshrl.u32 %v7770, 7
    %v7772 = vsub.s32 %v4274, %v7771
    %v7773 = vrot.slane %v7361, %v7772
    %v7774 = vsel %vm4279, %v7773, %v7769
    %v7775 = vlaneseq
    %v7776 = vshrl.u32 %v7775, 7
    %v7777 = vsub.s32 %v4281, %v7776
    %v7778 = vrot.slane %v7364, %v7777
    %v7779 = vsel %vm4286, %v7778, %v7774
    %v7780 = vlaneseq
    %v7781 = vshrl.u32 %v7780, 7
    %v7782 = vsub.s32 %v4178, %v7781
    %v7783 = vrot.slane %v7367, %v7782
    %v7784 = vlaneseq
    %v7785 = vshrl.u32 %v7784, 7
    %v7786 = vsub.s32 %v4183, %v7785
    %v7787 = vrot.slane %v7370, %v7786
    %v7788 = vsel %vm4188, %v7787, %v7783
    %v7789 = vlaneseq
    %v7790 = vshrl.u32 %v7789, 7
    %v7791 = vsub.s32 %v4190, %v7790
    %v7792 = vrot.slane %v7373, %v7791
    %v7793 = vsel %vm4195, %v7792, %v7788
    %v7794 = vlaneseq
    %v7795 = vshrl.u32 %v7794, 7
    %v7796 = vsub.s32 %v4197, %v7795
    %v7797 = vrot.slane %v7376, %v7796
    %v7798 = vsel %vm4202, %v7797, %v7793
    %v7799 = vlaneseq
    %v7800 = vshrl.u32 %v7799, 7
    %v7801 = vsub.s32 %v4204, %v7800
    %v7802 = vrot.slane %v7379, %v7801
    %v7803 = vsel %vm4209, %v7802, %v7798
    %v7804 = vlaneseq
    %v7805 = vshrl.u32 %v7804, 7
    %v7806 = vsub.s32 %v4211, %v7805
    %v7807 = vrot.slane %v7382, %v7806
    %v7808 = vsel %vm4216, %v7807, %v7803
    %v7809 = vlaneseq
    %v7810 = vshrl.u32 %v7809, 7
    %v7811 = vsub.s32 %v4218, %v7810
    %v7812 = vrot.slane %v7385, %v7811
    %v7813 = vsel %vm4223, %v7812, %v7808
    %v7814 = vlaneseq
    %v7815 = vshrl.u32 %v7814, 7
    %v7816 = vsub.s32 %v4225, %v7815
    %v7817 = vrot.slane %v7388, %v7816
    %v7818 = vsel %vm4230, %v7817, %v7813
    %v7819 = vlaneseq
    %v7820 = vshrl.u32 %v7819, 7
    %v7821 = vsub.s32 %v4232, %v7820
    %v7822 = vrot.slane %v7391, %v7821
    %v7823 = vsel %vm4237, %v7822, %v7818
    %v7824 = vlaneseq
    %v7825 = vshrl.u32 %v7824, 7
    %v7826 = vsub.s32 %v4239, %v7825
    %v7827 = vrot.slane %v7394, %v7826
    %v7828 = vsel %vm4244, %v7827, %v7823
    %v7829 = vlaneseq
    %v7830 = vshrl.u32 %v7829, 7
    %v7831 = vsub.s32 %v4246, %v7830
    %v7832 = vrot.slane %v7397, %v7831
    %v7833 = vsel %vm4251, %v7832, %v7828
    %v7834 = vlaneseq
    %v7835 = vshrl.u32 %v7834, 7
    %v7836 = vsub.s32 %v4253, %v7835
    %v7837 = vrot.slane %v7400, %v7836
    %v7838 = vsel %vm4258, %v7837, %v7833
    %v7839 = vlaneseq
    %v7840 = vshrl.u32 %v7839, 7
    %v7841 = vsub.s32 %v4260, %v7840
    %v7842 = vrot.slane %v7403, %v7841
    %v7843 = vsel %vm4265, %v7842, %v7838
    %v7844 = vlaneseq
    %v7845 = vshrl.u32 %v7844, 7
    %v7846 = vsub.s32 %v4267, %v7845
    %v7847 = vrot.slane %v7406, %v7846
    %v7848 = vsel %vm4272, %v7847, %v7843
    %v7849 = vlaneseq
    %v7850 = vshrl.u32 %v7849, 7
    %v7851 = vsub.s32 %v4274, %v7850
    %v7852 = vrot.slane %v7409, %v7851
    %v7853 = vsel %vm4279, %v7852, %v7848
    %v7854 = vlaneseq
    %v7855 = vshrl.u32 %v7854, 7
    %v7856 = vsub.s32 %v4281, %v7855
    %v7857 = vrot.slane %v7412, %v7856
    %v7858 = vsel %vm4286, %v7857, %v7853
    %v7859 = vlaneseq
    %v7860 = vshrl.u32 %v7859, 7
    %v7861 = vsub.s32 %v4178, %v7860
    %v7862 = vrot.slane %v7415, %v7861
    %v7863 = vlaneseq
    %v7864 = vshrl.u32 %v7863, 7
    %v7865 = vsub.s32 %v4183, %v7864
    %v7866 = vrot.slane %v7418, %v7865
    %v7867 = vsel %vm4188, %v7866, %v7862
    %v7868 = vlaneseq
    %v7869 = vshrl.u32 %v7868, 7
    %v7870 = vsub.s32 %v4190, %v7869
    %v7871 = vrot.slane %v7421, %v7870
    %v7872 = vsel %vm4195, %v7871, %v7867
    %v7873 = vlaneseq
    %v7874 = vshrl.u32 %v7873, 7
    %v7875 = vsub.s32 %v4197, %v7874
    %v7876 = vrot.slane %v7424, %v7875
    %v7877 = vsel %vm4202, %v7876, %v7872
    %v7878 = vlaneseq
    %v7879 = vshrl.u32 %v7878, 7
    %v7880 = vsub.s32 %v4204, %v7879
    %v7881 = vrot.slane %v7427, %v7880
    %v7882 = vsel %vm4209, %v7881, %v7877
    %v7883 = vlaneseq
    %v7884 = vshrl.u32 %v7883, 7
    %v7885 = vsub.s32 %v4211, %v7884
    %v7886 = vrot.slane %v7430, %v7885
    %v7887 = vsel %vm4216, %v7886, %v7882
    %v7888 = vlaneseq
    %v7889 = vshrl.u32 %v7888, 7
    %v7890 = vsub.s32 %v4218, %v7889
    %v7891 = vrot.slane %v7433, %v7890
    %v7892 = vsel %vm4223, %v7891, %v7887
    %v7893 = vlaneseq
    %v7894 = vshrl.u32 %v7893, 7
    %v7895 = vsub.s32 %v4225, %v7894
    %v7896 = vrot.slane %v7436, %v7895
    %v7897 = vsel %vm4230, %v7896, %v7892
    %v7898 = vlaneseq
    %v7899 = vshrl.u32 %v7898, 7
    %v7900 = vsub.s32 %v4232, %v7899
    %v7901 = vrot.slane %v7439, %v7900
    %v7902 = vsel %vm4237, %v7901, %v7897
    %v7903 = vlaneseq
    %v7904 = vshrl.u32 %v7903, 7
    %v7905 = vsub.s32 %v4239, %v7904
    %v7906 = vrot.slane %v7442, %v7905
    %v7907 = vsel %vm4244, %v7906, %v7902
    %v7908 = vlaneseq
    %v7909 = vshrl.u32 %v7908, 7
    %v7910 = vsub.s32 %v4246, %v7909
    %v7911 = vrot.slane %v7445, %v7910
    %v7912 = vsel %vm4251, %v7911, %v7907
    %v7913 = vlaneseq
    %v7914 = vshrl.u32 %v7913, 7
    %v7915 = vsub.s32 %v4253, %v7914
    %v7916 = vrot.slane %v7448, %v7915
    %v7917 = vsel %vm4258, %v7916, %v7912
    %v7918 = vlaneseq
    %v7919 = vshrl.u32 %v7918, 7
    %v7920 = vsub.s32 %v4260, %v7919
    %v7921 = vrot.slane %v7451, %v7920
    %v7922 = vsel %vm4265, %v7921, %v7917
    %v7923 = vlaneseq
    %v7924 = vshrl.u32 %v7923, 7
    %v7925 = vsub.s32 %v4267, %v7924
    %v7926 = vrot.slane %v7454, %v7925
    %v7927 = vsel %vm4272, %v7926, %v7922
    %v7928 = vlaneseq
    %v7929 = vshrl.u32 %v7928, 7
    %v7930 = vsub.s32 %v4274, %v7929
    %v7931 = vrot.slane %v7457, %v7930
    %v7932 = vsel %vm4279, %v7931, %v7927
    %v7933 = vlaneseq
    %v7934 = vshrl.u32 %v7933, 7
    %v7935 = vsub.s32 %v4281, %v7934
    %v7936 = vrot.slane %v7460, %v7935
    %v7937 = vsel %vm4286, %v7936, %v7932
    %v7938 = vlaneseq
    %v7939 = vshrl.u32 %v7938, 7
    %v7940 = vsub.s32 %v4178, %v7939
    %v7941 = vrot.slane %v7463, %v7940
    %v7942 = vlaneseq
    %v7943 = vshrl.u32 %v7942, 7
    %v7944 = vsub.s32 %v4183, %v7943
    %v7945 = vrot.slane %v7466, %v7944
    %v7946 = vsel %vm4188, %v7945, %v7941
    %v7947 = vlaneseq
    %v7948 = vshrl.u32 %v7947, 7
    %v7949 = vsub.s32 %v4190, %v7948
    %v7950 = vrot.slane %v7469, %v7949
    %v7951 = vsel %vm4195, %v7950, %v7946
    %v7952 = vlaneseq
    %v7953 = vshrl.u32 %v7952, 7
    %v7954 = vsub.s32 %v4197, %v7953
    %v7955 = vrot.slane %v7472, %v7954
    %v7956 = vsel %vm4202, %v7955, %v7951
    %v7957 = vlaneseq
    %v7958 = vshrl.u32 %v7957, 7
    %v7959 = vsub.s32 %v4204, %v7958
    %v7960 = vrot.slane %v7475, %v7959
    %v7961 = vsel %vm4209, %v7960, %v7956
    %v7962 = vlaneseq
    %v7963 = vshrl.u32 %v7962, 7
    %v7964 = vsub.s32 %v4211, %v7963
    %v7965 = vrot.slane %v7478, %v7964
    %v7966 = vsel %vm4216, %v7965, %v7961
    %v7967 = vlaneseq
    %v7968 = vshrl.u32 %v7967, 7
    %v7969 = vsub.s32 %v4218, %v7968
    %v7970 = vrot.slane %v7481, %v7969
    %v7971 = vsel %vm4223, %v7970, %v7966
    %v7972 = vlaneseq
    %v7973 = vshrl.u32 %v7972, 7
    %v7974 = vsub.s32 %v4225, %v7973
    %v7975 = vrot.slane %v7484, %v7974
    %v7976 = vsel %vm4230, %v7975, %v7971
    %v7977 = vlaneseq
    %v7978 = vshrl.u32 %v7977, 7
    %v7979 = vsub.s32 %v4232, %v7978
    %v7980 = vrot.slane %v7487, %v7979
    %v7981 = vsel %vm4237, %v7980, %v7976
    %v7982 = vlaneseq
    %v7983 = vshrl.u32 %v7982, 7
    %v7984 = vsub.s32 %v4239, %v7983
    %v7985 = vrot.slane %v7490, %v7984
    %v7986 = vsel %vm4244, %v7985, %v7981
    %v7987 = vlaneseq
    %v7988 = vshrl.u32 %v7987, 7
    %v7989 = vsub.s32 %v4246, %v7988
    %v7990 = vrot.slane %v7493, %v7989
    %v7991 = vsel %vm4251, %v7990, %v7986
    %v7992 = vlaneseq
    %v7993 = vshrl.u32 %v7992, 7
    %v7994 = vsub.s32 %v4253, %v7993
    %v7995 = vrot.slane %v7496, %v7994
    %v7996 = vsel %vm4258, %v7995, %v7991
    %v7997 = vlaneseq
    %v7998 = vshrl.u32 %v7997, 7
    %v7999 = vsub.s32 %v4260, %v7998
    %v8000 = vrot.slane %v7499, %v7999
    %v8001 = vsel %vm4265, %v8000, %v7996
    %v8002 = vlaneseq
    %v8003 = vshrl.u32 %v8002, 7
    %v8004 = vsub.s32 %v4267, %v8003
    %v8005 = vrot.slane %v7502, %v8004
    %v8006 = vsel %vm4272, %v8005, %v8001
    %v8007 = vlaneseq
    %v8008 = vshrl.u32 %v8007, 7
    %v8009 = vsub.s32 %v4274, %v8008
    %v8010 = vrot.slane %v7505, %v8009
    %v8011 = vsel %vm4279, %v8010, %v8006
    %v8012 = vlaneseq
    %v8013 = vshrl.u32 %v8012, 7
    %v8014 = vsub.s32 %v4281, %v8013
    %v8015 = vrot.slane %v7508, %v8014
    %v8016 = vsel %vm4286, %v8015, %v8011
    %v8017 = vlaneseq
    %v8018 = vshrl.u32 %v8017, 7
    %v8019 = vsub.s32 %v4178, %v8018
    %v8020 = vrot.slane %v7511, %v8019
    %v8021 = vlaneseq
    %v8022 = vshrl.u32 %v8021, 7
    %v8023 = vsub.s32 %v4183, %v8022
    %v8024 = vrot.slane %v7514, %v8023
    %v8025 = vsel %vm4188, %v8024, %v8020
    %v8026 = vlaneseq
    %v8027 = vshrl.u32 %v8026, 7
    %v8028 = vsub.s32 %v4190, %v8027
    %v8029 = vrot.slane %v7517, %v8028
    %v8030 = vsel %vm4195, %v8029, %v8025
    %v8031 = vlaneseq
    %v8032 = vshrl.u32 %v8031, 7
    %v8033 = vsub.s32 %v4197, %v8032
    %v8034 = vrot.slane %v7520, %v8033
    %v8035 = vsel %vm4202, %v8034, %v8030
    %v8036 = vlaneseq
    %v8037 = vshrl.u32 %v8036, 7
    %v8038 = vsub.s32 %v4204, %v8037
    %v8039 = vrot.slane %v7523, %v8038
    %v8040 = vsel %vm4209, %v8039, %v8035
    %v8041 = vlaneseq
    %v8042 = vshrl.u32 %v8041, 7
    %v8043 = vsub.s32 %v4211, %v8042
    %v8044 = vrot.slane %v7526, %v8043
    %v8045 = vsel %vm4216, %v8044, %v8040
    %v8046 = vlaneseq
    %v8047 = vshrl.u32 %v8046, 7
    %v8048 = vsub.s32 %v4218, %v8047
    %v8049 = vrot.slane %v7529, %v8048
    %v8050 = vsel %vm4223, %v8049, %v8045
    %v8051 = vlaneseq
    %v8052 = vshrl.u32 %v8051, 7
    %v8053 = vsub.s32 %v4225, %v8052
    %v8054 = vrot.slane %v7532, %v8053
    %v8055 = vsel %vm4230, %v8054, %v8050
    %v8056 = vlaneseq
    %v8057 = vshrl.u32 %v8056, 7
    %v8058 = vsub.s32 %v4232, %v8057
    %v8059 = vrot.slane %v7535, %v8058
    %v8060 = vsel %vm4237, %v8059, %v8055
    %v8061 = vlaneseq
    %v8062 = vshrl.u32 %v8061, 7
    %v8063 = vsub.s32 %v4239, %v8062
    %v8064 = vrot.slane %v7538, %v8063
    %v8065 = vsel %vm4244, %v8064, %v8060
    %v8066 = vlaneseq
    %v8067 = vshrl.u32 %v8066, 7
    %v8068 = vsub.s32 %v4246, %v8067
    %v8069 = vrot.slane %v7541, %v8068
    %v8070 = vsel %vm4251, %v8069, %v8065
    %v8071 = vlaneseq
    %v8072 = vshrl.u32 %v8071, 7
    %v8073 = vsub.s32 %v4253, %v8072
    %v8074 = vrot.slane %v7544, %v8073
    %v8075 = vsel %vm4258, %v8074, %v8070
    %v8076 = vlaneseq
    %v8077 = vshrl.u32 %v8076, 7
    %v8078 = vsub.s32 %v4260, %v8077
    %v8079 = vrot.slane %v7547, %v8078
    %v8080 = vsel %vm4265, %v8079, %v8075
    %v8081 = vlaneseq
    %v8082 = vshrl.u32 %v8081, 7
    %v8083 = vsub.s32 %v4267, %v8082
    %v8084 = vrot.slane %v7550, %v8083
    %v8085 = vsel %vm4272, %v8084, %v8080
    %v8086 = vlaneseq
    %v8087 = vshrl.u32 %v8086, 7
    %v8088 = vsub.s32 %v4274, %v8087
    %v8089 = vrot.slane %v7553, %v8088
    %v8090 = vsel %vm4279, %v8089, %v8085
    %v8091 = vlaneseq
    %v8092 = vshrl.u32 %v8091, 7
    %v8093 = vsub.s32 %v4281, %v8092
    %v8094 = vrot.slane %v7556, %v8093
    %v8095 = vsel %vm4286, %v8094, %v8090
    %v8096 = vlaneseq
    %v8097 = vshrl.u32 %v8096, 7
    %v8098 = vsub.s32 %v4178, %v8097
    %v8099 = vrot.slane %v7559, %v8098
    %v8100 = vlaneseq
    %v8101 = vshrl.u32 %v8100, 7
    %v8102 = vsub.s32 %v4183, %v8101
    %v8103 = vrot.slane %v7562, %v8102
    %v8104 = vsel %vm4188, %v8103, %v8099
    %v8105 = vlaneseq
    %v8106 = vshrl.u32 %v8105, 7
    %v8107 = vsub.s32 %v4190, %v8106
    %v8108 = vrot.slane %v7565, %v8107
    %v8109 = vsel %vm4195, %v8108, %v8104
    %v8110 = vlaneseq
    %v8111 = vshrl.u32 %v8110, 7
    %v8112 = vsub.s32 %v4197, %v8111
    %v8113 = vrot.slane %v7568, %v8112
    %v8114 = vsel %vm4202, %v8113, %v8109
    %v8115 = vlaneseq
    %v8116 = vshrl.u32 %v8115, 7
    %v8117 = vsub.s32 %v4204, %v8116
    %v8118 = vrot.slane %v7571, %v8117
    %v8119 = vsel %vm4209, %v8118, %v8114
    %v8120 = vlaneseq
    %v8121 = vshrl.u32 %v8120, 7
    %v8122 = vsub.s32 %v4211, %v8121
    %v8123 = vrot.slane %v7574, %v8122
    %v8124 = vsel %vm4216, %v8123, %v8119
    %v8125 = vlaneseq
    %v8126 = vshrl.u32 %v8125, 7
    %v8127 = vsub.s32 %v4218, %v8126
    %v8128 = vrot.slane %v7577, %v8127
    %v8129 = vsel %vm4223, %v8128, %v8124
    %v8130 = vlaneseq
    %v8131 = vshrl.u32 %v8130, 7
    %v8132 = vsub.s32 %v4225, %v8131
    %v8133 = vrot.slane %v7580, %v8132
    %v8134 = vsel %vm4230, %v8133, %v8129
    %v8135 = vlaneseq
    %v8136 = vshrl.u32 %v8135, 7
    %v8137 = vsub.s32 %v4232, %v8136
    %v8138 = vrot.slane %v7583, %v8137
    %v8139 = vsel %vm4237, %v8138, %v8134
    %v8140 = vlaneseq
    %v8141 = vshrl.u32 %v8140, 7
    %v8142 = vsub.s32 %v4239, %v8141
    %v8143 = vrot.slane %v7586, %v8142
    %v8144 = vsel %vm4244, %v8143, %v8139
    %v8145 = vlaneseq
    %v8146 = vshrl.u32 %v8145, 7
    %v8147 = vsub.s32 %v4246, %v8146
    %v8148 = vrot.slane %v7589, %v8147
    %v8149 = vsel %vm4251, %v8148, %v8144
    %v8150 = vlaneseq
    %v8151 = vshrl.u32 %v8150, 7
    %v8152 = vsub.s32 %v4253, %v8151
    %v8153 = vrot.slane %v7592, %v8152
    %v8154 = vsel %vm4258, %v8153, %v8149
    %v8155 = vlaneseq
    %v8156 = vshrl.u32 %v8155, 7
    %v8157 = vsub.s32 %v4260, %v8156
    %v8158 = vrot.slane %v7595, %v8157
    %v8159 = vsel %vm4265, %v8158, %v8154
    %v8160 = vlaneseq
    %v8161 = vshrl.u32 %v8160, 7
    %v8162 = vsub.s32 %v4267, %v8161
    %v8163 = vrot.slane %v7598, %v8162
    %v8164 = vsel %vm4272, %v8163, %v8159
    %v8165 = vlaneseq
    %v8166 = vshrl.u32 %v8165, 7
    %v8167 = vsub.s32 %v4274, %v8166
    %v8168 = vrot.slane %v7601, %v8167
    %v8169 = vsel %vm4279, %v8168, %v8164
    %v8170 = vlaneseq
    %v8171 = vshrl.u32 %v8170, 7
    %v8172 = vsub.s32 %v4281, %v8171
    %v8173 = vrot.slane %v7604, %v8172
    %v8174 = vsel %vm4286, %v8173, %v8169
    %v8175 = vlaneseq
    %v8176 = vshrl.u32 %v8175, 7
    %v8177 = vsub.s32 %v4178, %v8176
    %v8178 = vrot.slane %v7607, %v8177
    %v8179 = vlaneseq
    %v8180 = vshrl.u32 %v8179, 7
    %v8181 = vsub.s32 %v4183, %v8180
    %v8182 = vrot.slane %v7610, %v8181
    %v8183 = vsel %vm4188, %v8182, %v8178
    %v8184 = vlaneseq
    %v8185 = vshrl.u32 %v8184, 7
    %v8186 = vsub.s32 %v4190, %v8185
    %v8187 = vrot.slane %v7613, %v8186
    %v8188 = vsel %vm4195, %v8187, %v8183
    %v8189 = vlaneseq
    %v8190 = vshrl.u32 %v8189, 7
    %v8191 = vsub.s32 %v4197, %v8190
    %v8192 = vrot.slane %v7616, %v8191
    %v8193 = vsel %vm4202, %v8192, %v8188
    %v8194 = vlaneseq
    %v8195 = vshrl.u32 %v8194, 7
    %v8196 = vsub.s32 %v4204, %v8195
    %v8197 = vrot.slane %v7619, %v8196
    %v8198 = vsel %vm4209, %v8197, %v8193
    %v8199 = vlaneseq
    %v8200 = vshrl.u32 %v8199, 7
    %v8201 = vsub.s32 %v4211, %v8200
    %v8202 = vrot.slane %v7622, %v8201
    %v8203 = vsel %vm4216, %v8202, %v8198
    %v8204 = vlaneseq
    %v8205 = vshrl.u32 %v8204, 7
    %v8206 = vsub.s32 %v4218, %v8205
    %v8207 = vrot.slane %v7625, %v8206
    %v8208 = vsel %vm4223, %v8207, %v8203
    %v8209 = vlaneseq
    %v8210 = vshrl.u32 %v8209, 7
    %v8211 = vsub.s32 %v4225, %v8210
    %v8212 = vrot.slane %v7628, %v8211
    %v8213 = vsel %vm4230, %v8212, %v8208
    %v8214 = vlaneseq
    %v8215 = vshrl.u32 %v8214, 7
    %v8216 = vsub.s32 %v4232, %v8215
    %v8217 = vrot.slane %v7631, %v8216
    %v8218 = vsel %vm4237, %v8217, %v8213
    %v8219 = vlaneseq
    %v8220 = vshrl.u32 %v8219, 7
    %v8221 = vsub.s32 %v4239, %v8220
    %v8222 = vrot.slane %v7634, %v8221
    %v8223 = vsel %vm4244, %v8222, %v8218
    %v8224 = vlaneseq
    %v8225 = vshrl.u32 %v8224, 7
    %v8226 = vsub.s32 %v4246, %v8225
    %v8227 = vrot.slane %v7637, %v8226
    %v8228 = vsel %vm4251, %v8227, %v8223
    %v8229 = vlaneseq
    %v8230 = vshrl.u32 %v8229, 7
    %v8231 = vsub.s32 %v4253, %v8230
    %v8232 = vrot.slane %v7640, %v8231
    %v8233 = vsel %vm4258, %v8232, %v8228
    %v8234 = vlaneseq
    %v8235 = vshrl.u32 %v8234, 7
    %v8236 = vsub.s32 %v4260, %v8235
    %v8237 = vrot.slane %v7643, %v8236
    %v8238 = vsel %vm4265, %v8237, %v8233
    %v8239 = vlaneseq
    %v8240 = vshrl.u32 %v8239, 7
    %v8241 = vsub.s32 %v4267, %v8240
    %v8242 = vrot.slane %v7646, %v8241
    %v8243 = vsel %vm4272, %v8242, %v8238
    %v8244 = vlaneseq
    %v8245 = vshrl.u32 %v8244, 7
    %v8246 = vsub.s32 %v4274, %v8245
    %v8247 = vrot.slane %v7649, %v8246
    %v8248 = vsel %vm4279, %v8247, %v8243
    %v8249 = vlaneseq
    %v8250 = vshrl.u32 %v8249, 7
    %v8251 = vsub.s32 %v4281, %v8250
    %v8252 = vrot.slane %v7652, %v8251
    %v8253 = vsel %vm4286, %v8252, %v8248
    %v8254 = vlaneseq
    %v8255 = vshrl.u32 %v8254, 7
    %v8256 = vsub.s32 %v4178, %v8255
    %v8257 = vrot.slane %v7655, %v8256
    %v8258 = vlaneseq
    %v8259 = vshrl.u32 %v8258, 7
    %v8260 = vsub.s32 %v4183, %v8259
    %v8261 = vrot.slane %v7658, %v8260
    %v8262 = vsel %vm4188, %v8261, %v8257
    %v8263 = vlaneseq
    %v8264 = vshrl.u32 %v8263, 7
    %v8265 = vsub.s32 %v4190, %v8264
    %v8266 = vrot.slane %v7661, %v8265
    %v8267 = vsel %vm4195, %v8266, %v8262
    %v8268 = vlaneseq
    %v8269 = vshrl.u32 %v8268, 7
    %v8270 = vsub.s32 %v4197, %v8269
    %v8271 = vrot.slane %v7664, %v8270
    %v8272 = vsel %vm4202, %v8271, %v8267
    %v8273 = vlaneseq
    %v8274 = vshrl.u32 %v8273, 7
    %v8275 = vsub.s32 %v4204, %v8274
    %v8276 = vrot.slane %v7667, %v8275
    %v8277 = vsel %vm4209, %v8276, %v8272
    %v8278 = vlaneseq
    %v8279 = vshrl.u32 %v8278, 7
    %v8280 = vsub.s32 %v4211, %v8279
    %v8281 = vrot.slane %v7670, %v8280
    %v8282 = vsel %vm4216, %v8281, %v8277
    %v8283 = vlaneseq
    %v8284 = vshrl.u32 %v8283, 7
    %v8285 = vsub.s32 %v4218, %v8284
    %v8286 = vrot.slane %v7673, %v8285
    %v8287 = vsel %vm4223, %v8286, %v8282
    %v8288 = vlaneseq
    %v8289 = vshrl.u32 %v8288, 7
    %v8290 = vsub.s32 %v4225, %v8289
    %v8291 = vrot.slane %v7676, %v8290
    %v8292 = vsel %vm4230, %v8291, %v8287
    %v8293 = vlaneseq
    %v8294 = vshrl.u32 %v8293, 7
    %v8295 = vsub.s32 %v4232, %v8294
    %v8296 = vrot.slane %v7679, %v8295
    %v8297 = vsel %vm4237, %v8296, %v8292
    %v8298 = vlaneseq
    %v8299 = vshrl.u32 %v8298, 7
    %v8300 = vsub.s32 %v4239, %v8299
    %v8301 = vrot.slane %v7682, %v8300
    %v8302 = vsel %vm4244, %v8301, %v8297
    %v8303 = vlaneseq
    %v8304 = vshrl.u32 %v8303, 7
    %v8305 = vsub.s32 %v4246, %v8304
    %v8306 = vrot.slane %v7685, %v8305
    %v8307 = vsel %vm4251, %v8306, %v8302
    %v8308 = vlaneseq
    %v8309 = vshrl.u32 %v8308, 7
    %v8310 = vsub.s32 %v4253, %v8309
    %v8311 = vrot.slane %v7688, %v8310
    %v8312 = vsel %vm4258, %v8311, %v8307
    %v8313 = vlaneseq
    %v8314 = vshrl.u32 %v8313, 7
    %v8315 = vsub.s32 %v4260, %v8314
    %v8316 = vrot.slane %v7691, %v8315
    %v8317 = vsel %vm4265, %v8316, %v8312
    %v8318 = vlaneseq
    %v8319 = vshrl.u32 %v8318, 7
    %v8320 = vsub.s32 %v4267, %v8319
    %v8321 = vrot.slane %v7694, %v8320
    %v8322 = vsel %vm4272, %v8321, %v8317
    %v8323 = vlaneseq
    %v8324 = vshrl.u32 %v8323, 7
    %v8325 = vsub.s32 %v4274, %v8324
    %v8326 = vrot.slane %v7697, %v8325
    %v8327 = vsel %vm4279, %v8326, %v8322
    %v8328 = vlaneseq
    %v8329 = vshrl.u32 %v8328, 7
    %v8330 = vsub.s32 %v4281, %v8329
    %v8331 = vrot.slane %v7700, %v8330
    %v8332 = vsel %vm4286, %v8331, %v8327
    %v8333 = vsel %vm4841, %v7858, %v7779
    %v8334 = vsel %vm4843, %v7937, %v8333
    %v8335 = vsel %vm4845, %v8016, %v8334
    %v8336 = vsel %vm4847, %v8095, %v8335
    %v8337 = vsel %vm4849, %v8174, %v8336
    %v8338 = vsel %vm4851, %v8253, %v8337
    %v8339 = vsel %vm4853, %v8332, %v8338
    %v8341 = vsub.f32 %v2612, %v8339
    %8342 = vst [vmem:[#allocation6] sm:$0xff] %v8341
    // Predicated region
    $region18: #{tpu_custom_call.1} parent=1 // pred_check
      _
    $region19: #{tpu_custom_call.1} parent=1 // pred_check_branch
      %8344 = sbr.rel (0) target = $region21
    $region20: #{tpu_custom_call.1} parent=1 // pred_region
      %s8346 = ssub.s32 128, 128
      %8347 = vsyncadd [#allocation3], %s8346
      %s8349 = sshll.u32 [#allocation2], 4
      %s8350 = int_to_ptr.vmem [resolvable:$true] %s8349
      %8352 = dma.vmem_to_hbm [thread:$0]  %s8350, 128, %s4, [#allocation3]
    $region21: #{tpu_custom_call.1} parent=1 // pred_fallthru
      _
    // Predicated region
    $region22: #{tpu_custom_call.1} parent=1 // pred_check
      _
    $region23: #{tpu_custom_call.1} parent=1 // pred_check_branch
      %8354 = sbr.rel (0) target = $region25
    $region24: #{tpu_custom_call.1} parent=1 // pred_region
      %s8356 = ssub.s32 128, 128
      %8357 = vsyncadd [#allocation5], %s8356
      %s8359 = sshll.u32 [#allocation4], 4
      %s8360 = int_to_ptr.vmem [resolvable:$true] %s8359
      %8362 = dma.vmem_to_hbm [thread:$0]  %s8360, 128, %s5, [#allocation5]
    $region25: #{tpu_custom_call.1} parent=1 // pred_fallthru
      _
    // Predicated region
    $region26: #{tpu_custom_call.1} parent=1 // pred_check
      _
    $region27: #{tpu_custom_call.1} parent=1 // pred_check_branch
      %8364 = sbr.rel (0) target = $region29
    $region28: #{tpu_custom_call.1} parent=1 // pred_region
      %s8366 = ssub.s32 128, 128
      %8367 = vsyncadd [#allocation5], %s8366
      %s8369 = sshll.u32 [#allocation6], 4
      %s8370 = int_to_ptr.vmem [resolvable:$true] %s8369
      %8372 = dma.vmem_to_hbm [thread:$0]  %s8370, 128, %s6, [#allocation5]
    $region29: #{tpu_custom_call.1} parent=1 // pred_fallthru
      _
    // Predicated region
    $region30: #{tpu_custom_call.1} parent=1 // pred_check
      _
    $region31: #{tpu_custom_call.1} parent=1 // pred_check_branch
      %8374 = sbr.rel (0) target = $region33
    $region32: #{tpu_custom_call.1} parent=1 // pred_region
      %8375 = dma.done [#allocation3], 128
    $region33: #{tpu_custom_call.1} parent=1 // pred_fallthru
      _
    // Predicated region
    $region34: #{tpu_custom_call.1} parent=1 // pred_check
      _
    $region35: #{tpu_custom_call.1} parent=1 // pred_check_branch
      %8377 = sbr.rel (0) target = $region37
    $region36: #{tpu_custom_call.1} parent=1 // pred_region
      %8378 = dma.done [#allocation5], 128
    $region37: #{tpu_custom_call.1} parent=1 // pred_fallthru
      _
    // Predicated region
    $region38: #{tpu_custom_call.1} parent=1 // pred_check
      _
    $region39: #{tpu_custom_call.1} parent=1 // pred_check_branch
      %8380 = sbr.rel (0) target = $region41
    $region40: #{tpu_custom_call.1} parent=1 // pred_region
      %8381 = dma.done [#allocation5], 128
    $region41: #{tpu_custom_call.1} parent=1 // pred_fallthru
      _
    %8382 = vsyncpa [#allocation3], 1
    %8383 = vsyncpa [#allocation5], 1

</llo_original>
